<compile_context>
chip_gen: v7x
topology: tpu7x:2x2x1
jax: 0.10.0
libtpu: 0.0.40
codegen_flags: <defaults>
</compile_context>

<pallas_src>
import jax
import jax.numpy as jnp
from jax import lax
from jax.experimental import pallas as pl
from jax.experimental.pallas import tpu as pltpu

VMEM_SPEC = pl.BlockSpec(memory_space=pltpu.MemorySpace.VMEM)


# ---------------------------------------------------------------------------
# Fused kernel: embedding (one-hot matmul) + 2-layer bi-GRU + Linear + LogSoftmax
# ---------------------------------------------------------------------------
def _make_fused_kernel(S, B, Bp, E, H, Hp, L, V, n_layers):
    SBp = S * Bp
    G = 3 * Hp  # fused gate width (each gate padded to a 128-lane block)

    def kernel(*refs):
        it = iter(refs)
        idx_ref = next(it)                                   # [S*Bp, 1] int32 (t-major)
        table_ref = next(it)                                 # [V, E]
        wih0_ref = next(it)                                  # [2, E, G]
        wih_hi_ref = next(it) if n_layers > 1 else None      # [n_layers-1, 2, 2, H, G]
        whh_ref = next(it)                                   # [n_layers, 2, H, G]
        bx_ref = next(it)                                    # [n_layers, 2, 1, G]
        bhn_ref = next(it)                                   # [n_layers, 2, 1, G]
        fcw_ref = next(it)                                   # [2, H, L]
        fcb_ref = next(it)                                   # [1, L]
        out_ref = next(it)                                   # [B, L]
        gx_scr = next(it)                                    # VMEM scratch [S*Bp, G]

        # ---- embedding lookup as a one-hot matmul (keeps everything in one dispatch)
        idx = idx_ref[...]                                   # [S*Bp, 1]
        iota = lax.broadcasted_iota(jnp.int32, (SBp, V), 1)
        onehot = jnp.where(iota == idx, jnp.float32(1.0), jnp.float32(0.0))
        x0 = jnp.dot(onehot, table_ref[...],
                     preferred_element_type=jnp.float32)     # [S*Bp, E]

        def run_direction(layer, d, x_chunks, reverse, need_outs):
            whh = whh_ref[layer, d]                          # [H, G]
            b_x = bx_ref[layer, d]                           # [1, G]  (b_i* + folded b_h{r,z})
            b_hn = bhn_ref[layer, d]                         # [1, G]  (b_hn in the n block)

            # Batched input projection for ALL timesteps (off the serial h-chain),
            # staged through VMEM scratch to keep vreg pressure low.
            if layer == 0:
                gx = jnp.dot(x_chunks[0], wih0_ref[d],
                             preferred_element_type=jnp.float32)
            else:
                gx = (jnp.dot(x_chunks[0], wih_hi_ref[layer - 1, d, 0],
                              preferred_element_type=jnp.float32)
                      + jnp.dot(x_chunks[1], wih_hi_ref[layer - 1, d, 1],
                                preferred_element_type=jnp.float32))
            gx_scr[...] = gx + b_x                           # [S*Bp, G]

            h = jnp.zeros((Bp, Hp), jnp.float32)             # h_0 = 0 (PyTorch default)
            outs = [None] * S if need_outs else None
            order = range(S - 1, -1, -1) if reverse else range(S)
            for t in order:                                  # fully unrolled, h in vregs
                gx_t = gx_scr[t * Bp:(t + 1) * Bp, :]        # aligned (8-row) slice
                h_c = h[:, 0:H]                              # offset-0 lane slice
                gh = jnp.dot(h_c, whh, preferred_element_type=jnp.float32) + b_hn
                r = jax.nn.sigmoid(gx_t[:, 0:Hp] + gh[:, 0:Hp])
                z = jax.nn.sigmoid(gx_t[:, Hp:2 * Hp] + gh[:, Hp:2 * Hp])
                n = jnp.tanh(gx_t[:, 2 * Hp:3 * Hp] + r * gh[:, 2 * Hp:3 * Hp])
                h = (1.0 - z) * n + z * h
                if need_outs:
                    outs[t] = h[:, 0:H]
            return outs, h[:, 0:H]

        x_chunks = [x0]
        h_f = h_b = None
        for layer in range(n_layers):
            need_outs = layer < n_layers - 1
            outs_f, h_f = run_direction(layer, 0, x_chunks, False, need_outs)
            outs_b, h_b = run_direction(layer, 1, x_chunks, True, need_outs)
            if need_outs:
                # next layer consumes the fwd / bwd chunks as separate matmul inputs
                x_chunks = [jnp.concatenate(outs_f, axis=0),     # [S*Bp, H]
                            jnp.concatenate(outs_b, axis=0)]     # [S*Bp, H]

        # ---- FC on concat(hidden[-2], hidden[-1]) + log-softmax over labels
        logits = (jnp.dot(h_f, fcw_ref[0], preferred_element_type=jnp.float32)
                  + jnp.dot(h_b, fcw_ref[1], preferred_element_type=jnp.float32)
                  + fcb_ref[...])                              # [Bp, L]
        m = jnp.max(logits, axis=1, keepdims=True)
        shifted = logits - m
        lse = jnp.log(jnp.sum(jnp.exp(shifted), axis=1, keepdims=True))
        out_ref[...] = (shifted - lse)[0:B, :]                 # drop batch padding rows

    return kernel


# ---------------------------------------------------------------------------
# Parameter init: PyTorch-like U(-1/sqrt(H), 1/sqrt(H)).  Weights are transposed,
# gate-fused with each gate padded to a 128-lane block, biases folded ONCE here.
# Returns (packed params for the kernel, raw params for the pure-JAX reference).
# ---------------------------------------------------------------------------
def init_params(key, vocab_size, E, H, L, n_layers, Hp=128):
    keys = iter(jax.random.split(key, 1 + n_layers * 2 * 4 + 2))
    emb = jax.random.normal(next(keys), (vocab_size, E), jnp.float32)

    def pad_gates(w):
        # w: [rows, 3H] (r|z|n blocks of width H) -> [rows, 3*Hp], each block at a
        # 128-lane boundary, zeros elsewhere.
        rows = w.shape[0]
        out = jnp.zeros((rows, 3 * Hp), jnp.float32)
        for g in range(3):
            out = out.at[:, g * Hp:g * Hp + H].set(w[:, g * H:(g + 1) * H])
        return out

    s = float(H) ** -0.5
    wih0, wih_hi, whh_all, bx_all, bhn_all = [], [], [], [], []
    raw_gru = []
    for layer in range(n_layers):
        in_dim = E if layer == 0 else 2 * H
        wih_hi_layer = []
        raw_dirs = []
        for _d in range(2):  # 0 = forward, 1 = reverse
            w_ih = jax.random.uniform(next(keys), (3 * H, in_dim), jnp.float32, -s, s)
            w_hh = jax.random.uniform(next(keys), (3 * H, H), jnp.float32, -s, s)
            b_ih = jax.random.uniform(next(keys), (3 * H,), jnp.float32, -s, s)
            b_hh = jax.random.uniform(next(keys), (3 * H,), jnp.float32, -s, s)
            raw_dirs.append((w_ih, w_hh, b_ih, b_hh))

            if layer == 0:
                wih0.append(pad_gates(w_ih.T))                             # [E, 3Hp]
            else:
                wih_hi_layer.append(jnp.stack(
                    [pad_gates(w_ih[:, 0:H].T),                            # fwd-feature chunk
                     pad_gates(w_ih[:, H:2 * H].T)]))                      # bwd-feature chunk
            whh_all.append(pad_gates(w_hh.T))                              # [H, 3Hp]
            b_x = jnp.concatenate([b_ih[0:H] + b_hh[0:H],
                                   b_ih[H:2 * H] + b_hh[H:2 * H],
                                   b_ih[2 * H:3 * H]]).reshape(1, 3 * H)
            bx_all.append(pad_gates(b_x))                                  # [1, 3Hp]
            b_hn = jnp.concatenate([jnp.zeros((2 * H,), jnp.float32),
                                    b_hh[2 * H:3 * H]]).reshape(1, 3 * H)
            bhn_all.append(pad_gates(b_hn))                                # [1, 3Hp]
        raw_gru.append(raw_dirs)
        if layer > 0:
            wih_hi.append(jnp.stack(wih_hi_layer))                         # [2, 2, H, 3Hp]

    sf = float(2 * H) ** -0.5
    fc_w = jax.random.uniform(next(keys), (L, 2 * H), jnp.float32, -sf, sf)
    fc_b = jax.random.uniform(next(keys), (L,), jnp.float32, -sf, sf)

    params = {
        "embedding": emb,
        "wih0": jnp.stack(wih0),                                           # [2, E, 3Hp]
        "wih_hi": (jnp.stack(wih_hi) if n_layers > 1 else None),
        "whh": jnp.stack(whh_all).reshape(n_layers, 2, H, 3 * Hp),
        "bx": jnp.stack(bx_all).reshape(n_layers, 2, 1, 3 * Hp),
        "bhn": jnp.stack(bhn_all).reshape(n_layers, 2, 1, 3 * Hp),
        "fc_w": jnp.stack([fc_w[:, 0:H].T, fc_w[:, H:2 * H].T]),           # [2, H, L]
        "fc_b": fc_b.reshape(1, L),
    }
    ref_params = {"embedding": emb, "gru": raw_gru, "fc_w": fc_w, "fc_b": fc_b}
    return params, ref_params


# ---------------------------------------------------------------------------
# Forward: batch padding (XLA glue) -> ONE fused Pallas kernel
# ---------------------------------------------------------------------------
def rnn_forward(params, text):
    # TODO(synk): training-mode dropout not implemented (identity in eval mode).
    S, B = text.shape
    V, E = params["embedding"].shape
    n_layers, _, H, G = params["whh"].shape
    Hp = G // 3
    L = params["fc_b"].shape[1]
    Bp = ((B + 7) // 8) * 8  # pad batch to one sublane tile

    text_p = jnp.zeros((S, Bp), jnp.int32).at[:, :B].set(text.astype(jnp.int32))
    idx = text_p.reshape(S * Bp, 1)  # t-major row order

    flat = [idx, params["embedding"], params["wih0"]]
    if n_layers > 1:
        flat.append(params["wih_hi"])
    flat += [params["whh"], params["bx"], params["bhn"], params["fc_w"], params["fc_b"]]

    kernel = _make_fused_kernel(S, B, Bp, E, H, Hp, L, V, n_layers)

    flops = 2 * S * Bp * V * E
    flops += 2 * (2 * S * Bp * E * G)                       # layer-0 input projections
    flops += (n_layers - 1) * 2 * (2 * S * Bp * 2 * H * G)  # layer>=1 input projections
    flops += n_layers * 2 * S * (2 * Bp * H * G)            # per-step hidden matmuls
    flops += 2 * 2 * Bp * H * L                              # FC
    transcendentals = n_layers * 2 * S * Bp * G + Bp * L
    bytes_accessed = sum(int(a.size) * a.dtype.itemsize for a in flat) + B * L * 4

    return pl.pallas_call(
        kernel,
        out_shape=jax.ShapeDtypeStruct((B, L), jnp.float32),
        in_specs=[VMEM_SPEC] * len(flat),
        out_specs=VMEM_SPEC,
        scratch_shapes=[pltpu.VMEM((S * Bp, G), jnp.float32)],
        cost_estimate=pl.CostEstimate(flops=int(flops),
                                      transcendentals=int(transcendentals),
                                      bytes_accessed=int(bytes_accessed)),
    )(*flat)


# ---------------------------------------------------------------------------
# Pure-JAX reference (PyTorch GRU formulation, raw un-packed params)
# ---------------------------------------------------------------------------
def _reference_forward(ref_params, text):
    emb = jnp.take(ref_params["embedding"], text, axis=0)    # [S, B, E]
    S, B, _ = emb.shape
    x = emb
    h_f = h_b = None
    for layer_params in ref_params["gru"]:
        outs_dir = []
        for d, (w_ih, w_hh, b_ih, b_hh) in enumerate(layer_params):
            H = w_hh.shape[1]
            h = jnp.zeros((B, H), jnp.float32)
            out_t = [None] * S
            order = range(S) if d == 0 else range(S - 1, -1, -1)
            for t in order:
                gi = x[t] @ w_ih.T + b_ih
                gh = h @ w_hh.T + b_hh
                r = jax.nn.sigmoid(gi[:, 0:H] + gh[:, 0:H])
                z = jax.nn.sigmoid(gi[:, H:2 * H] + gh[:, H:2 * H])
                n = jnp.tanh(gi[:, 2 * H:3 * H] + r * gh[:, 2 * H:3 * H])
                h = (1.0 - z) * n + z * h
                out_t[t] = h
            outs_dir.append(jnp.stack(out_t, axis=0))
            if d == 0:
                h_f = h
            else:
                h_b = h
        x = jnp.concatenate(outs_dir, axis=-1)
    logits = (jnp.concatenate([h_f, h_b], axis=1) @ ref_params["fc_w"].T
              + ref_params["fc_b"])
    return jax.nn.log_softmax(logits, axis=1)


if __name__ == "__main__":
    vocab_size, embedding_dim, hidden_dim, label_dim = 50, 16, 32, 4
    n_layers = 2
    seq_len, batch = 8, 2

    key = jax.random.PRNGKey(0)
    kp, kt = jax.random.split(key)
    params, ref_params = init_params(kp, vocab_size, embedding_dim, hidden_dim,
                                     label_dim, n_layers)
    text = jax.random.randint(kt, (seq_len, batch), 0, vocab_size, dtype=jnp.int32)

    fwd = jax.jit(rnn_forward)
    out = jax.block_until_ready(fwd(params, text))

    assert out.shape == (batch, label_dim)
    assert bool(jnp.all(jnp.isfinite(out)))
    # each row of log-softmax output should exponentiate-sum to ~1
    assert bool(jnp.allclose(jnp.sum(jnp.exp(out), axis=1), 1.0, atol=1e-4))
    # numeric check vs pure-JAX reference (loose tol: TPU matmul pass differences)
    ref = jax.block_until_ready(jax.jit(_reference_forward)(ref_params, text))
    assert bool(jnp.allclose(out, ref, atol=2e-2, rtol=2e-2))
    print("KERNEL_OK")
</pallas_src>

<mosaic_0001>
module attributes {stable_mosaic.version = 11 : i64} {
  func.func @kernel(%arg0: memref<64x1xi32, #tpu.memory_space<vmem>>, %arg1: memref<50x16xf32, #tpu.memory_space<vmem>>, %arg2: memref<2x16x384xf32, #tpu.memory_space<vmem>>, %arg3: memref<1x2x2x32x384xf32, #tpu.memory_space<vmem>>, %arg4: memref<2x2x32x384xf32, #tpu.memory_space<vmem>>, %arg5: memref<2x2x1x384xf32, #tpu.memory_space<vmem>>, %arg6: memref<2x2x1x384xf32, #tpu.memory_space<vmem>>, %arg7: memref<2x32x4xf32, #tpu.memory_space<vmem>>, %arg8: memref<1x4xf32, #tpu.memory_space<vmem>>, %arg9: memref<2x4xf32, #tpu.memory_space<vmem>>, %arg10: memref<64x384xf32, #tpu.memory_space<vmem>>) attributes {dimension_semantics = [], scalar_prefetch = 0 : i64, scratch_operands = 1 : i64, tpu.core_type = #tpu.core_type<tc>} {
    %c0 = arith.constant 0 : index
    %c0_0 = arith.constant 0 : index
    %0 = vector.load %arg0[%c0, %c0_0] : memref<64x1xi32, #tpu.memory_space<vmem>>, vector<64x1xi32>
    %1 = tpu.iota {dimensions = array<i32: 1>} : vector<64x50xi32>
    %2 = vector.broadcast %0 : vector<64x1xi32> to vector<64x50xi32>
    %3 = arith.cmpi eq, %1, %2 : vector<64x50xi32>
    %cst = arith.constant 1.000000e+00 : f32
    %cst_1 = arith.constant 0.000000e+00 : f32
    %4 = vector.broadcast %cst : f32 to vector<64x50xf32>
    %5 = vector.broadcast %cst_1 : f32 to vector<64x50xf32>
    %6 = arith.select %3, %4, %5 : vector<64x50xi1>, vector<64x50xf32>
    %c0_2 = arith.constant 0 : index
    %c0_3 = arith.constant 0 : index
    %7 = vector.load %arg1[%c0_2, %c0_3] : memref<50x16xf32, #tpu.memory_space<vmem>>, vector<50x16xf32>
    %cst_4 = arith.constant dense<0.000000e+00> : vector<64x16xf32>
    %8 = tpu.matmul %6, %7, %cst_4 {dimension_numbers = #tpu.dot_dimension_numbers<[1], [0], [0], [1], [0, 0, 1, 1], [], []>} : vector<64x50xf32>, vector<50x16xf32>, vector<64x16xf32> -> vector<64x16xf32>
    %c0_5 = arith.constant 0 : index
    %c0_6 = arith.constant 0 : index
    %c0_7 = arith.constant 0 : index
    %c0_8 = arith.constant 0 : index
    %9 = vector.load %arg4[%c0_5, %c0_6, %c0_7, %c0_8] : memref<2x2x32x384xf32, #tpu.memory_space<vmem>>, vector<1x1x32x384xf32>
    %10 = vector.shape_cast %9 : vector<1x1x32x384xf32> to vector<32x384xf32>
    %c0_9 = arith.constant 0 : index
    %c0_10 = arith.constant 0 : index
    %c0_11 = arith.constant 0 : index
    %c0_12 = arith.constant 0 : index
    %11 = vector.load %arg5[%c0_9, %c0_10, %c0_11, %c0_12] : memref<2x2x1x384xf32, #tpu.memory_space<vmem>>, vector<1x1x1x384xf32>
    %12 = vector.shape_cast %11 : vector<1x1x1x384xf32> to vector<1x384xf32>
    %c0_13 = arith.constant 0 : index
    %c0_14 = arith.constant 0 : index
    %c0_15 = arith.constant 0 : index
    %c0_16 = arith.constant 0 : index
    %13 = vector.load %arg6[%c0_13, %c0_14, %c0_15, %c0_16] : memref<2x2x1x384xf32, #tpu.memory_space<vmem>>, vector<1x1x1x384xf32>
    %14 = vector.shape_cast %13 : vector<1x1x1x384xf32> to vector<1x384xf32>
    %c0_17 = arith.constant 0 : index
    %c0_18 = arith.constant 0 : index
    %c0_19 = arith.constant 0 : index
    %15 = vector.load %arg2[%c0_17, %c0_18, %c0_19] : memref<2x16x384xf32, #tpu.memory_space<vmem>>, vector<1x16x384xf32>
    %16 = vector.shape_cast %15 : vector<1x16x384xf32> to vector<16x384xf32>
    %cst_20 = arith.constant dense<0.000000e+00> : vector<64x384xf32>
    %17 = tpu.matmul %8, %16, %cst_20 {dimension_numbers = #tpu.dot_dimension_numbers<[1], [0], [0], [1], [0, 0, 1, 1], [], []>} : vector<64x16xf32>, vector<16x384xf32>, vector<64x384xf32> -> vector<64x384xf32>
    %18 = vector.broadcast %12 : vector<1x384xf32> to vector<64x384xf32>
    %19 = arith.addf %17, %18 : vector<64x384xf32>
    %c0_21 = arith.constant 0 : index
    %c0_22 = arith.constant 0 : index
    %20 = vector.load %arg10[%c0_21, %c0_22] : memref<64x384xf32, #tpu.memory_space<vmem>>, vector<64x384xf32>
    tpu.vector_store %arg10[%c0_21, %c0_22], %19 {strides = array<i32>} : memref<64x384xf32, #tpu.memory_space<vmem>>, vector<64x384xf32>,
    %cst_23 = arith.constant 0.000000e+00 : f32
    %21 = vector.broadcast %cst_23 : f32 to vector<8x128xf32>
    %c0_24 = arith.constant 0 : index
    %c0_25 = arith.constant 0 : index
    %22 = vector.load %arg10[%c0_24, %c0_25] : memref<64x384xf32, #tpu.memory_space<vmem>>, vector<8x384xf32>
    %23 = vector.extract_strided_slice %21 {offsets = [0, 0], sizes = [8, 32], strides = [1, 1]} : vector<8x128xf32> to vector<8x32xf32>
    %cst_26 = arith.constant dense<0.000000e+00> : vector<8x384xf32>
    %24 = tpu.matmul %23, %10, %cst_26 {dimension_numbers = #tpu.dot_dimension_numbers<[1], [0], [0], [1], [0, 0, 1, 1], [], []>} : vector<8x32xf32>, vector<32x384xf32>, vector<8x384xf32> -> vector<8x384xf32>
    %25 = vector.broadcast %14 : vector<1x384xf32> to vector<8x384xf32>
    %26 = arith.addf %24, %25 : vector<8x384xf32>
    %27 = vector.extract_strided_slice %22 {offsets = [0, 0], sizes = [8, 128], strides = [1, 1]} : vector<8x384xf32> to vector<8x128xf32>
    %28 = vector.extract_strided_slice %26 {offsets = [0, 0], sizes = [8, 128], strides = [1, 1]} : vector<8x384xf32> to vector<8x128xf32>
    %29 = arith.addf %27, %28 : vector<8x128xf32>
    %30 = arith.negf %29 : vector<8x128xf32>
    %31 = math.exp %30 : vector<8x128xf32>
    %cst_27 = arith.constant 1.000000e+00 : f32
    %32 = vector.broadcast %cst_27 : f32 to vector<8x128xf32>
    %33 = arith.addf %32, %31 : vector<8x128xf32>
    %34 = arith.divf %32, %33 : vector<8x128xf32>
    %35 = vector.extract_strided_slice %22 {offsets = [0, 128], sizes = [8, 128], strides = [1, 1]} : vector<8x384xf32> to vector<8x128xf32>
    %36 = vector.extract_strided_slice %26 {offsets = [0, 128], sizes = [8, 128], strides = [1, 1]} : vector<8x384xf32> to vector<8x128xf32>
    %37 = arith.addf %35, %36 : vector<8x128xf32>
    %38 = arith.negf %37 : vector<8x128xf32>
    %39 = math.exp %38 : vector<8x128xf32>
    %cst_28 = arith.constant 1.000000e+00 : f32
    %40 = vector.broadcast %cst_28 : f32 to vector<8x128xf32>
    %41 = arith.addf %40, %39 : vector<8x128xf32>
    %42 = arith.divf %40, %41 : vector<8x128xf32>
    %43 = vector.extract_strided_slice %22 {offsets = [0, 256], sizes = [8, 128], strides = [1, 1]} : vector<8x384xf32> to vector<8x128xf32>
    %44 = vector.extract_strided_slice %26 {offsets = [0, 256], sizes = [8, 128], strides = [1, 1]} : vector<8x384xf32> to vector<8x128xf32>
    %45 = arith.mulf %34, %44 : vector<8x128xf32>
    %46 = arith.addf %43, %45 : vector<8x128xf32>
    %47 = math.tanh %46 : vector<8x128xf32>
    %cst_29 = arith.constant 1.000000e+00 : f32
    %48 = vector.broadcast %cst_29 : f32 to vector<8x128xf32>
    %49 = arith.subf %48, %42 : vector<8x128xf32>
    %50 = arith.mulf %49, %47 : vector<8x128xf32>
    %51 = arith.mulf %42, %21 : vector<8x128xf32>
    %52 = arith.addf %50, %51 : vector<8x128xf32>
    %53 = vector.extract_strided_slice %52 {offsets = [0, 0], sizes = [8, 32], strides = [1, 1]} : vector<8x128xf32> to vector<8x32xf32>
    %c8 = arith.constant 8 : index
    %c0_30 = arith.constant 0 : index
    %54 = vector.load %arg10[%c8, %c0_30] : memref<64x384xf32, #tpu.memory_space<vmem>>, vector<8x384xf32>
    %55 = vector.extract_strided_slice %52 {offsets = [0, 0], sizes = [8, 32], strides = [1, 1]} : vector<8x128xf32> to vector<8x32xf32>
    %cst_31 = arith.constant dense<0.000000e+00> : vector<8x384xf32>
    %56 = tpu.matmul %55, %10, %cst_31 {dimension_numbers = #tpu.dot_dimension_numbers<[1], [0], [0], [1], [0, 0, 1, 1], [], []>} : vector<8x32xf32>, vector<32x384xf32>, vector<8x384xf32> -> vector<8x384xf32>
    %57 = vector.broadcast %14 : vector<1x384xf32> to vector<8x384xf32>
    %58 = arith.addf %56, %57 : vector<8x384xf32>
    %59 = vector.extract_strided_slice %54 {offsets = [0, 0], sizes = [8, 128], strides = [1, 1]} : vector<8x384xf32> to vector<8x128xf32>
    %60 = vector.extract_strided_slice %58 {offsets = [0, 0], sizes = [8, 128], strides = [1, 1]} : vector<8x384xf32> to vector<8x128xf32>
    %61 = arith.addf %59, %60 : vector<8x128xf32>
    %62 = arith.negf %61 : vector<8x128xf32>
    %63 = math.exp %62 : vector<8x128xf32>
    %cst_32 = arith.constant 1.000000e+00 : f32
    %64 = vector.broadcast %cst_32 : f32 to vector<8x128xf32>
    %65 = arith.addf %64, %63 : vector<8x128xf32>
    %66 = arith.divf %64, %65 : vector<8x128xf32>
    %67 = vector.extract_strided_slice %54 {offsets = [0, 128], sizes = [8, 128], strides = [1, 1]} : vector<8x384xf32> to vector<8x128xf32>
    %68 = vector.extract_strided_slice %58 {offsets = [0, 128], sizes = [8, 128], strides = [1, 1]} : vector<8x384xf32> to vector<8x128xf32>
    %69 = arith.addf %67, %68 : vector<8x128xf32>
    %70 = arith.negf %69 : vector<8x128xf32>
    %71 = math.exp %70 : vector<8x128xf32>
    %cst_33 = arith.constant 1.000000e+00 : f32
    %72 = vector.broadcast %cst_33 : f32 to vector<8x128xf32>
    %73 = arith.addf %72, %71 : vector<8x128xf32>
    %74 = arith.divf %72, %73 : vector<8x128xf32>
    %75 = vector.extract_strided_slice %54 {offsets = [0, 256], sizes = [8, 128], strides = [1, 1]} : vector<8x384xf32> to vector<8x128xf32>
    %76 = vector.extract_strided_slice %58 {offsets = [0, 256], sizes = [8, 128], strides = [1, 1]} : vector<8x384xf32> to vector<8x128xf32>
    %77 = arith.mulf %66, %76 : vector<8x128xf32>
    %78 = arith.addf %75, %77 : vector<8x128xf32>
    %79 = math.tanh %78 : vector<8x128xf32>
    %cst_34 = arith.constant 1.000000e+00 : f32
    %80 = vector.broadcast %cst_34 : f32 to vector<8x128xf32>
    %81 = arith.subf %80, %74 : vector<8x128xf32>
    %82 = arith.mulf %81, %79 : vector<8x128xf32>
    %83 = arith.mulf %74, %52 : vector<8x128xf32>
    %84 = arith.addf %82, %83 : vector<8x128xf32>
    %85 = vector.extract_strided_slice %84 {offsets = [0, 0], sizes = [8, 32], strides = [1, 1]} : vector<8x128xf32> to vector<8x32xf32>
    %c16 = arith.constant 16 : index
    %c0_35 = arith.constant 0 : index
    %86 = vector.load %arg10[%c16, %c0_35] : memref<64x384xf32, #tpu.memory_space<vmem>>, vector<8x384xf32>
    %87 = vector.extract_strided_slice %84 {offsets = [0, 0], sizes = [8, 32], strides = [1, 1]} : vector<8x128xf32> to vector<8x32xf32>
    %cst_36 = arith.constant dense<0.000000e+00> : vector<8x384xf32>
    %88 = tpu.matmul %87, %10, %cst_36 {dimension_numbers = #tpu.dot_dimension_numbers<[1], [0], [0], [1], [0, 0, 1, 1], [], []>} : vector<8x32xf32>, vector<32x384xf32>, vector<8x384xf32> -> vector<8x384xf32>
    %89 = vector.broadcast %14 : vector<1x384xf32> to vector<8x384xf32>
    %90 = arith.addf %88, %89 : vector<8x384xf32>
    %91 = vector.extract_strided_slice %86 {offsets = [0, 0], sizes = [8, 128], strides = [1, 1]} : vector<8x384xf32> to vector<8x128xf32>
    %92 = vector.extract_strided_slice %90 {offsets = [0, 0], sizes = [8, 128], strides = [1, 1]} : vector<8x384xf32> to vector<8x128xf32>
    %93 = arith.addf %91, %92 : vector<8x128xf32>
    %94 = arith.negf %93 : vector<8x128xf32>
    %95 = math.exp %94 : vector<8x128xf32>
    %cst_37 = arith.constant 1.000000e+00 : f32
    %96 = vector.broadcast %cst_37 : f32 to vector<8x128xf32>
    %97 = arith.addf %96, %95 : vector<8x128xf32>
    %98 = arith.divf %96, %97 : vector<8x128xf32>
    %99 = vector.extract_strided_slice %86 {offsets = [0, 128], sizes = [8, 128], strides = [1, 1]} : vector<8x384xf32> to vector<8x128xf32>
    %100 = vector.extract_strided_slice %90 {offsets = [0, 128], sizes = [8, 128], strides = [1, 1]} : vector<8x384xf32> to vector<8x128xf32>
    %101 = arith.addf %99, %100 : vector<8x128xf32>
    %102 = arith.negf %101 : vector<8x128xf32>
    %103 = math.exp %102 : vector<8x128xf32>
    %cst_38 = arith.constant 1.000000e+00 : f32
    %104 = vector.broadcast %cst_38 : f32 to vector<8x128xf32>
    %105 = arith.addf %104, %103 : vector<8x128xf32>
    %106 = arith.divf %104, %105 : vector<8x128xf32>
    %107 = vector.extract_strided_slice %86 {offsets = [0, 256], sizes = [8, 128], strides = [1, 1]} : vector<8x384xf32> to vector<8x128xf32>
    %108 = vector.extract_strided_slice %90 {offsets = [0, 256], sizes = [8, 128], strides = [1, 1]} : vector<8x384xf32> to vector<8x128xf32>
    %109 = arith.mulf %98, %108 : vector<8x128xf32>
    %110 = arith.addf %107, %109 : vector<8x128xf32>
    %111 = math.tanh %110 : vector<8x128xf32>
    %cst_39 = arith.constant 1.000000e+00 : f32
    %112 = vector.broadcast %cst_39 : f32 to vector<8x128xf32>
    %113 = arith.subf %112, %106 : vector<8x128xf32>
    %114 = arith.mulf %113, %111 : vector<8x128xf32>
    %115 = arith.mulf %106, %84 : vector<8x128xf32>
    %116 = arith.addf %114, %115 : vector<8x128xf32>
    %117 = vector.extract_strided_slice %116 {offsets = [0, 0], sizes = [8, 32], strides = [1, 1]} : vector<8x128xf32> to vector<8x32xf32>
    %c24 = arith.constant 24 : index
    %c0_40 = arith.constant 0 : index
    %118 = vector.load %arg10[%c24, %c0_40] : memref<64x384xf32, #tpu.memory_space<vmem>>, vector<8x384xf32>
    %119 = vector.extract_strided_slice %116 {offsets = [0, 0], sizes = [8, 32], strides = [1, 1]} : vector<8x128xf32> to vector<8x32xf32>
    %cst_41 = arith.constant dense<0.000000e+00> : vector<8x384xf32>
    %120 = tpu.matmul %119, %10, %cst_41 {dimension_numbers = #tpu.dot_dimension_numbers<[1], [0], [0], [1], [0, 0, 1, 1], [], []>} : vector<8x32xf32>, vector<32x384xf32>, vector<8x384xf32> -> vector<8x384xf32>
    %121 = vector.broadcast %14 : vector<1x384xf32> to vector<8x384xf32>
    %122 = arith.addf %120, %121 : vector<8x384xf32>
    %123 = vector.extract_strided_slice %118 {offsets = [0, 0], sizes = [8, 128], strides = [1, 1]} : vector<8x384xf32> to vector<8x128xf32>
    %124 = vector.extract_strided_slice %122 {offsets = [0, 0], sizes = [8, 128], strides = [1, 1]} : vector<8x384xf32> to vector<8x128xf32>
    %125 = arith.addf %123, %124 : vector<8x128xf32>
    %126 = arith.negf %125 : vector<8x128xf32>
    %127 = math.exp %126 : vector<8x128xf32>
    %cst_42 = arith.constant 1.000000e+00 : f32
    %128 = vector.broadcast %cst_42 : f32 to vector<8x128xf32>
    %129 = arith.addf %128, %127 : vector<8x128xf32>
    %130 = arith.divf %128, %129 : vector<8x128xf32>
    %131 = vector.extract_strided_slice %118 {offsets = [0, 128], sizes = [8, 128], strides = [1, 1]} : vector<8x384xf32> to vector<8x128xf32>
    %132 = vector.extract_strided_slice %122 {offsets = [0, 128], sizes = [8, 128], strides = [1, 1]} : vector<8x384xf32> to vector<8x128xf32>
    %133 = arith.addf %131, %132 : vector<8x128xf32>
    %134 = arith.negf %133 : vector<8x128xf32>
    %135 = math.exp %134 : vector<8x128xf32>
    %cst_43 = arith.constant 1.000000e+00 : f32
    %136 = vector.broadcast %cst_43 : f32 to vector<8x128xf32>
    %137 = arith.addf %136, %135 : vector<8x128xf32>
    %138 = arith.divf %136, %137 : vector<8x128xf32>
    %139 = vector.extract_strided_slice %118 {offsets = [0, 256], sizes = [8, 128], strides = [1, 1]} : vector<8x384xf32> to vector<8x128xf32>
    %140 = vector.extract_strided_slice %122 {offsets = [0, 256], sizes = [8, 128], strides = [1, 1]} : vector<8x384xf32> to vector<8x128xf32>
    %141 = arith.mulf %130, %140 : vector<8x128xf32>
    %142 = arith.addf %139, %141 : vector<8x128xf32>
    %143 = math.tanh %142 : vector<8x128xf32>
    %cst_44 = arith.constant 1.000000e+00 : f32
    %144 = vector.broadcast %cst_44 : f32 to vector<8x128xf32>
    %145 = arith.subf %144, %138 : vector<8x128xf32>
    %146 = arith.mulf %145, %143 : vector<8x128xf32>
    %147 = arith.mulf %138, %116 : vector<8x128xf32>
    %148 = arith.addf %146, %147 : vector<8x128xf32>
    %149 = vector.extract_strided_slice %148 {offsets = [0, 0], sizes = [8, 32], strides = [1, 1]} : vector<8x128xf32> to vector<8x32xf32>
    %c32 = arith.constant 32 : index
    %c0_45 = arith.constant 0 : index
    %150 = vector.load %arg10[%c32, %c0_45] : memref<64x384xf32, #tpu.memory_space<vmem>>, vector<8x384xf32>
    %151 = vector.extract_strided_slice %148 {offsets = [0, 0], sizes = [8, 32], strides = [1, 1]} : vector<8x128xf32> to vector<8x32xf32>
    %cst_46 = arith.constant dense<0.000000e+00> : vector<8x384xf32>
    %152 = tpu.matmul %151, %10, %cst_46 {dimension_numbers = #tpu.dot_dimension_numbers<[1], [0], [0], [1], [0, 0, 1, 1], [], []>} : vector<8x32xf32>, vector<32x384xf32>, vector<8x384xf32> -> vector<8x384xf32>
    %153 = vector.broadcast %14 : vector<1x384xf32> to vector<8x384xf32>
    %154 = arith.addf %152, %153 : vector<8x384xf32>
    %155 = vector.extract_strided_slice %150 {offsets = [0, 0], sizes = [8, 128], strides = [1, 1]} : vector<8x384xf32> to vector<8x128xf32>
    %156 = vector.extract_strided_slice %154 {offsets = [0, 0], sizes = [8, 128], strides = [1, 1]} : vector<8x384xf32> to vector<8x128xf32>
    %157 = arith.addf %155, %156 : vector<8x128xf32>
    %158 = arith.negf %157 : vector<8x128xf32>
    %159 = math.exp %158 : vector<8x128xf32>
    %cst_47 = arith.constant 1.000000e+00 : f32
    %160 = vector.broadcast %cst_47 : f32 to vector<8x128xf32>
    %161 = arith.addf %160, %159 : vector<8x128xf32>
    %162 = arith.divf %160, %161 : vector<8x128xf32>
    %163 = vector.extract_strided_slice %150 {offsets = [0, 128], sizes = [8, 128], strides = [1, 1]} : vector<8x384xf32> to vector<8x128xf32>
    %164 = vector.extract_strided_slice %154 {offsets = [0, 128], sizes = [8, 128], strides = [1, 1]} : vector<8x384xf32> to vector<8x128xf32>
    %165 = arith.addf %163, %164 : vector<8x128xf32>
    %166 = arith.negf %165 : vector<8x128xf32>
    %167 = math.exp %166 : vector<8x128xf32>
    %cst_48 = arith.constant 1.000000e+00 : f32
    %168 = vector.broadcast %cst_48 : f32 to vector<8x128xf32>
    %169 = arith.addf %168, %167 : vector<8x128xf32>
    %170 = arith.divf %168, %169 : vector<8x128xf32>
    %171 = vector.extract_strided_slice %150 {offsets = [0, 256], sizes = [8, 128], strides = [1, 1]} : vector<8x384xf32> to vector<8x128xf32>
    %172 = vector.extract_strided_slice %154 {offsets = [0, 256], sizes = [8, 128], strides = [1, 1]} : vector<8x384xf32> to vector<8x128xf32>
    %173 = arith.mulf %162, %172 : vector<8x128xf32>
    %174 = arith.addf %171, %173 : vector<8x128xf32>
    %175 = math.tanh %174 : vector<8x128xf32>
    %cst_49 = arith.constant 1.000000e+00 : f32
    %176 = vector.broadcast %cst_49 : f32 to vector<8x128xf32>
    %177 = arith.subf %176, %170 : vector<8x128xf32>
    %178 = arith.mulf %177, %175 : vector<8x128xf32>
    %179 = arith.mulf %170, %148 : vector<8x128xf32>
    %180 = arith.addf %178, %179 : vector<8x128xf32>
    %181 = vector.extract_strided_slice %180 {offsets = [0, 0], sizes = [8, 32], strides = [1, 1]} : vector<8x128xf32> to vector<8x32xf32>
    %c40 = arith.constant 40 : index
    %c0_50 = arith.constant 0 : index
    %182 = vector.load %arg10[%c40, %c0_50] : memref<64x384xf32, #tpu.memory_space<vmem>>, vector<8x384xf32>
    %183 = vector.extract_strided_slice %180 {offsets = [0, 0], sizes = [8, 32], strides = [1, 1]} : vector<8x128xf32> to vector<8x32xf32>
    %cst_51 = arith.constant dense<0.000000e+00> : vector<8x384xf32>
    %184 = tpu.matmul %183, %10, %cst_51 {dimension_numbers = #tpu.dot_dimension_numbers<[1], [0], [0], [1], [0, 0, 1, 1], [], []>} : vector<8x32xf32>, vector<32x384xf32>, vector<8x384xf32> -> vector<8x384xf32>
    %185 = vector.broadcast %14 : vector<1x384xf32> to vector<8x384xf32>
    %186 = arith.addf %184, %185 : vector<8x384xf32>
    %187 = vector.extract_strided_slice %182 {offsets = [0, 0], sizes = [8, 128], strides = [1, 1]} : vector<8x384xf32> to vector<8x128xf32>
    %188 = vector.extract_strided_slice %186 {offsets = [0, 0], sizes = [8, 128], strides = [1, 1]} : vector<8x384xf32> to vector<8x128xf32>
    %189 = arith.addf %187, %188 : vector<8x128xf32>
    %190 = arith.negf %189 : vector<8x128xf32>
    %191 = math.exp %190 : vector<8x128xf32>
    %cst_52 = arith.constant 1.000000e+00 : f32
    %192 = vector.broadcast %cst_52 : f32 to vector<8x128xf32>
    %193 = arith.addf %192, %191 : vector<8x128xf32>
    %194 = arith.divf %192, %193 : vector<8x128xf32>
    %195 = vector.extract_strided_slice %182 {offsets = [0, 128], sizes = [8, 128], strides = [1, 1]} : vector<8x384xf32> to vector<8x128xf32>
    %196 = vector.extract_strided_slice %186 {offsets = [0, 128], sizes = [8, 128], strides = [1, 1]} : vector<8x384xf32> to vector<8x128xf32>
    %197 = arith.addf %195, %196 : vector<8x128xf32>
    %198 = arith.negf %197 : vector<8x128xf32>
    %199 = math.exp %198 : vector<8x128xf32>
    %cst_53 = arith.constant 1.000000e+00 : f32
    %200 = vector.broadcast %cst_53 : f32 to vector<8x128xf32>
    %201 = arith.addf %200, %199 : vector<8x128xf32>
    %202 = arith.divf %200, %201 : vector<8x128xf32>
    %203 = vector.extract_strided_slice %182 {offsets = [0, 256], sizes = [8, 128], strides = [1, 1]} : vector<8x384xf32> to vector<8x128xf32>
    %204 = vector.extract_strided_slice %186 {offsets = [0, 256], sizes = [8, 128], strides = [1, 1]} : vector<8x384xf32> to vector<8x128xf32>
    %205 = arith.mulf %194, %204 : vector<8x128xf32>
    %206 = arith.addf %203, %205 : vector<8x128xf32>
    %207 = math.tanh %206 : vector<8x128xf32>
    %cst_54 = arith.constant 1.000000e+00 : f32
    %208 = vector.broadcast %cst_54 : f32 to vector<8x128xf32>
    %209 = arith.subf %208, %202 : vector<8x128xf32>
    %210 = arith.mulf %209, %207 : vector<8x128xf32>
    %211 = arith.mulf %202, %180 : vector<8x128xf32>
    %212 = arith.addf %210, %211 : vector<8x128xf32>
    %213 = vector.extract_strided_slice %212 {offsets = [0, 0], sizes = [8, 32], strides = [1, 1]} : vector<8x128xf32> to vector<8x32xf32>
    %c48 = arith.constant 48 : index
    %c0_55 = arith.constant 0 : index
    %214 = vector.load %arg10[%c48, %c0_55] : memref<64x384xf32, #tpu.memory_space<vmem>>, vector<8x384xf32>
    %215 = vector.extract_strided_slice %212 {offsets = [0, 0], sizes = [8, 32], strides = [1, 1]} : vector<8x128xf32> to vector<8x32xf32>
    %cst_56 = arith.constant dense<0.000000e+00> : vector<8x384xf32>
    %216 = tpu.matmul %215, %10, %cst_56 {dimension_numbers = #tpu.dot_dimension_numbers<[1], [0], [0], [1], [0, 0, 1, 1], [], []>} : vector<8x32xf32>, vector<32x384xf32>, vector<8x384xf32> -> vector<8x384xf32>
    %217 = vector.broadcast %14 : vector<1x384xf32> to vector<8x384xf32>
    %218 = arith.addf %216, %217 : vector<8x384xf32>
    %219 = vector.extract_strided_slice %214 {offsets = [0, 0], sizes = [8, 128], strides = [1, 1]} : vector<8x384xf32> to vector<8x128xf32>
    %220 = vector.extract_strided_slice %218 {offsets = [0, 0], sizes = [8, 128], strides = [1, 1]} : vector<8x384xf32> to vector<8x128xf32>
    %221 = arith.addf %219, %220 : vector<8x128xf32>
    %222 = arith.negf %221 : vector<8x128xf32>
    %223 = math.exp %222 : vector<8x128xf32>
    %cst_57 = arith.constant 1.000000e+00 : f32
    %224 = vector.broadcast %cst_57 : f32 to vector<8x128xf32>
    %225 = arith.addf %224, %223 : vector<8x128xf32>
    %226 = arith.divf %224, %225 : vector<8x128xf32>
    %227 = vector.extract_strided_slice %214 {offsets = [0, 128], sizes = [8, 128], strides = [1, 1]} : vector<8x384xf32> to vector<8x128xf32>
    %228 = vector.extract_strided_slice %218 {offsets = [0, 128], sizes = [8, 128], strides = [1, 1]} : vector<8x384xf32> to vector<8x128xf32>
    %229 = arith.addf %227, %228 : vector<8x128xf32>
    %230 = arith.negf %229 : vector<8x128xf32>
    %231 = math.exp %230 : vector<8x128xf32>
    %cst_58 = arith.constant 1.000000e+00 : f32
    %232 = vector.broadcast %cst_58 : f32 to vector<8x128xf32>
    %233 = arith.addf %232, %231 : vector<8x128xf32>
    %234 = arith.divf %232, %233 : vector<8x128xf32>
    %235 = vector.extract_strided_slice %214 {offsets = [0, 256], sizes = [8, 128], strides = [1, 1]} : vector<8x384xf32> to vector<8x128xf32>
    %236 = vector.extract_strided_slice %218 {offsets = [0, 256], sizes = [8, 128], strides = [1, 1]} : vector<8x384xf32> to vector<8x128xf32>
    %237 = arith.mulf %226, %236 : vector<8x128xf32>
    %238 = arith.addf %235, %237 : vector<8x128xf32>
    %239 = math.tanh %238 : vector<8x128xf32>
    %cst_59 = arith.constant 1.000000e+00 : f32
    %240 = vector.broadcast %cst_59 : f32 to vector<8x128xf32>
    %241 = arith.subf %240, %234 : vector<8x128xf32>
    %242 = arith.mulf %241, %239 : vector<8x128xf32>
    %243 = arith.mulf %234, %212 : vector<8x128xf32>
    %244 = arith.addf %242, %243 : vector<8x128xf32>
    %245 = vector.extract_strided_slice %244 {offsets = [0, 0], sizes = [8, 32], strides = [1, 1]} : vector<8x128xf32> to vector<8x32xf32>
    %c56 = arith.constant 56 : index
    %c0_60 = arith.constant 0 : index
    %246 = vector.load %arg10[%c56, %c0_60] : memref<64x384xf32, #tpu.memory_space<vmem>>, vector<8x384xf32>
    %247 = vector.extract_strided_slice %244 {offsets = [0, 0], sizes = [8, 32], strides = [1, 1]} : vector<8x128xf32> to vector<8x32xf32>
    %cst_61 = arith.constant dense<0.000000e+00> : vector<8x384xf32>
    %248 = tpu.matmul %247, %10, %cst_61 {dimension_numbers = #tpu.dot_dimension_numbers<[1], [0], [0], [1], [0, 0, 1, 1], [], []>} : vector<8x32xf32>, vector<32x384xf32>, vector<8x384xf32> -> vector<8x384xf32>
    %249 = vector.broadcast %14 : vector<1x384xf32> to vector<8x384xf32>
    %250 = arith.addf %248, %249 : vector<8x384xf32>
    %251 = vector.extract_strided_slice %246 {offsets = [0, 0], sizes = [8, 128], strides = [1, 1]} : vector<8x384xf32> to vector<8x128xf32>
    %252 = vector.extract_strided_slice %250 {offsets = [0, 0], sizes = [8, 128], strides = [1, 1]} : vector<8x384xf32> to vector<8x128xf32>
    %253 = arith.addf %251, %252 : vector<8x128xf32>
    %254 = arith.negf %253 : vector<8x128xf32>
    %255 = math.exp %254 : vector<8x128xf32>
    %cst_62 = arith.constant 1.000000e+00 : f32
    %256 = vector.broadcast %cst_62 : f32 to vector<8x128xf32>
    %257 = arith.addf %256, %255 : vector<8x128xf32>
    %258 = arith.divf %256, %257 : vector<8x128xf32>
    %259 = vector.extract_strided_slice %246 {offsets = [0, 128], sizes = [8, 128], strides = [1, 1]} : vector<8x384xf32> to vector<8x128xf32>
    %260 = vector.extract_strided_slice %250 {offsets = [0, 128], sizes = [8, 128], strides = [1, 1]} : vector<8x384xf32> to vector<8x128xf32>
    %261 = arith.addf %259, %260 : vector<8x128xf32>
    %262 = arith.negf %261 : vector<8x128xf32>
    %263 = math.exp %262 : vector<8x128xf32>
    %cst_63 = arith.constant 1.000000e+00 : f32
    %264 = vector.broadcast %cst_63 : f32 to vector<8x128xf32>
    %265 = arith.addf %264, %263 : vector<8x128xf32>
    %266 = arith.divf %264, %265 : vector<8x128xf32>
    %267 = vector.extract_strided_slice %246 {offsets = [0, 256], sizes = [8, 128], strides = [1, 1]} : vector<8x384xf32> to vector<8x128xf32>
    %268 = vector.extract_strided_slice %250 {offsets = [0, 256], sizes = [8, 128], strides = [1, 1]} : vector<8x384xf32> to vector<8x128xf32>
    %269 = arith.mulf %258, %268 : vector<8x128xf32>
    %270 = arith.addf %267, %269 : vector<8x128xf32>
    %271 = math.tanh %270 : vector<8x128xf32>
    %cst_64 = arith.constant 1.000000e+00 : f32
    %272 = vector.broadcast %cst_64 : f32 to vector<8x128xf32>
    %273 = arith.subf %272, %266 : vector<8x128xf32>
    %274 = arith.mulf %273, %271 : vector<8x128xf32>
    %275 = arith.mulf %266, %244 : vector<8x128xf32>
    %276 = arith.addf %274, %275 : vector<8x128xf32>
    %277 = vector.extract_strided_slice %276 {offsets = [0, 0], sizes = [8, 32], strides = [1, 1]} : vector<8x128xf32> to vector<8x32xf32>
    %c0_65 = arith.constant 0 : index
    %c1 = arith.constant 1 : index
    %c0_66 = arith.constant 0 : index
    %c0_67 = arith.constant 0 : index
    %278 = vector.load %arg4[%c0_65, %c1, %c0_66, %c0_67] : memref<2x2x32x384xf32, #tpu.memory_space<vmem>>, vector<1x1x32x384xf32>
    %279 = vector.shape_cast %278 : vector<1x1x32x384xf32> to vector<32x384xf32>
    %c0_68 = arith.constant 0 : index
    %c1_69 = arith.constant 1 : index
    %c0_70 = arith.constant 0 : index
    %c0_71 = arith.constant 0 : index
    %280 = vector.load %arg5[%c0_68, %c1_69, %c0_70, %c0_71] : memref<2x2x1x384xf32, #tpu.memory_space<vmem>>, vector<1x1x1x384xf32>
    %281 = vector.shape_cast %280 : vector<1x1x1x384xf32> to vector<1x384xf32>
    %c0_72 = arith.constant 0 : index
    %c1_73 = arith.constant 1 : index
    %c0_74 = arith.constant 0 : index
    %c0_75 = arith.constant 0 : index
    %282 = vector.load %arg6[%c0_72, %c1_73, %c0_74, %c0_75] : memref<2x2x1x384xf32, #tpu.memory_space<vmem>>, vector<1x1x1x384xf32>
    %283 = vector.shape_cast %282 : vector<1x1x1x384xf32> to vector<1x384xf32>
    %c1_76 = arith.constant 1 : index
    %c0_77 = arith.constant 0 : index
    %c0_78 = arith.constant 0 : index
    %284 = vector.load %arg2[%c1_76, %c0_77, %c0_78] : memref<2x16x384xf32, #tpu.memory_space<vmem>>, vector<1x16x384xf32>
    %285 = vector.shape_cast %284 : vector<1x16x384xf32> to vector<16x384xf32>
    %cst_79 = arith.constant dense<0.000000e+00> : vector<64x384xf32>
    %286 = tpu.matmul %8, %285, %cst_79 {dimension_numbers = #tpu.dot_dimension_numbers<[1], [0], [0], [1], [0, 0, 1, 1], [], []>} : vector<64x16xf32>, vector<16x384xf32>, vector<64x384xf32> -> vector<64x384xf32>
    %287 = vector.broadcast %281 : vector<1x384xf32> to vector<64x384xf32>
    %288 = arith.addf %286, %287 : vector<64x384xf32>
    %c0_80 = arith.constant 0 : index
    %c0_81 = arith.constant 0 : index
    %289 = vector.load %arg10[%c0_80, %c0_81] : memref<64x384xf32, #tpu.memory_space<vmem>>, vector<64x384xf32>
    tpu.vector_store %arg10[%c0_80, %c0_81], %288 {strides = array<i32>} : memref<64x384xf32, #tpu.memory_space<vmem>>, vector<64x384xf32>,
    %cst_82 = arith.constant 0.000000e+00 : f32
    %290 = vector.broadcast %cst_82 : f32 to vector<8x128xf32>
    %c56_83 = arith.constant 56 : index
    %c0_84 = arith.constant 0 : index
    %291 = vector.load %arg10[%c56_83, %c0_84] : memref<64x384xf32, #tpu.memory_space<vmem>>, vector<8x384xf32>
    %292 = vector.extract_strided_slice %290 {offsets = [0, 0], sizes = [8, 32], strides = [1, 1]} : vector<8x128xf32> to vector<8x32xf32>
    %cst_85 = arith.constant dense<0.000000e+00> : vector<8x384xf32>
    %293 = tpu.matmul %292, %279, %cst_85 {dimension_numbers = #tpu.dot_dimension_numbers<[1], [0], [0], [1], [0, 0, 1, 1], [], []>} : vector<8x32xf32>, vector<32x384xf32>, vector<8x384xf32> -> vector<8x384xf32>
    %294 = vector.broadcast %283 : vector<1x384xf32> to vector<8x384xf32>
    %295 = arith.addf %293, %294 : vector<8x384xf32>
    %296 = vector.extract_strided_slice %291 {offsets = [0, 0], sizes = [8, 128], strides = [1, 1]} : vector<8x384xf32> to vector<8x128xf32>
    %297 = vector.extract_strided_slice %295 {offsets = [0, 0], sizes = [8, 128], strides = [1, 1]} : vector<8x384xf32> to vector<8x128xf32>
    %298 = arith.addf %296, %297 : vector<8x128xf32>
    %299 = arith.negf %298 : vector<8x128xf32>
    %300 = math.exp %299 : vector<8x128xf32>
    %cst_86 = arith.constant 1.000000e+00 : f32
    %301 = vector.broadcast %cst_86 : f32 to vector<8x128xf32>
    %302 = arith.addf %301, %300 : vector<8x128xf32>
    %303 = arith.divf %301, %302 : vector<8x128xf32>
    %304 = vector.extract_strided_slice %291 {offsets = [0, 128], sizes = [8, 128], strides = [1, 1]} : vector<8x384xf32> to vector<8x128xf32>
    %305 = vector.extract_strided_slice %295 {offsets = [0, 128], sizes = [8, 128], strides = [1, 1]} : vector<8x384xf32> to vector<8x128xf32>
    %306 = arith.addf %304, %305 : vector<8x128xf32>
    %307 = arith.negf %306 : vector<8x128xf32>
    %308 = math.exp %307 : vector<8x128xf32>
    %cst_87 = arith.constant 1.000000e+00 : f32
    %309 = vector.broadcast %cst_87 : f32 to vector<8x128xf32>
    %310 = arith.addf %309, %308 : vector<8x128xf32>
    %311 = arith.divf %309, %310 : vector<8x128xf32>
    %312 = vector.extract_strided_slice %291 {offsets = [0, 256], sizes = [8, 128], strides = [1, 1]} : vector<8x384xf32> to vector<8x128xf32>
    %313 = vector.extract_strided_slice %295 {offsets = [0, 256], sizes = [8, 128], strides = [1, 1]} : vector<8x384xf32> to vector<8x128xf32>
    %314 = arith.mulf %303, %313 : vector<8x128xf32>
    %315 = arith.addf %312, %314 : vector<8x128xf32>
    %316 = math.tanh %315 : vector<8x128xf32>
    %cst_88 = arith.constant 1.000000e+00 : f32
    %317 = vector.broadcast %cst_88 : f32 to vector<8x128xf32>
    %318 = arith.subf %317, %311 : vector<8x128xf32>
    %319 = arith.mulf %318, %316 : vector<8x128xf32>
    %320 = arith.mulf %311, %290 : vector<8x128xf32>
    %321 = arith.addf %319, %320 : vector<8x128xf32>
    %322 = vector.extract_strided_slice %321 {offsets = [0, 0], sizes = [8, 32], strides = [1, 1]} : vector<8x128xf32> to vector<8x32xf32>
    %c48_89 = arith.constant 48 : index
    %c0_90 = arith.constant 0 : index
    %323 = vector.load %arg10[%c48_89, %c0_90] : memref<64x384xf32, #tpu.memory_space<vmem>>, vector<8x384xf32>
    %324 = vector.extract_strided_slice %321 {offsets = [0, 0], sizes = [8, 32], strides = [1, 1]} : vector<8x128xf32> to vector<8x32xf32>
    %cst_91 = arith.constant dense<0.000000e+00> : vector<8x384xf32>
    %325 = tpu.matmul %324, %279, %cst_91 {dimension_numbers = #tpu.dot_dimension_numbers<[1], [0], [0], [1], [0, 0, 1, 1], [], []>} : vector<8x32xf32>, vector<32x384xf32>, vector<8x384xf32> -> vector<8x384xf32>
    %326 = vector.broadcast %283 : vector<1x384xf32> to vector<8x384xf32>
    %327 = arith.addf %325, %326 : vector<8x384xf32>
    %328 = vector.extract_strided_slice %323 {offsets = [0, 0], sizes = [8, 128], strides = [1, 1]} : vector<8x384xf32> to vector<8x128xf32>
    %329 = vector.extract_strided_slice %327 {offsets = [0, 0], sizes = [8, 128], strides = [1, 1]} : vector<8x384xf32> to vector<8x128xf32>
    %330 = arith.addf %328, %329 : vector<8x128xf32>
    %331 = arith.negf %330 : vector<8x128xf32>
    %332 = math.exp %331 : vector<8x128xf32>
    %cst_92 = arith.constant 1.000000e+00 : f32
    %333 = vector.broadcast %cst_92 : f32 to vector<8x128xf32>
    %334 = arith.addf %333, %332 : vector<8x128xf32>
    %335 = arith.divf %333, %334 : vector<8x128xf32>
    %336 = vector.extract_strided_slice %323 {offsets = [0, 128], sizes = [8, 128], strides = [1, 1]} : vector<8x384xf32> to vector<8x128xf32>
    %337 = vector.extract_strided_slice %327 {offsets = [0, 128], sizes = [8, 128], strides = [1, 1]} : vector<8x384xf32> to vector<8x128xf32>
    %338 = arith.addf %336, %337 : vector<8x128xf32>
    %339 = arith.negf %338 : vector<8x128xf32>
    %340 = math.exp %339 : vector<8x128xf32>
    %cst_93 = arith.constant 1.000000e+00 : f32
    %341 = vector.broadcast %cst_93 : f32 to vector<8x128xf32>
    %342 = arith.addf %341, %340 : vector<8x128xf32>
    %343 = arith.divf %341, %342 : vector<8x128xf32>
    %344 = vector.extract_strided_slice %323 {offsets = [0, 256], sizes = [8, 128], strides = [1, 1]} : vector<8x384xf32> to vector<8x128xf32>
    %345 = vector.extract_strided_slice %327 {offsets = [0, 256], sizes = [8, 128], strides = [1, 1]} : vector<8x384xf32> to vector<8x128xf32>
    %346 = arith.mulf %335, %345 : vector<8x128xf32>
    %347 = arith.addf %344, %346 : vector<8x128xf32>
    %348 = math.tanh %347 : vector<8x128xf32>
    %cst_94 = arith.constant 1.000000e+00 : f32
    %349 = vector.broadcast %cst_94 : f32 to vector<8x128xf32>
    %350 = arith.subf %349, %343 : vector<8x128xf32>
    %351 = arith.mulf %350, %348 : vector<8x128xf32>
    %352 = arith.mulf %343, %321 : vector<8x128xf32>
    %353 = arith.addf %351, %352 : vector<8x128xf32>
    %354 = vector.extract_strided_slice %353 {offsets = [0, 0], sizes = [8, 32], strides = [1, 1]} : vector<8x128xf32> to vector<8x32xf32>
    %c40_95 = arith.constant 40 : index
    %c0_96 = arith.constant 0 : index
    %355 = vector.load %arg10[%c40_95, %c0_96] : memref<64x384xf32, #tpu.memory_space<vmem>>, vector<8x384xf32>
    %356 = vector.extract_strided_slice %353 {offsets = [0, 0], sizes = [8, 32], strides = [1, 1]} : vector<8x128xf32> to vector<8x32xf32>
    %cst_97 = arith.constant dense<0.000000e+00> : vector<8x384xf32>
    %357 = tpu.matmul %356, %279, %cst_97 {dimension_numbers = #tpu.dot_dimension_numbers<[1], [0], [0], [1], [0, 0, 1, 1], [], []>} : vector<8x32xf32>, vector<32x384xf32>, vector<8x384xf32> -> vector<8x384xf32>
    %358 = vector.broadcast %283 : vector<1x384xf32> to vector<8x384xf32>
    %359 = arith.addf %357, %358 : vector<8x384xf32>
    %360 = vector.extract_strided_slice %355 {offsets = [0, 0], sizes = [8, 128], strides = [1, 1]} : vector<8x384xf32> to vector<8x128xf32>
    %361 = vector.extract_strided_slice %359 {offsets = [0, 0], sizes = [8, 128], strides = [1, 1]} : vector<8x384xf32> to vector<8x128xf32>
    %362 = arith.addf %360, %361 : vector<8x128xf32>
    %363 = arith.negf %362 : vector<8x128xf32>
    %364 = math.exp %363 : vector<8x128xf32>
    %cst_98 = arith.constant 1.000000e+00 : f32
    %365 = vector.broadcast %cst_98 : f32 to vector<8x128xf32>
    %366 = arith.addf %365, %364 : vector<8x128xf32>
    %367 = arith.divf %365, %366 : vector<8x128xf32>
    %368 = vector.extract_strided_slice %355 {offsets = [0, 128], sizes = [8, 128], strides = [1, 1]} : vector<8x384xf32> to vector<8x128xf32>
    %369 = vector.extract_strided_slice %359 {offsets = [0, 128], sizes = [8, 128], strides = [1, 1]} : vector<8x384xf32> to vector<8x128xf32>
    %370 = arith.addf %368, %369 : vector<8x128xf32>
    %371 = arith.negf %370 : vector<8x128xf32>
    %372 = math.exp %371 : vector<8x128xf32>
    %cst_99 = arith.constant 1.000000e+00 : f32
    %373 = vector.broadcast %cst_99 : f32 to vector<8x128xf32>
    %374 = arith.addf %373, %372 : vector<8x128xf32>
    %375 = arith.divf %373, %374 : vector<8x128xf32>
    %376 = vector.extract_strided_slice %355 {offsets = [0, 256], sizes = [8, 128], strides = [1, 1]} : vector<8x384xf32> to vector<8x128xf32>
    %377 = vector.extract_strided_slice %359 {offsets = [0, 256], sizes = [8, 128], strides = [1, 1]} : vector<8x384xf32> to vector<8x128xf32>
    %378 = arith.mulf %367, %377 : vector<8x128xf32>
    %379 = arith.addf %376, %378 : vector<8x128xf32>
    %380 = math.tanh %379 : vector<8x128xf32>
    %cst_100 = arith.constant 1.000000e+00 : f32
    %381 = vector.broadcast %cst_100 : f32 to vector<8x128xf32>
    %382 = arith.subf %381, %375 : vector<8x128xf32>
    %383 = arith.mulf %382, %380 : vector<8x128xf32>
    %384 = arith.mulf %375, %353 : vector<8x128xf32>
    %385 = arith.addf %383, %384 : vector<8x128xf32>
    %386 = vector.extract_strided_slice %385 {offsets = [0, 0], sizes = [8, 32], strides = [1, 1]} : vector<8x128xf32> to vector<8x32xf32>
    %c32_101 = arith.constant 32 : index
    %c0_102 = arith.constant 0 : index
    %387 = vector.load %arg10[%c32_101, %c0_102] : memref<64x384xf32, #tpu.memory_space<vmem>>, vector<8x384xf32>
    %388 = vector.extract_strided_slice %385 {offsets = [0, 0], sizes = [8, 32], strides = [1, 1]} : vector<8x128xf32> to vector<8x32xf32>
    %cst_103 = arith.constant dense<0.000000e+00> : vector<8x384xf32>
    %389 = tpu.matmul %388, %279, %cst_103 {dimension_numbers = #tpu.dot_dimension_numbers<[1], [0], [0], [1], [0, 0, 1, 1], [], []>} : vector<8x32xf32>, vector<32x384xf32>, vector<8x384xf32> -> vector<8x384xf32>
    %390 = vector.broadcast %283 : vector<1x384xf32> to vector<8x384xf32>
    %391 = arith.addf %389, %390 : vector<8x384xf32>
    %392 = vector.extract_strided_slice %387 {offsets = [0, 0], sizes = [8, 128], strides = [1, 1]} : vector<8x384xf32> to vector<8x128xf32>
    %393 = vector.extract_strided_slice %391 {offsets = [0, 0], sizes = [8, 128], strides = [1, 1]} : vector<8x384xf32> to vector<8x128xf32>
    %394 = arith.addf %392, %393 : vector<8x128xf32>
    %395 = arith.negf %394 : vector<8x128xf32>
    %396 = math.exp %395 : vector<8x128xf32>
    %cst_104 = arith.constant 1.000000e+00 : f32
    %397 = vector.broadcast %cst_104 : f32 to vector<8x128xf32>
    %398 = arith.addf %397, %396 : vector<8x128xf32>
    %399 = arith.divf %397, %398 : vector<8x128xf32>
    %400 = vector.extract_strided_slice %387 {offsets = [0, 128], sizes = [8, 128], strides = [1, 1]} : vector<8x384xf32> to vector<8x128xf32>
    %401 = vector.extract_strided_slice %391 {offsets = [0, 128], sizes = [8, 128], strides = [1, 1]} : vector<8x384xf32> to vector<8x128xf32>
    %402 = arith.addf %400, %401 : vector<8x128xf32>
    %403 = arith.negf %402 : vector<8x128xf32>
    %404 = math.exp %403 : vector<8x128xf32>
    %cst_105 = arith.constant 1.000000e+00 : f32
    %405 = vector.broadcast %cst_105 : f32 to vector<8x128xf32>
    %406 = arith.addf %405, %404 : vector<8x128xf32>
    %407 = arith.divf %405, %406 : vector<8x128xf32>
    %408 = vector.extract_strided_slice %387 {offsets = [0, 256], sizes = [8, 128], strides = [1, 1]} : vector<8x384xf32> to vector<8x128xf32>
    %409 = vector.extract_strided_slice %391 {offsets = [0, 256], sizes = [8, 128], strides = [1, 1]} : vector<8x384xf32> to vector<8x128xf32>
    %410 = arith.mulf %399, %409 : vector<8x128xf32>
    %411 = arith.addf %408, %410 : vector<8x128xf32>
    %412 = math.tanh %411 : vector<8x128xf32>
    %cst_106 = arith.constant 1.000000e+00 : f32
    %413 = vector.broadcast %cst_106 : f32 to vector<8x128xf32>
    %414 = arith.subf %413, %407 : vector<8x128xf32>
    %415 = arith.mulf %414, %412 : vector<8x128xf32>
    %416 = arith.mulf %407, %385 : vector<8x128xf32>
    %417 = arith.addf %415, %416 : vector<8x128xf32>
    %418 = vector.extract_strided_slice %417 {offsets = [0, 0], sizes = [8, 32], strides = [1, 1]} : vector<8x128xf32> to vector<8x32xf32>
    %c24_107 = arith.constant 24 : index
    %c0_108 = arith.constant 0 : index
    %419 = vector.load %arg10[%c24_107, %c0_108] : memref<64x384xf32, #tpu.memory_space<vmem>>, vector<8x384xf32>
    %420 = vector.extract_strided_slice %417 {offsets = [0, 0], sizes = [8, 32], strides = [1, 1]} : vector<8x128xf32> to vector<8x32xf32>
    %cst_109 = arith.constant dense<0.000000e+00> : vector<8x384xf32>
    %421 = tpu.matmul %420, %279, %cst_109 {dimension_numbers = #tpu.dot_dimension_numbers<[1], [0], [0], [1], [0, 0, 1, 1], [], []>} : vector<8x32xf32>, vector<32x384xf32>, vector<8x384xf32> -> vector<8x384xf32>
    %422 = vector.broadcast %283 : vector<1x384xf32> to vector<8x384xf32>
    %423 = arith.addf %421, %422 : vector<8x384xf32>
    %424 = vector.extract_strided_slice %419 {offsets = [0, 0], sizes = [8, 128], strides = [1, 1]} : vector<8x384xf32> to vector<8x128xf32>
    %425 = vector.extract_strided_slice %423 {offsets = [0, 0], sizes = [8, 128], strides = [1, 1]} : vector<8x384xf32> to vector<8x128xf32>
    %426 = arith.addf %424, %425 : vector<8x128xf32>
    %427 = arith.negf %426 : vector<8x128xf32>
    %428 = math.exp %427 : vector<8x128xf32>
    %cst_110 = arith.constant 1.000000e+00 : f32
    %429 = vector.broadcast %cst_110 : f32 to vector<8x128xf32>
    %430 = arith.addf %429, %428 : vector<8x128xf32>
    %431 = arith.divf %429, %430 : vector<8x128xf32>
    %432 = vector.extract_strided_slice %419 {offsets = [0, 128], sizes = [8, 128], strides = [1, 1]} : vector<8x384xf32> to vector<8x128xf32>
    %433 = vector.extract_strided_slice %423 {offsets = [0, 128], sizes = [8, 128], strides = [1, 1]} : vector<8x384xf32> to vector<8x128xf32>
    %434 = arith.addf %432, %433 : vector<8x128xf32>
    %435 = arith.negf %434 : vector<8x128xf32>
    %436 = math.exp %435 : vector<8x128xf32>
    %cst_111 = arith.constant 1.000000e+00 : f32
    %437 = vector.broadcast %cst_111 : f32 to vector<8x128xf32>
    %438 = arith.addf %437, %436 : vector<8x128xf32>
    %439 = arith.divf %437, %438 : vector<8x128xf32>
    %440 = vector.extract_strided_slice %419 {offsets = [0, 256], sizes = [8, 128], strides = [1, 1]} : vector<8x384xf32> to vector<8x128xf32>
    %441 = vector.extract_strided_slice %423 {offsets = [0, 256], sizes = [8, 128], strides = [1, 1]} : vector<8x384xf32> to vector<8x128xf32>
    %442 = arith.mulf %431, %441 : vector<8x128xf32>
    %443 = arith.addf %440, %442 : vector<8x128xf32>
    %444 = math.tanh %443 : vector<8x128xf32>
    %cst_112 = arith.constant 1.000000e+00 : f32
    %445 = vector.broadcast %cst_112 : f32 to vector<8x128xf32>
    %446 = arith.subf %445, %439 : vector<8x128xf32>
    %447 = arith.mulf %446, %444 : vector<8x128xf32>
    %448 = arith.mulf %439, %417 : vector<8x128xf32>
    %449 = arith.addf %447, %448 : vector<8x128xf32>
    %450 = vector.extract_strided_slice %449 {offsets = [0, 0], sizes = [8, 32], strides = [1, 1]} : vector<8x128xf32> to vector<8x32xf32>
    %c16_113 = arith.constant 16 : index
    %c0_114 = arith.constant 0 : index
    %451 = vector.load %arg10[%c16_113, %c0_114] : memref<64x384xf32, #tpu.memory_space<vmem>>, vector<8x384xf32>
    %452 = vector.extract_strided_slice %449 {offsets = [0, 0], sizes = [8, 32], strides = [1, 1]} : vector<8x128xf32> to vector<8x32xf32>
    %cst_115 = arith.constant dense<0.000000e+00> : vector<8x384xf32>
    %453 = tpu.matmul %452, %279, %cst_115 {dimension_numbers = #tpu.dot_dimension_numbers<[1], [0], [0], [1], [0, 0, 1, 1], [], []>} : vector<8x32xf32>, vector<32x384xf32>, vector<8x384xf32> -> vector<8x384xf32>
    %454 = vector.broadcast %283 : vector<1x384xf32> to vector<8x384xf32>
    %455 = arith.addf %453, %454 : vector<8x384xf32>
    %456 = vector.extract_strided_slice %451 {offsets = [0, 0], sizes = [8, 128], strides = [1, 1]} : vector<8x384xf32> to vector<8x128xf32>
    %457 = vector.extract_strided_slice %455 {offsets = [0, 0], sizes = [8, 128], strides = [1, 1]} : vector<8x384xf32> to vector<8x128xf32>
    %458 = arith.addf %456, %457 : vector<8x128xf32>
    %459 = arith.negf %458 : vector<8x128xf32>
    %460 = math.exp %459 : vector<8x128xf32>
    %cst_116 = arith.constant 1.000000e+00 : f32
    %461 = vector.broadcast %cst_116 : f32 to vector<8x128xf32>
    %462 = arith.addf %461, %460 : vector<8x128xf32>
    %463 = arith.divf %461, %462 : vector<8x128xf32>
    %464 = vector.extract_strided_slice %451 {offsets = [0, 128], sizes = [8, 128], strides = [1, 1]} : vector<8x384xf32> to vector<8x128xf32>
    %465 = vector.extract_strided_slice %455 {offsets = [0, 128], sizes = [8, 128], strides = [1, 1]} : vector<8x384xf32> to vector<8x128xf32>
    %466 = arith.addf %464, %465 : vector<8x128xf32>
    %467 = arith.negf %466 : vector<8x128xf32>
    %468 = math.exp %467 : vector<8x128xf32>
    %cst_117 = arith.constant 1.000000e+00 : f32
    %469 = vector.broadcast %cst_117 : f32 to vector<8x128xf32>
    %470 = arith.addf %469, %468 : vector<8x128xf32>
    %471 = arith.divf %469, %470 : vector<8x128xf32>
    %472 = vector.extract_strided_slice %451 {offsets = [0, 256], sizes = [8, 128], strides = [1, 1]} : vector<8x384xf32> to vector<8x128xf32>
    %473 = vector.extract_strided_slice %455 {offsets = [0, 256], sizes = [8, 128], strides = [1, 1]} : vector<8x384xf32> to vector<8x128xf32>
    %474 = arith.mulf %463, %473 : vector<8x128xf32>
    %475 = arith.addf %472, %474 : vector<8x128xf32>
    %476 = math.tanh %475 : vector<8x128xf32>
    %cst_118 = arith.constant 1.000000e+00 : f32
    %477 = vector.broadcast %cst_118 : f32 to vector<8x128xf32>
    %478 = arith.subf %477, %471 : vector<8x128xf32>
    %479 = arith.mulf %478, %476 : vector<8x128xf32>
    %480 = arith.mulf %471, %449 : vector<8x128xf32>
    %481 = arith.addf %479, %480 : vector<8x128xf32>
    %482 = vector.extract_strided_slice %481 {offsets = [0, 0], sizes = [8, 32], strides = [1, 1]} : vector<8x128xf32> to vector<8x32xf32>
    %c8_119 = arith.constant 8 : index
    %c0_120 = arith.constant 0 : index
    %483 = vector.load %arg10[%c8_119, %c0_120] : memref<64x384xf32, #tpu.memory_space<vmem>>, vector<8x384xf32>
    %484 = vector.extract_strided_slice %481 {offsets = [0, 0], sizes = [8, 32], strides = [1, 1]} : vector<8x128xf32> to vector<8x32xf32>
    %cst_121 = arith.constant dense<0.000000e+00> : vector<8x384xf32>
    %485 = tpu.matmul %484, %279, %cst_121 {dimension_numbers = #tpu.dot_dimension_numbers<[1], [0], [0], [1], [0, 0, 1, 1], [], []>} : vector<8x32xf32>, vector<32x384xf32>, vector<8x384xf32> -> vector<8x384xf32>
    %486 = vector.broadcast %283 : vector<1x384xf32> to vector<8x384xf32>
    %487 = arith.addf %485, %486 : vector<8x384xf32>
    %488 = vector.extract_strided_slice %483 {offsets = [0, 0], sizes = [8, 128], strides = [1, 1]} : vector<8x384xf32> to vector<8x128xf32>
    %489 = vector.extract_strided_slice %487 {offsets = [0, 0], sizes = [8, 128], strides = [1, 1]} : vector<8x384xf32> to vector<8x128xf32>
    %490 = arith.addf %488, %489 : vector<8x128xf32>
    %491 = arith.negf %490 : vector<8x128xf32>
    %492 = math.exp %491 : vector<8x128xf32>
    %cst_122 = arith.constant 1.000000e+00 : f32
    %493 = vector.broadcast %cst_122 : f32 to vector<8x128xf32>
    %494 = arith.addf %493, %492 : vector<8x128xf32>
    %495 = arith.divf %493, %494 : vector<8x128xf32>
    %496 = vector.extract_strided_slice %483 {offsets = [0, 128], sizes = [8, 128], strides = [1, 1]} : vector<8x384xf32> to vector<8x128xf32>
    %497 = vector.extract_strided_slice %487 {offsets = [0, 128], sizes = [8, 128], strides = [1, 1]} : vector<8x384xf32> to vector<8x128xf32>
    %498 = arith.addf %496, %497 : vector<8x128xf32>
    %499 = arith.negf %498 : vector<8x128xf32>
    %500 = math.exp %499 : vector<8x128xf32>
    %cst_123 = arith.constant 1.000000e+00 : f32
    %501 = vector.broadcast %cst_123 : f32 to vector<8x128xf32>
    %502 = arith.addf %501, %500 : vector<8x128xf32>
    %503 = arith.divf %501, %502 : vector<8x128xf32>
    %504 = vector.extract_strided_slice %483 {offsets = [0, 256], sizes = [8, 128], strides = [1, 1]} : vector<8x384xf32> to vector<8x128xf32>
    %505 = vector.extract_strided_slice %487 {offsets = [0, 256], sizes = [8, 128], strides = [1, 1]} : vector<8x384xf32> to vector<8x128xf32>
    %506 = arith.mulf %495, %505 : vector<8x128xf32>
    %507 = arith.addf %504, %506 : vector<8x128xf32>
    %508 = math.tanh %507 : vector<8x128xf32>
    %cst_124 = arith.constant 1.000000e+00 : f32
    %509 = vector.broadcast %cst_124 : f32 to vector<8x128xf32>
    %510 = arith.subf %509, %503 : vector<8x128xf32>
    %511 = arith.mulf %510, %508 : vector<8x128xf32>
    %512 = arith.mulf %503, %481 : vector<8x128xf32>
    %513 = arith.addf %511, %512 : vector<8x128xf32>
    %514 = vector.extract_strided_slice %513 {offsets = [0, 0], sizes = [8, 32], strides = [1, 1]} : vector<8x128xf32> to vector<8x32xf32>
    %c0_125 = arith.constant 0 : index
    %c0_126 = arith.constant 0 : index
    %515 = vector.load %arg10[%c0_125, %c0_126] : memref<64x384xf32, #tpu.memory_space<vmem>>, vector<8x384xf32>
    %516 = vector.extract_strided_slice %513 {offsets = [0, 0], sizes = [8, 32], strides = [1, 1]} : vector<8x128xf32> to vector<8x32xf32>
    %cst_127 = arith.constant dense<0.000000e+00> : vector<8x384xf32>
    %517 = tpu.matmul %516, %279, %cst_127 {dimension_numbers = #tpu.dot_dimension_numbers<[1], [0], [0], [1], [0, 0, 1, 1], [], []>} : vector<8x32xf32>, vector<32x384xf32>, vector<8x384xf32> -> vector<8x384xf32>
    %518 = vector.broadcast %283 : vector<1x384xf32> to vector<8x384xf32>
    %519 = arith.addf %517, %518 : vector<8x384xf32>
    %520 = vector.extract_strided_slice %515 {offsets = [0, 0], sizes = [8, 128], strides = [1, 1]} : vector<8x384xf32> to vector<8x128xf32>
    %521 = vector.extract_strided_slice %519 {offsets = [0, 0], sizes = [8, 128], strides = [1, 1]} : vector<8x384xf32> to vector<8x128xf32>
    %522 = arith.addf %520, %521 : vector<8x128xf32>
    %523 = arith.negf %522 : vector<8x128xf32>
    %524 = math.exp %523 : vector<8x128xf32>
    %cst_128 = arith.constant 1.000000e+00 : f32
    %525 = vector.broadcast %cst_128 : f32 to vector<8x128xf32>
    %526 = arith.addf %525, %524 : vector<8x128xf32>
    %527 = arith.divf %525, %526 : vector<8x128xf32>
    %528 = vector.extract_strided_slice %515 {offsets = [0, 128], sizes = [8, 128], strides = [1, 1]} : vector<8x384xf32> to vector<8x128xf32>
    %529 = vector.extract_strided_slice %519 {offsets = [0, 128], sizes = [8, 128], strides = [1, 1]} : vector<8x384xf32> to vector<8x128xf32>
    %530 = arith.addf %528, %529 : vector<8x128xf32>
    %531 = arith.negf %530 : vector<8x128xf32>
    %532 = math.exp %531 : vector<8x128xf32>
    %cst_129 = arith.constant 1.000000e+00 : f32
    %533 = vector.broadcast %cst_129 : f32 to vector<8x128xf32>
    %534 = arith.addf %533, %532 : vector<8x128xf32>
    %535 = arith.divf %533, %534 : vector<8x128xf32>
    %536 = vector.extract_strided_slice %515 {offsets = [0, 256], sizes = [8, 128], strides = [1, 1]} : vector<8x384xf32> to vector<8x128xf32>
    %537 = vector.extract_strided_slice %519 {offsets = [0, 256], sizes = [8, 128], strides = [1, 1]} : vector<8x384xf32> to vector<8x128xf32>
    %538 = arith.mulf %527, %537 : vector<8x128xf32>
    %539 = arith.addf %536, %538 : vector<8x128xf32>
    %540 = math.tanh %539 : vector<8x128xf32>
    %cst_130 = arith.constant 1.000000e+00 : f32
    %541 = vector.broadcast %cst_130 : f32 to vector<8x128xf32>
    %542 = arith.subf %541, %535 : vector<8x128xf32>
    %543 = arith.mulf %542, %540 : vector<8x128xf32>
    %544 = arith.mulf %535, %513 : vector<8x128xf32>
    %545 = arith.addf %543, %544 : vector<8x128xf32>
    %546 = vector.extract_strided_slice %545 {offsets = [0, 0], sizes = [8, 32], strides = [1, 1]} : vector<8x128xf32> to vector<8x32xf32>
    %547 = tpu.concatenate %53, %85, %117, %149, %181, %213, %245, %277 in 0 : vector<8x32xf32>, vector<8x32xf32>, vector<8x32xf32>, vector<8x32xf32>, vector<8x32xf32>, vector<8x32xf32>, vector<8x32xf32>, vector<8x32xf32> -> vector<64x32xf32>
    %548 = tpu.concatenate %546, %514, %482, %450, %418, %386, %354, %322 in 0 : vector<8x32xf32>, vector<8x32xf32>, vector<8x32xf32>, vector<8x32xf32>, vector<8x32xf32>, vector<8x32xf32>, vector<8x32xf32>, vector<8x32xf32> -> vector<64x32xf32>
    %c1_131 = arith.constant 1 : index
    %c0_132 = arith.constant 0 : index
    %c0_133 = arith.constant 0 : index
    %c0_134 = arith.constant 0 : index
    %549 = vector.load %arg4[%c1_131, %c0_132, %c0_133, %c0_134] : memref<2x2x32x384xf32, #tpu.memory_space<vmem>>, vector<1x1x32x384xf32>
    %550 = vector.shape_cast %549 : vector<1x1x32x384xf32> to vector<32x384xf32>
    %c1_135 = arith.constant 1 : index
    %c0_136 = arith.constant 0 : index
    %c0_137 = arith.constant 0 : index
    %c0_138 = arith.constant 0 : index
    %551 = vector.load %arg5[%c1_135, %c0_136, %c0_137, %c0_138] : memref<2x2x1x384xf32, #tpu.memory_space<vmem>>, vector<1x1x1x384xf32>
    %552 = vector.shape_cast %551 : vector<1x1x1x384xf32> to vector<1x384xf32>
    %c1_139 = arith.constant 1 : index
    %c0_140 = arith.constant 0 : index
    %c0_141 = arith.constant 0 : index
    %c0_142 = arith.constant 0 : index
    %553 = vector.load %arg6[%c1_139, %c0_140, %c0_141, %c0_142] : memref<2x2x1x384xf32, #tpu.memory_space<vmem>>, vector<1x1x1x384xf32>
    %554 = vector.shape_cast %553 : vector<1x1x1x384xf32> to vector<1x384xf32>
    %c0_143 = arith.constant 0 : index
    %c0_144 = arith.constant 0 : index
    %c0_145 = arith.constant 0 : index
    %c0_146 = arith.constant 0 : index
    %c0_147 = arith.constant 0 : index
    %555 = vector.load %arg3[%c0_143, %c0_144, %c0_145, %c0_146, %c0_147] : memref<1x2x2x32x384xf32, #tpu.memory_space<vmem>>, vector<1x1x1x32x384xf32>
    %556 = vector.shape_cast %555 : vector<1x1x1x32x384xf32> to vector<32x384xf32>
    %cst_148 = arith.constant dense<0.000000e+00> : vector<64x384xf32>
    %557 = tpu.matmul %547, %556, %cst_148 {dimension_numbers = #tpu.dot_dimension_numbers<[1], [0], [0], [1], [0, 0, 1, 1], [], []>} : vector<64x32xf32>, vector<32x384xf32>, vector<64x384xf32> -> vector<64x384xf32>
    %c0_149 = arith.constant 0 : index
    %c0_150 = arith.constant 0 : index
    %c1_151 = arith.constant 1 : index
    %c0_152 = arith.constant 0 : index
    %c0_153 = arith.constant 0 : index
    %558 = vector.load %arg3[%c0_149, %c0_150, %c1_151, %c0_152, %c0_153] : memref<1x2x2x32x384xf32, #tpu.memory_space<vmem>>, vector<1x1x1x32x384xf32>
    %559 = vector.shape_cast %558 : vector<1x1x1x32x384xf32> to vector<32x384xf32>
    %cst_154 = arith.constant dense<0.000000e+00> : vector<64x384xf32>
    %560 = tpu.matmul %548, %559, %cst_154 {dimension_numbers = #tpu.dot_dimension_numbers<[1], [0], [0], [1], [0, 0, 1, 1], [], []>} : vector<64x32xf32>, vector<32x384xf32>, vector<64x384xf32> -> vector<64x384xf32>
    %561 = arith.addf %557, %560 : vector<64x384xf32>
    %562 = vector.broadcast %552 : vector<1x384xf32> to vector<64x384xf32>
    %563 = arith.addf %561, %562 : vector<64x384xf32>
    %c0_155 = arith.constant 0 : index
    %c0_156 = arith.constant 0 : index
    %564 = vector.load %arg10[%c0_155, %c0_156] : memref<64x384xf32, #tpu.memory_space<vmem>>, vector<64x384xf32>
    tpu.vector_store %arg10[%c0_155, %c0_156], %563 {strides = array<i32>} : memref<64x384xf32, #tpu.memory_space<vmem>>, vector<64x384xf32>,
    %cst_157 = arith.constant 0.000000e+00 : f32
    %565 = vector.broadcast %cst_157 : f32 to vector<8x128xf32>
    %c0_158 = arith.constant 0 : index
    %c0_159 = arith.constant 0 : index
    %566 = vector.load %arg10[%c0_158, %c0_159] : memref<64x384xf32, #tpu.memory_space<vmem>>, vector<8x384xf32>
    %567 = vector.extract_strided_slice %565 {offsets = [0, 0], sizes = [8, 32], strides = [1, 1]} : vector<8x128xf32> to vector<8x32xf32>
    %cst_160 = arith.constant dense<0.000000e+00> : vector<8x384xf32>
    %568 = tpu.matmul %567, %550, %cst_160 {dimension_numbers = #tpu.dot_dimension_numbers<[1], [0], [0], [1], [0, 0, 1, 1], [], []>} : vector<8x32xf32>, vector<32x384xf32>, vector<8x384xf32> -> vector<8x384xf32>
    %569 = vector.broadcast %554 : vector<1x384xf32> to vector<8x384xf32>
    %570 = arith.addf %568, %569 : vector<8x384xf32>
    %571 = vector.extract_strided_slice %566 {offsets = [0, 0], sizes = [8, 128], strides = [1, 1]} : vector<8x384xf32> to vector<8x128xf32>
    %572 = vector.extract_strided_slice %570 {offsets = [0, 0], sizes = [8, 128], strides = [1, 1]} : vector<8x384xf32> to vector<8x128xf32>
    %573 = arith.addf %571, %572 : vector<8x128xf32>
    %574 = arith.negf %573 : vector<8x128xf32>
    %575 = math.exp %574 : vector<8x128xf32>
    %cst_161 = arith.constant 1.000000e+00 : f32
    %576 = vector.broadcast %cst_161 : f32 to vector<8x128xf32>
    %577 = arith.addf %576, %575 : vector<8x128xf32>
    %578 = arith.divf %576, %577 : vector<8x128xf32>
    %579 = vector.extract_strided_slice %566 {offsets = [0, 128], sizes = [8, 128], strides = [1, 1]} : vector<8x384xf32> to vector<8x128xf32>
    %580 = vector.extract_strided_slice %570 {offsets = [0, 128], sizes = [8, 128], strides = [1, 1]} : vector<8x384xf32> to vector<8x128xf32>
    %581 = arith.addf %579, %580 : vector<8x128xf32>
    %582 = arith.negf %581 : vector<8x128xf32>
    %583 = math.exp %582 : vector<8x128xf32>
    %cst_162 = arith.constant 1.000000e+00 : f32
    %584 = vector.broadcast %cst_162 : f32 to vector<8x128xf32>
    %585 = arith.addf %584, %583 : vector<8x128xf32>
    %586 = arith.divf %584, %585 : vector<8x128xf32>
    %587 = vector.extract_strided_slice %566 {offsets = [0, 256], sizes = [8, 128], strides = [1, 1]} : vector<8x384xf32> to vector<8x128xf32>
    %588 = vector.extract_strided_slice %570 {offsets = [0, 256], sizes = [8, 128], strides = [1, 1]} : vector<8x384xf32> to vector<8x128xf32>
    %589 = arith.mulf %578, %588 : vector<8x128xf32>
    %590 = arith.addf %587, %589 : vector<8x128xf32>
    %591 = math.tanh %590 : vector<8x128xf32>
    %cst_163 = arith.constant 1.000000e+00 : f32
    %592 = vector.broadcast %cst_163 : f32 to vector<8x128xf32>
    %593 = arith.subf %592, %586 : vector<8x128xf32>
    %594 = arith.mulf %593, %591 : vector<8x128xf32>
    %595 = arith.mulf %586, %565 : vector<8x128xf32>
    %596 = arith.addf %594, %595 : vector<8x128xf32>
    %c8_164 = arith.constant 8 : index
    %c0_165 = arith.constant 0 : index
    %597 = vector.load %arg10[%c8_164, %c0_165] : memref<64x384xf32, #tpu.memory_space<vmem>>, vector<8x384xf32>
    %598 = vector.extract_strided_slice %596 {offsets = [0, 0], sizes = [8, 32], strides = [1, 1]} : vector<8x128xf32> to vector<8x32xf32>
    %cst_166 = arith.constant dense<0.000000e+00> : vector<8x384xf32>
    %599 = tpu.matmul %598, %550, %cst_166 {dimension_numbers = #tpu.dot_dimension_numbers<[1], [0], [0], [1], [0, 0, 1, 1], [], []>} : vector<8x32xf32>, vector<32x384xf32>, vector<8x384xf32> -> vector<8x384xf32>
    %600 = vector.broadcast %554 : vector<1x384xf32> to vector<8x384xf32>
    %601 = arith.addf %599, %600 : vector<8x384xf32>
    %602 = vector.extract_strided_slice %597 {offsets = [0, 0], sizes = [8, 128], strides = [1, 1]} : vector<8x384xf32> to vector<8x128xf32>
    %603 = vector.extract_strided_slice %601 {offsets = [0, 0], sizes = [8, 128], strides = [1, 1]} : vector<8x384xf32> to vector<8x128xf32>
    %604 = arith.addf %602, %603 : vector<8x128xf32>
    %605 = arith.negf %604 : vector<8x128xf32>
    %606 = math.exp %605 : vector<8x128xf32>
    %cst_167 = arith.constant 1.000000e+00 : f32
    %607 = vector.broadcast %cst_167 : f32 to vector<8x128xf32>
    %608 = arith.addf %607, %606 : vector<8x128xf32>
    %609 = arith.divf %607, %608 : vector<8x128xf32>
    %610 = vector.extract_strided_slice %597 {offsets = [0, 128], sizes = [8, 128], strides = [1, 1]} : vector<8x384xf32> to vector<8x128xf32>
    %611 = vector.extract_strided_slice %601 {offsets = [0, 128], sizes = [8, 128], strides = [1, 1]} : vector<8x384xf32> to vector<8x128xf32>
    %612 = arith.addf %610, %611 : vector<8x128xf32>
    %613 = arith.negf %612 : vector<8x128xf32>
    %614 = math.exp %613 : vector<8x128xf32>
    %cst_168 = arith.constant 1.000000e+00 : f32
    %615 = vector.broadcast %cst_168 : f32 to vector<8x128xf32>
    %616 = arith.addf %615, %614 : vector<8x128xf32>
    %617 = arith.divf %615, %616 : vector<8x128xf32>
    %618 = vector.extract_strided_slice %597 {offsets = [0, 256], sizes = [8, 128], strides = [1, 1]} : vector<8x384xf32> to vector<8x128xf32>
    %619 = vector.extract_strided_slice %601 {offsets = [0, 256], sizes = [8, 128], strides = [1, 1]} : vector<8x384xf32> to vector<8x128xf32>
    %620 = arith.mulf %609, %619 : vector<8x128xf32>
    %621 = arith.addf %618, %620 : vector<8x128xf32>
    %622 = math.tanh %621 : vector<8x128xf32>
    %cst_169 = arith.constant 1.000000e+00 : f32
    %623 = vector.broadcast %cst_169 : f32 to vector<8x128xf32>
    %624 = arith.subf %623, %617 : vector<8x128xf32>
    %625 = arith.mulf %624, %622 : vector<8x128xf32>
    %626 = arith.mulf %617, %596 : vector<8x128xf32>
    %627 = arith.addf %625, %626 : vector<8x128xf32>
    %c16_170 = arith.constant 16 : index
    %c0_171 = arith.constant 0 : index
    %628 = vector.load %arg10[%c16_170, %c0_171] : memref<64x384xf32, #tpu.memory_space<vmem>>, vector<8x384xf32>
    %629 = vector.extract_strided_slice %627 {offsets = [0, 0], sizes = [8, 32], strides = [1, 1]} : vector<8x128xf32> to vector<8x32xf32>
    %cst_172 = arith.constant dense<0.000000e+00> : vector<8x384xf32>
    %630 = tpu.matmul %629, %550, %cst_172 {dimension_numbers = #tpu.dot_dimension_numbers<[1], [0], [0], [1], [0, 0, 1, 1], [], []>} : vector<8x32xf32>, vector<32x384xf32>, vector<8x384xf32> -> vector<8x384xf32>
    %631 = vector.broadcast %554 : vector<1x384xf32> to vector<8x384xf32>
    %632 = arith.addf %630, %631 : vector<8x384xf32>
    %633 = vector.extract_strided_slice %628 {offsets = [0, 0], sizes = [8, 128], strides = [1, 1]} : vector<8x384xf32> to vector<8x128xf32>
    %634 = vector.extract_strided_slice %632 {offsets = [0, 0], sizes = [8, 128], strides = [1, 1]} : vector<8x384xf32> to vector<8x128xf32>
    %635 = arith.addf %633, %634 : vector<8x128xf32>
    %636 = arith.negf %635 : vector<8x128xf32>
    %637 = math.exp %636 : vector<8x128xf32>
    %cst_173 = arith.constant 1.000000e+00 : f32
    %638 = vector.broadcast %cst_173 : f32 to vector<8x128xf32>
    %639 = arith.addf %638, %637 : vector<8x128xf32>
    %640 = arith.divf %638, %639 : vector<8x128xf32>
    %641 = vector.extract_strided_slice %628 {offsets = [0, 128], sizes = [8, 128], strides = [1, 1]} : vector<8x384xf32> to vector<8x128xf32>
    %642 = vector.extract_strided_slice %632 {offsets = [0, 128], sizes = [8, 128], strides = [1, 1]} : vector<8x384xf32> to vector<8x128xf32>
    %643 = arith.addf %641, %642 : vector<8x128xf32>
    %644 = arith.negf %643 : vector<8x128xf32>
    %645 = math.exp %644 : vector<8x128xf32>
    %cst_174 = arith.constant 1.000000e+00 : f32
    %646 = vector.broadcast %cst_174 : f32 to vector<8x128xf32>
    %647 = arith.addf %646, %645 : vector<8x128xf32>
    %648 = arith.divf %646, %647 : vector<8x128xf32>
    %649 = vector.extract_strided_slice %628 {offsets = [0, 256], sizes = [8, 128], strides = [1, 1]} : vector<8x384xf32> to vector<8x128xf32>
    %650 = vector.extract_strided_slice %632 {offsets = [0, 256], sizes = [8, 128], strides = [1, 1]} : vector<8x384xf32> to vector<8x128xf32>
    %651 = arith.mulf %640, %650 : vector<8x128xf32>
    %652 = arith.addf %649, %651 : vector<8x128xf32>
    %653 = math.tanh %652 : vector<8x128xf32>
    %cst_175 = arith.constant 1.000000e+00 : f32
    %654 = vector.broadcast %cst_175 : f32 to vector<8x128xf32>
    %655 = arith.subf %654, %648 : vector<8x128xf32>
    %656 = arith.mulf %655, %653 : vector<8x128xf32>
    %657 = arith.mulf %648, %627 : vector<8x128xf32>
    %658 = arith.addf %656, %657 : vector<8x128xf32>
    %c24_176 = arith.constant 24 : index
    %c0_177 = arith.constant 0 : index
    %659 = vector.load %arg10[%c24_176, %c0_177] : memref<64x384xf32, #tpu.memory_space<vmem>>, vector<8x384xf32>
    %660 = vector.extract_strided_slice %658 {offsets = [0, 0], sizes = [8, 32], strides = [1, 1]} : vector<8x128xf32> to vector<8x32xf32>
    %cst_178 = arith.constant dense<0.000000e+00> : vector<8x384xf32>
    %661 = tpu.matmul %660, %550, %cst_178 {dimension_numbers = #tpu.dot_dimension_numbers<[1], [0], [0], [1], [0, 0, 1, 1], [], []>} : vector<8x32xf32>, vector<32x384xf32>, vector<8x384xf32> -> vector<8x384xf32>
    %662 = vector.broadcast %554 : vector<1x384xf32> to vector<8x384xf32>
    %663 = arith.addf %661, %662 : vector<8x384xf32>
    %664 = vector.extract_strided_slice %659 {offsets = [0, 0], sizes = [8, 128], strides = [1, 1]} : vector<8x384xf32> to vector<8x128xf32>
    %665 = vector.extract_strided_slice %663 {offsets = [0, 0], sizes = [8, 128], strides = [1, 1]} : vector<8x384xf32> to vector<8x128xf32>
    %666 = arith.addf %664, %665 : vector<8x128xf32>
    %667 = arith.negf %666 : vector<8x128xf32>
    %668 = math.exp %667 : vector<8x128xf32>
    %cst_179 = arith.constant 1.000000e+00 : f32
    %669 = vector.broadcast %cst_179 : f32 to vector<8x128xf32>
    %670 = arith.addf %669, %668 : vector<8x128xf32>
    %671 = arith.divf %669, %670 : vector<8x128xf32>
    %672 = vector.extract_strided_slice %659 {offsets = [0, 128], sizes = [8, 128], strides = [1, 1]} : vector<8x384xf32> to vector<8x128xf32>
    %673 = vector.extract_strided_slice %663 {offsets = [0, 128], sizes = [8, 128], strides = [1, 1]} : vector<8x384xf32> to vector<8x128xf32>
    %674 = arith.addf %672, %673 : vector<8x128xf32>
    %675 = arith.negf %674 : vector<8x128xf32>
    %676 = math.exp %675 : vector<8x128xf32>
    %cst_180 = arith.constant 1.000000e+00 : f32
    %677 = vector.broadcast %cst_180 : f32 to vector<8x128xf32>
    %678 = arith.addf %677, %676 : vector<8x128xf32>
    %679 = arith.divf %677, %678 : vector<8x128xf32>
    %680 = vector.extract_strided_slice %659 {offsets = [0, 256], sizes = [8, 128], strides = [1, 1]} : vector<8x384xf32> to vector<8x128xf32>
    %681 = vector.extract_strided_slice %663 {offsets = [0, 256], sizes = [8, 128], strides = [1, 1]} : vector<8x384xf32> to vector<8x128xf32>
    %682 = arith.mulf %671, %681 : vector<8x128xf32>
    %683 = arith.addf %680, %682 : vector<8x128xf32>
    %684 = math.tanh %683 : vector<8x128xf32>
    %cst_181 = arith.constant 1.000000e+00 : f32
    %685 = vector.broadcast %cst_181 : f32 to vector<8x128xf32>
    %686 = arith.subf %685, %679 : vector<8x128xf32>
    %687 = arith.mulf %686, %684 : vector<8x128xf32>
    %688 = arith.mulf %679, %658 : vector<8x128xf32>
    %689 = arith.addf %687, %688 : vector<8x128xf32>
    %c32_182 = arith.constant 32 : index
    %c0_183 = arith.constant 0 : index
    %690 = vector.load %arg10[%c32_182, %c0_183] : memref<64x384xf32, #tpu.memory_space<vmem>>, vector<8x384xf32>
    %691 = vector.extract_strided_slice %689 {offsets = [0, 0], sizes = [8, 32], strides = [1, 1]} : vector<8x128xf32> to vector<8x32xf32>
    %cst_184 = arith.constant dense<0.000000e+00> : vector<8x384xf32>
    %692 = tpu.matmul %691, %550, %cst_184 {dimension_numbers = #tpu.dot_dimension_numbers<[1], [0], [0], [1], [0, 0, 1, 1], [], []>} : vector<8x32xf32>, vector<32x384xf32>, vector<8x384xf32> -> vector<8x384xf32>
    %693 = vector.broadcast %554 : vector<1x384xf32> to vector<8x384xf32>
    %694 = arith.addf %692, %693 : vector<8x384xf32>
    %695 = vector.extract_strided_slice %690 {offsets = [0, 0], sizes = [8, 128], strides = [1, 1]} : vector<8x384xf32> to vector<8x128xf32>
    %696 = vector.extract_strided_slice %694 {offsets = [0, 0], sizes = [8, 128], strides = [1, 1]} : vector<8x384xf32> to vector<8x128xf32>
    %697 = arith.addf %695, %696 : vector<8x128xf32>
    %698 = arith.negf %697 : vector<8x128xf32>
    %699 = math.exp %698 : vector<8x128xf32>
    %cst_185 = arith.constant 1.000000e+00 : f32
    %700 = vector.broadcast %cst_185 : f32 to vector<8x128xf32>
    %701 = arith.addf %700, %699 : vector<8x128xf32>
    %702 = arith.divf %700, %701 : vector<8x128xf32>
    %703 = vector.extract_strided_slice %690 {offsets = [0, 128], sizes = [8, 128], strides = [1, 1]} : vector<8x384xf32> to vector<8x128xf32>
    %704 = vector.extract_strided_slice %694 {offsets = [0, 128], sizes = [8, 128], strides = [1, 1]} : vector<8x384xf32> to vector<8x128xf32>
    %705 = arith.addf %703, %704 : vector<8x128xf32>
    %706 = arith.negf %705 : vector<8x128xf32>
    %707 = math.exp %706 : vector<8x128xf32>
    %cst_186 = arith.constant 1.000000e+00 : f32
    %708 = vector.broadcast %cst_186 : f32 to vector<8x128xf32>
    %709 = arith.addf %708, %707 : vector<8x128xf32>
    %710 = arith.divf %708, %709 : vector<8x128xf32>
    %711 = vector.extract_strided_slice %690 {offsets = [0, 256], sizes = [8, 128], strides = [1, 1]} : vector<8x384xf32> to vector<8x128xf32>
    %712 = vector.extract_strided_slice %694 {offsets = [0, 256], sizes = [8, 128], strides = [1, 1]} : vector<8x384xf32> to vector<8x128xf32>
    %713 = arith.mulf %702, %712 : vector<8x128xf32>
    %714 = arith.addf %711, %713 : vector<8x128xf32>
    %715 = math.tanh %714 : vector<8x128xf32>
    %cst_187 = arith.constant 1.000000e+00 : f32
    %716 = vector.broadcast %cst_187 : f32 to vector<8x128xf32>
    %717 = arith.subf %716, %710 : vector<8x128xf32>
    %718 = arith.mulf %717, %715 : vector<8x128xf32>
    %719 = arith.mulf %710, %689 : vector<8x128xf32>
    %720 = arith.addf %718, %719 : vector<8x128xf32>
    %c40_188 = arith.constant 40 : index
    %c0_189 = arith.constant 0 : index
    %721 = vector.load %arg10[%c40_188, %c0_189] : memref<64x384xf32, #tpu.memory_space<vmem>>, vector<8x384xf32>
    %722 = vector.extract_strided_slice %720 {offsets = [0, 0], sizes = [8, 32], strides = [1, 1]} : vector<8x128xf32> to vector<8x32xf32>
    %cst_190 = arith.constant dense<0.000000e+00> : vector<8x384xf32>
    %723 = tpu.matmul %722, %550, %cst_190 {dimension_numbers = #tpu.dot_dimension_numbers<[1], [0], [0], [1], [0, 0, 1, 1], [], []>} : vector<8x32xf32>, vector<32x384xf32>, vector<8x384xf32> -> vector<8x384xf32>
    %724 = vector.broadcast %554 : vector<1x384xf32> to vector<8x384xf32>
    %725 = arith.addf %723, %724 : vector<8x384xf32>
    %726 = vector.extract_strided_slice %721 {offsets = [0, 0], sizes = [8, 128], strides = [1, 1]} : vector<8x384xf32> to vector<8x128xf32>
    %727 = vector.extract_strided_slice %725 {offsets = [0, 0], sizes = [8, 128], strides = [1, 1]} : vector<8x384xf32> to vector<8x128xf32>
    %728 = arith.addf %726, %727 : vector<8x128xf32>
    %729 = arith.negf %728 : vector<8x128xf32>
    %730 = math.exp %729 : vector<8x128xf32>
    %cst_191 = arith.constant 1.000000e+00 : f32
    %731 = vector.broadcast %cst_191 : f32 to vector<8x128xf32>
    %732 = arith.addf %731, %730 : vector<8x128xf32>
    %733 = arith.divf %731, %732 : vector<8x128xf32>
    %734 = vector.extract_strided_slice %721 {offsets = [0, 128], sizes = [8, 128], strides = [1, 1]} : vector<8x384xf32> to vector<8x128xf32>
    %735 = vector.extract_strided_slice %725 {offsets = [0, 128], sizes = [8, 128], strides = [1, 1]} : vector<8x384xf32> to vector<8x128xf32>
    %736 = arith.addf %734, %735 : vector<8x128xf32>
    %737 = arith.negf %736 : vector<8x128xf32>
    %738 = math.exp %737 : vector<8x128xf32>
    %cst_192 = arith.constant 1.000000e+00 : f32
    %739 = vector.broadcast %cst_192 : f32 to vector<8x128xf32>
    %740 = arith.addf %739, %738 : vector<8x128xf32>
    %741 = arith.divf %739, %740 : vector<8x128xf32>
    %742 = vector.extract_strided_slice %721 {offsets = [0, 256], sizes = [8, 128], strides = [1, 1]} : vector<8x384xf32> to vector<8x128xf32>
    %743 = vector.extract_strided_slice %725 {offsets = [0, 256], sizes = [8, 128], strides = [1, 1]} : vector<8x384xf32> to vector<8x128xf32>
    %744 = arith.mulf %733, %743 : vector<8x128xf32>
    %745 = arith.addf %742, %744 : vector<8x128xf32>
    %746 = math.tanh %745 : vector<8x128xf32>
    %cst_193 = arith.constant 1.000000e+00 : f32
    %747 = vector.broadcast %cst_193 : f32 to vector<8x128xf32>
    %748 = arith.subf %747, %741 : vector<8x128xf32>
    %749 = arith.mulf %748, %746 : vector<8x128xf32>
    %750 = arith.mulf %741, %720 : vector<8x128xf32>
    %751 = arith.addf %749, %750 : vector<8x128xf32>
    %c48_194 = arith.constant 48 : index
    %c0_195 = arith.constant 0 : index
    %752 = vector.load %arg10[%c48_194, %c0_195] : memref<64x384xf32, #tpu.memory_space<vmem>>, vector<8x384xf32>
    %753 = vector.extract_strided_slice %751 {offsets = [0, 0], sizes = [8, 32], strides = [1, 1]} : vector<8x128xf32> to vector<8x32xf32>
    %cst_196 = arith.constant dense<0.000000e+00> : vector<8x384xf32>
    %754 = tpu.matmul %753, %550, %cst_196 {dimension_numbers = #tpu.dot_dimension_numbers<[1], [0], [0], [1], [0, 0, 1, 1], [], []>} : vector<8x32xf32>, vector<32x384xf32>, vector<8x384xf32> -> vector<8x384xf32>
    %755 = vector.broadcast %554 : vector<1x384xf32> to vector<8x384xf32>
    %756 = arith.addf %754, %755 : vector<8x384xf32>
    %757 = vector.extract_strided_slice %752 {offsets = [0, 0], sizes = [8, 128], strides = [1, 1]} : vector<8x384xf32> to vector<8x128xf32>
    %758 = vector.extract_strided_slice %756 {offsets = [0, 0], sizes = [8, 128], strides = [1, 1]} : vector<8x384xf32> to vector<8x128xf32>
    %759 = arith.addf %757, %758 : vector<8x128xf32>
    %760 = arith.negf %759 : vector<8x128xf32>
    %761 = math.exp %760 : vector<8x128xf32>
    %cst_197 = arith.constant 1.000000e+00 : f32
    %762 = vector.broadcast %cst_197 : f32 to vector<8x128xf32>
    %763 = arith.addf %762, %761 : vector<8x128xf32>
    %764 = arith.divf %762, %763 : vector<8x128xf32>
    %765 = vector.extract_strided_slice %752 {offsets = [0, 128], sizes = [8, 128], strides = [1, 1]} : vector<8x384xf32> to vector<8x128xf32>
    %766 = vector.extract_strided_slice %756 {offsets = [0, 128], sizes = [8, 128], strides = [1, 1]} : vector<8x384xf32> to vector<8x128xf32>
    %767 = arith.addf %765, %766 : vector<8x128xf32>
    %768 = arith.negf %767 : vector<8x128xf32>
    %769 = math.exp %768 : vector<8x128xf32>
    %cst_198 = arith.constant 1.000000e+00 : f32
    %770 = vector.broadcast %cst_198 : f32 to vector<8x128xf32>
    %771 = arith.addf %770, %769 : vector<8x128xf32>
    %772 = arith.divf %770, %771 : vector<8x128xf32>
    %773 = vector.extract_strided_slice %752 {offsets = [0, 256], sizes = [8, 128], strides = [1, 1]} : vector<8x384xf32> to vector<8x128xf32>
    %774 = vector.extract_strided_slice %756 {offsets = [0, 256], sizes = [8, 128], strides = [1, 1]} : vector<8x384xf32> to vector<8x128xf32>
    %775 = arith.mulf %764, %774 : vector<8x128xf32>
    %776 = arith.addf %773, %775 : vector<8x128xf32>
    %777 = math.tanh %776 : vector<8x128xf32>
    %cst_199 = arith.constant 1.000000e+00 : f32
    %778 = vector.broadcast %cst_199 : f32 to vector<8x128xf32>
    %779 = arith.subf %778, %772 : vector<8x128xf32>
    %780 = arith.mulf %779, %777 : vector<8x128xf32>
    %781 = arith.mulf %772, %751 : vector<8x128xf32>
    %782 = arith.addf %780, %781 : vector<8x128xf32>
    %c56_200 = arith.constant 56 : index
    %c0_201 = arith.constant 0 : index
    %783 = vector.load %arg10[%c56_200, %c0_201] : memref<64x384xf32, #tpu.memory_space<vmem>>, vector<8x384xf32>
    %784 = vector.extract_strided_slice %782 {offsets = [0, 0], sizes = [8, 32], strides = [1, 1]} : vector<8x128xf32> to vector<8x32xf32>
    %cst_202 = arith.constant dense<0.000000e+00> : vector<8x384xf32>
    %785 = tpu.matmul %784, %550, %cst_202 {dimension_numbers = #tpu.dot_dimension_numbers<[1], [0], [0], [1], [0, 0, 1, 1], [], []>} : vector<8x32xf32>, vector<32x384xf32>, vector<8x384xf32> -> vector<8x384xf32>
    %786 = vector.broadcast %554 : vector<1x384xf32> to vector<8x384xf32>
    %787 = arith.addf %785, %786 : vector<8x384xf32>
    %788 = vector.extract_strided_slice %783 {offsets = [0, 0], sizes = [8, 128], strides = [1, 1]} : vector<8x384xf32> to vector<8x128xf32>
    %789 = vector.extract_strided_slice %787 {offsets = [0, 0], sizes = [8, 128], strides = [1, 1]} : vector<8x384xf32> to vector<8x128xf32>
    %790 = arith.addf %788, %789 : vector<8x128xf32>
    %791 = arith.negf %790 : vector<8x128xf32>
    %792 = math.exp %791 : vector<8x128xf32>
    %cst_203 = arith.constant 1.000000e+00 : f32
    %793 = vector.broadcast %cst_203 : f32 to vector<8x128xf32>
    %794 = arith.addf %793, %792 : vector<8x128xf32>
    %795 = arith.divf %793, %794 : vector<8x128xf32>
    %796 = vector.extract_strided_slice %783 {offsets = [0, 128], sizes = [8, 128], strides = [1, 1]} : vector<8x384xf32> to vector<8x128xf32>
    %797 = vector.extract_strided_slice %787 {offsets = [0, 128], sizes = [8, 128], strides = [1, 1]} : vector<8x384xf32> to vector<8x128xf32>
    %798 = arith.addf %796, %797 : vector<8x128xf32>
    %799 = arith.negf %798 : vector<8x128xf32>
    %800 = math.exp %799 : vector<8x128xf32>
    %cst_204 = arith.constant 1.000000e+00 : f32
    %801 = vector.broadcast %cst_204 : f32 to vector<8x128xf32>
    %802 = arith.addf %801, %800 : vector<8x128xf32>
    %803 = arith.divf %801, %802 : vector<8x128xf32>
    %804 = vector.extract_strided_slice %783 {offsets = [0, 256], sizes = [8, 128], strides = [1, 1]} : vector<8x384xf32> to vector<8x128xf32>
    %805 = vector.extract_strided_slice %787 {offsets = [0, 256], sizes = [8, 128], strides = [1, 1]} : vector<8x384xf32> to vector<8x128xf32>
    %806 = arith.mulf %795, %805 : vector<8x128xf32>
    %807 = arith.addf %804, %806 : vector<8x128xf32>
    %808 = math.tanh %807 : vector<8x128xf32>
    %cst_205 = arith.constant 1.000000e+00 : f32
    %809 = vector.broadcast %cst_205 : f32 to vector<8x128xf32>
    %810 = arith.subf %809, %803 : vector<8x128xf32>
    %811 = arith.mulf %810, %808 : vector<8x128xf32>
    %812 = arith.mulf %803, %782 : vector<8x128xf32>
    %813 = arith.addf %811, %812 : vector<8x128xf32>
    %814 = vector.extract_strided_slice %813 {offsets = [0, 0], sizes = [8, 32], strides = [1, 1]} : vector<8x128xf32> to vector<8x32xf32>
    %c1_206 = arith.constant 1 : index
    %c1_207 = arith.constant 1 : index
    %c0_208 = arith.constant 0 : index
    %c0_209 = arith.constant 0 : index
    %815 = vector.load %arg4[%c1_206, %c1_207, %c0_208, %c0_209] : memref<2x2x32x384xf32, #tpu.memory_space<vmem>>, vector<1x1x32x384xf32>
    %816 = vector.shape_cast %815 : vector<1x1x32x384xf32> to vector<32x384xf32>
    %c1_210 = arith.constant 1 : index
    %c1_211 = arith.constant 1 : index
    %c0_212 = arith.constant 0 : index
    %c0_213 = arith.constant 0 : index
    %817 = vector.load %arg5[%c1_210, %c1_211, %c0_212, %c0_213] : memref<2x2x1x384xf32, #tpu.memory_space<vmem>>, vector<1x1x1x384xf32>
    %818 = vector.shape_cast %817 : vector<1x1x1x384xf32> to vector<1x384xf32>
    %c1_214 = arith.constant 1 : index
    %c1_215 = arith.constant 1 : index
    %c0_216 = arith.constant 0 : index
    %c0_217 = arith.constant 0 : index
    %819 = vector.load %arg6[%c1_214, %c1_215, %c0_216, %c0_217] : memref<2x2x1x384xf32, #tpu.memory_space<vmem>>, vector<1x1x1x384xf32>
    %820 = vector.shape_cast %819 : vector<1x1x1x384xf32> to vector<1x384xf32>
    %c0_218 = arith.constant 0 : index
    %c1_219 = arith.constant 1 : index
    %c0_220 = arith.constant 0 : index
    %c0_221 = arith.constant 0 : index
    %c0_222 = arith.constant 0 : index
    %821 = vector.load %arg3[%c0_218, %c1_219, %c0_220, %c0_221, %c0_222] : memref<1x2x2x32x384xf32, #tpu.memory_space<vmem>>, vector<1x1x1x32x384xf32>
    %822 = vector.shape_cast %821 : vector<1x1x1x32x384xf32> to vector<32x384xf32>
    %cst_223 = arith.constant dense<0.000000e+00> : vector<64x384xf32>
    %823 = tpu.matmul %547, %822, %cst_223 {dimension_numbers = #tpu.dot_dimension_numbers<[1], [0], [0], [1], [0, 0, 1, 1], [], []>} : vector<64x32xf32>, vector<32x384xf32>, vector<64x384xf32> -> vector<64x384xf32>
    %c0_224 = arith.constant 0 : index
    %c1_225 = arith.constant 1 : index
    %c1_226 = arith.constant 1 : index
    %c0_227 = arith.constant 0 : index
    %c0_228 = arith.constant 0 : index
    %824 = vector.load %arg3[%c0_224, %c1_225, %c1_226, %c0_227, %c0_228] : memref<1x2x2x32x384xf32, #tpu.memory_space<vmem>>, vector<1x1x1x32x384xf32>
    %825 = vector.shape_cast %824 : vector<1x1x1x32x384xf32> to vector<32x384xf32>
    %cst_229 = arith.constant dense<0.000000e+00> : vector<64x384xf32>
    %826 = tpu.matmul %548, %825, %cst_229 {dimension_numbers = #tpu.dot_dimension_numbers<[1], [0], [0], [1], [0, 0, 1, 1], [], []>} : vector<64x32xf32>, vector<32x384xf32>, vector<64x384xf32> -> vector<64x384xf32>
    %827 = arith.addf %823, %826 : vector<64x384xf32>
    %828 = vector.broadcast %818 : vector<1x384xf32> to vector<64x384xf32>
    %829 = arith.addf %827, %828 : vector<64x384xf32>
    %c0_230 = arith.constant 0 : index
    %c0_231 = arith.constant 0 : index
    %830 = vector.load %arg10[%c0_230, %c0_231] : memref<64x384xf32, #tpu.memory_space<vmem>>, vector<64x384xf32>
    tpu.vector_store %arg10[%c0_230, %c0_231], %829 {strides = array<i32>} : memref<64x384xf32, #tpu.memory_space<vmem>>, vector<64x384xf32>,
    %cst_232 = arith.constant 0.000000e+00 : f32
    %831 = vector.broadcast %cst_232 : f32 to vector<8x128xf32>
    %c56_233 = arith.constant 56 : index
    %c0_234 = arith.constant 0 : index
    %832 = vector.load %arg10[%c56_233, %c0_234] : memref<64x384xf32, #tpu.memory_space<vmem>>, vector<8x384xf32>
    %833 = vector.extract_strided_slice %831 {offsets = [0, 0], sizes = [8, 32], strides = [1, 1]} : vector<8x128xf32> to vector<8x32xf32>
    %cst_235 = arith.constant dense<0.000000e+00> : vector<8x384xf32>
    %834 = tpu.matmul %833, %816, %cst_235 {dimension_numbers = #tpu.dot_dimension_numbers<[1], [0], [0], [1], [0, 0, 1, 1], [], []>} : vector<8x32xf32>, vector<32x384xf32>, vector<8x384xf32> -> vector<8x384xf32>
    %835 = vector.broadcast %820 : vector<1x384xf32> to vector<8x384xf32>
    %836 = arith.addf %834, %835 : vector<8x384xf32>
    %837 = vector.extract_strided_slice %832 {offsets = [0, 0], sizes = [8, 128], strides = [1, 1]} : vector<8x384xf32> to vector<8x128xf32>
    %838 = vector.extract_strided_slice %836 {offsets = [0, 0], sizes = [8, 128], strides = [1, 1]} : vector<8x384xf32> to vector<8x128xf32>
    %839 = arith.addf %837, %838 : vector<8x128xf32>
    %840 = arith.negf %839 : vector<8x128xf32>
    %841 = math.exp %840 : vector<8x128xf32>
    %cst_236 = arith.constant 1.000000e+00 : f32
    %842 = vector.broadcast %cst_236 : f32 to vector<8x128xf32>
    %843 = arith.addf %842, %841 : vector<8x128xf32>
    %844 = arith.divf %842, %843 : vector<8x128xf32>
    %845 = vector.extract_strided_slice %832 {offsets = [0, 128], sizes = [8, 128], strides = [1, 1]} : vector<8x384xf32> to vector<8x128xf32>
    %846 = vector.extract_strided_slice %836 {offsets = [0, 128], sizes = [8, 128], strides = [1, 1]} : vector<8x384xf32> to vector<8x128xf32>
    %847 = arith.addf %845, %846 : vector<8x128xf32>
    %848 = arith.negf %847 : vector<8x128xf32>
    %849 = math.exp %848 : vector<8x128xf32>
    %cst_237 = arith.constant 1.000000e+00 : f32
    %850 = vector.broadcast %cst_237 : f32 to vector<8x128xf32>
    %851 = arith.addf %850, %849 : vector<8x128xf32>
    %852 = arith.divf %850, %851 : vector<8x128xf32>
    %853 = vector.extract_strided_slice %832 {offsets = [0, 256], sizes = [8, 128], strides = [1, 1]} : vector<8x384xf32> to vector<8x128xf32>
    %854 = vector.extract_strided_slice %836 {offsets = [0, 256], sizes = [8, 128], strides = [1, 1]} : vector<8x384xf32> to vector<8x128xf32>
    %855 = arith.mulf %844, %854 : vector<8x128xf32>
    %856 = arith.addf %853, %855 : vector<8x128xf32>
    %857 = math.tanh %856 : vector<8x128xf32>
    %cst_238 = arith.constant 1.000000e+00 : f32
    %858 = vector.broadcast %cst_238 : f32 to vector<8x128xf32>
    %859 = arith.subf %858, %852 : vector<8x128xf32>
    %860 = arith.mulf %859, %857 : vector<8x128xf32>
    %861 = arith.mulf %852, %831 : vector<8x128xf32>
    %862 = arith.addf %860, %861 : vector<8x128xf32>
    %c48_239 = arith.constant 48 : index
    %c0_240 = arith.constant 0 : index
    %863 = vector.load %arg10[%c48_239, %c0_240] : memref<64x384xf32, #tpu.memory_space<vmem>>, vector<8x384xf32>
    %864 = vector.extract_strided_slice %862 {offsets = [0, 0], sizes = [8, 32], strides = [1, 1]} : vector<8x128xf32> to vector<8x32xf32>
    %cst_241 = arith.constant dense<0.000000e+00> : vector<8x384xf32>
    %865 = tpu.matmul %864, %816, %cst_241 {dimension_numbers = #tpu.dot_dimension_numbers<[1], [0], [0], [1], [0, 0, 1, 1], [], []>} : vector<8x32xf32>, vector<32x384xf32>, vector<8x384xf32> -> vector<8x384xf32>
    %866 = vector.broadcast %820 : vector<1x384xf32> to vector<8x384xf32>
    %867 = arith.addf %865, %866 : vector<8x384xf32>
    %868 = vector.extract_strided_slice %863 {offsets = [0, 0], sizes = [8, 128], strides = [1, 1]} : vector<8x384xf32> to vector<8x128xf32>
    %869 = vector.extract_strided_slice %867 {offsets = [0, 0], sizes = [8, 128], strides = [1, 1]} : vector<8x384xf32> to vector<8x128xf32>
    %870 = arith.addf %868, %869 : vector<8x128xf32>
    %871 = arith.negf %870 : vector<8x128xf32>
    %872 = math.exp %871 : vector<8x128xf32>
    %cst_242 = arith.constant 1.000000e+00 : f32
    %873 = vector.broadcast %cst_242 : f32 to vector<8x128xf32>
    %874 = arith.addf %873, %872 : vector<8x128xf32>
    %875 = arith.divf %873, %874 : vector<8x128xf32>
    %876 = vector.extract_strided_slice %863 {offsets = [0, 128], sizes = [8, 128], strides = [1, 1]} : vector<8x384xf32> to vector<8x128xf32>
    %877 = vector.extract_strided_slice %867 {offsets = [0, 128], sizes = [8, 128], strides = [1, 1]} : vector<8x384xf32> to vector<8x128xf32>
    %878 = arith.addf %876, %877 : vector<8x128xf32>
    %879 = arith.negf %878 : vector<8x128xf32>
    %880 = math.exp %879 : vector<8x128xf32>
    %cst_243 = arith.constant 1.000000e+00 : f32
    %881 = vector.broadcast %cst_243 : f32 to vector<8x128xf32>
    %882 = arith.addf %881, %880 : vector<8x128xf32>
    %883 = arith.divf %881, %882 : vector<8x128xf32>
    %884 = vector.extract_strided_slice %863 {offsets = [0, 256], sizes = [8, 128], strides = [1, 1]} : vector<8x384xf32> to vector<8x128xf32>
    %885 = vector.extract_strided_slice %867 {offsets = [0, 256], sizes = [8, 128], strides = [1, 1]} : vector<8x384xf32> to vector<8x128xf32>
    %886 = arith.mulf %875, %885 : vector<8x128xf32>
    %887 = arith.addf %884, %886 : vector<8x128xf32>
    %888 = math.tanh %887 : vector<8x128xf32>
    %cst_244 = arith.constant 1.000000e+00 : f32
    %889 = vector.broadcast %cst_244 : f32 to vector<8x128xf32>
    %890 = arith.subf %889, %883 : vector<8x128xf32>
    %891 = arith.mulf %890, %888 : vector<8x128xf32>
    %892 = arith.mulf %883, %862 : vector<8x128xf32>
    %893 = arith.addf %891, %892 : vector<8x128xf32>
    %c40_245 = arith.constant 40 : index
    %c0_246 = arith.constant 0 : index
    %894 = vector.load %arg10[%c40_245, %c0_246] : memref<64x384xf32, #tpu.memory_space<vmem>>, vector<8x384xf32>
    %895 = vector.extract_strided_slice %893 {offsets = [0, 0], sizes = [8, 32], strides = [1, 1]} : vector<8x128xf32> to vector<8x32xf32>
    %cst_247 = arith.constant dense<0.000000e+00> : vector<8x384xf32>
    %896 = tpu.matmul %895, %816, %cst_247 {dimension_numbers = #tpu.dot_dimension_numbers<[1], [0], [0], [1], [0, 0, 1, 1], [], []>} : vector<8x32xf32>, vector<32x384xf32>, vector<8x384xf32> -> vector<8x384xf32>
    %897 = vector.broadcast %820 : vector<1x384xf32> to vector<8x384xf32>
    %898 = arith.addf %896, %897 : vector<8x384xf32>
    %899 = vector.extract_strided_slice %894 {offsets = [0, 0], sizes = [8, 128], strides = [1, 1]} : vector<8x384xf32> to vector<8x128xf32>
    %900 = vector.extract_strided_slice %898 {offsets = [0, 0], sizes = [8, 128], strides = [1, 1]} : vector<8x384xf32> to vector<8x128xf32>
    %901 = arith.addf %899, %900 : vector<8x128xf32>
    %902 = arith.negf %901 : vector<8x128xf32>
    %903 = math.exp %902 : vector<8x128xf32>
    %cst_248 = arith.constant 1.000000e+00 : f32
    %904 = vector.broadcast %cst_248 : f32 to vector<8x128xf32>
    %905 = arith.addf %904, %903 : vector<8x128xf32>
    %906 = arith.divf %904, %905 : vector<8x128xf32>
    %907 = vector.extract_strided_slice %894 {offsets = [0, 128], sizes = [8, 128], strides = [1, 1]} : vector<8x384xf32> to vector<8x128xf32>
    %908 = vector.extract_strided_slice %898 {offsets = [0, 128], sizes = [8, 128], strides = [1, 1]} : vector<8x384xf32> to vector<8x128xf32>
    %909 = arith.addf %907, %908 : vector<8x128xf32>
    %910 = arith.negf %909 : vector<8x128xf32>
    %911 = math.exp %910 : vector<8x128xf32>
    %cst_249 = arith.constant 1.000000e+00 : f32
    %912 = vector.broadcast %cst_249 : f32 to vector<8x128xf32>
    %913 = arith.addf %912, %911 : vector<8x128xf32>
    %914 = arith.divf %912, %913 : vector<8x128xf32>
    %915 = vector.extract_strided_slice %894 {offsets = [0, 256], sizes = [8, 128], strides = [1, 1]} : vector<8x384xf32> to vector<8x128xf32>
    %916 = vector.extract_strided_slice %898 {offsets = [0, 256], sizes = [8, 128], strides = [1, 1]} : vector<8x384xf32> to vector<8x128xf32>
    %917 = arith.mulf %906, %916 : vector<8x128xf32>
    %918 = arith.addf %915, %917 : vector<8x128xf32>
    %919 = math.tanh %918 : vector<8x128xf32>
    %cst_250 = arith.constant 1.000000e+00 : f32
    %920 = vector.broadcast %cst_250 : f32 to vector<8x128xf32>
    %921 = arith.subf %920, %914 : vector<8x128xf32>
    %922 = arith.mulf %921, %919 : vector<8x128xf32>
    %923 = arith.mulf %914, %893 : vector<8x128xf32>
    %924 = arith.addf %922, %923 : vector<8x128xf32>
    %c32_251 = arith.constant 32 : index
    %c0_252 = arith.constant 0 : index
    %925 = vector.load %arg10[%c32_251, %c0_252] : memref<64x384xf32, #tpu.memory_space<vmem>>, vector<8x384xf32>
    %926 = vector.extract_strided_slice %924 {offsets = [0, 0], sizes = [8, 32], strides = [1, 1]} : vector<8x128xf32> to vector<8x32xf32>
    %cst_253 = arith.constant dense<0.000000e+00> : vector<8x384xf32>
    %927 = tpu.matmul %926, %816, %cst_253 {dimension_numbers = #tpu.dot_dimension_numbers<[1], [0], [0], [1], [0, 0, 1, 1], [], []>} : vector<8x32xf32>, vector<32x384xf32>, vector<8x384xf32> -> vector<8x384xf32>
    %928 = vector.broadcast %820 : vector<1x384xf32> to vector<8x384xf32>
    %929 = arith.addf %927, %928 : vector<8x384xf32>
    %930 = vector.extract_strided_slice %925 {offsets = [0, 0], sizes = [8, 128], strides = [1, 1]} : vector<8x384xf32> to vector<8x128xf32>
    %931 = vector.extract_strided_slice %929 {offsets = [0, 0], sizes = [8, 128], strides = [1, 1]} : vector<8x384xf32> to vector<8x128xf32>
    %932 = arith.addf %930, %931 : vector<8x128xf32>
    %933 = arith.negf %932 : vector<8x128xf32>
    %934 = math.exp %933 : vector<8x128xf32>
    %cst_254 = arith.constant 1.000000e+00 : f32
    %935 = vector.broadcast %cst_254 : f32 to vector<8x128xf32>
    %936 = arith.addf %935, %934 : vector<8x128xf32>
    %937 = arith.divf %935, %936 : vector<8x128xf32>
    %938 = vector.extract_strided_slice %925 {offsets = [0, 128], sizes = [8, 128], strides = [1, 1]} : vector<8x384xf32> to vector<8x128xf32>
    %939 = vector.extract_strided_slice %929 {offsets = [0, 128], sizes = [8, 128], strides = [1, 1]} : vector<8x384xf32> to vector<8x128xf32>
    %940 = arith.addf %938, %939 : vector<8x128xf32>
    %941 = arith.negf %940 : vector<8x128xf32>
    %942 = math.exp %941 : vector<8x128xf32>
    %cst_255 = arith.constant 1.000000e+00 : f32
    %943 = vector.broadcast %cst_255 : f32 to vector<8x128xf32>
    %944 = arith.addf %943, %942 : vector<8x128xf32>
    %945 = arith.divf %943, %944 : vector<8x128xf32>
    %946 = vector.extract_strided_slice %925 {offsets = [0, 256], sizes = [8, 128], strides = [1, 1]} : vector<8x384xf32> to vector<8x128xf32>
    %947 = vector.extract_strided_slice %929 {offsets = [0, 256], sizes = [8, 128], strides = [1, 1]} : vector<8x384xf32> to vector<8x128xf32>
    %948 = arith.mulf %937, %947 : vector<8x128xf32>
    %949 = arith.addf %946, %948 : vector<8x128xf32>
    %950 = math.tanh %949 : vector<8x128xf32>
    %cst_256 = arith.constant 1.000000e+00 : f32
    %951 = vector.broadcast %cst_256 : f32 to vector<8x128xf32>
    %952 = arith.subf %951, %945 : vector<8x128xf32>
    %953 = arith.mulf %952, %950 : vector<8x128xf32>
    %954 = arith.mulf %945, %924 : vector<8x128xf32>
    %955 = arith.addf %953, %954 : vector<8x128xf32>
    %c24_257 = arith.constant 24 : index
    %c0_258 = arith.constant 0 : index
    %956 = vector.load %arg10[%c24_257, %c0_258] : memref<64x384xf32, #tpu.memory_space<vmem>>, vector<8x384xf32>
    %957 = vector.extract_strided_slice %955 {offsets = [0, 0], sizes = [8, 32], strides = [1, 1]} : vector<8x128xf32> to vector<8x32xf32>
    %cst_259 = arith.constant dense<0.000000e+00> : vector<8x384xf32>
    %958 = tpu.matmul %957, %816, %cst_259 {dimension_numbers = #tpu.dot_dimension_numbers<[1], [0], [0], [1], [0, 0, 1, 1], [], []>} : vector<8x32xf32>, vector<32x384xf32>, vector<8x384xf32> -> vector<8x384xf32>
    %959 = vector.broadcast %820 : vector<1x384xf32> to vector<8x384xf32>
    %960 = arith.addf %958, %959 : vector<8x384xf32>
    %961 = vector.extract_strided_slice %956 {offsets = [0, 0], sizes = [8, 128], strides = [1, 1]} : vector<8x384xf32> to vector<8x128xf32>
    %962 = vector.extract_strided_slice %960 {offsets = [0, 0], sizes = [8, 128], strides = [1, 1]} : vector<8x384xf32> to vector<8x128xf32>
    %963 = arith.addf %961, %962 : vector<8x128xf32>
    %964 = arith.negf %963 : vector<8x128xf32>
    %965 = math.exp %964 : vector<8x128xf32>
    %cst_260 = arith.constant 1.000000e+00 : f32
    %966 = vector.broadcast %cst_260 : f32 to vector<8x128xf32>
    %967 = arith.addf %966, %965 : vector<8x128xf32>
    %968 = arith.divf %966, %967 : vector<8x128xf32>
    %969 = vector.extract_strided_slice %956 {offsets = [0, 128], sizes = [8, 128], strides = [1, 1]} : vector<8x384xf32> to vector<8x128xf32>
    %970 = vector.extract_strided_slice %960 {offsets = [0, 128], sizes = [8, 128], strides = [1, 1]} : vector<8x384xf32> to vector<8x128xf32>
    %971 = arith.addf %969, %970 : vector<8x128xf32>
    %972 = arith.negf %971 : vector<8x128xf32>
    %973 = math.exp %972 : vector<8x128xf32>
    %cst_261 = arith.constant 1.000000e+00 : f32
    %974 = vector.broadcast %cst_261 : f32 to vector<8x128xf32>
    %975 = arith.addf %974, %973 : vector<8x128xf32>
    %976 = arith.divf %974, %975 : vector<8x128xf32>
    %977 = vector.extract_strided_slice %956 {offsets = [0, 256], sizes = [8, 128], strides = [1, 1]} : vector<8x384xf32> to vector<8x128xf32>
    %978 = vector.extract_strided_slice %960 {offsets = [0, 256], sizes = [8, 128], strides = [1, 1]} : vector<8x384xf32> to vector<8x128xf32>
    %979 = arith.mulf %968, %978 : vector<8x128xf32>
    %980 = arith.addf %977, %979 : vector<8x128xf32>
    %981 = math.tanh %980 : vector<8x128xf32>
    %cst_262 = arith.constant 1.000000e+00 : f32
    %982 = vector.broadcast %cst_262 : f32 to vector<8x128xf32>
    %983 = arith.subf %982, %976 : vector<8x128xf32>
    %984 = arith.mulf %983, %981 : vector<8x128xf32>
    %985 = arith.mulf %976, %955 : vector<8x128xf32>
    %986 = arith.addf %984, %985 : vector<8x128xf32>
    %c16_263 = arith.constant 16 : index
    %c0_264 = arith.constant 0 : index
    %987 = vector.load %arg10[%c16_263, %c0_264] : memref<64x384xf32, #tpu.memory_space<vmem>>, vector<8x384xf32>
    %988 = vector.extract_strided_slice %986 {offsets = [0, 0], sizes = [8, 32], strides = [1, 1]} : vector<8x128xf32> to vector<8x32xf32>
    %cst_265 = arith.constant dense<0.000000e+00> : vector<8x384xf32>
    %989 = tpu.matmul %988, %816, %cst_265 {dimension_numbers = #tpu.dot_dimension_numbers<[1], [0], [0], [1], [0, 0, 1, 1], [], []>} : vector<8x32xf32>, vector<32x384xf32>, vector<8x384xf32> -> vector<8x384xf32>
    %990 = vector.broadcast %820 : vector<1x384xf32> to vector<8x384xf32>
    %991 = arith.addf %989, %990 : vector<8x384xf32>
    %992 = vector.extract_strided_slice %987 {offsets = [0, 0], sizes = [8, 128], strides = [1, 1]} : vector<8x384xf32> to vector<8x128xf32>
    %993 = vector.extract_strided_slice %991 {offsets = [0, 0], sizes = [8, 128], strides = [1, 1]} : vector<8x384xf32> to vector<8x128xf32>
    %994 = arith.addf %992, %993 : vector<8x128xf32>
    %995 = arith.negf %994 : vector<8x128xf32>
    %996 = math.exp %995 : vector<8x128xf32>
    %cst_266 = arith.constant 1.000000e+00 : f32
    %997 = vector.broadcast %cst_266 : f32 to vector<8x128xf32>
    %998 = arith.addf %997, %996 : vector<8x128xf32>
    %999 = arith.divf %997, %998 : vector<8x128xf32>
    %1000 = vector.extract_strided_slice %987 {offsets = [0, 128], sizes = [8, 128], strides = [1, 1]} : vector<8x384xf32> to vector<8x128xf32>
    %1001 = vector.extract_strided_slice %991 {offsets = [0, 128], sizes = [8, 128], strides = [1, 1]} : vector<8x384xf32> to vector<8x128xf32>
    %1002 = arith.addf %1000, %1001 : vector<8x128xf32>
    %1003 = arith.negf %1002 : vector<8x128xf32>
    %1004 = math.exp %1003 : vector<8x128xf32>
    %cst_267 = arith.constant 1.000000e+00 : f32
    %1005 = vector.broadcast %cst_267 : f32 to vector<8x128xf32>
    %1006 = arith.addf %1005, %1004 : vector<8x128xf32>
    %1007 = arith.divf %1005, %1006 : vector<8x128xf32>
    %1008 = vector.extract_strided_slice %987 {offsets = [0, 256], sizes = [8, 128], strides = [1, 1]} : vector<8x384xf32> to vector<8x128xf32>
    %1009 = vector.extract_strided_slice %991 {offsets = [0, 256], sizes = [8, 128], strides = [1, 1]} : vector<8x384xf32> to vector<8x128xf32>
    %1010 = arith.mulf %999, %1009 : vector<8x128xf32>
    %1011 = arith.addf %1008, %1010 : vector<8x128xf32>
    %1012 = math.tanh %1011 : vector<8x128xf32>
    %cst_268 = arith.constant 1.000000e+00 : f32
    %1013 = vector.broadcast %cst_268 : f32 to vector<8x128xf32>
    %1014 = arith.subf %1013, %1007 : vector<8x128xf32>
    %1015 = arith.mulf %1014, %1012 : vector<8x128xf32>
    %1016 = arith.mulf %1007, %986 : vector<8x128xf32>
    %1017 = arith.addf %1015, %1016 : vector<8x128xf32>
    %c8_269 = arith.constant 8 : index
    %c0_270 = arith.constant 0 : index
    %1018 = vector.load %arg10[%c8_269, %c0_270] : memref<64x384xf32, #tpu.memory_space<vmem>>, vector<8x384xf32>
    %1019 = vector.extract_strided_slice %1017 {offsets = [0, 0], sizes = [8, 32], strides = [1, 1]} : vector<8x128xf32> to vector<8x32xf32>
    %cst_271 = arith.constant dense<0.000000e+00> : vector<8x384xf32>
    %1020 = tpu.matmul %1019, %816, %cst_271 {dimension_numbers = #tpu.dot_dimension_numbers<[1], [0], [0], [1], [0, 0, 1, 1], [], []>} : vector<8x32xf32>, vector<32x384xf32>, vector<8x384xf32> -> vector<8x384xf32>
    %1021 = vector.broadcast %820 : vector<1x384xf32> to vector<8x384xf32>
    %1022 = arith.addf %1020, %1021 : vector<8x384xf32>
    %1023 = vector.extract_strided_slice %1018 {offsets = [0, 0], sizes = [8, 128], strides = [1, 1]} : vector<8x384xf32> to vector<8x128xf32>
    %1024 = vector.extract_strided_slice %1022 {offsets = [0, 0], sizes = [8, 128], strides = [1, 1]} : vector<8x384xf32> to vector<8x128xf32>
    %1025 = arith.addf %1023, %1024 : vector<8x128xf32>
    %1026 = arith.negf %1025 : vector<8x128xf32>
    %1027 = math.exp %1026 : vector<8x128xf32>
    %cst_272 = arith.constant 1.000000e+00 : f32
    %1028 = vector.broadcast %cst_272 : f32 to vector<8x128xf32>
    %1029 = arith.addf %1028, %1027 : vector<8x128xf32>
    %1030 = arith.divf %1028, %1029 : vector<8x128xf32>
    %1031 = vector.extract_strided_slice %1018 {offsets = [0, 128], sizes = [8, 128], strides = [1, 1]} : vector<8x384xf32> to vector<8x128xf32>
    %1032 = vector.extract_strided_slice %1022 {offsets = [0, 128], sizes = [8, 128], strides = [1, 1]} : vector<8x384xf32> to vector<8x128xf32>
    %1033 = arith.addf %1031, %1032 : vector<8x128xf32>
    %1034 = arith.negf %1033 : vector<8x128xf32>
    %1035 = math.exp %1034 : vector<8x128xf32>
    %cst_273 = arith.constant 1.000000e+00 : f32
    %1036 = vector.broadcast %cst_273 : f32 to vector<8x128xf32>
    %1037 = arith.addf %1036, %1035 : vector<8x128xf32>
    %1038 = arith.divf %1036, %1037 : vector<8x128xf32>
    %1039 = vector.extract_strided_slice %1018 {offsets = [0, 256], sizes = [8, 128], strides = [1, 1]} : vector<8x384xf32> to vector<8x128xf32>
    %1040 = vector.extract_strided_slice %1022 {offsets = [0, 256], sizes = [8, 128], strides = [1, 1]} : vector<8x384xf32> to vector<8x128xf32>
    %1041 = arith.mulf %1030, %1040 : vector<8x128xf32>
    %1042 = arith.addf %1039, %1041 : vector<8x128xf32>
    %1043 = math.tanh %1042 : vector<8x128xf32>
    %cst_274 = arith.constant 1.000000e+00 : f32
    %1044 = vector.broadcast %cst_274 : f32 to vector<8x128xf32>
    %1045 = arith.subf %1044, %1038 : vector<8x128xf32>
    %1046 = arith.mulf %1045, %1043 : vector<8x128xf32>
    %1047 = arith.mulf %1038, %1017 : vector<8x128xf32>
    %1048 = arith.addf %1046, %1047 : vector<8x128xf32>
    %c0_275 = arith.constant 0 : index
    %c0_276 = arith.constant 0 : index
    %1049 = vector.load %arg10[%c0_275, %c0_276] : memref<64x384xf32, #tpu.memory_space<vmem>>, vector<8x384xf32>
    %1050 = vector.extract_strided_slice %1048 {offsets = [0, 0], sizes = [8, 32], strides = [1, 1]} : vector<8x128xf32> to vector<8x32xf32>
    %cst_277 = arith.constant dense<0.000000e+00> : vector<8x384xf32>
    %1051 = tpu.matmul %1050, %816, %cst_277 {dimension_numbers = #tpu.dot_dimension_numbers<[1], [0], [0], [1], [0, 0, 1, 1], [], []>} : vector<8x32xf32>, vector<32x384xf32>, vector<8x384xf32> -> vector<8x384xf32>
    %1052 = vector.broadcast %820 : vector<1x384xf32> to vector<8x384xf32>
    %1053 = arith.addf %1051, %1052 : vector<8x384xf32>
    %1054 = vector.extract_strided_slice %1049 {offsets = [0, 0], sizes = [8, 128], strides = [1, 1]} : vector<8x384xf32> to vector<8x128xf32>
    %1055 = vector.extract_strided_slice %1053 {offsets = [0, 0], sizes = [8, 128], strides = [1, 1]} : vector<8x384xf32> to vector<8x128xf32>
    %1056 = arith.addf %1054, %1055 : vector<8x128xf32>
    %1057 = arith.negf %1056 : vector<8x128xf32>
    %1058 = math.exp %1057 : vector<8x128xf32>
    %cst_278 = arith.constant 1.000000e+00 : f32
    %1059 = vector.broadcast %cst_278 : f32 to vector<8x128xf32>
    %1060 = arith.addf %1059, %1058 : vector<8x128xf32>
    %1061 = arith.divf %1059, %1060 : vector<8x128xf32>
    %1062 = vector.extract_strided_slice %1049 {offsets = [0, 128], sizes = [8, 128], strides = [1, 1]} : vector<8x384xf32> to vector<8x128xf32>
    %1063 = vector.extract_strided_slice %1053 {offsets = [0, 128], sizes = [8, 128], strides = [1, 1]} : vector<8x384xf32> to vector<8x128xf32>
    %1064 = arith.addf %1062, %1063 : vector<8x128xf32>
    %1065 = arith.negf %1064 : vector<8x128xf32>
    %1066 = math.exp %1065 : vector<8x128xf32>
    %cst_279 = arith.constant 1.000000e+00 : f32
    %1067 = vector.broadcast %cst_279 : f32 to vector<8x128xf32>
    %1068 = arith.addf %1067, %1066 : vector<8x128xf32>
    %1069 = arith.divf %1067, %1068 : vector<8x128xf32>
    %1070 = vector.extract_strided_slice %1049 {offsets = [0, 256], sizes = [8, 128], strides = [1, 1]} : vector<8x384xf32> to vector<8x128xf32>
    %1071 = vector.extract_strided_slice %1053 {offsets = [0, 256], sizes = [8, 128], strides = [1, 1]} : vector<8x384xf32> to vector<8x128xf32>
    %1072 = arith.mulf %1061, %1071 : vector<8x128xf32>
    %1073 = arith.addf %1070, %1072 : vector<8x128xf32>
    %1074 = math.tanh %1073 : vector<8x128xf32>
    %cst_280 = arith.constant 1.000000e+00 : f32
    %1075 = vector.broadcast %cst_280 : f32 to vector<8x128xf32>
    %1076 = arith.subf %1075, %1069 : vector<8x128xf32>
    %1077 = arith.mulf %1076, %1074 : vector<8x128xf32>
    %1078 = arith.mulf %1069, %1048 : vector<8x128xf32>
    %1079 = arith.addf %1077, %1078 : vector<8x128xf32>
    %1080 = vector.extract_strided_slice %1079 {offsets = [0, 0], sizes = [8, 32], strides = [1, 1]} : vector<8x128xf32> to vector<8x32xf32>
    %c0_281 = arith.constant 0 : index
    %c0_282 = arith.constant 0 : index
    %c0_283 = arith.constant 0 : index
    %1081 = vector.load %arg7[%c0_281, %c0_282, %c0_283] : memref<2x32x4xf32, #tpu.memory_space<vmem>>, vector<1x32x4xf32>
    %1082 = vector.shape_cast %1081 : vector<1x32x4xf32> to vector<32x4xf32>
    %cst_284 = arith.constant dense<0.000000e+00> : vector<8x4xf32>
    %1083 = tpu.matmul %814, %1082, %cst_284 {dimension_numbers = #tpu.dot_dimension_numbers<[1], [0], [0], [1], [0, 0, 1, 1], [], []>} : vector<8x32xf32>, vector<32x4xf32>, vector<8x4xf32> -> vector<8x4xf32>
    %c1_285 = arith.constant 1 : index
    %c0_286 = arith.constant 0 : index
    %c0_287 = arith.constant 0 : index
    %1084 = vector.load %arg7[%c1_285, %c0_286, %c0_287] : memref<2x32x4xf32, #tpu.memory_space<vmem>>, vector<1x32x4xf32>
    %1085 = vector.shape_cast %1084 : vector<1x32x4xf32> to vector<32x4xf32>
    %cst_288 = arith.constant dense<0.000000e+00> : vector<8x4xf32>
    %1086 = tpu.matmul %1080, %1085, %cst_288 {dimension_numbers = #tpu.dot_dimension_numbers<[1], [0], [0], [1], [0, 0, 1, 1], [], []>} : vector<8x32xf32>, vector<32x4xf32>, vector<8x4xf32> -> vector<8x4xf32>
    %1087 = arith.addf %1083, %1086 : vector<8x4xf32>
    %c0_289 = arith.constant 0 : index
    %c0_290 = arith.constant 0 : index
    %1088 = vector.load %arg8[%c0_289, %c0_290] : memref<1x4xf32, #tpu.memory_space<vmem>>, vector<1x4xf32>
    %1089 = vector.broadcast %1088 : vector<1x4xf32> to vector<8x4xf32>
    %1090 = arith.addf %1087, %1089 : vector<8x4xf32>
    %cst_291 = arith.constant dense<0xFF800000> : vector<8xf32>
    %1091 = vector.multi_reduction <maximumf>, %1090, %cst_291 [1] : vector<8x4xf32> to vector<8xf32>
    %1092 = vector.shape_cast %1091 : vector<8xf32> to vector<8x1xf32>
    %1093 = vector.broadcast %1092 : vector<8x1xf32> to vector<8x4xf32>
    %1094 = arith.subf %1090, %1093 : vector<8x4xf32>
    %1095 = math.exp %1094 : vector<8x4xf32>
    %cst_292 = arith.constant dense<0.000000e+00> : vector<8xf32>
    %1096 = vector.multi_reduction <add>, %1095, %cst_292 [1] : vector<8x4xf32> to vector<8xf32>
    %1097 = vector.shape_cast %1096 : vector<8xf32> to vector<8x1xf32>
    %1098 = math.log %1097 : vector<8x1xf32>
    %1099 = vector.broadcast %1098 : vector<8x1xf32> to vector<8x4xf32>
    %1100 = arith.subf %1094, %1099 : vector<8x4xf32>
    %1101 = vector.extract_strided_slice %1100 {offsets = [0, 0], sizes = [2, 4], strides = [1, 1]} : vector<8x4xf32> to vector<2x4xf32>
    %c0_293 = arith.constant 0 : index
    %c0_294 = arith.constant 0 : index
    %1102 = vector.load %arg9[%c0_293, %c0_294] : memref<2x4xf32, #tpu.memory_space<vmem>>, vector<2x4xf32>
    tpu.vector_store %arg9[%c0_293, %c0_294], %1101 {strides = array<i32>} : memref<2x4xf32, #tpu.memory_space<vmem>>, vector<2x4xf32>,
    return
  }
}

</mosaic_0001>

<llo_original>
// kernel: rnn_forward.1
$region0: #{rnn_forward.1}
  #allocation0 [shape = 'u32[]', space=smem, size = 0x4, offset = 0x4, fixed_abs, tag = 'smem constant byte address 0x4 - core index']
  #allocation1 [shape = 'u32[144,128]{1,0:T(1,128)}', space=vmem, size = 0x12000, scoped, tag = 'internal scratch']
  #allocation2 [shape = 'f32[64,384]{1,0:T(8,128)}', space=vmem, size = 0x18000, scoped, tag = 'scratch operand']
  %s0 = inlined_call_operand.vmem [shape: s32[64,1], index: 0, kind: input, shape index: {}]
  %s1 = inlined_call_operand.vmem [shape: f32[50,16], index: 1, kind: input, shape index: {}]
  %s2 = inlined_call_operand.vmem [shape: f32[2,16,384], index: 2, kind: input, shape index: {}]
  %s3 = inlined_call_operand.hbm [shape: f32[1,2,2,32,384], index: 3, kind: input, shape index: {}]
  %s4 = inlined_call_operand.hbm [shape: f32[2,2,32,384], index: 4, kind: input, shape index: {}]
  %s5 = inlined_call_operand.vmem [shape: f32[2,2,1,384], index: 5, kind: input, shape index: {}]
  %s6 = inlined_call_operand.vmem [shape: f32[2,2,1,384], index: 6, kind: input, shape index: {}]
  %s7 = inlined_call_operand.vmem [shape: f32[2,32,4], index: 7, kind: input, shape index: {}]
  %s8 = inlined_call_operand.vmem [shape: f32[1,4], index: 8, kind: input, shape index: {}]
  %s9 = inlined_call_operand.hbm [shape: f32[2,4], index: 9, kind: output, shape index: {}]
  %s10 = sld [smem:[#allocation0]]
  $region54: #{rnn_forward.1} parent=0
    _
  %s12 = ssub.s32 1, %s10
  %s13 = scalar_select 0, %s12, %s10
  $region1: #{rnn_forward.1} parent=0
    #allocation3 [shape = 'u8[196608]{0}', space=vmem, size = 0x30000, scoped, tag = 'input window, operand 3, single buffered']
    #allocation4 [shape = 's32[1]{0}', space=sflag, size = 0x4, scoped, tag = 'scoped memory for rnn_forward.1']
    #allocation5 [shape = 's32[1]{0}', space=sflag, size = 0x4, scoped, tag = 'scoped memory for rnn_forward.1']
    #allocation6 [shape = 'u8[196608]{0}', space=vmem, size = 0x30000, scoped, tag = 'input window, operand 4, single buffered']
    #allocation7 [shape = 's32[1]{0}', space=sflag, size = 0x4, scoped, tag = 'scoped memory for rnn_forward.1']
    #allocation8 [shape = 'u8[1024]{0}', space=vmem, size = 0x400, scoped, tag = 'output window, operand 0, single buffered']
    %14 = vsyncpa [#allocation4], 0
    %15 = vsyncpa [#allocation7], 0
    %16 = vsyncpa [#allocation5], 0
    // Predicated region
    $region2: #{rnn_forward.1} parent=1 // pred_check
      _
    $region3: #{rnn_forward.1} parent=1 // pred_check_branch
      %18 = sbr.rel (0) target = $region5
    $region4: #{rnn_forward.1} parent=1 // pred_region
      _
    $region5: #{rnn_forward.1} parent=1 // pred_fallthru
      _
    // Predicated region
    $region6: #{rnn_forward.1} parent=1 // pred_check
      _
    $region7: #{rnn_forward.1} parent=1 // pred_check_branch
      %20 = sbr.rel (0) target = $region9
    $region8: #{rnn_forward.1} parent=1 // pred_region
      _
    $region9: #{rnn_forward.1} parent=1 // pred_fallthru
      _
    // Predicated region
    $region10: #{rnn_forward.1} parent=1 // pred_check
      _
    $region11: #{rnn_forward.1} parent=1 // pred_check_branch
      %22 = sbr.rel (0) target = $region13
    $region12: #{rnn_forward.1} parent=1 // pred_region
      _
    $region13: #{rnn_forward.1} parent=1 // pred_fallthru
      _
    // Predicated region
    $region14: #{rnn_forward.1} parent=1 // pred_check
      _
    $region15: #{rnn_forward.1} parent=1 // pred_check_branch
      %24 = sbr.rel (0) target = $region17
    $region16: #{rnn_forward.1} parent=1 // pred_region
      %s26 = ssub.s32 6144, 6144
      %27 = vsyncadd [#allocation4], %s26
      %s28 = sshll.u32 [#allocation3], 4
      %s29 = int_to_ptr.vmem [resolvable:$true] %s28
      %34 = dma.hbm_to_vmem [thread:$0]  %s3, 6144, %s29, [#allocation4], 384, 384, 24
    $region17: #{rnn_forward.1} parent=1 // pred_fallthru
      _
    // Predicated region
    $region18: #{rnn_forward.1} parent=1 // pred_check
      _
    $region19: #{rnn_forward.1} parent=1 // pred_check_branch
      %36 = sbr.rel (0) target = $region21
    $region20: #{rnn_forward.1} parent=1 // pred_region
      %s38 = ssub.s32 6144, 6144
      %39 = vsyncadd [#allocation7], %s38
      %s40 = sshll.u32 [#allocation6], 4
      %s41 = int_to_ptr.vmem [resolvable:$true] %s40
      %46 = dma.hbm_to_vmem [thread:$0]  %s4, 6144, %s41, [#allocation7], 384, 384, 24
    $region21: #{rnn_forward.1} parent=1 // pred_fallthru
      _
    // Predicated region
    $region22: #{rnn_forward.1} parent=1 // pred_check
      _
    $region23: #{rnn_forward.1} parent=1 // pred_check_branch
      %48 = sbr.rel (0) target = $region25
    $region24: #{rnn_forward.1} parent=1 // pred_region
      _
    $region25: #{rnn_forward.1} parent=1 // pred_fallthru
      _
    // Predicated region
    $region26: #{rnn_forward.1} parent=1 // pred_check
      _
    $region27: #{rnn_forward.1} parent=1 // pred_check_branch
      %50 = sbr.rel (0) target = $region29
    $region28: #{rnn_forward.1} parent=1 // pred_region
      _
    $region29: #{rnn_forward.1} parent=1 // pred_fallthru
      _
    // Predicated region
    $region30: #{rnn_forward.1} parent=1 // pred_check
      _
    $region31: #{rnn_forward.1} parent=1 // pred_check_branch
      %52 = sbr.rel (0) target = $region33
    $region32: #{rnn_forward.1} parent=1 // pred_region
      _
    $region33: #{rnn_forward.1} parent=1 // pred_fallthru
      _
    // Predicated region
    $region34: #{rnn_forward.1} parent=1 // pred_check
      _
    $region35: #{rnn_forward.1} parent=1 // pred_check_branch
      %54 = sbr.rel (0) target = $region37
    $region36: #{rnn_forward.1} parent=1 // pred_region
      _
    $region37: #{rnn_forward.1} parent=1 // pred_fallthru
      _
    // Predicated region
    $region38: #{rnn_forward.1} parent=1 // pred_check
      _
    $region39: #{rnn_forward.1} parent=1 // pred_check_branch
      %56 = sbr.rel (0) target = $region41
    $region40: #{rnn_forward.1} parent=1 // pred_region
      %57 = dma.done [#allocation4], 6144
    $region41: #{rnn_forward.1} parent=1 // pred_fallthru
      _
    // Predicated region
    $region42: #{rnn_forward.1} parent=1 // pred_check
      _
    $region43: #{rnn_forward.1} parent=1 // pred_check_branch
      %59 = sbr.rel (0) target = $region45
    $region44: #{rnn_forward.1} parent=1 // pred_region
      %60 = dma.done [#allocation7], 6144
    $region45: #{rnn_forward.1} parent=1 // pred_fallthru
      _
    %v61 = vld [vmem:[%s0] sm:$0xff]
    %v62 = vld [vmem:[%s0 + $0x8] sm:$0xff]
    %v63 = vld [vmem:[%s0 + $0x10] sm:$0xff]
    %v64 = vld [vmem:[%s0 + $0x18] sm:$0xff]
    %v65 = vld [vmem:[%s0 + $0x20] sm:$0xff]
    %v66 = vld [vmem:[%s0 + $0x28] sm:$0xff]
    %v67 = vld [vmem:[%s0 + $0x30] sm:$0xff]
    %v68 = vld [vmem:[%s0 + $0x38] sm:$0xff]
    %v69 = vlaneseq
    %v70 = vand.u32 %v69, 127
    %71 = vset.pattern.permute.xlu0 0
    %72 = vperm.xlu0 %71, %v61
    %v73 = vpop.permute.xlu0 %72
    %74 = vset.pattern.permute.xlu0 0
    %75 = vperm.xlu0 %74, %v62
    %v76 = vpop.permute.xlu0 %75
    %77 = vset.pattern.permute.xlu0 0
    %78 = vperm.xlu0 %77, %v63
    %v79 = vpop.permute.xlu0 %78
    %80 = vset.pattern.permute.xlu0 0
    %81 = vperm.xlu0 %80, %v64
    %v82 = vpop.permute.xlu0 %81
    %83 = vset.pattern.permute.xlu0 0
    %84 = vperm.xlu0 %83, %v65
    %v85 = vpop.permute.xlu0 %84
    %86 = vset.pattern.permute.xlu0 0
    %87 = vperm.xlu0 %86, %v66
    %v88 = vpop.permute.xlu0 %87
    %89 = vset.pattern.permute.xlu0 0
    %90 = vperm.xlu0 %89, %v67
    %v91 = vpop.permute.xlu0 %90
    %92 = vset.pattern.permute.xlu0 0
    %93 = vperm.xlu0 %92, %v68
    %v94 = vpop.permute.xlu0 %93
    %vm95 = vcmp.eq.s32.totalorder %v70, %v73
    %vm96 = vcmp.eq.s32.totalorder %v70, %v76
    %vm97 = vcmp.eq.s32.totalorder %v70, %v79
    %vm98 = vcmp.eq.s32.totalorder %v70, %v82
    %vm99 = vcmp.eq.s32.totalorder %v70, %v85
    %vm100 = vcmp.eq.s32.totalorder %v70, %v88
    %vm101 = vcmp.eq.s32.totalorder %v70, %v91
    %vm102 = vcmp.eq.s32.totalorder %v70, %v94
    %v103 = vsel %vm95, 1.0, 0.0
    %v104 = vsel %vm96, 1.0, 0.0
    %v105 = vsel %vm97, 1.0, 0.0
    %v106 = vsel %vm98, 1.0, 0.0
    %v107 = vsel %vm99, 1.0, 0.0
    %v108 = vsel %vm100, 1.0, 0.0
    %v109 = vsel %vm101, 1.0, 0.0
    %v110 = vsel %vm102, 1.0, 0.0
    %v111 = vld [vmem:[%s1] sm:$0xff]
    %v112 = vld [vmem:[%s1 + $0x8] sm:$0xff]
    %v113 = vld [vmem:[%s1 + $0x10] sm:$0xff]
    %v114 = vld [vmem:[%s1 + $0x18] sm:$0xff]
    %v115 = vld [vmem:[%s1 + $0x20] sm:$0xff]
    %v116 = vld [vmem:[%s1 + $0x28] sm:$0xff]
    %v117 = vld [vmem:[%s1 + $0x30] sm:$0x3]
    %vm118 = vcmask 408576
    %v120 = vsel %vm118, %v103, 0
    %v123 = vsel %vm118, %v104, 0
    %v126 = vsel %vm118, %v105, 0
    %v129 = vsel %vm118, %v106, 0
    %v132 = vsel %vm118, %v107, 0
    %v135 = vsel %vm118, %v108, 0
    %v138 = vsel %vm118, %v109, 0
    %v141 = vsel %vm118, %v110, 0
    %vm143 = vcmask 1041408
    %v145 = vsel %vm143, %v117, 0
    %147 = vmatprep.subr.mxu0 0.0
    %148 = vmatpush1.msra.mxu0 %v111
    %149 = vmatprep.subr.mxu0 0.0
    %150 = vmatpush1.msra.mxu0 %v112
    %151 = vmatprep.subr.mxu0 0.0
    %152 = vmatpush1.msra.mxu0 %v113
    %153 = vmatprep.subr.mxu0 0.0
    %154 = vmatpush1.msra.mxu0 %v114
    %155 = vmatprep.subr.mxu0 0.0
    %156 = vmatpush1.msra.mxu0 %v115
    %157 = vmatprep.subr.mxu0 0.0
    %158 = vmatpush1.msra.mxu0 %v116
    %159 = vmatprep.subr.mxu0 0.0
    %160 = vmatpush1.msra.mxu0 %v145
    %161 = vmatprep.subr.mxu0 0.0
    %162 = vmatpush1.msra.mxu0 0.0
    %163 = vmatprep.subr.mxu0 0.0
    %164 = vmatpush1.msra.mxu0 0.0
    %165 = vmatprep.subr.mxu0 0.0
    %166 = vmatpush1.msra.mxu0 0.0
    %167 = vmatprep.subr.mxu0 0.0
    %168 = vmatpush1.msra.mxu0 0.0
    %169 = vmatprep.subr.mxu0 0.0
    %170 = vmatpush1.msra.mxu0 0.0
    %171 = vmatprep.subr.mxu0 0.0
    %172 = vmatpush1.msra.mxu0 0.0
    %173 = vmatprep.subr.mxu0 0.0
    %174 = vmatpush1.msra.mxu0 0.0
    %175 = vmatprep.subr.mxu0 0.0
    %176 = vmatpush1.msra.mxu0 0.0
    %177 = vmatprep.subr.mxu0 0.0
    %178 = vmatpush1.msra.mxu0 0.0
    %179 = vmatprep.subr.mxu0 0.0
    %180 = vmatpush1.msra.mxu0 0.0
    %181 = vmatprep.subr.mxu0 0.0
    %182 = vmatpush1.msra.mxu0 0.0
    %183 = vmatprep.subr.mxu0 0.0
    %184 = vmatpush1.msra.mxu0 0.0
    %185 = vmatprep.subr.mxu0 0.0
    %186 = vmatpush1.msra.mxu0 0.0
    %187 = vmatprep.subr.mxu0 0.0
    %188 = vmatpush1.msra.mxu0 0.0
    %189 = vmatprep.subr.mxu0 0.0
    %190 = vmatpush1.msra.mxu0 0.0
    %191 = vmatprep.subr.mxu0 0.0
    %192 = vmatpush1.msra.mxu0 0.0
    %193 = vmatprep.subr.mxu0 0.0
    %194 = vmatpush1.msra.mxu0 0.0
    %195 = vmatprep.subr.mxu0 0.0
    %196 = vmatpush1.msra.mxu0 0.0
    %197 = vmatprep.subr.mxu0 0.0
    %198 = vmatpush1.msra.mxu0 0.0
    %199 = vmatprep.subr.mxu0 0.0
    %200 = vmatpush1.msra.mxu0 0.0
    %201 = vmatprep.subr.mxu0 0.0
    %202 = vmatpush1.msra.mxu0 0.0
    %203 = vmatprep.subr.mxu0 0.0
    %204 = vmatpush1.msra.mxu0 0.0
    %205 = vmatprep.subr.mxu0 0.0
    %206 = vmatpush1.msra.mxu0 0.0
    %207 = vmatprep.subr.mxu0 0.0
    %208 = vmatpush1.msra.mxu0 0.0
    %209 = vmatprep.subr.mxu0 0.0
    %210 = vmatpush1.msra.mxu0 0.0
    %211 = vmatprep.mubr.f32.mxu0 0.0
    %212 = vmatmul.mubr.f32.gmra.mrb[0].mxu0 %v120
    %v213 = vpop.f32.mrb[0].mxu0
    %v214 = vadd.f32 0.0, %v213
    %v215 = vpop.f32.mrb[0].mxu0
    %216 = vmatprep.mubr.f32.mxu0 0.0
    %217 = vmatmul.mubr.f32.gmra.mrb[0].mxu0 %v123
    %v218 = vpop.f32.mrb[0].mxu0
    %v219 = vadd.f32 0.0, %v218
    %v220 = vpop.f32.mrb[0].mxu0
    %221 = vmatprep.mubr.f32.mxu0 0.0
    %222 = vmatmul.mubr.f32.gmra.mrb[0].mxu0 %v126
    %v223 = vpop.f32.mrb[0].mxu0
    %v224 = vadd.f32 0.0, %v223
    %v225 = vpop.f32.mrb[0].mxu0
    %226 = vmatprep.mubr.f32.mxu0 0.0
    %227 = vmatmul.mubr.f32.gmra.mrb[0].mxu0 %v129
    %v228 = vpop.f32.mrb[0].mxu0
    %v229 = vadd.f32 0.0, %v228
    %v230 = vpop.f32.mrb[0].mxu0
    %231 = vmatprep.mubr.f32.mxu0 0.0
    %232 = vmatmul.mubr.f32.gmra.mrb[0].mxu0 %v132
    %v233 = vpop.f32.mrb[0].mxu0
    %v234 = vadd.f32 0.0, %v233
    %v235 = vpop.f32.mrb[0].mxu0
    %236 = vmatprep.mubr.f32.mxu0 0.0
    %237 = vmatmul.mubr.f32.gmra.mrb[0].mxu0 %v135
    %v238 = vpop.f32.mrb[0].mxu0
    %v239 = vadd.f32 0.0, %v238
    %v240 = vpop.f32.mrb[0].mxu0
    %241 = vmatprep.mubr.f32.mxu0 0.0
    %242 = vmatmul.mubr.f32.gmra.mrb[0].mxu0 %v138
    %v243 = vpop.f32.mrb[0].mxu0
    %v244 = vadd.f32 0.0, %v243
    %v245 = vpop.f32.mrb[0].mxu0
    %246 = vmatprep.mubr.f32.mxu0 0.0
    %247 = vmatmul.mubr.f32.gmra.mrb[0].mxu0 %v141
    %v248 = vpop.f32.mrb[0].mxu0
    %v249 = vadd.f32 0.0, %v248
    %v250 = vpop.f32.mrb[0].mxu0
    %251 = vdwg.mxu0
    %v252 = vld [vmem:[#allocation6] sm:$0xff]
    %v253 = vld [vmem:[#allocation6 + $0x8] sm:$0xff]
    %v254 = vld [vmem:[#allocation6 + $0x10] sm:$0xff]
    %v255 = vld [vmem:[#allocation6 + $0x18] sm:$0xff]
    %v256 = vld [vmem:[#allocation6 + $0x20] sm:$0xff]
    %v257 = vld [vmem:[#allocation6 + $0x28] sm:$0xff]
    %v258 = vld [vmem:[#allocation6 + $0x30] sm:$0xff]
    %v259 = vld [vmem:[#allocation6 + $0x38] sm:$0xff]
    %v260 = vld [vmem:[#allocation6 + $0x40] sm:$0xff]
    %v261 = vld [vmem:[#allocation6 + $0x48] sm:$0xff]
    %v262 = vld [vmem:[#allocation6 + $0x50] sm:$0xff]
    %v263 = vld [vmem:[#allocation6 + $0x58] sm:$0xff]
    %v264 = vld [vmem:[%s5] sm:$0x7]
    %v265 = vld [vmem:[%s6] sm:$0x7]
    %v266 = vld [vmem:[%s2] sm:$0xff]
    %v267 = vld [vmem:[%s2 + $0x8] sm:$0xff]
    %v268 = vld [vmem:[%s2 + $0x10] sm:$0xff]
    %v269 = vld [vmem:[%s2 + $0x18] sm:$0xff]
    %v270 = vld [vmem:[%s2 + $0x20] sm:$0xff]
    %v271 = vld [vmem:[%s2 + $0x28] sm:$0xff]
    %v273 = vlaneseq
    %v274 = vshrl.u32 %v273, 7
    %v275 = vsub.s32 0, %v274
    %v276 = vrot.slane %v264, %v275
    %v277 = vlaneseq
    %v278 = vshrl.u32 %v277, 7
    %v279 = vsub.s32 1, %v278
    %v280 = vrot.slane %v264, %v279
    %v281 = vlaneseq
    %v282 = vshrl.u32 %v281, 7
    %v283 = vsub.s32 2, %v282
    %v284 = vrot.slane %v264, %v283
    %vm288 = vcmask 130048
    %v290 = vsel %vm288, %v214, 0
    %v293 = vsel %vm288, %v219, 0
    %v296 = vsel %vm288, %v224, 0
    %v299 = vsel %vm288, %v229, 0
    %v302 = vsel %vm288, %v234, 0
    %v305 = vsel %vm288, %v239, 0
    %v308 = vsel %vm288, %v244, 0
    %v311 = vsel %vm288, %v249, 0
    %313 = vmatprep.subr.mxu0 %v267
    %314 = vmatpush1.msra.mxu0 %v266
    %315 = vmatprep.subr.mxu0 %v270
    %316 = vmatpush1.msra.mxu0 %v269
    %317 = vmatprep.subr.mxu0 0.0
    %318 = vmatpush1.msra.mxu0 0.0
    %319 = vmatprep.subr.mxu0 0.0
    %320 = vmatpush1.msra.mxu0 0.0
    %321 = vmatprep.subr.mxu0 0.0
    %322 = vmatpush1.msra.mxu0 0.0
    %323 = vmatprep.subr.mxu0 0.0
    %324 = vmatpush1.msra.mxu0 0.0
    %325 = vmatprep.subr.mxu0 0.0
    %326 = vmatpush1.msra.mxu0 0.0
    %327 = vmatprep.subr.mxu0 0.0
    %328 = vmatpush1.msra.mxu0 0.0
    %329 = vmatprep.subr.mxu0 0.0
    %330 = vmatpush1.msra.mxu0 0.0
    %331 = vmatprep.subr.mxu0 0.0
    %332 = vmatpush1.msra.mxu0 0.0
    %333 = vmatprep.subr.mxu0 0.0
    %334 = vmatpush1.msra.mxu0 0.0
    %335 = vmatprep.subr.mxu0 0.0
    %336 = vmatpush1.msra.mxu0 0.0
    %337 = vmatprep.subr.mxu0 0.0
    %338 = vmatpush1.msra.mxu0 0.0
    %339 = vmatprep.subr.mxu0 0.0
    %340 = vmatpush1.msra.mxu0 0.0
    %341 = vmatprep.subr.mxu0 0.0
    %342 = vmatpush1.msra.mxu0 0.0
    %343 = vmatprep.subr.mxu0 0.0
    %344 = vmatpush1.msra.mxu0 0.0
    %345 = vmatprep.subr.mxu0 0.0
    %346 = vmatpush1.msra.mxu0 0.0
    %347 = vmatprep.subr.mxu0 0.0
    %348 = vmatpush1.msra.mxu0 0.0
    %349 = vmatprep.subr.mxu0 0.0
    %350 = vmatpush1.msra.mxu0 0.0
    %351 = vmatprep.subr.mxu0 0.0
    %352 = vmatpush1.msra.mxu0 0.0
    %353 = vmatprep.subr.mxu0 0.0
    %354 = vmatpush1.msra.mxu0 0.0
    %355 = vmatprep.subr.mxu0 0.0
    %356 = vmatpush1.msra.mxu0 0.0
    %357 = vmatprep.subr.mxu0 0.0
    %358 = vmatpush1.msra.mxu0 0.0
    %359 = vmatprep.subr.mxu0 0.0
    %360 = vmatpush1.msra.mxu0 0.0
    %361 = vmatprep.subr.mxu0 0.0
    %362 = vmatpush1.msra.mxu0 0.0
    %363 = vmatprep.subr.mxu0 0.0
    %364 = vmatpush1.msra.mxu0 0.0
    %365 = vmatprep.subr.mxu0 0.0
    %366 = vmatpush1.msra.mxu0 0.0
    %367 = vmatprep.subr.mxu0 0.0
    %368 = vmatpush1.msra.mxu0 0.0
    %369 = vmatprep.subr.mxu0 0.0
    %370 = vmatpush1.msra.mxu0 0.0
    %371 = vmatprep.subr.mxu0 0.0
    %372 = vmatpush1.msra.mxu0 0.0
    %373 = vmatprep.subr.mxu0 0.0
    %374 = vmatpush1.msra.mxu0 0.0
    %375 = vmatprep.subr.mxu0 0.0
    %376 = vmatpush1.msra.mxu0 0.0
    %377 = vmatprep.mubr.f32.mxu0 0.0
    %378 = vmatmul.mubr.f32.gmra.mrb[0].mxu0 %v290
    %v379 = vpop.f32.mrb[0].mxu0
    %v380 = vadd.f32 %v276, %v379
    %v381 = vpop.f32.mrb[0].mxu0
    %v382 = vadd.f32 %v280, %v381
    %383 = vmatprep.mubr.f32.mxu0 0.0
    %384 = vmatmul.mubr.f32.gmra.mrb[0].mxu0 %v293
    %v385 = vpop.f32.mrb[0].mxu0
    %v386 = vadd.f32 %v276, %v385
    %v387 = vpop.f32.mrb[0].mxu0
    %v388 = vadd.f32 %v280, %v387
    %389 = vmatprep.mubr.f32.mxu0 0.0
    %390 = vmatmul.mubr.f32.gmra.mrb[0].mxu0 %v296
    %v391 = vpop.f32.mrb[0].mxu0
    %v392 = vadd.f32 %v276, %v391
    %v393 = vpop.f32.mrb[0].mxu0
    %v394 = vadd.f32 %v280, %v393
    %395 = vmatprep.mubr.f32.mxu0 0.0
    %396 = vmatmul.mubr.f32.gmra.mrb[0].mxu0 %v299
    %v397 = vpop.f32.mrb[0].mxu0
    %v398 = vadd.f32 %v276, %v397
    %v399 = vpop.f32.mrb[0].mxu0
    %v400 = vadd.f32 %v280, %v399
    %401 = vmatprep.mubr.f32.mxu0 0.0
    %402 = vmatmul.mubr.f32.gmra.mrb[0].mxu0 %v302
    %v403 = vpop.f32.mrb[0].mxu0
    %v404 = vadd.f32 %v276, %v403
    %v405 = vpop.f32.mrb[0].mxu0
    %v406 = vadd.f32 %v280, %v405
    %407 = vmatprep.mubr.f32.mxu0 0.0
    %408 = vmatmul.mubr.f32.gmra.mrb[0].mxu0 %v305
    %v409 = vpop.f32.mrb[0].mxu0
    %v410 = vadd.f32 %v276, %v409
    %v411 = vpop.f32.mrb[0].mxu0
    %v412 = vadd.f32 %v280, %v411
    %413 = vmatprep.mubr.f32.mxu0 0.0
    %414 = vmatmul.mubr.f32.gmra.mrb[0].mxu0 %v308
    %v415 = vpop.f32.mrb[0].mxu0
    %v416 = vadd.f32 %v276, %v415
    %v417 = vpop.f32.mrb[0].mxu0
    %v418 = vadd.f32 %v280, %v417
    %419 = vmatprep.mubr.f32.mxu0 0.0
    %420 = vmatmul.mubr.f32.gmra.mrb[0].mxu0 %v311
    %v421 = vpop.f32.mrb[0].mxu0
    %v422 = vadd.f32 %v276, %v421
    %v423 = vpop.f32.mrb[0].mxu0
    %v424 = vadd.f32 %v280, %v423
    %425 = vdwg.mxu0
    %426 = vmatprep.subr.mxu0 0.0
    %427 = vmatpush1.msra.mxu0 %v268
    %428 = vmatprep.subr.mxu0 0.0
    %429 = vmatpush1.msra.mxu0 %v271
    %430 = vmatprep.subr.mxu0 0.0
    %431 = vmatpush1.msra.mxu0 0.0
    %432 = vmatprep.subr.mxu0 0.0
    %433 = vmatpush1.msra.mxu0 0.0
    %434 = vmatprep.subr.mxu0 0.0
    %435 = vmatpush1.msra.mxu0 0.0
    %436 = vmatprep.subr.mxu0 0.0
    %437 = vmatpush1.msra.mxu0 0.0
    %438 = vmatprep.subr.mxu0 0.0
    %439 = vmatpush1.msra.mxu0 0.0
    %440 = vmatprep.subr.mxu0 0.0
    %441 = vmatpush1.msra.mxu0 0.0
    %442 = vmatprep.subr.mxu0 0.0
    %443 = vmatpush1.msra.mxu0 0.0
    %444 = vmatprep.subr.mxu0 0.0
    %445 = vmatpush1.msra.mxu0 0.0
    %446 = vmatprep.subr.mxu0 0.0
    %447 = vmatpush1.msra.mxu0 0.0
    %448 = vmatprep.subr.mxu0 0.0
    %449 = vmatpush1.msra.mxu0 0.0
    %450 = vmatprep.subr.mxu0 0.0
    %451 = vmatpush1.msra.mxu0 0.0
    %452 = vmatprep.subr.mxu0 0.0
    %453 = vmatpush1.msra.mxu0 0.0
    %454 = vmatprep.subr.mxu0 0.0
    %455 = vmatpush1.msra.mxu0 0.0
    %456 = vmatprep.subr.mxu0 0.0
    %457 = vmatpush1.msra.mxu0 0.0
    %458 = vmatprep.subr.mxu0 0.0
    %459 = vmatpush1.msra.mxu0 0.0
    %460 = vmatprep.subr.mxu0 0.0
    %461 = vmatpush1.msra.mxu0 0.0
    %462 = vmatprep.subr.mxu0 0.0
    %463 = vmatpush1.msra.mxu0 0.0
    %464 = vmatprep.subr.mxu0 0.0
    %465 = vmatpush1.msra.mxu0 0.0
    %466 = vmatprep.subr.mxu0 0.0
    %467 = vmatpush1.msra.mxu0 0.0
    %468 = vmatprep.subr.mxu0 0.0
    %469 = vmatpush1.msra.mxu0 0.0
    %470 = vmatprep.subr.mxu0 0.0
    %471 = vmatpush1.msra.mxu0 0.0
    %472 = vmatprep.subr.mxu0 0.0
    %473 = vmatpush1.msra.mxu0 0.0
    %474 = vmatprep.subr.mxu0 0.0
    %475 = vmatpush1.msra.mxu0 0.0
    %476 = vmatprep.subr.mxu0 0.0
    %477 = vmatpush1.msra.mxu0 0.0
    %478 = vmatprep.subr.mxu0 0.0
    %479 = vmatpush1.msra.mxu0 0.0
    %480 = vmatprep.subr.mxu0 0.0
    %481 = vmatpush1.msra.mxu0 0.0
    %482 = vmatprep.subr.mxu0 0.0
    %483 = vmatpush1.msra.mxu0 0.0
    %484 = vmatprep.subr.mxu0 0.0
    %485 = vmatpush1.msra.mxu0 0.0
    %486 = vmatprep.subr.mxu0 0.0
    %487 = vmatpush1.msra.mxu0 0.0
    %488 = vmatprep.subr.mxu0 0.0
    %489 = vmatpush1.msra.mxu0 0.0
    %490 = vmatprep.mubr.f32.mxu0 0.0
    %491 = vmatmul.mubr.f32.gmra.mrb[0].mxu0 %v290
    %v492 = vpop.f32.mrb[0].mxu0
    %v493 = vadd.f32 %v284, %v492
    %v494 = vpop.f32.mrb[0].mxu0
    %495 = vmatprep.mubr.f32.mxu0 0.0
    %496 = vmatmul.mubr.f32.gmra.mrb[0].mxu0 %v293
    %v497 = vpop.f32.mrb[0].mxu0
    %v498 = vadd.f32 %v284, %v497
    %v499 = vpop.f32.mrb[0].mxu0
    %500 = vmatprep.mubr.f32.mxu0 0.0
    %501 = vmatmul.mubr.f32.gmra.mrb[0].mxu0 %v296
    %v502 = vpop.f32.mrb[0].mxu0
    %v503 = vadd.f32 %v284, %v502
    %v504 = vpop.f32.mrb[0].mxu0
    %505 = vmatprep.mubr.f32.mxu0 0.0
    %506 = vmatmul.mubr.f32.gmra.mrb[0].mxu0 %v299
    %v507 = vpop.f32.mrb[0].mxu0
    %v508 = vadd.f32 %v284, %v507
    %v509 = vpop.f32.mrb[0].mxu0
    %510 = vmatprep.mubr.f32.mxu0 0.0
    %511 = vmatmul.mubr.f32.gmra.mrb[0].mxu0 %v302
    %v512 = vpop.f32.mrb[0].mxu0
    %v513 = vadd.f32 %v284, %v512
    %v514 = vpop.f32.mrb[0].mxu0
    %515 = vmatprep.mubr.f32.mxu0 0.0
    %516 = vmatmul.mubr.f32.gmra.mrb[0].mxu0 %v305
    %v517 = vpop.f32.mrb[0].mxu0
    %v518 = vadd.f32 %v284, %v517
    %v519 = vpop.f32.mrb[0].mxu0
    %520 = vmatprep.mubr.f32.mxu0 0.0
    %521 = vmatmul.mubr.f32.gmra.mrb[0].mxu0 %v308
    %v522 = vpop.f32.mrb[0].mxu0
    %v523 = vadd.f32 %v284, %v522
    %v524 = vpop.f32.mrb[0].mxu0
    %525 = vmatprep.mubr.f32.mxu0 0.0
    %526 = vmatmul.mubr.f32.gmra.mrb[0].mxu0 %v311
    %v527 = vpop.f32.mrb[0].mxu0
    %v528 = vadd.f32 %v284, %v527
    %v529 = vpop.f32.mrb[0].mxu0
    %530 = vdwg.mxu0
    %531 = vst [vmem:[#allocation2] sm:$0xff] %v380
    %532 = vst [vmem:[#allocation2 + $0x8] sm:$0xff] %v382
    %533 = vst [vmem:[#allocation2 + $0x10] sm:$0xff] %v493
    %534 = vst [vmem:[#allocation2 + $0x18] sm:$0xff] %v386
    %535 = vst [vmem:[#allocation2 + $0x20] sm:$0xff] %v388
    %536 = vst [vmem:[#allocation2 + $0x28] sm:$0xff] %v498
    %537 = vst [vmem:[#allocation2 + $0x30] sm:$0xff] %v392
    %538 = vst [vmem:[#allocation2 + $0x38] sm:$0xff] %v394
    %539 = vst [vmem:[#allocation2 + $0x40] sm:$0xff] %v503
    %540 = vst [vmem:[#allocation2 + $0x48] sm:$0xff] %v398
    %541 = vst [vmem:[#allocation2 + $0x50] sm:$0xff] %v400
    %542 = vst [vmem:[#allocation2 + $0x58] sm:$0xff] %v508
    %543 = vst [vmem:[#allocation2 + $0x60] sm:$0xff] %v404
    %544 = vst [vmem:[#allocation2 + $0x68] sm:$0xff] %v406
    %545 = vst [vmem:[#allocation2 + $0x70] sm:$0xff] %v513
    %546 = vst [vmem:[#allocation2 + $0x78] sm:$0xff] %v410
    %547 = vst [vmem:[#allocation2 + $0x80] sm:$0xff] %v412
    %548 = vst [vmem:[#allocation2 + $0x88] sm:$0xff] %v518
    %549 = vst [vmem:[#allocation2 + $0x90] sm:$0xff] %v416
    %550 = vst [vmem:[#allocation2 + $0x98] sm:$0xff] %v418
    %551 = vst [vmem:[#allocation2 + $0xa0] sm:$0xff] %v523
    %552 = vst [vmem:[#allocation2 + $0xa8] sm:$0xff] %v422
    %553 = vst [vmem:[#allocation2 + $0xb0] sm:$0xff] %v424
    %554 = vst [vmem:[#allocation2 + $0xb8] sm:$0xff] %v528
    %v555 = vld [vmem:[#allocation2] sm:$0xff]
    %v556 = vld [vmem:[#allocation2 + $0x8] sm:$0xff]
    %v557 = vld [vmem:[#allocation2 + $0x10] sm:$0xff]
    %v559 = vlaneseq
    %v560 = vshrl.u32 %v559, 7
    %v561 = vsub.s32 0, %v560
    %v562 = vrot.slane %v265, %v561
    %v563 = vlaneseq
    %v564 = vshrl.u32 %v563, 7
    %v565 = vsub.s32 1, %v564
    %v566 = vrot.slane %v265, %v565
    %v567 = vlaneseq
    %v568 = vshrl.u32 %v567, 7
    %v569 = vsub.s32 2, %v568
    %v570 = vrot.slane %v265, %v569
    %vm574 = vcmask 261120
    %v576 = vsel %vm574, 0.0, 0
    %578 = vmatprep.subr.mxu0 %v253
    %579 = vmatpush1.msra.mxu0 %v252
    %580 = vmatprep.subr.mxu0 %v256
    %581 = vmatpush1.msra.mxu0 %v255
    %582 = vmatprep.subr.mxu0 %v259
    %583 = vmatpush1.msra.mxu0 %v258
    %584 = vmatprep.subr.mxu0 %v262
    %585 = vmatpush1.msra.mxu0 %v261
    %586 = vmatprep.subr.mxu0 0.0
    %587 = vmatpush1.msra.mxu0 0.0
    %588 = vmatprep.subr.mxu0 0.0
    %589 = vmatpush1.msra.mxu0 0.0
    %590 = vmatprep.subr.mxu0 0.0
    %591 = vmatpush1.msra.mxu0 0.0
    %592 = vmatprep.subr.mxu0 0.0
    %593 = vmatpush1.msra.mxu0 0.0
    %594 = vmatprep.subr.mxu0 0.0
    %595 = vmatpush1.msra.mxu0 0.0
    %596 = vmatprep.subr.mxu0 0.0
    %597 = vmatpush1.msra.mxu0 0.0
    %598 = vmatprep.subr.mxu0 0.0
    %599 = vmatpush1.msra.mxu0 0.0
    %600 = vmatprep.subr.mxu0 0.0
    %601 = vmatpush1.msra.mxu0 0.0
    %602 = vmatprep.subr.mxu0 0.0
    %603 = vmatpush1.msra.mxu0 0.0
    %604 = vmatprep.subr.mxu0 0.0
    %605 = vmatpush1.msra.mxu0 0.0
    %606 = vmatprep.subr.mxu0 0.0
    %607 = vmatpush1.msra.mxu0 0.0
    %608 = vmatprep.subr.mxu0 0.0
    %609 = vmatpush1.msra.mxu0 0.0
    %610 = vmatprep.subr.mxu0 0.0
    %611 = vmatpush1.msra.mxu0 0.0
    %612 = vmatprep.subr.mxu0 0.0
    %613 = vmatpush1.msra.mxu0 0.0
    %614 = vmatprep.subr.mxu0 0.0
    %615 = vmatpush1.msra.mxu0 0.0
    %616 = vmatprep.subr.mxu0 0.0
    %617 = vmatpush1.msra.mxu0 0.0
    %618 = vmatprep.subr.mxu0 0.0
    %619 = vmatpush1.msra.mxu0 0.0
    %620 = vmatprep.subr.mxu0 0.0
    %621 = vmatpush1.msra.mxu0 0.0
    %622 = vmatprep.subr.mxu0 0.0
    %623 = vmatpush1.msra.mxu0 0.0
    %624 = vmatprep.subr.mxu0 0.0
    %625 = vmatpush1.msra.mxu0 0.0
    %626 = vmatprep.subr.mxu0 0.0
    %627 = vmatpush1.msra.mxu0 0.0
    %628 = vmatprep.subr.mxu0 0.0
    %629 = vmatpush1.msra.mxu0 0.0
    %630 = vmatprep.subr.mxu0 0.0
    %631 = vmatpush1.msra.mxu0 0.0
    %632 = vmatprep.subr.mxu0 0.0
    %633 = vmatpush1.msra.mxu0 0.0
    %634 = vmatprep.subr.mxu0 0.0
    %635 = vmatpush1.msra.mxu0 0.0
    %636 = vmatprep.subr.mxu0 0.0
    %637 = vmatpush1.msra.mxu0 0.0
    %638 = vmatprep.subr.mxu0 0.0
    %639 = vmatpush1.msra.mxu0 0.0
    %640 = vmatprep.subr.mxu0 0.0
    %641 = vmatpush1.msra.mxu0 0.0
    %642 = vmatprep.mubr.f32.mxu0 0.0
    %643 = vmatmul.mubr.f32.gmra.mrb[0].mxu0 %v576
    %v644 = vpop.f32.mrb[0].mxu0
    %v645 = vadd.f32 %v562, %v644
    %v646 = vpop.f32.mrb[0].mxu0
    %v647 = vadd.f32 %v566, %v646
    %648 = vdwg.mxu0
    %649 = vmatprep.subr.mxu0 0.0
    %650 = vmatpush1.msra.mxu0 %v254
    %651 = vmatprep.subr.mxu0 0.0
    %652 = vmatpush1.msra.mxu0 %v257
    %653 = vmatprep.subr.mxu0 0.0
    %654 = vmatpush1.msra.mxu0 %v260
    %655 = vmatprep.subr.mxu0 0.0
    %656 = vmatpush1.msra.mxu0 %v263
    %657 = vmatprep.subr.mxu0 0.0
    %658 = vmatpush1.msra.mxu0 0.0
    %659 = vmatprep.subr.mxu0 0.0
    %660 = vmatpush1.msra.mxu0 0.0
    %661 = vmatprep.subr.mxu0 0.0
    %662 = vmatpush1.msra.mxu0 0.0
    %663 = vmatprep.subr.mxu0 0.0
    %664 = vmatpush1.msra.mxu0 0.0
    %665 = vmatprep.subr.mxu0 0.0
    %666 = vmatpush1.msra.mxu0 0.0
    %667 = vmatprep.subr.mxu0 0.0
    %668 = vmatpush1.msra.mxu0 0.0
    %669 = vmatprep.subr.mxu0 0.0
    %670 = vmatpush1.msra.mxu0 0.0
    %671 = vmatprep.subr.mxu0 0.0
    %672 = vmatpush1.msra.mxu0 0.0
    %673 = vmatprep.subr.mxu0 0.0
    %674 = vmatpush1.msra.mxu0 0.0
    %675 = vmatprep.subr.mxu0 0.0
    %676 = vmatpush1.msra.mxu0 0.0
    %677 = vmatprep.subr.mxu0 0.0
    %678 = vmatpush1.msra.mxu0 0.0
    %679 = vmatprep.subr.mxu0 0.0
    %680 = vmatpush1.msra.mxu0 0.0
    %681 = vmatprep.subr.mxu0 0.0
    %682 = vmatpush1.msra.mxu0 0.0
    %683 = vmatprep.subr.mxu0 0.0
    %684 = vmatpush1.msra.mxu0 0.0
    %685 = vmatprep.subr.mxu0 0.0
    %686 = vmatpush1.msra.mxu0 0.0
    %687 = vmatprep.subr.mxu0 0.0
    %688 = vmatpush1.msra.mxu0 0.0
    %689 = vmatprep.subr.mxu0 0.0
    %690 = vmatpush1.msra.mxu0 0.0
    %691 = vmatprep.subr.mxu0 0.0
    %692 = vmatpush1.msra.mxu0 0.0
    %693 = vmatprep.subr.mxu0 0.0
    %694 = vmatpush1.msra.mxu0 0.0
    %695 = vmatprep.subr.mxu0 0.0
    %696 = vmatpush1.msra.mxu0 0.0
    %697 = vmatprep.subr.mxu0 0.0
    %698 = vmatpush1.msra.mxu0 0.0
    %699 = vmatprep.subr.mxu0 0.0
    %700 = vmatpush1.msra.mxu0 0.0
    %701 = vmatprep.subr.mxu0 0.0
    %702 = vmatpush1.msra.mxu0 0.0
    %703 = vmatprep.subr.mxu0 0.0
    %704 = vmatpush1.msra.mxu0 0.0
    %705 = vmatprep.subr.mxu0 0.0
    %706 = vmatpush1.msra.mxu0 0.0
    %707 = vmatprep.subr.mxu0 0.0
    %708 = vmatpush1.msra.mxu0 0.0
    %709 = vmatprep.subr.mxu0 0.0
    %710 = vmatpush1.msra.mxu0 0.0
    %711 = vmatprep.subr.mxu0 0.0
    %712 = vmatpush1.msra.mxu0 0.0
    %713 = vmatprep.mubr.f32.mxu0 0.0
    %714 = vmatmul.mubr.f32.gmra.mrb[0].mxu0 %v576
    %v715 = vpop.f32.mrb[0].mxu0
    %v716 = vadd.f32 %v570, %v715
    %v717 = vpop.f32.mrb[0].mxu0
    %718 = vdwg.mxu0
    %v719 = vadd.f32 %v555, %v645
    %v720 = vxor.u32 %v719, 2147483648
    %v721 = vmul.f32 %v720, 1.442695
    %v722 = vpow.pop %v721
    %v723 = vadd.f32 %v722, 1.0
    %v724 = vrcp.pop %v723
    %v725 = vmul.f32 1.0, %v724
    %v726 = vadd.f32 %v556, %v647
    %v727 = vxor.u32 %v726, 2147483648
    %v728 = vmul.f32 %v727, 1.442695
    %v729 = vpow.pop %v728
    %v730 = vadd.f32 %v729, 1.0
    %v731 = vrcp.pop %v730
    %v732 = vmul.f32 1.0, %v731
    %v733 = vmul.f32 %v725, %v716
    %v734 = vadd.f32 %v557, %v733
    %v735 = vtanh.pop %v734
    %v736 = vsub.f32 1.0, %v732
    %v737 = vmul.f32 %v736, %v735
    %v738 = vmul.f32 %v732, 0.0
    %v739 = vadd.f32 %v737, %v738
    %v740 = vld [vmem:[#allocation2 + $0x18] sm:$0xff]
    %v741 = vld [vmem:[#allocation2 + $0x20] sm:$0xff]
    %v742 = vld [vmem:[#allocation2 + $0x28] sm:$0xff]
    %v744 = vsel %vm574, %v739, 0
    %746 = vmatprep.subr.mxu0 %v253
    %747 = vmatpush1.msra.mxu0 %v252
    %748 = vmatprep.subr.mxu0 %v256
    %749 = vmatpush1.msra.mxu0 %v255
    %750 = vmatprep.subr.mxu0 %v259
    %751 = vmatpush1.msra.mxu0 %v258
    %752 = vmatprep.subr.mxu0 %v262
    %753 = vmatpush1.msra.mxu0 %v261
    %754 = vmatprep.subr.mxu0 0.0
    %755 = vmatpush1.msra.mxu0 0.0
    %756 = vmatprep.subr.mxu0 0.0
    %757 = vmatpush1.msra.mxu0 0.0
    %758 = vmatprep.subr.mxu0 0.0
    %759 = vmatpush1.msra.mxu0 0.0
    %760 = vmatprep.subr.mxu0 0.0
    %761 = vmatpush1.msra.mxu0 0.0
    %762 = vmatprep.subr.mxu0 0.0
    %763 = vmatpush1.msra.mxu0 0.0
    %764 = vmatprep.subr.mxu0 0.0
    %765 = vmatpush1.msra.mxu0 0.0
    %766 = vmatprep.subr.mxu0 0.0
    %767 = vmatpush1.msra.mxu0 0.0
    %768 = vmatprep.subr.mxu0 0.0
    %769 = vmatpush1.msra.mxu0 0.0
    %770 = vmatprep.subr.mxu0 0.0
    %771 = vmatpush1.msra.mxu0 0.0
    %772 = vmatprep.subr.mxu0 0.0
    %773 = vmatpush1.msra.mxu0 0.0
    %774 = vmatprep.subr.mxu0 0.0
    %775 = vmatpush1.msra.mxu0 0.0
    %776 = vmatprep.subr.mxu0 0.0
    %777 = vmatpush1.msra.mxu0 0.0
    %778 = vmatprep.subr.mxu0 0.0
    %779 = vmatpush1.msra.mxu0 0.0
    %780 = vmatprep.subr.mxu0 0.0
    %781 = vmatpush1.msra.mxu0 0.0
    %782 = vmatprep.subr.mxu0 0.0
    %783 = vmatpush1.msra.mxu0 0.0
    %784 = vmatprep.subr.mxu0 0.0
    %785 = vmatpush1.msra.mxu0 0.0
    %786 = vmatprep.subr.mxu0 0.0
    %787 = vmatpush1.msra.mxu0 0.0
    %788 = vmatprep.subr.mxu0 0.0
    %789 = vmatpush1.msra.mxu0 0.0
    %790 = vmatprep.subr.mxu0 0.0
    %791 = vmatpush1.msra.mxu0 0.0
    %792 = vmatprep.subr.mxu0 0.0
    %793 = vmatpush1.msra.mxu0 0.0
    %794 = vmatprep.subr.mxu0 0.0
    %795 = vmatpush1.msra.mxu0 0.0
    %796 = vmatprep.subr.mxu0 0.0
    %797 = vmatpush1.msra.mxu0 0.0
    %798 = vmatprep.subr.mxu0 0.0
    %799 = vmatpush1.msra.mxu0 0.0
    %800 = vmatprep.subr.mxu0 0.0
    %801 = vmatpush1.msra.mxu0 0.0
    %802 = vmatprep.subr.mxu0 0.0
    %803 = vmatpush1.msra.mxu0 0.0
    %804 = vmatprep.subr.mxu0 0.0
    %805 = vmatpush1.msra.mxu0 0.0
    %806 = vmatprep.subr.mxu0 0.0
    %807 = vmatpush1.msra.mxu0 0.0
    %808 = vmatprep.subr.mxu0 0.0
    %809 = vmatpush1.msra.mxu0 0.0
    %810 = vmatprep.mubr.f32.mxu0 0.0
    %811 = vmatmul.mubr.f32.gmra.mrb[0].mxu0 %v744
    %v812 = vpop.f32.mrb[0].mxu0
    %v813 = vadd.f32 %v562, %v812
    %v814 = vpop.f32.mrb[0].mxu0
    %v815 = vadd.f32 %v566, %v814
    %816 = vdwg.mxu0
    %817 = vmatprep.subr.mxu0 0.0
    %818 = vmatpush1.msra.mxu0 %v254
    %819 = vmatprep.subr.mxu0 0.0
    %820 = vmatpush1.msra.mxu0 %v257
    %821 = vmatprep.subr.mxu0 0.0
    %822 = vmatpush1.msra.mxu0 %v260
    %823 = vmatprep.subr.mxu0 0.0
    %824 = vmatpush1.msra.mxu0 %v263
    %825 = vmatprep.subr.mxu0 0.0
    %826 = vmatpush1.msra.mxu0 0.0
    %827 = vmatprep.subr.mxu0 0.0
    %828 = vmatpush1.msra.mxu0 0.0
    %829 = vmatprep.subr.mxu0 0.0
    %830 = vmatpush1.msra.mxu0 0.0
    %831 = vmatprep.subr.mxu0 0.0
    %832 = vmatpush1.msra.mxu0 0.0
    %833 = vmatprep.subr.mxu0 0.0
    %834 = vmatpush1.msra.mxu0 0.0
    %835 = vmatprep.subr.mxu0 0.0
    %836 = vmatpush1.msra.mxu0 0.0
    %837 = vmatprep.subr.mxu0 0.0
    %838 = vmatpush1.msra.mxu0 0.0
    %839 = vmatprep.subr.mxu0 0.0
    %840 = vmatpush1.msra.mxu0 0.0
    %841 = vmatprep.subr.mxu0 0.0
    %842 = vmatpush1.msra.mxu0 0.0
    %843 = vmatprep.subr.mxu0 0.0
    %844 = vmatpush1.msra.mxu0 0.0
    %845 = vmatprep.subr.mxu0 0.0
    %846 = vmatpush1.msra.mxu0 0.0
    %847 = vmatprep.subr.mxu0 0.0
    %848 = vmatpush1.msra.mxu0 0.0
    %849 = vmatprep.subr.mxu0 0.0
    %850 = vmatpush1.msra.mxu0 0.0
    %851 = vmatprep.subr.mxu0 0.0
    %852 = vmatpush1.msra.mxu0 0.0
    %853 = vmatprep.subr.mxu0 0.0
    %854 = vmatpush1.msra.mxu0 0.0
    %855 = vmatprep.subr.mxu0 0.0
    %856 = vmatpush1.msra.mxu0 0.0
    %857 = vmatprep.subr.mxu0 0.0
    %858 = vmatpush1.msra.mxu0 0.0
    %859 = vmatprep.subr.mxu0 0.0
    %860 = vmatpush1.msra.mxu0 0.0
    %861 = vmatprep.subr.mxu0 0.0
    %862 = vmatpush1.msra.mxu0 0.0
    %863 = vmatprep.subr.mxu0 0.0
    %864 = vmatpush1.msra.mxu0 0.0
    %865 = vmatprep.subr.mxu0 0.0
    %866 = vmatpush1.msra.mxu0 0.0
    %867 = vmatprep.subr.mxu0 0.0
    %868 = vmatpush1.msra.mxu0 0.0
    %869 = vmatprep.subr.mxu0 0.0
    %870 = vmatpush1.msra.mxu0 0.0
    %871 = vmatprep.subr.mxu0 0.0
    %872 = vmatpush1.msra.mxu0 0.0
    %873 = vmatprep.subr.mxu0 0.0
    %874 = vmatpush1.msra.mxu0 0.0
    %875 = vmatprep.subr.mxu0 0.0
    %876 = vmatpush1.msra.mxu0 0.0
    %877 = vmatprep.subr.mxu0 0.0
    %878 = vmatpush1.msra.mxu0 0.0
    %879 = vmatprep.subr.mxu0 0.0
    %880 = vmatpush1.msra.mxu0 0.0
    %881 = vmatprep.mubr.f32.mxu0 0.0
    %882 = vmatmul.mubr.f32.gmra.mrb[0].mxu0 %v744
    %v883 = vpop.f32.mrb[0].mxu0
    %v884 = vadd.f32 %v570, %v883
    %v885 = vpop.f32.mrb[0].mxu0
    %886 = vdwg.mxu0
    %v887 = vadd.f32 %v740, %v813
    %v888 = vxor.u32 %v887, 2147483648
    %v889 = vmul.f32 %v888, 1.442695
    %v890 = vpow.pop %v889
    %v891 = vadd.f32 %v890, 1.0
    %v892 = vrcp.pop %v891
    %v893 = vmul.f32 1.0, %v892
    %v894 = vadd.f32 %v741, %v815
    %v895 = vxor.u32 %v894, 2147483648
    %v896 = vmul.f32 %v895, 1.442695
    %v897 = vpow.pop %v896
    %v898 = vadd.f32 %v897, 1.0
    %v899 = vrcp.pop %v898
    %v900 = vmul.f32 1.0, %v899
    %v901 = vmul.f32 %v893, %v884
    %v902 = vadd.f32 %v742, %v901
    %v903 = vtanh.pop %v902
    %v904 = vsub.f32 1.0, %v900
    %v905 = vmul.f32 %v904, %v903
    %v906 = vmul.f32 %v900, %v739
    %v907 = vadd.f32 %v905, %v906
    %v908 = vld [vmem:[#allocation2 + $0x30] sm:$0xff]
    %v909 = vld [vmem:[#allocation2 + $0x38] sm:$0xff]
    %v910 = vld [vmem:[#allocation2 + $0x40] sm:$0xff]
    %v912 = vsel %vm574, %v907, 0
    %914 = vmatprep.subr.mxu0 %v253
    %915 = vmatpush1.msra.mxu0 %v252
    %916 = vmatprep.subr.mxu0 %v256
    %917 = vmatpush1.msra.mxu0 %v255
    %918 = vmatprep.subr.mxu0 %v259
    %919 = vmatpush1.msra.mxu0 %v258
    %920 = vmatprep.subr.mxu0 %v262
    %921 = vmatpush1.msra.mxu0 %v261
    %922 = vmatprep.subr.mxu0 0.0
    %923 = vmatpush1.msra.mxu0 0.0
    %924 = vmatprep.subr.mxu0 0.0
    %925 = vmatpush1.msra.mxu0 0.0
    %926 = vmatprep.subr.mxu0 0.0
    %927 = vmatpush1.msra.mxu0 0.0
    %928 = vmatprep.subr.mxu0 0.0
    %929 = vmatpush1.msra.mxu0 0.0
    %930 = vmatprep.subr.mxu0 0.0
    %931 = vmatpush1.msra.mxu0 0.0
    %932 = vmatprep.subr.mxu0 0.0
    %933 = vmatpush1.msra.mxu0 0.0
    %934 = vmatprep.subr.mxu0 0.0
    %935 = vmatpush1.msra.mxu0 0.0
    %936 = vmatprep.subr.mxu0 0.0
    %937 = vmatpush1.msra.mxu0 0.0
    %938 = vmatprep.subr.mxu0 0.0
    %939 = vmatpush1.msra.mxu0 0.0
    %940 = vmatprep.subr.mxu0 0.0
    %941 = vmatpush1.msra.mxu0 0.0
    %942 = vmatprep.subr.mxu0 0.0
    %943 = vmatpush1.msra.mxu0 0.0
    %944 = vmatprep.subr.mxu0 0.0
    %945 = vmatpush1.msra.mxu0 0.0
    %946 = vmatprep.subr.mxu0 0.0
    %947 = vmatpush1.msra.mxu0 0.0
    %948 = vmatprep.subr.mxu0 0.0
    %949 = vmatpush1.msra.mxu0 0.0
    %950 = vmatprep.subr.mxu0 0.0
    %951 = vmatpush1.msra.mxu0 0.0
    %952 = vmatprep.subr.mxu0 0.0
    %953 = vmatpush1.msra.mxu0 0.0
    %954 = vmatprep.subr.mxu0 0.0
    %955 = vmatpush1.msra.mxu0 0.0
    %956 = vmatprep.subr.mxu0 0.0
    %957 = vmatpush1.msra.mxu0 0.0
    %958 = vmatprep.subr.mxu0 0.0
    %959 = vmatpush1.msra.mxu0 0.0
    %960 = vmatprep.subr.mxu0 0.0
    %961 = vmatpush1.msra.mxu0 0.0
    %962 = vmatprep.subr.mxu0 0.0
    %963 = vmatpush1.msra.mxu0 0.0
    %964 = vmatprep.subr.mxu0 0.0
    %965 = vmatpush1.msra.mxu0 0.0
    %966 = vmatprep.subr.mxu0 0.0
    %967 = vmatpush1.msra.mxu0 0.0
    %968 = vmatprep.subr.mxu0 0.0
    %969 = vmatpush1.msra.mxu0 0.0
    %970 = vmatprep.subr.mxu0 0.0
    %971 = vmatpush1.msra.mxu0 0.0
    %972 = vmatprep.subr.mxu0 0.0
    %973 = vmatpush1.msra.mxu0 0.0
    %974 = vmatprep.subr.mxu0 0.0
    %975 = vmatpush1.msra.mxu0 0.0
    %976 = vmatprep.subr.mxu0 0.0
    %977 = vmatpush1.msra.mxu0 0.0
    %978 = vmatprep.mubr.f32.mxu0 0.0
    %979 = vmatmul.mubr.f32.gmra.mrb[0].mxu0 %v912
    %v980 = vpop.f32.mrb[0].mxu0
    %v981 = vadd.f32 %v562, %v980
    %v982 = vpop.f32.mrb[0].mxu0
    %v983 = vadd.f32 %v566, %v982
    %984 = vdwg.mxu0
    %985 = vmatprep.subr.mxu0 0.0
    %986 = vmatpush1.msra.mxu0 %v254
    %987 = vmatprep.subr.mxu0 0.0
    %988 = vmatpush1.msra.mxu0 %v257
    %989 = vmatprep.subr.mxu0 0.0
    %990 = vmatpush1.msra.mxu0 %v260
    %991 = vmatprep.subr.mxu0 0.0
    %992 = vmatpush1.msra.mxu0 %v263
    %993 = vmatprep.subr.mxu0 0.0
    %994 = vmatpush1.msra.mxu0 0.0
    %995 = vmatprep.subr.mxu0 0.0
    %996 = vmatpush1.msra.mxu0 0.0
    %997 = vmatprep.subr.mxu0 0.0
    %998 = vmatpush1.msra.mxu0 0.0
    %999 = vmatprep.subr.mxu0 0.0
    %1000 = vmatpush1.msra.mxu0 0.0
    %1001 = vmatprep.subr.mxu0 0.0
    %1002 = vmatpush1.msra.mxu0 0.0
    %1003 = vmatprep.subr.mxu0 0.0
    %1004 = vmatpush1.msra.mxu0 0.0
    %1005 = vmatprep.subr.mxu0 0.0
    %1006 = vmatpush1.msra.mxu0 0.0
    %1007 = vmatprep.subr.mxu0 0.0
    %1008 = vmatpush1.msra.mxu0 0.0
    %1009 = vmatprep.subr.mxu0 0.0
    %1010 = vmatpush1.msra.mxu0 0.0
    %1011 = vmatprep.subr.mxu0 0.0
    %1012 = vmatpush1.msra.mxu0 0.0
    %1013 = vmatprep.subr.mxu0 0.0
    %1014 = vmatpush1.msra.mxu0 0.0
    %1015 = vmatprep.subr.mxu0 0.0
    %1016 = vmatpush1.msra.mxu0 0.0
    %1017 = vmatprep.subr.mxu0 0.0
    %1018 = vmatpush1.msra.mxu0 0.0
    %1019 = vmatprep.subr.mxu0 0.0
    %1020 = vmatpush1.msra.mxu0 0.0
    %1021 = vmatprep.subr.mxu0 0.0
    %1022 = vmatpush1.msra.mxu0 0.0
    %1023 = vmatprep.subr.mxu0 0.0
    %1024 = vmatpush1.msra.mxu0 0.0
    %1025 = vmatprep.subr.mxu0 0.0
    %1026 = vmatpush1.msra.mxu0 0.0
    %1027 = vmatprep.subr.mxu0 0.0
    %1028 = vmatpush1.msra.mxu0 0.0
    %1029 = vmatprep.subr.mxu0 0.0
    %1030 = vmatpush1.msra.mxu0 0.0
    %1031 = vmatprep.subr.mxu0 0.0
    %1032 = vmatpush1.msra.mxu0 0.0
    %1033 = vmatprep.subr.mxu0 0.0
    %1034 = vmatpush1.msra.mxu0 0.0
    %1035 = vmatprep.subr.mxu0 0.0
    %1036 = vmatpush1.msra.mxu0 0.0
    %1037 = vmatprep.subr.mxu0 0.0
    %1038 = vmatpush1.msra.mxu0 0.0
    %1039 = vmatprep.subr.mxu0 0.0
    %1040 = vmatpush1.msra.mxu0 0.0
    %1041 = vmatprep.subr.mxu0 0.0
    %1042 = vmatpush1.msra.mxu0 0.0
    %1043 = vmatprep.subr.mxu0 0.0
    %1044 = vmatpush1.msra.mxu0 0.0
    %1045 = vmatprep.subr.mxu0 0.0
    %1046 = vmatpush1.msra.mxu0 0.0
    %1047 = vmatprep.subr.mxu0 0.0
    %1048 = vmatpush1.msra.mxu0 0.0
    %1049 = vmatprep.mubr.f32.mxu0 0.0
    %1050 = vmatmul.mubr.f32.gmra.mrb[0].mxu0 %v912
    %v1051 = vpop.f32.mrb[0].mxu0
    %v1052 = vadd.f32 %v570, %v1051
    %v1053 = vpop.f32.mrb[0].mxu0
    %1054 = vdwg.mxu0
    %v1055 = vadd.f32 %v908, %v981
    %v1056 = vxor.u32 %v1055, 2147483648
    %v1057 = vmul.f32 %v1056, 1.442695
    %v1058 = vpow.pop %v1057
    %v1059 = vadd.f32 %v1058, 1.0
    %v1060 = vrcp.pop %v1059
    %v1061 = vmul.f32 1.0, %v1060
    %v1062 = vadd.f32 %v909, %v983
    %v1063 = vxor.u32 %v1062, 2147483648
    %v1064 = vmul.f32 %v1063, 1.442695
    %v1065 = vpow.pop %v1064
    %v1066 = vadd.f32 %v1065, 1.0
    %v1067 = vrcp.pop %v1066
    %v1068 = vmul.f32 1.0, %v1067
    %v1069 = vmul.f32 %v1061, %v1052
    %v1070 = vadd.f32 %v910, %v1069
    %v1071 = vtanh.pop %v1070
    %v1072 = vsub.f32 1.0, %v1068
    %v1073 = vmul.f32 %v1072, %v1071
    %v1074 = vmul.f32 %v1068, %v907
    %v1075 = vadd.f32 %v1073, %v1074
    %v1076 = vld [vmem:[#allocation2 + $0x48] sm:$0xff]
    %v1077 = vld [vmem:[#allocation2 + $0x50] sm:$0xff]
    %v1078 = vld [vmem:[#allocation2 + $0x58] sm:$0xff]
    %v1080 = vsel %vm574, %v1075, 0
    %1082 = vmatprep.subr.mxu0 %v253
    %1083 = vmatpush1.msra.mxu0 %v252
    %1084 = vmatprep.subr.mxu0 %v256
    %1085 = vmatpush1.msra.mxu0 %v255
    %1086 = vmatprep.subr.mxu0 %v259
    %1087 = vmatpush1.msra.mxu0 %v258
    %1088 = vmatprep.subr.mxu0 %v262
    %1089 = vmatpush1.msra.mxu0 %v261
    %1090 = vmatprep.subr.mxu0 0.0
    %1091 = vmatpush1.msra.mxu0 0.0
    %1092 = vmatprep.subr.mxu0 0.0
    %1093 = vmatpush1.msra.mxu0 0.0
    %1094 = vmatprep.subr.mxu0 0.0
    %1095 = vmatpush1.msra.mxu0 0.0
    %1096 = vmatprep.subr.mxu0 0.0
    %1097 = vmatpush1.msra.mxu0 0.0
    %1098 = vmatprep.subr.mxu0 0.0
    %1099 = vmatpush1.msra.mxu0 0.0
    %1100 = vmatprep.subr.mxu0 0.0
    %1101 = vmatpush1.msra.mxu0 0.0
    %1102 = vmatprep.subr.mxu0 0.0
    %1103 = vmatpush1.msra.mxu0 0.0
    %1104 = vmatprep.subr.mxu0 0.0
    %1105 = vmatpush1.msra.mxu0 0.0
    %1106 = vmatprep.subr.mxu0 0.0
    %1107 = vmatpush1.msra.mxu0 0.0
    %1108 = vmatprep.subr.mxu0 0.0
    %1109 = vmatpush1.msra.mxu0 0.0
    %1110 = vmatprep.subr.mxu0 0.0
    %1111 = vmatpush1.msra.mxu0 0.0
    %1112 = vmatprep.subr.mxu0 0.0
    %1113 = vmatpush1.msra.mxu0 0.0
    %1114 = vmatprep.subr.mxu0 0.0
    %1115 = vmatpush1.msra.mxu0 0.0
    %1116 = vmatprep.subr.mxu0 0.0
    %1117 = vmatpush1.msra.mxu0 0.0
    %1118 = vmatprep.subr.mxu0 0.0
    %1119 = vmatpush1.msra.mxu0 0.0
    %1120 = vmatprep.subr.mxu0 0.0
    %1121 = vmatpush1.msra.mxu0 0.0
    %1122 = vmatprep.subr.mxu0 0.0
    %1123 = vmatpush1.msra.mxu0 0.0
    %1124 = vmatprep.subr.mxu0 0.0
    %1125 = vmatpush1.msra.mxu0 0.0
    %1126 = vmatprep.subr.mxu0 0.0
    %1127 = vmatpush1.msra.mxu0 0.0
    %1128 = vmatprep.subr.mxu0 0.0
    %1129 = vmatpush1.msra.mxu0 0.0
    %1130 = vmatprep.subr.mxu0 0.0
    %1131 = vmatpush1.msra.mxu0 0.0
    %1132 = vmatprep.subr.mxu0 0.0
    %1133 = vmatpush1.msra.mxu0 0.0
    %1134 = vmatprep.subr.mxu0 0.0
    %1135 = vmatpush1.msra.mxu0 0.0
    %1136 = vmatprep.subr.mxu0 0.0
    %1137 = vmatpush1.msra.mxu0 0.0
    %1138 = vmatprep.subr.mxu0 0.0
    %1139 = vmatpush1.msra.mxu0 0.0
    %1140 = vmatprep.subr.mxu0 0.0
    %1141 = vmatpush1.msra.mxu0 0.0
    %1142 = vmatprep.subr.mxu0 0.0
    %1143 = vmatpush1.msra.mxu0 0.0
    %1144 = vmatprep.subr.mxu0 0.0
    %1145 = vmatpush1.msra.mxu0 0.0
    %1146 = vmatprep.mubr.f32.mxu0 0.0
    %1147 = vmatmul.mubr.f32.gmra.mrb[0].mxu0 %v1080
    %v1148 = vpop.f32.mrb[0].mxu0
    %v1149 = vadd.f32 %v562, %v1148
    %v1150 = vpop.f32.mrb[0].mxu0
    %v1151 = vadd.f32 %v566, %v1150
    %1152 = vdwg.mxu0
    %1153 = vmatprep.subr.mxu0 0.0
    %1154 = vmatpush1.msra.mxu0 %v254
    %1155 = vmatprep.subr.mxu0 0.0
    %1156 = vmatpush1.msra.mxu0 %v257
    %1157 = vmatprep.subr.mxu0 0.0
    %1158 = vmatpush1.msra.mxu0 %v260
    %1159 = vmatprep.subr.mxu0 0.0
    %1160 = vmatpush1.msra.mxu0 %v263
    %1161 = vmatprep.subr.mxu0 0.0
    %1162 = vmatpush1.msra.mxu0 0.0
    %1163 = vmatprep.subr.mxu0 0.0
    %1164 = vmatpush1.msra.mxu0 0.0
    %1165 = vmatprep.subr.mxu0 0.0
    %1166 = vmatpush1.msra.mxu0 0.0
    %1167 = vmatprep.subr.mxu0 0.0
    %1168 = vmatpush1.msra.mxu0 0.0
    %1169 = vmatprep.subr.mxu0 0.0
    %1170 = vmatpush1.msra.mxu0 0.0
    %1171 = vmatprep.subr.mxu0 0.0
    %1172 = vmatpush1.msra.mxu0 0.0
    %1173 = vmatprep.subr.mxu0 0.0
    %1174 = vmatpush1.msra.mxu0 0.0
    %1175 = vmatprep.subr.mxu0 0.0
    %1176 = vmatpush1.msra.mxu0 0.0
    %1177 = vmatprep.subr.mxu0 0.0
    %1178 = vmatpush1.msra.mxu0 0.0
    %1179 = vmatprep.subr.mxu0 0.0
    %1180 = vmatpush1.msra.mxu0 0.0
    %1181 = vmatprep.subr.mxu0 0.0
    %1182 = vmatpush1.msra.mxu0 0.0
    %1183 = vmatprep.subr.mxu0 0.0
    %1184 = vmatpush1.msra.mxu0 0.0
    %1185 = vmatprep.subr.mxu0 0.0
    %1186 = vmatpush1.msra.mxu0 0.0
    %1187 = vmatprep.subr.mxu0 0.0
    %1188 = vmatpush1.msra.mxu0 0.0
    %1189 = vmatprep.subr.mxu0 0.0
    %1190 = vmatpush1.msra.mxu0 0.0
    %1191 = vmatprep.subr.mxu0 0.0
    %1192 = vmatpush1.msra.mxu0 0.0
    %1193 = vmatprep.subr.mxu0 0.0
    %1194 = vmatpush1.msra.mxu0 0.0
    %1195 = vmatprep.subr.mxu0 0.0
    %1196 = vmatpush1.msra.mxu0 0.0
    %1197 = vmatprep.subr.mxu0 0.0
    %1198 = vmatpush1.msra.mxu0 0.0
    %1199 = vmatprep.subr.mxu0 0.0
    %1200 = vmatpush1.msra.mxu0 0.0
    %1201 = vmatprep.subr.mxu0 0.0
    %1202 = vmatpush1.msra.mxu0 0.0
    %1203 = vmatprep.subr.mxu0 0.0
    %1204 = vmatpush1.msra.mxu0 0.0
    %1205 = vmatprep.subr.mxu0 0.0
    %1206 = vmatpush1.msra.mxu0 0.0
    %1207 = vmatprep.subr.mxu0 0.0
    %1208 = vmatpush1.msra.mxu0 0.0
    %1209 = vmatprep.subr.mxu0 0.0
    %1210 = vmatpush1.msra.mxu0 0.0
    %1211 = vmatprep.subr.mxu0 0.0
    %1212 = vmatpush1.msra.mxu0 0.0
    %1213 = vmatprep.subr.mxu0 0.0
    %1214 = vmatpush1.msra.mxu0 0.0
    %1215 = vmatprep.subr.mxu0 0.0
    %1216 = vmatpush1.msra.mxu0 0.0
    %1217 = vmatprep.mubr.f32.mxu0 0.0
    %1218 = vmatmul.mubr.f32.gmra.mrb[0].mxu0 %v1080
    %v1219 = vpop.f32.mrb[0].mxu0
    %v1220 = vadd.f32 %v570, %v1219
    %v1221 = vpop.f32.mrb[0].mxu0
    %1222 = vdwg.mxu0
    %v1223 = vadd.f32 %v1076, %v1149
    %v1224 = vxor.u32 %v1223, 2147483648
    %v1225 = vmul.f32 %v1224, 1.442695
    %v1226 = vpow.pop %v1225
    %v1227 = vadd.f32 %v1226, 1.0
    %v1228 = vrcp.pop %v1227
    %v1229 = vmul.f32 1.0, %v1228
    %v1230 = vadd.f32 %v1077, %v1151
    %v1231 = vxor.u32 %v1230, 2147483648
    %v1232 = vmul.f32 %v1231, 1.442695
    %v1233 = vpow.pop %v1232
    %v1234 = vadd.f32 %v1233, 1.0
    %v1235 = vrcp.pop %v1234
    %v1236 = vmul.f32 1.0, %v1235
    %v1237 = vmul.f32 %v1229, %v1220
    %v1238 = vadd.f32 %v1078, %v1237
    %v1239 = vtanh.pop %v1238
    %v1240 = vsub.f32 1.0, %v1236
    %v1241 = vmul.f32 %v1240, %v1239
    %v1242 = vmul.f32 %v1236, %v1075
    %v1243 = vadd.f32 %v1241, %v1242
    %v1244 = vld [vmem:[#allocation2 + $0x60] sm:$0xff]
    %v1245 = vld [vmem:[#allocation2 + $0x68] sm:$0xff]
    %v1246 = vld [vmem:[#allocation2 + $0x70] sm:$0xff]
    %v1248 = vsel %vm574, %v1243, 0
    %1250 = vmatprep.subr.mxu0 %v253
    %1251 = vmatpush1.msra.mxu0 %v252
    %1252 = vmatprep.subr.mxu0 %v256
    %1253 = vmatpush1.msra.mxu0 %v255
    %1254 = vmatprep.subr.mxu0 %v259
    %1255 = vmatpush1.msra.mxu0 %v258
    %1256 = vmatprep.subr.mxu0 %v262
    %1257 = vmatpush1.msra.mxu0 %v261
    %1258 = vmatprep.subr.mxu0 0.0
    %1259 = vmatpush1.msra.mxu0 0.0
    %1260 = vmatprep.subr.mxu0 0.0
    %1261 = vmatpush1.msra.mxu0 0.0
    %1262 = vmatprep.subr.mxu0 0.0
    %1263 = vmatpush1.msra.mxu0 0.0
    %1264 = vmatprep.subr.mxu0 0.0
    %1265 = vmatpush1.msra.mxu0 0.0
    %1266 = vmatprep.subr.mxu0 0.0
    %1267 = vmatpush1.msra.mxu0 0.0
    %1268 = vmatprep.subr.mxu0 0.0
    %1269 = vmatpush1.msra.mxu0 0.0
    %1270 = vmatprep.subr.mxu0 0.0
    %1271 = vmatpush1.msra.mxu0 0.0
    %1272 = vmatprep.subr.mxu0 0.0
    %1273 = vmatpush1.msra.mxu0 0.0
    %1274 = vmatprep.subr.mxu0 0.0
    %1275 = vmatpush1.msra.mxu0 0.0
    %1276 = vmatprep.subr.mxu0 0.0
    %1277 = vmatpush1.msra.mxu0 0.0
    %1278 = vmatprep.subr.mxu0 0.0
    %1279 = vmatpush1.msra.mxu0 0.0
    %1280 = vmatprep.subr.mxu0 0.0
    %1281 = vmatpush1.msra.mxu0 0.0
    %1282 = vmatprep.subr.mxu0 0.0
    %1283 = vmatpush1.msra.mxu0 0.0
    %1284 = vmatprep.subr.mxu0 0.0
    %1285 = vmatpush1.msra.mxu0 0.0
    %1286 = vmatprep.subr.mxu0 0.0
    %1287 = vmatpush1.msra.mxu0 0.0
    %1288 = vmatprep.subr.mxu0 0.0
    %1289 = vmatpush1.msra.mxu0 0.0
    %1290 = vmatprep.subr.mxu0 0.0
    %1291 = vmatpush1.msra.mxu0 0.0
    %1292 = vmatprep.subr.mxu0 0.0
    %1293 = vmatpush1.msra.mxu0 0.0
    %1294 = vmatprep.subr.mxu0 0.0
    %1295 = vmatpush1.msra.mxu0 0.0
    %1296 = vmatprep.subr.mxu0 0.0
    %1297 = vmatpush1.msra.mxu0 0.0
    %1298 = vmatprep.subr.mxu0 0.0
    %1299 = vmatpush1.msra.mxu0 0.0
    %1300 = vmatprep.subr.mxu0 0.0
    %1301 = vmatpush1.msra.mxu0 0.0
    %1302 = vmatprep.subr.mxu0 0.0
    %1303 = vmatpush1.msra.mxu0 0.0
    %1304 = vmatprep.subr.mxu0 0.0
    %1305 = vmatpush1.msra.mxu0 0.0
    %1306 = vmatprep.subr.mxu0 0.0
    %1307 = vmatpush1.msra.mxu0 0.0
    %1308 = vmatprep.subr.mxu0 0.0
    %1309 = vmatpush1.msra.mxu0 0.0
    %1310 = vmatprep.subr.mxu0 0.0
    %1311 = vmatpush1.msra.mxu0 0.0
    %1312 = vmatprep.subr.mxu0 0.0
    %1313 = vmatpush1.msra.mxu0 0.0
    %1314 = vmatprep.mubr.f32.mxu0 0.0
    %1315 = vmatmul.mubr.f32.gmra.mrb[0].mxu0 %v1248
    %v1316 = vpop.f32.mrb[0].mxu0
    %v1317 = vadd.f32 %v562, %v1316
    %v1318 = vpop.f32.mrb[0].mxu0
    %v1319 = vadd.f32 %v566, %v1318
    %1320 = vdwg.mxu0
    %1321 = vmatprep.subr.mxu0 0.0
    %1322 = vmatpush1.msra.mxu0 %v254
    %1323 = vmatprep.subr.mxu0 0.0
    %1324 = vmatpush1.msra.mxu0 %v257
    %1325 = vmatprep.subr.mxu0 0.0
    %1326 = vmatpush1.msra.mxu0 %v260
    %1327 = vmatprep.subr.mxu0 0.0
    %1328 = vmatpush1.msra.mxu0 %v263
    %1329 = vmatprep.subr.mxu0 0.0
    %1330 = vmatpush1.msra.mxu0 0.0
    %1331 = vmatprep.subr.mxu0 0.0
    %1332 = vmatpush1.msra.mxu0 0.0
    %1333 = vmatprep.subr.mxu0 0.0
    %1334 = vmatpush1.msra.mxu0 0.0
    %1335 = vmatprep.subr.mxu0 0.0
    %1336 = vmatpush1.msra.mxu0 0.0
    %1337 = vmatprep.subr.mxu0 0.0
    %1338 = vmatpush1.msra.mxu0 0.0
    %1339 = vmatprep.subr.mxu0 0.0
    %1340 = vmatpush1.msra.mxu0 0.0
    %1341 = vmatprep.subr.mxu0 0.0
    %1342 = vmatpush1.msra.mxu0 0.0
    %1343 = vmatprep.subr.mxu0 0.0
    %1344 = vmatpush1.msra.mxu0 0.0
    %1345 = vmatprep.subr.mxu0 0.0
    %1346 = vmatpush1.msra.mxu0 0.0
    %1347 = vmatprep.subr.mxu0 0.0
    %1348 = vmatpush1.msra.mxu0 0.0
    %1349 = vmatprep.subr.mxu0 0.0
    %1350 = vmatpush1.msra.mxu0 0.0
    %1351 = vmatprep.subr.mxu0 0.0
    %1352 = vmatpush1.msra.mxu0 0.0
    %1353 = vmatprep.subr.mxu0 0.0
    %1354 = vmatpush1.msra.mxu0 0.0
    %1355 = vmatprep.subr.mxu0 0.0
    %1356 = vmatpush1.msra.mxu0 0.0
    %1357 = vmatprep.subr.mxu0 0.0
    %1358 = vmatpush1.msra.mxu0 0.0
    %1359 = vmatprep.subr.mxu0 0.0
    %1360 = vmatpush1.msra.mxu0 0.0
    %1361 = vmatprep.subr.mxu0 0.0
    %1362 = vmatpush1.msra.mxu0 0.0
    %1363 = vmatprep.subr.mxu0 0.0
    %1364 = vmatpush1.msra.mxu0 0.0
    %1365 = vmatprep.subr.mxu0 0.0
    %1366 = vmatpush1.msra.mxu0 0.0
    %1367 = vmatprep.subr.mxu0 0.0
    %1368 = vmatpush1.msra.mxu0 0.0
    %1369 = vmatprep.subr.mxu0 0.0
    %1370 = vmatpush1.msra.mxu0 0.0
    %1371 = vmatprep.subr.mxu0 0.0
    %1372 = vmatpush1.msra.mxu0 0.0
    %1373 = vmatprep.subr.mxu0 0.0
    %1374 = vmatpush1.msra.mxu0 0.0
    %1375 = vmatprep.subr.mxu0 0.0
    %1376 = vmatpush1.msra.mxu0 0.0
    %1377 = vmatprep.subr.mxu0 0.0
    %1378 = vmatpush1.msra.mxu0 0.0
    %1379 = vmatprep.subr.mxu0 0.0
    %1380 = vmatpush1.msra.mxu0 0.0
    %1381 = vmatprep.subr.mxu0 0.0
    %1382 = vmatpush1.msra.mxu0 0.0
    %1383 = vmatprep.subr.mxu0 0.0
    %1384 = vmatpush1.msra.mxu0 0.0
    %1385 = vmatprep.mubr.f32.mxu0 0.0
    %1386 = vmatmul.mubr.f32.gmra.mrb[0].mxu0 %v1248
    %v1387 = vpop.f32.mrb[0].mxu0
    %v1388 = vadd.f32 %v570, %v1387
    %v1389 = vpop.f32.mrb[0].mxu0
    %1390 = vdwg.mxu0
    %v1391 = vadd.f32 %v1244, %v1317
    %v1392 = vxor.u32 %v1391, 2147483648
    %v1393 = vmul.f32 %v1392, 1.442695
    %v1394 = vpow.pop %v1393
    %v1395 = vadd.f32 %v1394, 1.0
    %v1396 = vrcp.pop %v1395
    %v1397 = vmul.f32 1.0, %v1396
    %v1398 = vadd.f32 %v1245, %v1319
    %v1399 = vxor.u32 %v1398, 2147483648
    %v1400 = vmul.f32 %v1399, 1.442695
    %v1401 = vpow.pop %v1400
    %v1402 = vadd.f32 %v1401, 1.0
    %v1403 = vrcp.pop %v1402
    %v1404 = vmul.f32 1.0, %v1403
    %v1405 = vmul.f32 %v1397, %v1388
    %v1406 = vadd.f32 %v1246, %v1405
    %v1407 = vtanh.pop %v1406
    %v1408 = vsub.f32 1.0, %v1404
    %v1409 = vmul.f32 %v1408, %v1407
    %v1410 = vmul.f32 %v1404, %v1243
    %v1411 = vadd.f32 %v1409, %v1410
    %v1412 = vld [vmem:[#allocation2 + $0x78] sm:$0xff]
    %v1413 = vld [vmem:[#allocation2 + $0x80] sm:$0xff]
    %v1414 = vld [vmem:[#allocation2 + $0x88] sm:$0xff]
    %v1416 = vsel %vm574, %v1411, 0
    %1418 = vmatprep.subr.mxu0 %v253
    %1419 = vmatpush1.msra.mxu0 %v252
    %1420 = vmatprep.subr.mxu0 %v256
    %1421 = vmatpush1.msra.mxu0 %v255
    %1422 = vmatprep.subr.mxu0 %v259
    %1423 = vmatpush1.msra.mxu0 %v258
    %1424 = vmatprep.subr.mxu0 %v262
    %1425 = vmatpush1.msra.mxu0 %v261
    %1426 = vmatprep.subr.mxu0 0.0
    %1427 = vmatpush1.msra.mxu0 0.0
    %1428 = vmatprep.subr.mxu0 0.0
    %1429 = vmatpush1.msra.mxu0 0.0
    %1430 = vmatprep.subr.mxu0 0.0
    %1431 = vmatpush1.msra.mxu0 0.0
    %1432 = vmatprep.subr.mxu0 0.0
    %1433 = vmatpush1.msra.mxu0 0.0
    %1434 = vmatprep.subr.mxu0 0.0
    %1435 = vmatpush1.msra.mxu0 0.0
    %1436 = vmatprep.subr.mxu0 0.0
    %1437 = vmatpush1.msra.mxu0 0.0
    %1438 = vmatprep.subr.mxu0 0.0
    %1439 = vmatpush1.msra.mxu0 0.0
    %1440 = vmatprep.subr.mxu0 0.0
    %1441 = vmatpush1.msra.mxu0 0.0
    %1442 = vmatprep.subr.mxu0 0.0
    %1443 = vmatpush1.msra.mxu0 0.0
    %1444 = vmatprep.subr.mxu0 0.0
    %1445 = vmatpush1.msra.mxu0 0.0
    %1446 = vmatprep.subr.mxu0 0.0
    %1447 = vmatpush1.msra.mxu0 0.0
    %1448 = vmatprep.subr.mxu0 0.0
    %1449 = vmatpush1.msra.mxu0 0.0
    %1450 = vmatprep.subr.mxu0 0.0
    %1451 = vmatpush1.msra.mxu0 0.0
    %1452 = vmatprep.subr.mxu0 0.0
    %1453 = vmatpush1.msra.mxu0 0.0
    %1454 = vmatprep.subr.mxu0 0.0
    %1455 = vmatpush1.msra.mxu0 0.0
    %1456 = vmatprep.subr.mxu0 0.0
    %1457 = vmatpush1.msra.mxu0 0.0
    %1458 = vmatprep.subr.mxu0 0.0
    %1459 = vmatpush1.msra.mxu0 0.0
    %1460 = vmatprep.subr.mxu0 0.0
    %1461 = vmatpush1.msra.mxu0 0.0
    %1462 = vmatprep.subr.mxu0 0.0
    %1463 = vmatpush1.msra.mxu0 0.0
    %1464 = vmatprep.subr.mxu0 0.0
    %1465 = vmatpush1.msra.mxu0 0.0
    %1466 = vmatprep.subr.mxu0 0.0
    %1467 = vmatpush1.msra.mxu0 0.0
    %1468 = vmatprep.subr.mxu0 0.0
    %1469 = vmatpush1.msra.mxu0 0.0
    %1470 = vmatprep.subr.mxu0 0.0
    %1471 = vmatpush1.msra.mxu0 0.0
    %1472 = vmatprep.subr.mxu0 0.0
    %1473 = vmatpush1.msra.mxu0 0.0
    %1474 = vmatprep.subr.mxu0 0.0
    %1475 = vmatpush1.msra.mxu0 0.0
    %1476 = vmatprep.subr.mxu0 0.0
    %1477 = vmatpush1.msra.mxu0 0.0
    %1478 = vmatprep.subr.mxu0 0.0
    %1479 = vmatpush1.msra.mxu0 0.0
    %1480 = vmatprep.subr.mxu0 0.0
    %1481 = vmatpush1.msra.mxu0 0.0
    %1482 = vmatprep.mubr.f32.mxu0 0.0
    %1483 = vmatmul.mubr.f32.gmra.mrb[0].mxu0 %v1416
    %v1484 = vpop.f32.mrb[0].mxu0
    %v1485 = vadd.f32 %v562, %v1484
    %v1486 = vpop.f32.mrb[0].mxu0
    %v1487 = vadd.f32 %v566, %v1486
    %1488 = vdwg.mxu0
    %1489 = vmatprep.subr.mxu0 0.0
    %1490 = vmatpush1.msra.mxu0 %v254
    %1491 = vmatprep.subr.mxu0 0.0
    %1492 = vmatpush1.msra.mxu0 %v257
    %1493 = vmatprep.subr.mxu0 0.0
    %1494 = vmatpush1.msra.mxu0 %v260
    %1495 = vmatprep.subr.mxu0 0.0
    %1496 = vmatpush1.msra.mxu0 %v263
    %1497 = vmatprep.subr.mxu0 0.0
    %1498 = vmatpush1.msra.mxu0 0.0
    %1499 = vmatprep.subr.mxu0 0.0
    %1500 = vmatpush1.msra.mxu0 0.0
    %1501 = vmatprep.subr.mxu0 0.0
    %1502 = vmatpush1.msra.mxu0 0.0
    %1503 = vmatprep.subr.mxu0 0.0
    %1504 = vmatpush1.msra.mxu0 0.0
    %1505 = vmatprep.subr.mxu0 0.0
    %1506 = vmatpush1.msra.mxu0 0.0
    %1507 = vmatprep.subr.mxu0 0.0
    %1508 = vmatpush1.msra.mxu0 0.0
    %1509 = vmatprep.subr.mxu0 0.0
    %1510 = vmatpush1.msra.mxu0 0.0
    %1511 = vmatprep.subr.mxu0 0.0
    %1512 = vmatpush1.msra.mxu0 0.0
    %1513 = vmatprep.subr.mxu0 0.0
    %1514 = vmatpush1.msra.mxu0 0.0
    %1515 = vmatprep.subr.mxu0 0.0
    %1516 = vmatpush1.msra.mxu0 0.0
    %1517 = vmatprep.subr.mxu0 0.0
    %1518 = vmatpush1.msra.mxu0 0.0
    %1519 = vmatprep.subr.mxu0 0.0
    %1520 = vmatpush1.msra.mxu0 0.0
    %1521 = vmatprep.subr.mxu0 0.0
    %1522 = vmatpush1.msra.mxu0 0.0
    %1523 = vmatprep.subr.mxu0 0.0
    %1524 = vmatpush1.msra.mxu0 0.0
    %1525 = vmatprep.subr.mxu0 0.0
    %1526 = vmatpush1.msra.mxu0 0.0
    %1527 = vmatprep.subr.mxu0 0.0
    %1528 = vmatpush1.msra.mxu0 0.0
    %1529 = vmatprep.subr.mxu0 0.0
    %1530 = vmatpush1.msra.mxu0 0.0
    %1531 = vmatprep.subr.mxu0 0.0
    %1532 = vmatpush1.msra.mxu0 0.0
    %1533 = vmatprep.subr.mxu0 0.0
    %1534 = vmatpush1.msra.mxu0 0.0
    %1535 = vmatprep.subr.mxu0 0.0
    %1536 = vmatpush1.msra.mxu0 0.0
    %1537 = vmatprep.subr.mxu0 0.0
    %1538 = vmatpush1.msra.mxu0 0.0
    %1539 = vmatprep.subr.mxu0 0.0
    %1540 = vmatpush1.msra.mxu0 0.0
    %1541 = vmatprep.subr.mxu0 0.0
    %1542 = vmatpush1.msra.mxu0 0.0
    %1543 = vmatprep.subr.mxu0 0.0
    %1544 = vmatpush1.msra.mxu0 0.0
    %1545 = vmatprep.subr.mxu0 0.0
    %1546 = vmatpush1.msra.mxu0 0.0
    %1547 = vmatprep.subr.mxu0 0.0
    %1548 = vmatpush1.msra.mxu0 0.0
    %1549 = vmatprep.subr.mxu0 0.0
    %1550 = vmatpush1.msra.mxu0 0.0
    %1551 = vmatprep.subr.mxu0 0.0
    %1552 = vmatpush1.msra.mxu0 0.0
    %1553 = vmatprep.mubr.f32.mxu0 0.0
    %1554 = vmatmul.mubr.f32.gmra.mrb[0].mxu0 %v1416
    %v1555 = vpop.f32.mrb[0].mxu0
    %v1556 = vadd.f32 %v570, %v1555
    %v1557 = vpop.f32.mrb[0].mxu0
    %1558 = vdwg.mxu0
    %v1559 = vadd.f32 %v1412, %v1485
    %v1560 = vxor.u32 %v1559, 2147483648
    %v1561 = vmul.f32 %v1560, 1.442695
    %v1562 = vpow.pop %v1561
    %v1563 = vadd.f32 %v1562, 1.0
    %v1564 = vrcp.pop %v1563
    %v1565 = vmul.f32 1.0, %v1564
    %v1566 = vadd.f32 %v1413, %v1487
    %v1567 = vxor.u32 %v1566, 2147483648
    %v1568 = vmul.f32 %v1567, 1.442695
    %v1569 = vpow.pop %v1568
    %v1570 = vadd.f32 %v1569, 1.0
    %v1571 = vrcp.pop %v1570
    %v1572 = vmul.f32 1.0, %v1571
    %v1573 = vmul.f32 %v1565, %v1556
    %v1574 = vadd.f32 %v1414, %v1573
    %v1575 = vtanh.pop %v1574
    %v1576 = vsub.f32 1.0, %v1572
    %v1577 = vmul.f32 %v1576, %v1575
    %v1578 = vmul.f32 %v1572, %v1411
    %v1579 = vadd.f32 %v1577, %v1578
    %v1580 = vld [vmem:[#allocation2 + $0x90] sm:$0xff]
    %v1581 = vld [vmem:[#allocation2 + $0x98] sm:$0xff]
    %v1582 = vld [vmem:[#allocation2 + $0xa0] sm:$0xff]
    %v1584 = vsel %vm574, %v1579, 0
    %1586 = vmatprep.subr.mxu0 %v253
    %1587 = vmatpush1.msra.mxu0 %v252
    %1588 = vmatprep.subr.mxu0 %v256
    %1589 = vmatpush1.msra.mxu0 %v255
    %1590 = vmatprep.subr.mxu0 %v259
    %1591 = vmatpush1.msra.mxu0 %v258
    %1592 = vmatprep.subr.mxu0 %v262
    %1593 = vmatpush1.msra.mxu0 %v261
    %1594 = vmatprep.subr.mxu0 0.0
    %1595 = vmatpush1.msra.mxu0 0.0
    %1596 = vmatprep.subr.mxu0 0.0
    %1597 = vmatpush1.msra.mxu0 0.0
    %1598 = vmatprep.subr.mxu0 0.0
    %1599 = vmatpush1.msra.mxu0 0.0
    %1600 = vmatprep.subr.mxu0 0.0
    %1601 = vmatpush1.msra.mxu0 0.0
    %1602 = vmatprep.subr.mxu0 0.0
    %1603 = vmatpush1.msra.mxu0 0.0
    %1604 = vmatprep.subr.mxu0 0.0
    %1605 = vmatpush1.msra.mxu0 0.0
    %1606 = vmatprep.subr.mxu0 0.0
    %1607 = vmatpush1.msra.mxu0 0.0
    %1608 = vmatprep.subr.mxu0 0.0
    %1609 = vmatpush1.msra.mxu0 0.0
    %1610 = vmatprep.subr.mxu0 0.0
    %1611 = vmatpush1.msra.mxu0 0.0
    %1612 = vmatprep.subr.mxu0 0.0
    %1613 = vmatpush1.msra.mxu0 0.0
    %1614 = vmatprep.subr.mxu0 0.0
    %1615 = vmatpush1.msra.mxu0 0.0
    %1616 = vmatprep.subr.mxu0 0.0
    %1617 = vmatpush1.msra.mxu0 0.0
    %1618 = vmatprep.subr.mxu0 0.0
    %1619 = vmatpush1.msra.mxu0 0.0
    %1620 = vmatprep.subr.mxu0 0.0
    %1621 = vmatpush1.msra.mxu0 0.0
    %1622 = vmatprep.subr.mxu0 0.0
    %1623 = vmatpush1.msra.mxu0 0.0
    %1624 = vmatprep.subr.mxu0 0.0
    %1625 = vmatpush1.msra.mxu0 0.0
    %1626 = vmatprep.subr.mxu0 0.0
    %1627 = vmatpush1.msra.mxu0 0.0
    %1628 = vmatprep.subr.mxu0 0.0
    %1629 = vmatpush1.msra.mxu0 0.0
    %1630 = vmatprep.subr.mxu0 0.0
    %1631 = vmatpush1.msra.mxu0 0.0
    %1632 = vmatprep.subr.mxu0 0.0
    %1633 = vmatpush1.msra.mxu0 0.0
    %1634 = vmatprep.subr.mxu0 0.0
    %1635 = vmatpush1.msra.mxu0 0.0
    %1636 = vmatprep.subr.mxu0 0.0
    %1637 = vmatpush1.msra.mxu0 0.0
    %1638 = vmatprep.subr.mxu0 0.0
    %1639 = vmatpush1.msra.mxu0 0.0
    %1640 = vmatprep.subr.mxu0 0.0
    %1641 = vmatpush1.msra.mxu0 0.0
    %1642 = vmatprep.subr.mxu0 0.0
    %1643 = vmatpush1.msra.mxu0 0.0
    %1644 = vmatprep.subr.mxu0 0.0
    %1645 = vmatpush1.msra.mxu0 0.0
    %1646 = vmatprep.subr.mxu0 0.0
    %1647 = vmatpush1.msra.mxu0 0.0
    %1648 = vmatprep.subr.mxu0 0.0
    %1649 = vmatpush1.msra.mxu0 0.0
    %1650 = vmatprep.mubr.f32.mxu0 0.0
    %1651 = vmatmul.mubr.f32.gmra.mrb[0].mxu0 %v1584
    %v1652 = vpop.f32.mrb[0].mxu0
    %v1653 = vadd.f32 %v562, %v1652
    %v1654 = vpop.f32.mrb[0].mxu0
    %v1655 = vadd.f32 %v566, %v1654
    %1656 = vdwg.mxu0
    %1657 = vmatprep.subr.mxu0 0.0
    %1658 = vmatpush1.msra.mxu0 %v254
    %1659 = vmatprep.subr.mxu0 0.0
    %1660 = vmatpush1.msra.mxu0 %v257
    %1661 = vmatprep.subr.mxu0 0.0
    %1662 = vmatpush1.msra.mxu0 %v260
    %1663 = vmatprep.subr.mxu0 0.0
    %1664 = vmatpush1.msra.mxu0 %v263
    %1665 = vmatprep.subr.mxu0 0.0
    %1666 = vmatpush1.msra.mxu0 0.0
    %1667 = vmatprep.subr.mxu0 0.0
    %1668 = vmatpush1.msra.mxu0 0.0
    %1669 = vmatprep.subr.mxu0 0.0
    %1670 = vmatpush1.msra.mxu0 0.0
    %1671 = vmatprep.subr.mxu0 0.0
    %1672 = vmatpush1.msra.mxu0 0.0
    %1673 = vmatprep.subr.mxu0 0.0
    %1674 = vmatpush1.msra.mxu0 0.0
    %1675 = vmatprep.subr.mxu0 0.0
    %1676 = vmatpush1.msra.mxu0 0.0
    %1677 = vmatprep.subr.mxu0 0.0
    %1678 = vmatpush1.msra.mxu0 0.0
    %1679 = vmatprep.subr.mxu0 0.0
    %1680 = vmatpush1.msra.mxu0 0.0
    %1681 = vmatprep.subr.mxu0 0.0
    %1682 = vmatpush1.msra.mxu0 0.0
    %1683 = vmatprep.subr.mxu0 0.0
    %1684 = vmatpush1.msra.mxu0 0.0
    %1685 = vmatprep.subr.mxu0 0.0
    %1686 = vmatpush1.msra.mxu0 0.0
    %1687 = vmatprep.subr.mxu0 0.0
    %1688 = vmatpush1.msra.mxu0 0.0
    %1689 = vmatprep.subr.mxu0 0.0
    %1690 = vmatpush1.msra.mxu0 0.0
    %1691 = vmatprep.subr.mxu0 0.0
    %1692 = vmatpush1.msra.mxu0 0.0
    %1693 = vmatprep.subr.mxu0 0.0
    %1694 = vmatpush1.msra.mxu0 0.0
    %1695 = vmatprep.subr.mxu0 0.0
    %1696 = vmatpush1.msra.mxu0 0.0
    %1697 = vmatprep.subr.mxu0 0.0
    %1698 = vmatpush1.msra.mxu0 0.0
    %1699 = vmatprep.subr.mxu0 0.0
    %1700 = vmatpush1.msra.mxu0 0.0
    %1701 = vmatprep.subr.mxu0 0.0
    %1702 = vmatpush1.msra.mxu0 0.0
    %1703 = vmatprep.subr.mxu0 0.0
    %1704 = vmatpush1.msra.mxu0 0.0
    %1705 = vmatprep.subr.mxu0 0.0
    %1706 = vmatpush1.msra.mxu0 0.0
    %1707 = vmatprep.subr.mxu0 0.0
    %1708 = vmatpush1.msra.mxu0 0.0
    %1709 = vmatprep.subr.mxu0 0.0
    %1710 = vmatpush1.msra.mxu0 0.0
    %1711 = vmatprep.subr.mxu0 0.0
    %1712 = vmatpush1.msra.mxu0 0.0
    %1713 = vmatprep.subr.mxu0 0.0
    %1714 = vmatpush1.msra.mxu0 0.0
    %1715 = vmatprep.subr.mxu0 0.0
    %1716 = vmatpush1.msra.mxu0 0.0
    %1717 = vmatprep.subr.mxu0 0.0
    %1718 = vmatpush1.msra.mxu0 0.0
    %1719 = vmatprep.subr.mxu0 0.0
    %1720 = vmatpush1.msra.mxu0 0.0
    %1721 = vmatprep.mubr.f32.mxu0 0.0
    %1722 = vmatmul.mubr.f32.gmra.mrb[0].mxu0 %v1584
    %v1723 = vpop.f32.mrb[0].mxu0
    %v1724 = vadd.f32 %v570, %v1723
    %v1725 = vpop.f32.mrb[0].mxu0
    %1726 = vdwg.mxu0
    %v1727 = vadd.f32 %v1580, %v1653
    %v1728 = vxor.u32 %v1727, 2147483648
    %v1729 = vmul.f32 %v1728, 1.442695
    %v1730 = vpow.pop %v1729
    %v1731 = vadd.f32 %v1730, 1.0
    %v1732 = vrcp.pop %v1731
    %v1733 = vmul.f32 1.0, %v1732
    %v1734 = vadd.f32 %v1581, %v1655
    %v1735 = vxor.u32 %v1734, 2147483648
    %v1736 = vmul.f32 %v1735, 1.442695
    %v1737 = vpow.pop %v1736
    %v1738 = vadd.f32 %v1737, 1.0
    %v1739 = vrcp.pop %v1738
    %v1740 = vmul.f32 1.0, %v1739
    %v1741 = vmul.f32 %v1733, %v1724
    %v1742 = vadd.f32 %v1582, %v1741
    %v1743 = vtanh.pop %v1742
    %v1744 = vsub.f32 1.0, %v1740
    %v1745 = vmul.f32 %v1744, %v1743
    %v1746 = vmul.f32 %v1740, %v1579
    %v1747 = vadd.f32 %v1745, %v1746
    %v1748 = vld [vmem:[#allocation2 + $0xa8] sm:$0xff]
    %v1749 = vld [vmem:[#allocation2 + $0xb0] sm:$0xff]
    %v1750 = vld [vmem:[#allocation2 + $0xb8] sm:$0xff]
    %v1752 = vsel %vm574, %v1747, 0
    %1754 = vmatprep.subr.mxu0 %v253
    %1755 = vmatpush1.msra.mxu0 %v252
    %1756 = vmatprep.subr.mxu0 %v256
    %1757 = vmatpush1.msra.mxu0 %v255
    %1758 = vmatprep.subr.mxu0 %v259
    %1759 = vmatpush1.msra.mxu0 %v258
    %1760 = vmatprep.subr.mxu0 %v262
    %1761 = vmatpush1.msra.mxu0 %v261
    %1762 = vmatprep.subr.mxu0 0.0
    %1763 = vmatpush1.msra.mxu0 0.0
    %1764 = vmatprep.subr.mxu0 0.0
    %1765 = vmatpush1.msra.mxu0 0.0
    %1766 = vmatprep.subr.mxu0 0.0
    %1767 = vmatpush1.msra.mxu0 0.0
    %1768 = vmatprep.subr.mxu0 0.0
    %1769 = vmatpush1.msra.mxu0 0.0
    %1770 = vmatprep.subr.mxu0 0.0
    %1771 = vmatpush1.msra.mxu0 0.0
    %1772 = vmatprep.subr.mxu0 0.0
    %1773 = vmatpush1.msra.mxu0 0.0
    %1774 = vmatprep.subr.mxu0 0.0
    %1775 = vmatpush1.msra.mxu0 0.0
    %1776 = vmatprep.subr.mxu0 0.0
    %1777 = vmatpush1.msra.mxu0 0.0
    %1778 = vmatprep.subr.mxu0 0.0
    %1779 = vmatpush1.msra.mxu0 0.0
    %1780 = vmatprep.subr.mxu0 0.0
    %1781 = vmatpush1.msra.mxu0 0.0
    %1782 = vmatprep.subr.mxu0 0.0
    %1783 = vmatpush1.msra.mxu0 0.0
    %1784 = vmatprep.subr.mxu0 0.0
    %1785 = vmatpush1.msra.mxu0 0.0
    %1786 = vmatprep.subr.mxu0 0.0
    %1787 = vmatpush1.msra.mxu0 0.0
    %1788 = vmatprep.subr.mxu0 0.0
    %1789 = vmatpush1.msra.mxu0 0.0
    %1790 = vmatprep.subr.mxu0 0.0
    %1791 = vmatpush1.msra.mxu0 0.0
    %1792 = vmatprep.subr.mxu0 0.0
    %1793 = vmatpush1.msra.mxu0 0.0
    %1794 = vmatprep.subr.mxu0 0.0
    %1795 = vmatpush1.msra.mxu0 0.0
    %1796 = vmatprep.subr.mxu0 0.0
    %1797 = vmatpush1.msra.mxu0 0.0
    %1798 = vmatprep.subr.mxu0 0.0
    %1799 = vmatpush1.msra.mxu0 0.0
    %1800 = vmatprep.subr.mxu0 0.0
    %1801 = vmatpush1.msra.mxu0 0.0
    %1802 = vmatprep.subr.mxu0 0.0
    %1803 = vmatpush1.msra.mxu0 0.0
    %1804 = vmatprep.subr.mxu0 0.0
    %1805 = vmatpush1.msra.mxu0 0.0
    %1806 = vmatprep.subr.mxu0 0.0
    %1807 = vmatpush1.msra.mxu0 0.0
    %1808 = vmatprep.subr.mxu0 0.0
    %1809 = vmatpush1.msra.mxu0 0.0
    %1810 = vmatprep.subr.mxu0 0.0
    %1811 = vmatpush1.msra.mxu0 0.0
    %1812 = vmatprep.subr.mxu0 0.0
    %1813 = vmatpush1.msra.mxu0 0.0
    %1814 = vmatprep.subr.mxu0 0.0
    %1815 = vmatpush1.msra.mxu0 0.0
    %1816 = vmatprep.subr.mxu0 0.0
    %1817 = vmatpush1.msra.mxu0 0.0
    %1818 = vmatprep.mubr.f32.mxu0 0.0
    %1819 = vmatmul.mubr.f32.gmra.mrb[0].mxu0 %v1752
    %v1820 = vpop.f32.mrb[0].mxu0
    %v1821 = vadd.f32 %v562, %v1820
    %v1822 = vpop.f32.mrb[0].mxu0
    %v1823 = vadd.f32 %v566, %v1822
    %1824 = vdwg.mxu0
    %1825 = vmatprep.subr.mxu0 0.0
    %1826 = vmatpush1.msra.mxu0 %v254
    %1827 = vmatprep.subr.mxu0 0.0
    %1828 = vmatpush1.msra.mxu0 %v257
    %1829 = vmatprep.subr.mxu0 0.0
    %1830 = vmatpush1.msra.mxu0 %v260
    %1831 = vmatprep.subr.mxu0 0.0
    %1832 = vmatpush1.msra.mxu0 %v263
    %1833 = vmatprep.subr.mxu0 0.0
    %1834 = vmatpush1.msra.mxu0 0.0
    %1835 = vmatprep.subr.mxu0 0.0
    %1836 = vmatpush1.msra.mxu0 0.0
    %1837 = vmatprep.subr.mxu0 0.0
    %1838 = vmatpush1.msra.mxu0 0.0
    %1839 = vmatprep.subr.mxu0 0.0
    %1840 = vmatpush1.msra.mxu0 0.0
    %1841 = vmatprep.subr.mxu0 0.0
    %1842 = vmatpush1.msra.mxu0 0.0
    %1843 = vmatprep.subr.mxu0 0.0
    %1844 = vmatpush1.msra.mxu0 0.0
    %1845 = vmatprep.subr.mxu0 0.0
    %1846 = vmatpush1.msra.mxu0 0.0
    %1847 = vmatprep.subr.mxu0 0.0
    %1848 = vmatpush1.msra.mxu0 0.0
    %1849 = vmatprep.subr.mxu0 0.0
    %1850 = vmatpush1.msra.mxu0 0.0
    %1851 = vmatprep.subr.mxu0 0.0
    %1852 = vmatpush1.msra.mxu0 0.0
    %1853 = vmatprep.subr.mxu0 0.0
    %1854 = vmatpush1.msra.mxu0 0.0
    %1855 = vmatprep.subr.mxu0 0.0
    %1856 = vmatpush1.msra.mxu0 0.0
    %1857 = vmatprep.subr.mxu0 0.0
    %1858 = vmatpush1.msra.mxu0 0.0
    %1859 = vmatprep.subr.mxu0 0.0
    %1860 = vmatpush1.msra.mxu0 0.0
    %1861 = vmatprep.subr.mxu0 0.0
    %1862 = vmatpush1.msra.mxu0 0.0
    %1863 = vmatprep.subr.mxu0 0.0
    %1864 = vmatpush1.msra.mxu0 0.0
    %1865 = vmatprep.subr.mxu0 0.0
    %1866 = vmatpush1.msra.mxu0 0.0
    %1867 = vmatprep.subr.mxu0 0.0
    %1868 = vmatpush1.msra.mxu0 0.0
    %1869 = vmatprep.subr.mxu0 0.0
    %1870 = vmatpush1.msra.mxu0 0.0
    %1871 = vmatprep.subr.mxu0 0.0
    %1872 = vmatpush1.msra.mxu0 0.0
    %1873 = vmatprep.subr.mxu0 0.0
    %1874 = vmatpush1.msra.mxu0 0.0
    %1875 = vmatprep.subr.mxu0 0.0
    %1876 = vmatpush1.msra.mxu0 0.0
    %1877 = vmatprep.subr.mxu0 0.0
    %1878 = vmatpush1.msra.mxu0 0.0
    %1879 = vmatprep.subr.mxu0 0.0
    %1880 = vmatpush1.msra.mxu0 0.0
    %1881 = vmatprep.subr.mxu0 0.0
    %1882 = vmatpush1.msra.mxu0 0.0
    %1883 = vmatprep.subr.mxu0 0.0
    %1884 = vmatpush1.msra.mxu0 0.0
    %1885 = vmatprep.subr.mxu0 0.0
    %1886 = vmatpush1.msra.mxu0 0.0
    %1887 = vmatprep.subr.mxu0 0.0
    %1888 = vmatpush1.msra.mxu0 0.0
    %1889 = vmatprep.mubr.f32.mxu0 0.0
    %1890 = vmatmul.mubr.f32.gmra.mrb[0].mxu0 %v1752
    %v1891 = vpop.f32.mrb[0].mxu0
    %v1892 = vadd.f32 %v570, %v1891
    %v1893 = vpop.f32.mrb[0].mxu0
    %1894 = vdwg.mxu0
    %v1895 = vadd.f32 %v1748, %v1821
    %v1896 = vxor.u32 %v1895, 2147483648
    %v1897 = vmul.f32 %v1896, 1.442695
    %v1898 = vpow.pop %v1897
    %v1899 = vadd.f32 %v1898, 1.0
    %v1900 = vrcp.pop %v1899
    %v1901 = vmul.f32 1.0, %v1900
    %v1902 = vadd.f32 %v1749, %v1823
    %v1903 = vxor.u32 %v1902, 2147483648
    %v1904 = vmul.f32 %v1903, 1.442695
    %v1905 = vpow.pop %v1904
    %v1906 = vadd.f32 %v1905, 1.0
    %v1907 = vrcp.pop %v1906
    %v1908 = vmul.f32 1.0, %v1907
    %v1909 = vmul.f32 %v1901, %v1892
    %v1910 = vadd.f32 %v1750, %v1909
    %v1911 = vtanh.pop %v1910
    %v1912 = vsub.f32 1.0, %v1908
    %v1913 = vmul.f32 %v1912, %v1911
    %v1914 = vmul.f32 %v1908, %v1747
    %v1915 = vadd.f32 %v1913, %v1914
    %s1916 = scalar_lea.vmem [#allocation6], 96
    %v1917 = vld [vmem:[%s1916] sm:$0xff]
    %v1918 = vld [vmem:[%s1916 + $0x8] sm:$0xff]
    %v1919 = vld [vmem:[%s1916 + $0x10] sm:$0xff]
    %v1920 = vld [vmem:[%s1916 + $0x18] sm:$0xff]
    %v1921 = vld [vmem:[%s1916 + $0x20] sm:$0xff]
    %v1922 = vld [vmem:[%s1916 + $0x28] sm:$0xff]
    %v1923 = vld [vmem:[%s1916 + $0x30] sm:$0xff]
    %v1924 = vld [vmem:[%s1916 + $0x38] sm:$0xff]
    %v1925 = vld [vmem:[%s1916 + $0x40] sm:$0xff]
    %v1926 = vld [vmem:[%s1916 + $0x48] sm:$0xff]
    %v1927 = vld [vmem:[%s1916 + $0x50] sm:$0xff]
    %v1928 = vld [vmem:[%s1916 + $0x58] sm:$0xff]
    %s1929 = scalar_lea.vmem %s5, 3
    %v1930 = vld [vmem:[%s1929] sm:$0x7]
    %s1931 = scalar_lea.vmem %s6, 3
    %v1932 = vld [vmem:[%s1931] sm:$0x7]
    %s1933 = scalar_lea.vmem %s2, 48
    %v1934 = vld [vmem:[%s1933] sm:$0xff]
    %v1935 = vld [vmem:[%s1933 + $0x8] sm:$0xff]
    %v1936 = vld [vmem:[%s1933 + $0x10] sm:$0xff]
    %v1937 = vld [vmem:[%s1933 + $0x18] sm:$0xff]
    %v1938 = vld [vmem:[%s1933 + $0x20] sm:$0xff]
    %v1939 = vld [vmem:[%s1933 + $0x28] sm:$0xff]
    %v1941 = vlaneseq
    %v1942 = vshrl.u32 %v1941, 7
    %v1943 = vsub.s32 0, %v1942
    %v1944 = vrot.slane %v1930, %v1943
    %v1945 = vlaneseq
    %v1946 = vshrl.u32 %v1945, 7
    %v1947 = vsub.s32 1, %v1946
    %v1948 = vrot.slane %v1930, %v1947
    %v1949 = vlaneseq
    %v1950 = vshrl.u32 %v1949, 7
    %v1951 = vsub.s32 2, %v1950
    %v1952 = vrot.slane %v1930, %v1951
    %1956 = vmatprep.subr.mxu0 %v1935
    %1957 = vmatpush1.msra.mxu0 %v1934
    %1958 = vmatprep.subr.mxu0 %v1938
    %1959 = vmatpush1.msra.mxu0 %v1937
    %1960 = vmatprep.subr.mxu0 0.0
    %1961 = vmatpush1.msra.mxu0 0.0
    %1962 = vmatprep.subr.mxu0 0.0
    %1963 = vmatpush1.msra.mxu0 0.0
    %1964 = vmatprep.subr.mxu0 0.0
    %1965 = vmatpush1.msra.mxu0 0.0
    %1966 = vmatprep.subr.mxu0 0.0
    %1967 = vmatpush1.msra.mxu0 0.0
    %1968 = vmatprep.subr.mxu0 0.0
    %1969 = vmatpush1.msra.mxu0 0.0
    %1970 = vmatprep.subr.mxu0 0.0
    %1971 = vmatpush1.msra.mxu0 0.0
    %1972 = vmatprep.subr.mxu0 0.0
    %1973 = vmatpush1.msra.mxu0 0.0
    %1974 = vmatprep.subr.mxu0 0.0
    %1975 = vmatpush1.msra.mxu0 0.0
    %1976 = vmatprep.subr.mxu0 0.0
    %1977 = vmatpush1.msra.mxu0 0.0
    %1978 = vmatprep.subr.mxu0 0.0
    %1979 = vmatpush1.msra.mxu0 0.0
    %1980 = vmatprep.subr.mxu0 0.0
    %1981 = vmatpush1.msra.mxu0 0.0
    %1982 = vmatprep.subr.mxu0 0.0
    %1983 = vmatpush1.msra.mxu0 0.0
    %1984 = vmatprep.subr.mxu0 0.0
    %1985 = vmatpush1.msra.mxu0 0.0
    %1986 = vmatprep.subr.mxu0 0.0
    %1987 = vmatpush1.msra.mxu0 0.0
    %1988 = vmatprep.subr.mxu0 0.0
    %1989 = vmatpush1.msra.mxu0 0.0
    %1990 = vmatprep.subr.mxu0 0.0
    %1991 = vmatpush1.msra.mxu0 0.0
    %1992 = vmatprep.subr.mxu0 0.0
    %1993 = vmatpush1.msra.mxu0 0.0
    %1994 = vmatprep.subr.mxu0 0.0
    %1995 = vmatpush1.msra.mxu0 0.0
    %1996 = vmatprep.subr.mxu0 0.0
    %1997 = vmatpush1.msra.mxu0 0.0
    %1998 = vmatprep.subr.mxu0 0.0
    %1999 = vmatpush1.msra.mxu0 0.0
    %2000 = vmatprep.subr.mxu0 0.0
    %2001 = vmatpush1.msra.mxu0 0.0
    %2002 = vmatprep.subr.mxu0 0.0
    %2003 = vmatpush1.msra.mxu0 0.0
    %2004 = vmatprep.subr.mxu0 0.0
    %2005 = vmatpush1.msra.mxu0 0.0
    %2006 = vmatprep.subr.mxu0 0.0
    %2007 = vmatpush1.msra.mxu0 0.0
    %2008 = vmatprep.subr.mxu0 0.0
    %2009 = vmatpush1.msra.mxu0 0.0
    %2010 = vmatprep.subr.mxu0 0.0
    %2011 = vmatpush1.msra.mxu0 0.0
    %2012 = vmatprep.subr.mxu0 0.0
    %2013 = vmatpush1.msra.mxu0 0.0
    %2014 = vmatprep.subr.mxu0 0.0
    %2015 = vmatpush1.msra.mxu0 0.0
    %2016 = vmatprep.subr.mxu0 0.0
    %2017 = vmatpush1.msra.mxu0 0.0
    %2018 = vmatprep.subr.mxu0 0.0
    %2019 = vmatpush1.msra.mxu0 0.0
    %2020 = vmatprep.mubr.f32.mxu0 0.0
    %2021 = vmatmul.mubr.f32.gmra.mrb[0].mxu0 %v290
    %v2022 = vpop.f32.mrb[0].mxu0
    %v2023 = vadd.f32 %v1944, %v2022
    %v2024 = vpop.f32.mrb[0].mxu0
    %v2025 = vadd.f32 %v1948, %v2024
    %2026 = vmatprep.mubr.f32.mxu0 0.0
    %2027 = vmatmul.mubr.f32.gmra.mrb[0].mxu0 %v293
    %v2028 = vpop.f32.mrb[0].mxu0
    %v2029 = vadd.f32 %v1944, %v2028
    %v2030 = vpop.f32.mrb[0].mxu0
    %v2031 = vadd.f32 %v1948, %v2030
    %2032 = vmatprep.mubr.f32.mxu0 0.0
    %2033 = vmatmul.mubr.f32.gmra.mrb[0].mxu0 %v296
    %v2034 = vpop.f32.mrb[0].mxu0
    %v2035 = vadd.f32 %v1944, %v2034
    %v2036 = vpop.f32.mrb[0].mxu0
    %v2037 = vadd.f32 %v1948, %v2036
    %2038 = vmatprep.mubr.f32.mxu0 0.0
    %2039 = vmatmul.mubr.f32.gmra.mrb[0].mxu0 %v299
    %v2040 = vpop.f32.mrb[0].mxu0
    %v2041 = vadd.f32 %v1944, %v2040
    %v2042 = vpop.f32.mrb[0].mxu0
    %v2043 = vadd.f32 %v1948, %v2042
    %2044 = vmatprep.mubr.f32.mxu0 0.0
    %2045 = vmatmul.mubr.f32.gmra.mrb[0].mxu0 %v302
    %v2046 = vpop.f32.mrb[0].mxu0
    %v2047 = vadd.f32 %v1944, %v2046
    %v2048 = vpop.f32.mrb[0].mxu0
    %v2049 = vadd.f32 %v1948, %v2048
    %2050 = vmatprep.mubr.f32.mxu0 0.0
    %2051 = vmatmul.mubr.f32.gmra.mrb[0].mxu0 %v305
    %v2052 = vpop.f32.mrb[0].mxu0
    %v2053 = vadd.f32 %v1944, %v2052
    %v2054 = vpop.f32.mrb[0].mxu0
    %v2055 = vadd.f32 %v1948, %v2054
    %2056 = vmatprep.mubr.f32.mxu0 0.0
    %2057 = vmatmul.mubr.f32.gmra.mrb[0].mxu0 %v308
    %v2058 = vpop.f32.mrb[0].mxu0
    %v2059 = vadd.f32 %v1944, %v2058
    %v2060 = vpop.f32.mrb[0].mxu0
    %v2061 = vadd.f32 %v1948, %v2060
    %2062 = vmatprep.mubr.f32.mxu0 0.0
    %2063 = vmatmul.mubr.f32.gmra.mrb[0].mxu0 %v311
    %v2064 = vpop.f32.mrb[0].mxu0
    %v2065 = vadd.f32 %v1944, %v2064
    %v2066 = vpop.f32.mrb[0].mxu0
    %v2067 = vadd.f32 %v1948, %v2066
    %2068 = vdwg.mxu0
    %2069 = vmatprep.subr.mxu0 0.0
    %2070 = vmatpush1.msra.mxu0 %v1936
    %2071 = vmatprep.subr.mxu0 0.0
    %2072 = vmatpush1.msra.mxu0 %v1939
    %2073 = vmatprep.subr.mxu0 0.0
    %2074 = vmatpush1.msra.mxu0 0.0
    %2075 = vmatprep.subr.mxu0 0.0
    %2076 = vmatpush1.msra.mxu0 0.0
    %2077 = vmatprep.subr.mxu0 0.0
    %2078 = vmatpush1.msra.mxu0 0.0
    %2079 = vmatprep.subr.mxu0 0.0
    %2080 = vmatpush1.msra.mxu0 0.0
    %2081 = vmatprep.subr.mxu0 0.0
    %2082 = vmatpush1.msra.mxu0 0.0
    %2083 = vmatprep.subr.mxu0 0.0
    %2084 = vmatpush1.msra.mxu0 0.0
    %2085 = vmatprep.subr.mxu0 0.0
    %2086 = vmatpush1.msra.mxu0 0.0
    %2087 = vmatprep.subr.mxu0 0.0
    %2088 = vmatpush1.msra.mxu0 0.0
    %2089 = vmatprep.subr.mxu0 0.0
    %2090 = vmatpush1.msra.mxu0 0.0
    %2091 = vmatprep.subr.mxu0 0.0
    %2092 = vmatpush1.msra.mxu0 0.0
    %2093 = vmatprep.subr.mxu0 0.0
    %2094 = vmatpush1.msra.mxu0 0.0
    %2095 = vmatprep.subr.mxu0 0.0
    %2096 = vmatpush1.msra.mxu0 0.0
    %2097 = vmatprep.subr.mxu0 0.0
    %2098 = vmatpush1.msra.mxu0 0.0
    %2099 = vmatprep.subr.mxu0 0.0
    %2100 = vmatpush1.msra.mxu0 0.0
    %2101 = vmatprep.subr.mxu0 0.0
    %2102 = vmatpush1.msra.mxu0 0.0
    %2103 = vmatprep.subr.mxu0 0.0
    %2104 = vmatpush1.msra.mxu0 0.0
    %2105 = vmatprep.subr.mxu0 0.0
    %2106 = vmatpush1.msra.mxu0 0.0
    %2107 = vmatprep.subr.mxu0 0.0
    %2108 = vmatpush1.msra.mxu0 0.0
    %2109 = vmatprep.subr.mxu0 0.0
    %2110 = vmatpush1.msra.mxu0 0.0
    %2111 = vmatprep.subr.mxu0 0.0
    %2112 = vmatpush1.msra.mxu0 0.0
    %2113 = vmatprep.subr.mxu0 0.0
    %2114 = vmatpush1.msra.mxu0 0.0
    %2115 = vmatprep.subr.mxu0 0.0
    %2116 = vmatpush1.msra.mxu0 0.0
    %2117 = vmatprep.subr.mxu0 0.0
    %2118 = vmatpush1.msra.mxu0 0.0
    %2119 = vmatprep.subr.mxu0 0.0
    %2120 = vmatpush1.msra.mxu0 0.0
    %2121 = vmatprep.subr.mxu0 0.0
    %2122 = vmatpush1.msra.mxu0 0.0
    %2123 = vmatprep.subr.mxu0 0.0
    %2124 = vmatpush1.msra.mxu0 0.0
    %2125 = vmatprep.subr.mxu0 0.0
    %2126 = vmatpush1.msra.mxu0 0.0
    %2127 = vmatprep.subr.mxu0 0.0
    %2128 = vmatpush1.msra.mxu0 0.0
    %2129 = vmatprep.subr.mxu0 0.0
    %2130 = vmatpush1.msra.mxu0 0.0
    %2131 = vmatprep.subr.mxu0 0.0
    %2132 = vmatpush1.msra.mxu0 0.0
    %2133 = vmatprep.mubr.f32.mxu0 0.0
    %2134 = vmatmul.mubr.f32.gmra.mrb[0].mxu0 %v290
    %v2135 = vpop.f32.mrb[0].mxu0
    %v2136 = vadd.f32 %v1952, %v2135
    %v2137 = vpop.f32.mrb[0].mxu0
    %2138 = vmatprep.mubr.f32.mxu0 0.0
    %2139 = vmatmul.mubr.f32.gmra.mrb[0].mxu0 %v293
    %v2140 = vpop.f32.mrb[0].mxu0
    %v2141 = vadd.f32 %v1952, %v2140
    %v2142 = vpop.f32.mrb[0].mxu0
    %2143 = vmatprep.mubr.f32.mxu0 0.0
    %2144 = vmatmul.mubr.f32.gmra.mrb[0].mxu0 %v296
    %v2145 = vpop.f32.mrb[0].mxu0
    %v2146 = vadd.f32 %v1952, %v2145
    %v2147 = vpop.f32.mrb[0].mxu0
    %2148 = vmatprep.mubr.f32.mxu0 0.0
    %2149 = vmatmul.mubr.f32.gmra.mrb[0].mxu0 %v299
    %v2150 = vpop.f32.mrb[0].mxu0
    %v2151 = vadd.f32 %v1952, %v2150
    %v2152 = vpop.f32.mrb[0].mxu0
    %2153 = vmatprep.mubr.f32.mxu0 0.0
    %2154 = vmatmul.mubr.f32.gmra.mrb[0].mxu0 %v302
    %v2155 = vpop.f32.mrb[0].mxu0
    %v2156 = vadd.f32 %v1952, %v2155
    %v2157 = vpop.f32.mrb[0].mxu0
    %2158 = vmatprep.mubr.f32.mxu0 0.0
    %2159 = vmatmul.mubr.f32.gmra.mrb[0].mxu0 %v305
    %v2160 = vpop.f32.mrb[0].mxu0
    %v2161 = vadd.f32 %v1952, %v2160
    %v2162 = vpop.f32.mrb[0].mxu0
    %2163 = vmatprep.mubr.f32.mxu0 0.0
    %2164 = vmatmul.mubr.f32.gmra.mrb[0].mxu0 %v308
    %v2165 = vpop.f32.mrb[0].mxu0
    %v2166 = vadd.f32 %v1952, %v2165
    %v2167 = vpop.f32.mrb[0].mxu0
    %2168 = vmatprep.mubr.f32.mxu0 0.0
    %2169 = vmatmul.mubr.f32.gmra.mrb[0].mxu0 %v311
    %v2170 = vpop.f32.mrb[0].mxu0
    %v2171 = vadd.f32 %v1952, %v2170
    %v2172 = vpop.f32.mrb[0].mxu0
    %2173 = vdwg.mxu0
    %2174 = vst [vmem:[#allocation2] sm:$0xff] %v2023
    %2175 = vst [vmem:[#allocation2 + $0x8] sm:$0xff] %v2025
    %2176 = vst [vmem:[#allocation2 + $0x10] sm:$0xff] %v2136
    %2177 = vst [vmem:[#allocation2 + $0x18] sm:$0xff] %v2029
    %2178 = vst [vmem:[#allocation2 + $0x20] sm:$0xff] %v2031
    %2179 = vst [vmem:[#allocation2 + $0x28] sm:$0xff] %v2141
    %2180 = vst [vmem:[#allocation2 + $0x30] sm:$0xff] %v2035
    %2181 = vst [vmem:[#allocation2 + $0x38] sm:$0xff] %v2037
    %2182 = vst [vmem:[#allocation2 + $0x40] sm:$0xff] %v2146
    %2183 = vst [vmem:[#allocation2 + $0x48] sm:$0xff] %v2041
    %2184 = vst [vmem:[#allocation2 + $0x50] sm:$0xff] %v2043
    %2185 = vst [vmem:[#allocation2 + $0x58] sm:$0xff] %v2151
    %2186 = vst [vmem:[#allocation2 + $0x60] sm:$0xff] %v2047
    %2187 = vst [vmem:[#allocation2 + $0x68] sm:$0xff] %v2049
    %2188 = vst [vmem:[#allocation2 + $0x70] sm:$0xff] %v2156
    %2189 = vst [vmem:[#allocation2 + $0x78] sm:$0xff] %v2053
    %2190 = vst [vmem:[#allocation2 + $0x80] sm:$0xff] %v2055
    %2191 = vst [vmem:[#allocation2 + $0x88] sm:$0xff] %v2161
    %2192 = vst [vmem:[#allocation2 + $0x90] sm:$0xff] %v2059
    %2193 = vst [vmem:[#allocation2 + $0x98] sm:$0xff] %v2061
    %2194 = vst [vmem:[#allocation2 + $0xa0] sm:$0xff] %v2166
    %2195 = vst [vmem:[#allocation2 + $0xa8] sm:$0xff] %v2065
    %2196 = vst [vmem:[#allocation2 + $0xb0] sm:$0xff] %v2067
    %2197 = vst [vmem:[#allocation2 + $0xb8] sm:$0xff] %v2171
    %v2198 = vld [vmem:[#allocation2 + $0xa8] sm:$0xff]
    %v2199 = vld [vmem:[#allocation2 + $0xb0] sm:$0xff]
    %v2200 = vld [vmem:[#allocation2 + $0xb8] sm:$0xff]
    %v2202 = vlaneseq
    %v2203 = vshrl.u32 %v2202, 7
    %v2204 = vsub.s32 0, %v2203
    %v2205 = vrot.slane %v1932, %v2204
    %v2206 = vlaneseq
    %v2207 = vshrl.u32 %v2206, 7
    %v2208 = vsub.s32 1, %v2207
    %v2209 = vrot.slane %v1932, %v2208
    %v2210 = vlaneseq
    %v2211 = vshrl.u32 %v2210, 7
    %v2212 = vsub.s32 2, %v2211
    %v2213 = vrot.slane %v1932, %v2212
    %2217 = vmatprep.subr.mxu0 %v1918
    %2218 = vmatpush1.msra.mxu0 %v1917
    %2219 = vmatprep.subr.mxu0 %v1921
    %2220 = vmatpush1.msra.mxu0 %v1920
    %2221 = vmatprep.subr.mxu0 %v1924
    %2222 = vmatpush1.msra.mxu0 %v1923
    %2223 = vmatprep.subr.mxu0 %v1927
    %2224 = vmatpush1.msra.mxu0 %v1926
    %2225 = vmatprep.subr.mxu0 0.0
    %2226 = vmatpush1.msra.mxu0 0.0
    %2227 = vmatprep.subr.mxu0 0.0
    %2228 = vmatpush1.msra.mxu0 0.0
    %2229 = vmatprep.subr.mxu0 0.0
    %2230 = vmatpush1.msra.mxu0 0.0
    %2231 = vmatprep.subr.mxu0 0.0
    %2232 = vmatpush1.msra.mxu0 0.0
    %2233 = vmatprep.subr.mxu0 0.0
    %2234 = vmatpush1.msra.mxu0 0.0
    %2235 = vmatprep.subr.mxu0 0.0
    %2236 = vmatpush1.msra.mxu0 0.0
    %2237 = vmatprep.subr.mxu0 0.0
    %2238 = vmatpush1.msra.mxu0 0.0
    %2239 = vmatprep.subr.mxu0 0.0
    %2240 = vmatpush1.msra.mxu0 0.0
    %2241 = vmatprep.subr.mxu0 0.0
    %2242 = vmatpush1.msra.mxu0 0.0
    %2243 = vmatprep.subr.mxu0 0.0
    %2244 = vmatpush1.msra.mxu0 0.0
    %2245 = vmatprep.subr.mxu0 0.0
    %2246 = vmatpush1.msra.mxu0 0.0
    %2247 = vmatprep.subr.mxu0 0.0
    %2248 = vmatpush1.msra.mxu0 0.0
    %2249 = vmatprep.subr.mxu0 0.0
    %2250 = vmatpush1.msra.mxu0 0.0
    %2251 = vmatprep.subr.mxu0 0.0
    %2252 = vmatpush1.msra.mxu0 0.0
    %2253 = vmatprep.subr.mxu0 0.0
    %2254 = vmatpush1.msra.mxu0 0.0
    %2255 = vmatprep.subr.mxu0 0.0
    %2256 = vmatpush1.msra.mxu0 0.0
    %2257 = vmatprep.subr.mxu0 0.0
    %2258 = vmatpush1.msra.mxu0 0.0
    %2259 = vmatprep.subr.mxu0 0.0
    %2260 = vmatpush1.msra.mxu0 0.0
    %2261 = vmatprep.subr.mxu0 0.0
    %2262 = vmatpush1.msra.mxu0 0.0
    %2263 = vmatprep.subr.mxu0 0.0
    %2264 = vmatpush1.msra.mxu0 0.0
    %2265 = vmatprep.subr.mxu0 0.0
    %2266 = vmatpush1.msra.mxu0 0.0
    %2267 = vmatprep.subr.mxu0 0.0
    %2268 = vmatpush1.msra.mxu0 0.0
    %2269 = vmatprep.subr.mxu0 0.0
    %2270 = vmatpush1.msra.mxu0 0.0
    %2271 = vmatprep.subr.mxu0 0.0
    %2272 = vmatpush1.msra.mxu0 0.0
    %2273 = vmatprep.subr.mxu0 0.0
    %2274 = vmatpush1.msra.mxu0 0.0
    %2275 = vmatprep.subr.mxu0 0.0
    %2276 = vmatpush1.msra.mxu0 0.0
    %2277 = vmatprep.subr.mxu0 0.0
    %2278 = vmatpush1.msra.mxu0 0.0
    %2279 = vmatprep.subr.mxu0 0.0
    %2280 = vmatpush1.msra.mxu0 0.0
    %2281 = vmatprep.mubr.f32.mxu0 0.0
    %2282 = vmatmul.mubr.f32.gmra.mrb[0].mxu0 %v576
    %v2283 = vpop.f32.mrb[0].mxu0
    %v2284 = vadd.f32 %v2205, %v2283
    %v2285 = vpop.f32.mrb[0].mxu0
    %v2286 = vadd.f32 %v2209, %v2285
    %2287 = vdwg.mxu0
    %2288 = vmatprep.subr.mxu0 0.0
    %2289 = vmatpush1.msra.mxu0 %v1919
    %2290 = vmatprep.subr.mxu0 0.0
    %2291 = vmatpush1.msra.mxu0 %v1922
    %2292 = vmatprep.subr.mxu0 0.0
    %2293 = vmatpush1.msra.mxu0 %v1925
    %2294 = vmatprep.subr.mxu0 0.0
    %2295 = vmatpush1.msra.mxu0 %v1928
    %2296 = vmatprep.subr.mxu0 0.0
    %2297 = vmatpush1.msra.mxu0 0.0
    %2298 = vmatprep.subr.mxu0 0.0
    %2299 = vmatpush1.msra.mxu0 0.0
    %2300 = vmatprep.subr.mxu0 0.0
    %2301 = vmatpush1.msra.mxu0 0.0
    %2302 = vmatprep.subr.mxu0 0.0
    %2303 = vmatpush1.msra.mxu0 0.0
    %2304 = vmatprep.subr.mxu0 0.0
    %2305 = vmatpush1.msra.mxu0 0.0
    %2306 = vmatprep.subr.mxu0 0.0
    %2307 = vmatpush1.msra.mxu0 0.0
    %2308 = vmatprep.subr.mxu0 0.0
    %2309 = vmatpush1.msra.mxu0 0.0
    %2310 = vmatprep.subr.mxu0 0.0
    %2311 = vmatpush1.msra.mxu0 0.0
    %2312 = vmatprep.subr.mxu0 0.0
    %2313 = vmatpush1.msra.mxu0 0.0
    %2314 = vmatprep.subr.mxu0 0.0
    %2315 = vmatpush1.msra.mxu0 0.0
    %2316 = vmatprep.subr.mxu0 0.0
    %2317 = vmatpush1.msra.mxu0 0.0
    %2318 = vmatprep.subr.mxu0 0.0
    %2319 = vmatpush1.msra.mxu0 0.0
    %2320 = vmatprep.subr.mxu0 0.0
    %2321 = vmatpush1.msra.mxu0 0.0
    %2322 = vmatprep.subr.mxu0 0.0
    %2323 = vmatpush1.msra.mxu0 0.0
    %2324 = vmatprep.subr.mxu0 0.0
    %2325 = vmatpush1.msra.mxu0 0.0
    %2326 = vmatprep.subr.mxu0 0.0
    %2327 = vmatpush1.msra.mxu0 0.0
    %2328 = vmatprep.subr.mxu0 0.0
    %2329 = vmatpush1.msra.mxu0 0.0
    %2330 = vmatprep.subr.mxu0 0.0
    %2331 = vmatpush1.msra.mxu0 0.0
    %2332 = vmatprep.subr.mxu0 0.0
    %2333 = vmatpush1.msra.mxu0 0.0
    %2334 = vmatprep.subr.mxu0 0.0
    %2335 = vmatpush1.msra.mxu0 0.0
    %2336 = vmatprep.subr.mxu0 0.0
    %2337 = vmatpush1.msra.mxu0 0.0
    %2338 = vmatprep.subr.mxu0 0.0
    %2339 = vmatpush1.msra.mxu0 0.0
    %2340 = vmatprep.subr.mxu0 0.0
    %2341 = vmatpush1.msra.mxu0 0.0
    %2342 = vmatprep.subr.mxu0 0.0
    %2343 = vmatpush1.msra.mxu0 0.0
    %2344 = vmatprep.subr.mxu0 0.0
    %2345 = vmatpush1.msra.mxu0 0.0
    %2346 = vmatprep.subr.mxu0 0.0
    %2347 = vmatpush1.msra.mxu0 0.0
    %2348 = vmatprep.subr.mxu0 0.0
    %2349 = vmatpush1.msra.mxu0 0.0
    %2350 = vmatprep.subr.mxu0 0.0
    %2351 = vmatpush1.msra.mxu0 0.0
    %2352 = vmatprep.mubr.f32.mxu0 0.0
    %2353 = vmatmul.mubr.f32.gmra.mrb[0].mxu0 %v576
    %v2354 = vpop.f32.mrb[0].mxu0
    %v2355 = vadd.f32 %v2213, %v2354
    %v2356 = vpop.f32.mrb[0].mxu0
    %2357 = vdwg.mxu0
    %v2358 = vadd.f32 %v2198, %v2284
    %v2359 = vxor.u32 %v2358, 2147483648
    %v2360 = vmul.f32 %v2359, 1.442695
    %v2361 = vpow.pop %v2360
    %v2362 = vadd.f32 %v2361, 1.0
    %v2363 = vrcp.pop %v2362
    %v2364 = vmul.f32 1.0, %v2363
    %v2365 = vadd.f32 %v2199, %v2286
    %v2366 = vxor.u32 %v2365, 2147483648
    %v2367 = vmul.f32 %v2366, 1.442695
    %v2368 = vpow.pop %v2367
    %v2369 = vadd.f32 %v2368, 1.0
    %v2370 = vrcp.pop %v2369
    %v2371 = vmul.f32 1.0, %v2370
    %v2372 = vmul.f32 %v2364, %v2355
    %v2373 = vadd.f32 %v2200, %v2372
    %v2374 = vtanh.pop %v2373
    %v2375 = vsub.f32 1.0, %v2371
    %v2376 = vmul.f32 %v2375, %v2374
    %v2377 = vmul.f32 %v2371, 0.0
    %v2378 = vadd.f32 %v2376, %v2377
    %v2379 = vld [vmem:[#allocation2 + $0x90] sm:$0xff]
    %v2380 = vld [vmem:[#allocation2 + $0x98] sm:$0xff]
    %v2381 = vld [vmem:[#allocation2 + $0xa0] sm:$0xff]
    %v2383 = vsel %vm574, %v2378, 0
    %2385 = vmatprep.subr.mxu0 %v1918
    %2386 = vmatpush1.msra.mxu0 %v1917
    %2387 = vmatprep.subr.mxu0 %v1921
    %2388 = vmatpush1.msra.mxu0 %v1920
    %2389 = vmatprep.subr.mxu0 %v1924
    %2390 = vmatpush1.msra.mxu0 %v1923
    %2391 = vmatprep.subr.mxu0 %v1927
    %2392 = vmatpush1.msra.mxu0 %v1926
    %2393 = vmatprep.subr.mxu0 0.0
    %2394 = vmatpush1.msra.mxu0 0.0
    %2395 = vmatprep.subr.mxu0 0.0
    %2396 = vmatpush1.msra.mxu0 0.0
    %2397 = vmatprep.subr.mxu0 0.0
    %2398 = vmatpush1.msra.mxu0 0.0
    %2399 = vmatprep.subr.mxu0 0.0
    %2400 = vmatpush1.msra.mxu0 0.0
    %2401 = vmatprep.subr.mxu0 0.0
    %2402 = vmatpush1.msra.mxu0 0.0
    %2403 = vmatprep.subr.mxu0 0.0
    %2404 = vmatpush1.msra.mxu0 0.0
    %2405 = vmatprep.subr.mxu0 0.0
    %2406 = vmatpush1.msra.mxu0 0.0
    %2407 = vmatprep.subr.mxu0 0.0
    %2408 = vmatpush1.msra.mxu0 0.0
    %2409 = vmatprep.subr.mxu0 0.0
    %2410 = vmatpush1.msra.mxu0 0.0
    %2411 = vmatprep.subr.mxu0 0.0
    %2412 = vmatpush1.msra.mxu0 0.0
    %2413 = vmatprep.subr.mxu0 0.0
    %2414 = vmatpush1.msra.mxu0 0.0
    %2415 = vmatprep.subr.mxu0 0.0
    %2416 = vmatpush1.msra.mxu0 0.0
    %2417 = vmatprep.subr.mxu0 0.0
    %2418 = vmatpush1.msra.mxu0 0.0
    %2419 = vmatprep.subr.mxu0 0.0
    %2420 = vmatpush1.msra.mxu0 0.0
    %2421 = vmatprep.subr.mxu0 0.0
    %2422 = vmatpush1.msra.mxu0 0.0
    %2423 = vmatprep.subr.mxu0 0.0
    %2424 = vmatpush1.msra.mxu0 0.0
    %2425 = vmatprep.subr.mxu0 0.0
    %2426 = vmatpush1.msra.mxu0 0.0
    %2427 = vmatprep.subr.mxu0 0.0
    %2428 = vmatpush1.msra.mxu0 0.0
    %2429 = vmatprep.subr.mxu0 0.0
    %2430 = vmatpush1.msra.mxu0 0.0
    %2431 = vmatprep.subr.mxu0 0.0
    %2432 = vmatpush1.msra.mxu0 0.0
    %2433 = vmatprep.subr.mxu0 0.0
    %2434 = vmatpush1.msra.mxu0 0.0
    %2435 = vmatprep.subr.mxu0 0.0
    %2436 = vmatpush1.msra.mxu0 0.0
    %2437 = vmatprep.subr.mxu0 0.0
    %2438 = vmatpush1.msra.mxu0 0.0
    %2439 = vmatprep.subr.mxu0 0.0
    %2440 = vmatpush1.msra.mxu0 0.0
    %2441 = vmatprep.subr.mxu0 0.0
    %2442 = vmatpush1.msra.mxu0 0.0
    %2443 = vmatprep.subr.mxu0 0.0
    %2444 = vmatpush1.msra.mxu0 0.0
    %2445 = vmatprep.subr.mxu0 0.0
    %2446 = vmatpush1.msra.mxu0 0.0
    %2447 = vmatprep.subr.mxu0 0.0
    %2448 = vmatpush1.msra.mxu0 0.0
    %2449 = vmatprep.mubr.f32.mxu0 0.0
    %2450 = vmatmul.mubr.f32.gmra.mrb[0].mxu0 %v2383
    %v2451 = vpop.f32.mrb[0].mxu0
    %v2452 = vadd.f32 %v2205, %v2451
    %v2453 = vpop.f32.mrb[0].mxu0
    %v2454 = vadd.f32 %v2209, %v2453
    %2455 = vdwg.mxu0
    %2456 = vmatprep.subr.mxu0 0.0
    %2457 = vmatpush1.msra.mxu0 %v1919
    %2458 = vmatprep.subr.mxu0 0.0
    %2459 = vmatpush1.msra.mxu0 %v1922
    %2460 = vmatprep.subr.mxu0 0.0
    %2461 = vmatpush1.msra.mxu0 %v1925
    %2462 = vmatprep.subr.mxu0 0.0
    %2463 = vmatpush1.msra.mxu0 %v1928
    %2464 = vmatprep.subr.mxu0 0.0
    %2465 = vmatpush1.msra.mxu0 0.0
    %2466 = vmatprep.subr.mxu0 0.0
    %2467 = vmatpush1.msra.mxu0 0.0
    %2468 = vmatprep.subr.mxu0 0.0
    %2469 = vmatpush1.msra.mxu0 0.0
    %2470 = vmatprep.subr.mxu0 0.0
    %2471 = vmatpush1.msra.mxu0 0.0
    %2472 = vmatprep.subr.mxu0 0.0
    %2473 = vmatpush1.msra.mxu0 0.0
    %2474 = vmatprep.subr.mxu0 0.0
    %2475 = vmatpush1.msra.mxu0 0.0
    %2476 = vmatprep.subr.mxu0 0.0
    %2477 = vmatpush1.msra.mxu0 0.0
    %2478 = vmatprep.subr.mxu0 0.0
    %2479 = vmatpush1.msra.mxu0 0.0
    %2480 = vmatprep.subr.mxu0 0.0
    %2481 = vmatpush1.msra.mxu0 0.0
    %2482 = vmatprep.subr.mxu0 0.0
    %2483 = vmatpush1.msra.mxu0 0.0
    %2484 = vmatprep.subr.mxu0 0.0
    %2485 = vmatpush1.msra.mxu0 0.0
    %2486 = vmatprep.subr.mxu0 0.0
    %2487 = vmatpush1.msra.mxu0 0.0
    %2488 = vmatprep.subr.mxu0 0.0
    %2489 = vmatpush1.msra.mxu0 0.0
    %2490 = vmatprep.subr.mxu0 0.0
    %2491 = vmatpush1.msra.mxu0 0.0
    %2492 = vmatprep.subr.mxu0 0.0
    %2493 = vmatpush1.msra.mxu0 0.0
    %2494 = vmatprep.subr.mxu0 0.0
    %2495 = vmatpush1.msra.mxu0 0.0
    %2496 = vmatprep.subr.mxu0 0.0
    %2497 = vmatpush1.msra.mxu0 0.0
    %2498 = vmatprep.subr.mxu0 0.0
    %2499 = vmatpush1.msra.mxu0 0.0
    %2500 = vmatprep.subr.mxu0 0.0
    %2501 = vmatpush1.msra.mxu0 0.0
    %2502 = vmatprep.subr.mxu0 0.0
    %2503 = vmatpush1.msra.mxu0 0.0
    %2504 = vmatprep.subr.mxu0 0.0
    %2505 = vmatpush1.msra.mxu0 0.0
    %2506 = vmatprep.subr.mxu0 0.0
    %2507 = vmatpush1.msra.mxu0 0.0
    %2508 = vmatprep.subr.mxu0 0.0
    %2509 = vmatpush1.msra.mxu0 0.0
    %2510 = vmatprep.subr.mxu0 0.0
    %2511 = vmatpush1.msra.mxu0 0.0
    %2512 = vmatprep.subr.mxu0 0.0
    %2513 = vmatpush1.msra.mxu0 0.0
    %2514 = vmatprep.subr.mxu0 0.0
    %2515 = vmatpush1.msra.mxu0 0.0
    %2516 = vmatprep.subr.mxu0 0.0
    %2517 = vmatpush1.msra.mxu0 0.0
    %2518 = vmatprep.subr.mxu0 0.0
    %2519 = vmatpush1.msra.mxu0 0.0
    %2520 = vmatprep.mubr.f32.mxu0 0.0
    %2521 = vmatmul.mubr.f32.gmra.mrb[0].mxu0 %v2383
    %v2522 = vpop.f32.mrb[0].mxu0
    %v2523 = vadd.f32 %v2213, %v2522
    %v2524 = vpop.f32.mrb[0].mxu0
    %2525 = vdwg.mxu0
    %v2526 = vadd.f32 %v2379, %v2452
    %v2527 = vxor.u32 %v2526, 2147483648
    %v2528 = vmul.f32 %v2527, 1.442695
    %v2529 = vpow.pop %v2528
    %v2530 = vadd.f32 %v2529, 1.0
    %v2531 = vrcp.pop %v2530
    %v2532 = vmul.f32 1.0, %v2531
    %v2533 = vadd.f32 %v2380, %v2454
    %v2534 = vxor.u32 %v2533, 2147483648
    %v2535 = vmul.f32 %v2534, 1.442695
    %v2536 = vpow.pop %v2535
    %v2537 = vadd.f32 %v2536, 1.0
    %v2538 = vrcp.pop %v2537
    %v2539 = vmul.f32 1.0, %v2538
    %v2540 = vmul.f32 %v2532, %v2523
    %v2541 = vadd.f32 %v2381, %v2540
    %v2542 = vtanh.pop %v2541
    %v2543 = vsub.f32 1.0, %v2539
    %v2544 = vmul.f32 %v2543, %v2542
    %v2545 = vmul.f32 %v2539, %v2378
    %v2546 = vadd.f32 %v2544, %v2545
    %v2547 = vld [vmem:[#allocation2 + $0x78] sm:$0xff]
    %v2548 = vld [vmem:[#allocation2 + $0x80] sm:$0xff]
    %v2549 = vld [vmem:[#allocation2 + $0x88] sm:$0xff]
    %v2551 = vsel %vm574, %v2546, 0
    %2553 = vmatprep.subr.mxu0 %v1918
    %2554 = vmatpush1.msra.mxu0 %v1917
    %2555 = vmatprep.subr.mxu0 %v1921
    %2556 = vmatpush1.msra.mxu0 %v1920
    %2557 = vmatprep.subr.mxu0 %v1924
    %2558 = vmatpush1.msra.mxu0 %v1923
    %2559 = vmatprep.subr.mxu0 %v1927
    %2560 = vmatpush1.msra.mxu0 %v1926
    %2561 = vmatprep.subr.mxu0 0.0
    %2562 = vmatpush1.msra.mxu0 0.0
    %2563 = vmatprep.subr.mxu0 0.0
    %2564 = vmatpush1.msra.mxu0 0.0
    %2565 = vmatprep.subr.mxu0 0.0
    %2566 = vmatpush1.msra.mxu0 0.0
    %2567 = vmatprep.subr.mxu0 0.0
    %2568 = vmatpush1.msra.mxu0 0.0
    %2569 = vmatprep.subr.mxu0 0.0
    %2570 = vmatpush1.msra.mxu0 0.0
    %2571 = vmatprep.subr.mxu0 0.0
    %2572 = vmatpush1.msra.mxu0 0.0
    %2573 = vmatprep.subr.mxu0 0.0
    %2574 = vmatpush1.msra.mxu0 0.0
    %2575 = vmatprep.subr.mxu0 0.0
    %2576 = vmatpush1.msra.mxu0 0.0
    %2577 = vmatprep.subr.mxu0 0.0
    %2578 = vmatpush1.msra.mxu0 0.0
    %2579 = vmatprep.subr.mxu0 0.0
    %2580 = vmatpush1.msra.mxu0 0.0
    %2581 = vmatprep.subr.mxu0 0.0
    %2582 = vmatpush1.msra.mxu0 0.0
    %2583 = vmatprep.subr.mxu0 0.0
    %2584 = vmatpush1.msra.mxu0 0.0
    %2585 = vmatprep.subr.mxu0 0.0
    %2586 = vmatpush1.msra.mxu0 0.0
    %2587 = vmatprep.subr.mxu0 0.0
    %2588 = vmatpush1.msra.mxu0 0.0
    %2589 = vmatprep.subr.mxu0 0.0
    %2590 = vmatpush1.msra.mxu0 0.0
    %2591 = vmatprep.subr.mxu0 0.0
    %2592 = vmatpush1.msra.mxu0 0.0
    %2593 = vmatprep.subr.mxu0 0.0
    %2594 = vmatpush1.msra.mxu0 0.0
    %2595 = vmatprep.subr.mxu0 0.0
    %2596 = vmatpush1.msra.mxu0 0.0
    %2597 = vmatprep.subr.mxu0 0.0
    %2598 = vmatpush1.msra.mxu0 0.0
    %2599 = vmatprep.subr.mxu0 0.0
    %2600 = vmatpush1.msra.mxu0 0.0
    %2601 = vmatprep.subr.mxu0 0.0
    %2602 = vmatpush1.msra.mxu0 0.0
    %2603 = vmatprep.subr.mxu0 0.0
    %2604 = vmatpush1.msra.mxu0 0.0
    %2605 = vmatprep.subr.mxu0 0.0
    %2606 = vmatpush1.msra.mxu0 0.0
    %2607 = vmatprep.subr.mxu0 0.0
    %2608 = vmatpush1.msra.mxu0 0.0
    %2609 = vmatprep.subr.mxu0 0.0
    %2610 = vmatpush1.msra.mxu0 0.0
    %2611 = vmatprep.subr.mxu0 0.0
    %2612 = vmatpush1.msra.mxu0 0.0
    %2613 = vmatprep.subr.mxu0 0.0
    %2614 = vmatpush1.msra.mxu0 0.0
    %2615 = vmatprep.subr.mxu0 0.0
    %2616 = vmatpush1.msra.mxu0 0.0
    %2617 = vmatprep.mubr.f32.mxu0 0.0
    %2618 = vmatmul.mubr.f32.gmra.mrb[0].mxu0 %v2551
    %v2619 = vpop.f32.mrb[0].mxu0
    %v2620 = vadd.f32 %v2205, %v2619
    %v2621 = vpop.f32.mrb[0].mxu0
    %v2622 = vadd.f32 %v2209, %v2621
    %2623 = vdwg.mxu0
    %2624 = vmatprep.subr.mxu0 0.0
    %2625 = vmatpush1.msra.mxu0 %v1919
    %2626 = vmatprep.subr.mxu0 0.0
    %2627 = vmatpush1.msra.mxu0 %v1922
    %2628 = vmatprep.subr.mxu0 0.0
    %2629 = vmatpush1.msra.mxu0 %v1925
    %2630 = vmatprep.subr.mxu0 0.0
    %2631 = vmatpush1.msra.mxu0 %v1928
    %2632 = vmatprep.subr.mxu0 0.0
    %2633 = vmatpush1.msra.mxu0 0.0
    %2634 = vmatprep.subr.mxu0 0.0
    %2635 = vmatpush1.msra.mxu0 0.0
    %2636 = vmatprep.subr.mxu0 0.0
    %2637 = vmatpush1.msra.mxu0 0.0
    %2638 = vmatprep.subr.mxu0 0.0
    %2639 = vmatpush1.msra.mxu0 0.0
    %2640 = vmatprep.subr.mxu0 0.0
    %2641 = vmatpush1.msra.mxu0 0.0
    %2642 = vmatprep.subr.mxu0 0.0
    %2643 = vmatpush1.msra.mxu0 0.0
    %2644 = vmatprep.subr.mxu0 0.0
    %2645 = vmatpush1.msra.mxu0 0.0
    %2646 = vmatprep.subr.mxu0 0.0
    %2647 = vmatpush1.msra.mxu0 0.0
    %2648 = vmatprep.subr.mxu0 0.0
    %2649 = vmatpush1.msra.mxu0 0.0
    %2650 = vmatprep.subr.mxu0 0.0
    %2651 = vmatpush1.msra.mxu0 0.0
    %2652 = vmatprep.subr.mxu0 0.0
    %2653 = vmatpush1.msra.mxu0 0.0
    %2654 = vmatprep.subr.mxu0 0.0
    %2655 = vmatpush1.msra.mxu0 0.0
    %2656 = vmatprep.subr.mxu0 0.0
    %2657 = vmatpush1.msra.mxu0 0.0
    %2658 = vmatprep.subr.mxu0 0.0
    %2659 = vmatpush1.msra.mxu0 0.0
    %2660 = vmatprep.subr.mxu0 0.0
    %2661 = vmatpush1.msra.mxu0 0.0
    %2662 = vmatprep.subr.mxu0 0.0
    %2663 = vmatpush1.msra.mxu0 0.0
    %2664 = vmatprep.subr.mxu0 0.0
    %2665 = vmatpush1.msra.mxu0 0.0
    %2666 = vmatprep.subr.mxu0 0.0
    %2667 = vmatpush1.msra.mxu0 0.0
    %2668 = vmatprep.subr.mxu0 0.0
    %2669 = vmatpush1.msra.mxu0 0.0
    %2670 = vmatprep.subr.mxu0 0.0
    %2671 = vmatpush1.msra.mxu0 0.0
    %2672 = vmatprep.subr.mxu0 0.0
    %2673 = vmatpush1.msra.mxu0 0.0
    %2674 = vmatprep.subr.mxu0 0.0
    %2675 = vmatpush1.msra.mxu0 0.0
    %2676 = vmatprep.subr.mxu0 0.0
    %2677 = vmatpush1.msra.mxu0 0.0
    %2678 = vmatprep.subr.mxu0 0.0
    %2679 = vmatpush1.msra.mxu0 0.0
    %2680 = vmatprep.subr.mxu0 0.0
    %2681 = vmatpush1.msra.mxu0 0.0
    %2682 = vmatprep.subr.mxu0 0.0
    %2683 = vmatpush1.msra.mxu0 0.0
    %2684 = vmatprep.subr.mxu0 0.0
    %2685 = vmatpush1.msra.mxu0 0.0
    %2686 = vmatprep.subr.mxu0 0.0
    %2687 = vmatpush1.msra.mxu0 0.0
    %2688 = vmatprep.mubr.f32.mxu0 0.0
    %2689 = vmatmul.mubr.f32.gmra.mrb[0].mxu0 %v2551
    %v2690 = vpop.f32.mrb[0].mxu0
    %v2691 = vadd.f32 %v2213, %v2690
    %v2692 = vpop.f32.mrb[0].mxu0
    %2693 = vdwg.mxu0
    %v2694 = vadd.f32 %v2547, %v2620
    %v2695 = vxor.u32 %v2694, 2147483648
    %v2696 = vmul.f32 %v2695, 1.442695
    %v2697 = vpow.pop %v2696
    %v2698 = vadd.f32 %v2697, 1.0
    %v2699 = vrcp.pop %v2698
    %v2700 = vmul.f32 1.0, %v2699
    %v2701 = vadd.f32 %v2548, %v2622
    %v2702 = vxor.u32 %v2701, 2147483648
    %v2703 = vmul.f32 %v2702, 1.442695
    %v2704 = vpow.pop %v2703
    %v2705 = vadd.f32 %v2704, 1.0
    %v2706 = vrcp.pop %v2705
    %v2707 = vmul.f32 1.0, %v2706
    %v2708 = vmul.f32 %v2700, %v2691
    %v2709 = vadd.f32 %v2549, %v2708
    %v2710 = vtanh.pop %v2709
    %v2711 = vsub.f32 1.0, %v2707
    %v2712 = vmul.f32 %v2711, %v2710
    %v2713 = vmul.f32 %v2707, %v2546
    %v2714 = vadd.f32 %v2712, %v2713
    %v2715 = vld [vmem:[#allocation2 + $0x60] sm:$0xff]
    %v2716 = vld [vmem:[#allocation2 + $0x68] sm:$0xff]
    %v2717 = vld [vmem:[#allocation2 + $0x70] sm:$0xff]
    %v2719 = vsel %vm574, %v2714, 0
    %2721 = vmatprep.subr.mxu0 %v1918
    %2722 = vmatpush1.msra.mxu0 %v1917
    %2723 = vmatprep.subr.mxu0 %v1921
    %2724 = vmatpush1.msra.mxu0 %v1920
    %2725 = vmatprep.subr.mxu0 %v1924
    %2726 = vmatpush1.msra.mxu0 %v1923
    %2727 = vmatprep.subr.mxu0 %v1927
    %2728 = vmatpush1.msra.mxu0 %v1926
    %2729 = vmatprep.subr.mxu0 0.0
    %2730 = vmatpush1.msra.mxu0 0.0
    %2731 = vmatprep.subr.mxu0 0.0
    %2732 = vmatpush1.msra.mxu0 0.0
    %2733 = vmatprep.subr.mxu0 0.0
    %2734 = vmatpush1.msra.mxu0 0.0
    %2735 = vmatprep.subr.mxu0 0.0
    %2736 = vmatpush1.msra.mxu0 0.0
    %2737 = vmatprep.subr.mxu0 0.0
    %2738 = vmatpush1.msra.mxu0 0.0
    %2739 = vmatprep.subr.mxu0 0.0
    %2740 = vmatpush1.msra.mxu0 0.0
    %2741 = vmatprep.subr.mxu0 0.0
    %2742 = vmatpush1.msra.mxu0 0.0
    %2743 = vmatprep.subr.mxu0 0.0
    %2744 = vmatpush1.msra.mxu0 0.0
    %2745 = vmatprep.subr.mxu0 0.0
    %2746 = vmatpush1.msra.mxu0 0.0
    %2747 = vmatprep.subr.mxu0 0.0
    %2748 = vmatpush1.msra.mxu0 0.0
    %2749 = vmatprep.subr.mxu0 0.0
    %2750 = vmatpush1.msra.mxu0 0.0
    %2751 = vmatprep.subr.mxu0 0.0
    %2752 = vmatpush1.msra.mxu0 0.0
    %2753 = vmatprep.subr.mxu0 0.0
    %2754 = vmatpush1.msra.mxu0 0.0
    %2755 = vmatprep.subr.mxu0 0.0
    %2756 = vmatpush1.msra.mxu0 0.0
    %2757 = vmatprep.subr.mxu0 0.0
    %2758 = vmatpush1.msra.mxu0 0.0
    %2759 = vmatprep.subr.mxu0 0.0
    %2760 = vmatpush1.msra.mxu0 0.0
    %2761 = vmatprep.subr.mxu0 0.0
    %2762 = vmatpush1.msra.mxu0 0.0
    %2763 = vmatprep.subr.mxu0 0.0
    %2764 = vmatpush1.msra.mxu0 0.0
    %2765 = vmatprep.subr.mxu0 0.0
    %2766 = vmatpush1.msra.mxu0 0.0
    %2767 = vmatprep.subr.mxu0 0.0
    %2768 = vmatpush1.msra.mxu0 0.0
    %2769 = vmatprep.subr.mxu0 0.0
    %2770 = vmatpush1.msra.mxu0 0.0
    %2771 = vmatprep.subr.mxu0 0.0
    %2772 = vmatpush1.msra.mxu0 0.0
    %2773 = vmatprep.subr.mxu0 0.0
    %2774 = vmatpush1.msra.mxu0 0.0
    %2775 = vmatprep.subr.mxu0 0.0
    %2776 = vmatpush1.msra.mxu0 0.0
    %2777 = vmatprep.subr.mxu0 0.0
    %2778 = vmatpush1.msra.mxu0 0.0
    %2779 = vmatprep.subr.mxu0 0.0
    %2780 = vmatpush1.msra.mxu0 0.0
    %2781 = vmatprep.subr.mxu0 0.0
    %2782 = vmatpush1.msra.mxu0 0.0
    %2783 = vmatprep.subr.mxu0 0.0
    %2784 = vmatpush1.msra.mxu0 0.0
    %2785 = vmatprep.mubr.f32.mxu0 0.0
    %2786 = vmatmul.mubr.f32.gmra.mrb[0].mxu0 %v2719
    %v2787 = vpop.f32.mrb[0].mxu0
    %v2788 = vadd.f32 %v2205, %v2787
    %v2789 = vpop.f32.mrb[0].mxu0
    %v2790 = vadd.f32 %v2209, %v2789
    %2791 = vdwg.mxu0
    %2792 = vmatprep.subr.mxu0 0.0
    %2793 = vmatpush1.msra.mxu0 %v1919
    %2794 = vmatprep.subr.mxu0 0.0
    %2795 = vmatpush1.msra.mxu0 %v1922
    %2796 = vmatprep.subr.mxu0 0.0
    %2797 = vmatpush1.msra.mxu0 %v1925
    %2798 = vmatprep.subr.mxu0 0.0
    %2799 = vmatpush1.msra.mxu0 %v1928
    %2800 = vmatprep.subr.mxu0 0.0
    %2801 = vmatpush1.msra.mxu0 0.0
    %2802 = vmatprep.subr.mxu0 0.0
    %2803 = vmatpush1.msra.mxu0 0.0
    %2804 = vmatprep.subr.mxu0 0.0
    %2805 = vmatpush1.msra.mxu0 0.0
    %2806 = vmatprep.subr.mxu0 0.0
    %2807 = vmatpush1.msra.mxu0 0.0
    %2808 = vmatprep.subr.mxu0 0.0
    %2809 = vmatpush1.msra.mxu0 0.0
    %2810 = vmatprep.subr.mxu0 0.0
    %2811 = vmatpush1.msra.mxu0 0.0
    %2812 = vmatprep.subr.mxu0 0.0
    %2813 = vmatpush1.msra.mxu0 0.0
    %2814 = vmatprep.subr.mxu0 0.0
    %2815 = vmatpush1.msra.mxu0 0.0
    %2816 = vmatprep.subr.mxu0 0.0
    %2817 = vmatpush1.msra.mxu0 0.0
    %2818 = vmatprep.subr.mxu0 0.0
    %2819 = vmatpush1.msra.mxu0 0.0
    %2820 = vmatprep.subr.mxu0 0.0
    %2821 = vmatpush1.msra.mxu0 0.0
    %2822 = vmatprep.subr.mxu0 0.0
    %2823 = vmatpush1.msra.mxu0 0.0
    %2824 = vmatprep.subr.mxu0 0.0
    %2825 = vmatpush1.msra.mxu0 0.0
    %2826 = vmatprep.subr.mxu0 0.0
    %2827 = vmatpush1.msra.mxu0 0.0
    %2828 = vmatprep.subr.mxu0 0.0
    %2829 = vmatpush1.msra.mxu0 0.0
    %2830 = vmatprep.subr.mxu0 0.0
    %2831 = vmatpush1.msra.mxu0 0.0
    %2832 = vmatprep.subr.mxu0 0.0
    %2833 = vmatpush1.msra.mxu0 0.0
    %2834 = vmatprep.subr.mxu0 0.0
    %2835 = vmatpush1.msra.mxu0 0.0
    %2836 = vmatprep.subr.mxu0 0.0
    %2837 = vmatpush1.msra.mxu0 0.0
    %2838 = vmatprep.subr.mxu0 0.0
    %2839 = vmatpush1.msra.mxu0 0.0
    %2840 = vmatprep.subr.mxu0 0.0
    %2841 = vmatpush1.msra.mxu0 0.0
    %2842 = vmatprep.subr.mxu0 0.0
    %2843 = vmatpush1.msra.mxu0 0.0
    %2844 = vmatprep.subr.mxu0 0.0
    %2845 = vmatpush1.msra.mxu0 0.0
    %2846 = vmatprep.subr.mxu0 0.0
    %2847 = vmatpush1.msra.mxu0 0.0
    %2848 = vmatprep.subr.mxu0 0.0
    %2849 = vmatpush1.msra.mxu0 0.0
    %2850 = vmatprep.subr.mxu0 0.0
    %2851 = vmatpush1.msra.mxu0 0.0
    %2852 = vmatprep.subr.mxu0 0.0
    %2853 = vmatpush1.msra.mxu0 0.0
    %2854 = vmatprep.subr.mxu0 0.0
    %2855 = vmatpush1.msra.mxu0 0.0
    %2856 = vmatprep.mubr.f32.mxu0 0.0
    %2857 = vmatmul.mubr.f32.gmra.mrb[0].mxu0 %v2719
    %v2858 = vpop.f32.mrb[0].mxu0
    %v2859 = vadd.f32 %v2213, %v2858
    %v2860 = vpop.f32.mrb[0].mxu0
    %2861 = vdwg.mxu0
    %v2862 = vadd.f32 %v2715, %v2788
    %v2863 = vxor.u32 %v2862, 2147483648
    %v2864 = vmul.f32 %v2863, 1.442695
    %v2865 = vpow.pop %v2864
    %v2866 = vadd.f32 %v2865, 1.0
    %v2867 = vrcp.pop %v2866
    %v2868 = vmul.f32 1.0, %v2867
    %v2869 = vadd.f32 %v2716, %v2790
    %v2870 = vxor.u32 %v2869, 2147483648
    %v2871 = vmul.f32 %v2870, 1.442695
    %v2872 = vpow.pop %v2871
    %v2873 = vadd.f32 %v2872, 1.0
    %v2874 = vrcp.pop %v2873
    %v2875 = vmul.f32 1.0, %v2874
    %v2876 = vmul.f32 %v2868, %v2859
    %v2877 = vadd.f32 %v2717, %v2876
    %v2878 = vtanh.pop %v2877
    %v2879 = vsub.f32 1.0, %v2875
    %v2880 = vmul.f32 %v2879, %v2878
    %v2881 = vmul.f32 %v2875, %v2714
    %v2882 = vadd.f32 %v2880, %v2881
    %v2883 = vld [vmem:[#allocation2 + $0x48] sm:$0xff]
    %v2884 = vld [vmem:[#allocation2 + $0x50] sm:$0xff]
    %v2885 = vld [vmem:[#allocation2 + $0x58] sm:$0xff]
    %v2887 = vsel %vm574, %v2882, 0
    %2889 = vmatprep.subr.mxu0 %v1918
    %2890 = vmatpush1.msra.mxu0 %v1917
    %2891 = vmatprep.subr.mxu0 %v1921
    %2892 = vmatpush1.msra.mxu0 %v1920
    %2893 = vmatprep.subr.mxu0 %v1924
    %2894 = vmatpush1.msra.mxu0 %v1923
    %2895 = vmatprep.subr.mxu0 %v1927
    %2896 = vmatpush1.msra.mxu0 %v1926
    %2897 = vmatprep.subr.mxu0 0.0
    %2898 = vmatpush1.msra.mxu0 0.0
    %2899 = vmatprep.subr.mxu0 0.0
    %2900 = vmatpush1.msra.mxu0 0.0
    %2901 = vmatprep.subr.mxu0 0.0
    %2902 = vmatpush1.msra.mxu0 0.0
    %2903 = vmatprep.subr.mxu0 0.0
    %2904 = vmatpush1.msra.mxu0 0.0
    %2905 = vmatprep.subr.mxu0 0.0
    %2906 = vmatpush1.msra.mxu0 0.0
    %2907 = vmatprep.subr.mxu0 0.0
    %2908 = vmatpush1.msra.mxu0 0.0
    %2909 = vmatprep.subr.mxu0 0.0
    %2910 = vmatpush1.msra.mxu0 0.0
    %2911 = vmatprep.subr.mxu0 0.0
    %2912 = vmatpush1.msra.mxu0 0.0
    %2913 = vmatprep.subr.mxu0 0.0
    %2914 = vmatpush1.msra.mxu0 0.0
    %2915 = vmatprep.subr.mxu0 0.0
    %2916 = vmatpush1.msra.mxu0 0.0
    %2917 = vmatprep.subr.mxu0 0.0
    %2918 = vmatpush1.msra.mxu0 0.0
    %2919 = vmatprep.subr.mxu0 0.0
    %2920 = vmatpush1.msra.mxu0 0.0
    %2921 = vmatprep.subr.mxu0 0.0
    %2922 = vmatpush1.msra.mxu0 0.0
    %2923 = vmatprep.subr.mxu0 0.0
    %2924 = vmatpush1.msra.mxu0 0.0
    %2925 = vmatprep.subr.mxu0 0.0
    %2926 = vmatpush1.msra.mxu0 0.0
    %2927 = vmatprep.subr.mxu0 0.0
    %2928 = vmatpush1.msra.mxu0 0.0
    %2929 = vmatprep.subr.mxu0 0.0
    %2930 = vmatpush1.msra.mxu0 0.0
    %2931 = vmatprep.subr.mxu0 0.0
    %2932 = vmatpush1.msra.mxu0 0.0
    %2933 = vmatprep.subr.mxu0 0.0
    %2934 = vmatpush1.msra.mxu0 0.0
    %2935 = vmatprep.subr.mxu0 0.0
    %2936 = vmatpush1.msra.mxu0 0.0
    %2937 = vmatprep.subr.mxu0 0.0
    %2938 = vmatpush1.msra.mxu0 0.0
    %2939 = vmatprep.subr.mxu0 0.0
    %2940 = vmatpush1.msra.mxu0 0.0
    %2941 = vmatprep.subr.mxu0 0.0
    %2942 = vmatpush1.msra.mxu0 0.0
    %2943 = vmatprep.subr.mxu0 0.0
    %2944 = vmatpush1.msra.mxu0 0.0
    %2945 = vmatprep.subr.mxu0 0.0
    %2946 = vmatpush1.msra.mxu0 0.0
    %2947 = vmatprep.subr.mxu0 0.0
    %2948 = vmatpush1.msra.mxu0 0.0
    %2949 = vmatprep.subr.mxu0 0.0
    %2950 = vmatpush1.msra.mxu0 0.0
    %2951 = vmatprep.subr.mxu0 0.0
    %2952 = vmatpush1.msra.mxu0 0.0
    %2953 = vmatprep.mubr.f32.mxu0 0.0
    %2954 = vmatmul.mubr.f32.gmra.mrb[0].mxu0 %v2887
    %v2955 = vpop.f32.mrb[0].mxu0
    %v2956 = vadd.f32 %v2205, %v2955
    %v2957 = vpop.f32.mrb[0].mxu0
    %v2958 = vadd.f32 %v2209, %v2957
    %2959 = vdwg.mxu0
    %2960 = vmatprep.subr.mxu0 0.0
    %2961 = vmatpush1.msra.mxu0 %v1919
    %2962 = vmatprep.subr.mxu0 0.0
    %2963 = vmatpush1.msra.mxu0 %v1922
    %2964 = vmatprep.subr.mxu0 0.0
    %2965 = vmatpush1.msra.mxu0 %v1925
    %2966 = vmatprep.subr.mxu0 0.0
    %2967 = vmatpush1.msra.mxu0 %v1928
    %2968 = vmatprep.subr.mxu0 0.0
    %2969 = vmatpush1.msra.mxu0 0.0
    %2970 = vmatprep.subr.mxu0 0.0
    %2971 = vmatpush1.msra.mxu0 0.0
    %2972 = vmatprep.subr.mxu0 0.0
    %2973 = vmatpush1.msra.mxu0 0.0
    %2974 = vmatprep.subr.mxu0 0.0
    %2975 = vmatpush1.msra.mxu0 0.0
    %2976 = vmatprep.subr.mxu0 0.0
    %2977 = vmatpush1.msra.mxu0 0.0
    %2978 = vmatprep.subr.mxu0 0.0
    %2979 = vmatpush1.msra.mxu0 0.0
    %2980 = vmatprep.subr.mxu0 0.0
    %2981 = vmatpush1.msra.mxu0 0.0
    %2982 = vmatprep.subr.mxu0 0.0
    %2983 = vmatpush1.msra.mxu0 0.0
    %2984 = vmatprep.subr.mxu0 0.0
    %2985 = vmatpush1.msra.mxu0 0.0
    %2986 = vmatprep.subr.mxu0 0.0
    %2987 = vmatpush1.msra.mxu0 0.0
    %2988 = vmatprep.subr.mxu0 0.0
    %2989 = vmatpush1.msra.mxu0 0.0
    %2990 = vmatprep.subr.mxu0 0.0
    %2991 = vmatpush1.msra.mxu0 0.0
    %2992 = vmatprep.subr.mxu0 0.0
    %2993 = vmatpush1.msra.mxu0 0.0
    %2994 = vmatprep.subr.mxu0 0.0
    %2995 = vmatpush1.msra.mxu0 0.0
    %2996 = vmatprep.subr.mxu0 0.0
    %2997 = vmatpush1.msra.mxu0 0.0
    %2998 = vmatprep.subr.mxu0 0.0
    %2999 = vmatpush1.msra.mxu0 0.0
    %3000 = vmatprep.subr.mxu0 0.0
    %3001 = vmatpush1.msra.mxu0 0.0
    %3002 = vmatprep.subr.mxu0 0.0
    %3003 = vmatpush1.msra.mxu0 0.0
    %3004 = vmatprep.subr.mxu0 0.0
    %3005 = vmatpush1.msra.mxu0 0.0
    %3006 = vmatprep.subr.mxu0 0.0
    %3007 = vmatpush1.msra.mxu0 0.0
    %3008 = vmatprep.subr.mxu0 0.0
    %3009 = vmatpush1.msra.mxu0 0.0
    %3010 = vmatprep.subr.mxu0 0.0
    %3011 = vmatpush1.msra.mxu0 0.0
    %3012 = vmatprep.subr.mxu0 0.0
    %3013 = vmatpush1.msra.mxu0 0.0
    %3014 = vmatprep.subr.mxu0 0.0
    %3015 = vmatpush1.msra.mxu0 0.0
    %3016 = vmatprep.subr.mxu0 0.0
    %3017 = vmatpush1.msra.mxu0 0.0
    %3018 = vmatprep.subr.mxu0 0.0
    %3019 = vmatpush1.msra.mxu0 0.0
    %3020 = vmatprep.subr.mxu0 0.0
    %3021 = vmatpush1.msra.mxu0 0.0
    %3022 = vmatprep.subr.mxu0 0.0
    %3023 = vmatpush1.msra.mxu0 0.0
    %3024 = vmatprep.mubr.f32.mxu0 0.0
    %3025 = vmatmul.mubr.f32.gmra.mrb[0].mxu0 %v2887
    %v3026 = vpop.f32.mrb[0].mxu0
    %v3027 = vadd.f32 %v2213, %v3026
    %v3028 = vpop.f32.mrb[0].mxu0
    %3029 = vdwg.mxu0
    %v3030 = vadd.f32 %v2883, %v2956
    %v3031 = vxor.u32 %v3030, 2147483648
    %v3032 = vmul.f32 %v3031, 1.442695
    %v3033 = vpow.pop %v3032
    %v3034 = vadd.f32 %v3033, 1.0
    %v3035 = vrcp.pop %v3034
    %v3036 = vmul.f32 1.0, %v3035
    %v3037 = vadd.f32 %v2884, %v2958
    %v3038 = vxor.u32 %v3037, 2147483648
    %v3039 = vmul.f32 %v3038, 1.442695
    %v3040 = vpow.pop %v3039
    %v3041 = vadd.f32 %v3040, 1.0
    %v3042 = vrcp.pop %v3041
    %v3043 = vmul.f32 1.0, %v3042
    %v3044 = vmul.f32 %v3036, %v3027
    %v3045 = vadd.f32 %v2885, %v3044
    %v3046 = vtanh.pop %v3045
    %v3047 = vsub.f32 1.0, %v3043
    %v3048 = vmul.f32 %v3047, %v3046
    %v3049 = vmul.f32 %v3043, %v2882
    %v3050 = vadd.f32 %v3048, %v3049
    %v3051 = vld [vmem:[#allocation2 + $0x30] sm:$0xff]
    %v3052 = vld [vmem:[#allocation2 + $0x38] sm:$0xff]
    %v3053 = vld [vmem:[#allocation2 + $0x40] sm:$0xff]
    %v3055 = vsel %vm574, %v3050, 0
    %3057 = vmatprep.subr.mxu0 %v1918
    %3058 = vmatpush1.msra.mxu0 %v1917
    %3059 = vmatprep.subr.mxu0 %v1921
    %3060 = vmatpush1.msra.mxu0 %v1920
    %3061 = vmatprep.subr.mxu0 %v1924
    %3062 = vmatpush1.msra.mxu0 %v1923
    %3063 = vmatprep.subr.mxu0 %v1927
    %3064 = vmatpush1.msra.mxu0 %v1926
    %3065 = vmatprep.subr.mxu0 0.0
    %3066 = vmatpush1.msra.mxu0 0.0
    %3067 = vmatprep.subr.mxu0 0.0
    %3068 = vmatpush1.msra.mxu0 0.0
    %3069 = vmatprep.subr.mxu0 0.0
    %3070 = vmatpush1.msra.mxu0 0.0
    %3071 = vmatprep.subr.mxu0 0.0
    %3072 = vmatpush1.msra.mxu0 0.0
    %3073 = vmatprep.subr.mxu0 0.0
    %3074 = vmatpush1.msra.mxu0 0.0
    %3075 = vmatprep.subr.mxu0 0.0
    %3076 = vmatpush1.msra.mxu0 0.0
    %3077 = vmatprep.subr.mxu0 0.0
    %3078 = vmatpush1.msra.mxu0 0.0
    %3079 = vmatprep.subr.mxu0 0.0
    %3080 = vmatpush1.msra.mxu0 0.0
    %3081 = vmatprep.subr.mxu0 0.0
    %3082 = vmatpush1.msra.mxu0 0.0
    %3083 = vmatprep.subr.mxu0 0.0
    %3084 = vmatpush1.msra.mxu0 0.0
    %3085 = vmatprep.subr.mxu0 0.0
    %3086 = vmatpush1.msra.mxu0 0.0
    %3087 = vmatprep.subr.mxu0 0.0
    %3088 = vmatpush1.msra.mxu0 0.0
    %3089 = vmatprep.subr.mxu0 0.0
    %3090 = vmatpush1.msra.mxu0 0.0
    %3091 = vmatprep.subr.mxu0 0.0
    %3092 = vmatpush1.msra.mxu0 0.0
    %3093 = vmatprep.subr.mxu0 0.0
    %3094 = vmatpush1.msra.mxu0 0.0
    %3095 = vmatprep.subr.mxu0 0.0
    %3096 = vmatpush1.msra.mxu0 0.0
    %3097 = vmatprep.subr.mxu0 0.0
    %3098 = vmatpush1.msra.mxu0 0.0
    %3099 = vmatprep.subr.mxu0 0.0
    %3100 = vmatpush1.msra.mxu0 0.0
    %3101 = vmatprep.subr.mxu0 0.0
    %3102 = vmatpush1.msra.mxu0 0.0
    %3103 = vmatprep.subr.mxu0 0.0
    %3104 = vmatpush1.msra.mxu0 0.0
    %3105 = vmatprep.subr.mxu0 0.0
    %3106 = vmatpush1.msra.mxu0 0.0
    %3107 = vmatprep.subr.mxu0 0.0
    %3108 = vmatpush1.msra.mxu0 0.0
    %3109 = vmatprep.subr.mxu0 0.0
    %3110 = vmatpush1.msra.mxu0 0.0
    %3111 = vmatprep.subr.mxu0 0.0
    %3112 = vmatpush1.msra.mxu0 0.0
    %3113 = vmatprep.subr.mxu0 0.0
    %3114 = vmatpush1.msra.mxu0 0.0
    %3115 = vmatprep.subr.mxu0 0.0
    %3116 = vmatpush1.msra.mxu0 0.0
    %3117 = vmatprep.subr.mxu0 0.0
    %3118 = vmatpush1.msra.mxu0 0.0
    %3119 = vmatprep.subr.mxu0 0.0
    %3120 = vmatpush1.msra.mxu0 0.0
    %3121 = vmatprep.mubr.f32.mxu0 0.0
    %3122 = vmatmul.mubr.f32.gmra.mrb[0].mxu0 %v3055
    %v3123 = vpop.f32.mrb[0].mxu0
    %v3124 = vadd.f32 %v2205, %v3123
    %v3125 = vpop.f32.mrb[0].mxu0
    %v3126 = vadd.f32 %v2209, %v3125
    %3127 = vdwg.mxu0
    %3128 = vmatprep.subr.mxu0 0.0
    %3129 = vmatpush1.msra.mxu0 %v1919
    %3130 = vmatprep.subr.mxu0 0.0
    %3131 = vmatpush1.msra.mxu0 %v1922
    %3132 = vmatprep.subr.mxu0 0.0
    %3133 = vmatpush1.msra.mxu0 %v1925
    %3134 = vmatprep.subr.mxu0 0.0
    %3135 = vmatpush1.msra.mxu0 %v1928
    %3136 = vmatprep.subr.mxu0 0.0
    %3137 = vmatpush1.msra.mxu0 0.0
    %3138 = vmatprep.subr.mxu0 0.0
    %3139 = vmatpush1.msra.mxu0 0.0
    %3140 = vmatprep.subr.mxu0 0.0
    %3141 = vmatpush1.msra.mxu0 0.0
    %3142 = vmatprep.subr.mxu0 0.0
    %3143 = vmatpush1.msra.mxu0 0.0
    %3144 = vmatprep.subr.mxu0 0.0
    %3145 = vmatpush1.msra.mxu0 0.0
    %3146 = vmatprep.subr.mxu0 0.0
    %3147 = vmatpush1.msra.mxu0 0.0
    %3148 = vmatprep.subr.mxu0 0.0
    %3149 = vmatpush1.msra.mxu0 0.0
    %3150 = vmatprep.subr.mxu0 0.0
    %3151 = vmatpush1.msra.mxu0 0.0
    %3152 = vmatprep.subr.mxu0 0.0
    %3153 = vmatpush1.msra.mxu0 0.0
    %3154 = vmatprep.subr.mxu0 0.0
    %3155 = vmatpush1.msra.mxu0 0.0
    %3156 = vmatprep.subr.mxu0 0.0
    %3157 = vmatpush1.msra.mxu0 0.0
    %3158 = vmatprep.subr.mxu0 0.0
    %3159 = vmatpush1.msra.mxu0 0.0
    %3160 = vmatprep.subr.mxu0 0.0
    %3161 = vmatpush1.msra.mxu0 0.0
    %3162 = vmatprep.subr.mxu0 0.0
    %3163 = vmatpush1.msra.mxu0 0.0
    %3164 = vmatprep.subr.mxu0 0.0
    %3165 = vmatpush1.msra.mxu0 0.0
    %3166 = vmatprep.subr.mxu0 0.0
    %3167 = vmatpush1.msra.mxu0 0.0
    %3168 = vmatprep.subr.mxu0 0.0
    %3169 = vmatpush1.msra.mxu0 0.0
    %3170 = vmatprep.subr.mxu0 0.0
    %3171 = vmatpush1.msra.mxu0 0.0
    %3172 = vmatprep.subr.mxu0 0.0
    %3173 = vmatpush1.msra.mxu0 0.0
    %3174 = vmatprep.subr.mxu0 0.0
    %3175 = vmatpush1.msra.mxu0 0.0
    %3176 = vmatprep.subr.mxu0 0.0
    %3177 = vmatpush1.msra.mxu0 0.0
    %3178 = vmatprep.subr.mxu0 0.0
    %3179 = vmatpush1.msra.mxu0 0.0
    %3180 = vmatprep.subr.mxu0 0.0
    %3181 = vmatpush1.msra.mxu0 0.0
    %3182 = vmatprep.subr.mxu0 0.0
    %3183 = vmatpush1.msra.mxu0 0.0
    %3184 = vmatprep.subr.mxu0 0.0
    %3185 = vmatpush1.msra.mxu0 0.0
    %3186 = vmatprep.subr.mxu0 0.0
    %3187 = vmatpush1.msra.mxu0 0.0
    %3188 = vmatprep.subr.mxu0 0.0
    %3189 = vmatpush1.msra.mxu0 0.0
    %3190 = vmatprep.subr.mxu0 0.0
    %3191 = vmatpush1.msra.mxu0 0.0
    %3192 = vmatprep.mubr.f32.mxu0 0.0
    %3193 = vmatmul.mubr.f32.gmra.mrb[0].mxu0 %v3055
    %v3194 = vpop.f32.mrb[0].mxu0
    %v3195 = vadd.f32 %v2213, %v3194
    %v3196 = vpop.f32.mrb[0].mxu0
    %3197 = vdwg.mxu0
    %v3198 = vadd.f32 %v3051, %v3124
    %v3199 = vxor.u32 %v3198, 2147483648
    %v3200 = vmul.f32 %v3199, 1.442695
    %v3201 = vpow.pop %v3200
    %v3202 = vadd.f32 %v3201, 1.0
    %v3203 = vrcp.pop %v3202
    %v3204 = vmul.f32 1.0, %v3203
    %v3205 = vadd.f32 %v3052, %v3126
    %v3206 = vxor.u32 %v3205, 2147483648
    %v3207 = vmul.f32 %v3206, 1.442695
    %v3208 = vpow.pop %v3207
    %v3209 = vadd.f32 %v3208, 1.0
    %v3210 = vrcp.pop %v3209
    %v3211 = vmul.f32 1.0, %v3210
    %v3212 = vmul.f32 %v3204, %v3195
    %v3213 = vadd.f32 %v3053, %v3212
    %v3214 = vtanh.pop %v3213
    %v3215 = vsub.f32 1.0, %v3211
    %v3216 = vmul.f32 %v3215, %v3214
    %v3217 = vmul.f32 %v3211, %v3050
    %v3218 = vadd.f32 %v3216, %v3217
    %v3219 = vld [vmem:[#allocation2 + $0x18] sm:$0xff]
    %v3220 = vld [vmem:[#allocation2 + $0x20] sm:$0xff]
    %v3221 = vld [vmem:[#allocation2 + $0x28] sm:$0xff]
    %v3223 = vsel %vm574, %v3218, 0
    %3225 = vmatprep.subr.mxu0 %v1918
    %3226 = vmatpush1.msra.mxu0 %v1917
    %3227 = vmatprep.subr.mxu0 %v1921
    %3228 = vmatpush1.msra.mxu0 %v1920
    %3229 = vmatprep.subr.mxu0 %v1924
    %3230 = vmatpush1.msra.mxu0 %v1923
    %3231 = vmatprep.subr.mxu0 %v1927
    %3232 = vmatpush1.msra.mxu0 %v1926
    %3233 = vmatprep.subr.mxu0 0.0
    %3234 = vmatpush1.msra.mxu0 0.0
    %3235 = vmatprep.subr.mxu0 0.0
    %3236 = vmatpush1.msra.mxu0 0.0
    %3237 = vmatprep.subr.mxu0 0.0
    %3238 = vmatpush1.msra.mxu0 0.0
    %3239 = vmatprep.subr.mxu0 0.0
    %3240 = vmatpush1.msra.mxu0 0.0
    %3241 = vmatprep.subr.mxu0 0.0
    %3242 = vmatpush1.msra.mxu0 0.0
    %3243 = vmatprep.subr.mxu0 0.0
    %3244 = vmatpush1.msra.mxu0 0.0
    %3245 = vmatprep.subr.mxu0 0.0
    %3246 = vmatpush1.msra.mxu0 0.0
    %3247 = vmatprep.subr.mxu0 0.0
    %3248 = vmatpush1.msra.mxu0 0.0
    %3249 = vmatprep.subr.mxu0 0.0
    %3250 = vmatpush1.msra.mxu0 0.0
    %3251 = vmatprep.subr.mxu0 0.0
    %3252 = vmatpush1.msra.mxu0 0.0
    %3253 = vmatprep.subr.mxu0 0.0
    %3254 = vmatpush1.msra.mxu0 0.0
    %3255 = vmatprep.subr.mxu0 0.0
    %3256 = vmatpush1.msra.mxu0 0.0
    %3257 = vmatprep.subr.mxu0 0.0
    %3258 = vmatpush1.msra.mxu0 0.0
    %3259 = vmatprep.subr.mxu0 0.0
    %3260 = vmatpush1.msra.mxu0 0.0
    %3261 = vmatprep.subr.mxu0 0.0
    %3262 = vmatpush1.msra.mxu0 0.0
    %3263 = vmatprep.subr.mxu0 0.0
    %3264 = vmatpush1.msra.mxu0 0.0
    %3265 = vmatprep.subr.mxu0 0.0
    %3266 = vmatpush1.msra.mxu0 0.0
    %3267 = vmatprep.subr.mxu0 0.0
    %3268 = vmatpush1.msra.mxu0 0.0
    %3269 = vmatprep.subr.mxu0 0.0
    %3270 = vmatpush1.msra.mxu0 0.0
    %3271 = vmatprep.subr.mxu0 0.0
    %3272 = vmatpush1.msra.mxu0 0.0
    %3273 = vmatprep.subr.mxu0 0.0
    %3274 = vmatpush1.msra.mxu0 0.0
    %3275 = vmatprep.subr.mxu0 0.0
    %3276 = vmatpush1.msra.mxu0 0.0
    %3277 = vmatprep.subr.mxu0 0.0
    %3278 = vmatpush1.msra.mxu0 0.0
    %3279 = vmatprep.subr.mxu0 0.0
    %3280 = vmatpush1.msra.mxu0 0.0
    %3281 = vmatprep.subr.mxu0 0.0
    %3282 = vmatpush1.msra.mxu0 0.0
    %3283 = vmatprep.subr.mxu0 0.0
    %3284 = vmatpush1.msra.mxu0 0.0
    %3285 = vmatprep.subr.mxu0 0.0
    %3286 = vmatpush1.msra.mxu0 0.0
    %3287 = vmatprep.subr.mxu0 0.0
    %3288 = vmatpush1.msra.mxu0 0.0
    %3289 = vmatprep.mubr.f32.mxu0 0.0
    %3290 = vmatmul.mubr.f32.gmra.mrb[0].mxu0 %v3223
    %v3291 = vpop.f32.mrb[0].mxu0
    %v3292 = vadd.f32 %v2205, %v3291
    %v3293 = vpop.f32.mrb[0].mxu0
    %v3294 = vadd.f32 %v2209, %v3293
    %3295 = vdwg.mxu0
    %3296 = vmatprep.subr.mxu0 0.0
    %3297 = vmatpush1.msra.mxu0 %v1919
    %3298 = vmatprep.subr.mxu0 0.0
    %3299 = vmatpush1.msra.mxu0 %v1922
    %3300 = vmatprep.subr.mxu0 0.0
    %3301 = vmatpush1.msra.mxu0 %v1925
    %3302 = vmatprep.subr.mxu0 0.0
    %3303 = vmatpush1.msra.mxu0 %v1928
    %3304 = vmatprep.subr.mxu0 0.0
    %3305 = vmatpush1.msra.mxu0 0.0
    %3306 = vmatprep.subr.mxu0 0.0
    %3307 = vmatpush1.msra.mxu0 0.0
    %3308 = vmatprep.subr.mxu0 0.0
    %3309 = vmatpush1.msra.mxu0 0.0
    %3310 = vmatprep.subr.mxu0 0.0
    %3311 = vmatpush1.msra.mxu0 0.0
    %3312 = vmatprep.subr.mxu0 0.0
    %3313 = vmatpush1.msra.mxu0 0.0
    %3314 = vmatprep.subr.mxu0 0.0
    %3315 = vmatpush1.msra.mxu0 0.0
    %3316 = vmatprep.subr.mxu0 0.0
    %3317 = vmatpush1.msra.mxu0 0.0
    %3318 = vmatprep.subr.mxu0 0.0
    %3319 = vmatpush1.msra.mxu0 0.0
    %3320 = vmatprep.subr.mxu0 0.0
    %3321 = vmatpush1.msra.mxu0 0.0
    %3322 = vmatprep.subr.mxu0 0.0
    %3323 = vmatpush1.msra.mxu0 0.0
    %3324 = vmatprep.subr.mxu0 0.0
    %3325 = vmatpush1.msra.mxu0 0.0
    %3326 = vmatprep.subr.mxu0 0.0
    %3327 = vmatpush1.msra.mxu0 0.0
    %3328 = vmatprep.subr.mxu0 0.0
    %3329 = vmatpush1.msra.mxu0 0.0
    %3330 = vmatprep.subr.mxu0 0.0
    %3331 = vmatpush1.msra.mxu0 0.0
    %3332 = vmatprep.subr.mxu0 0.0
    %3333 = vmatpush1.msra.mxu0 0.0
    %3334 = vmatprep.subr.mxu0 0.0
    %3335 = vmatpush1.msra.mxu0 0.0
    %3336 = vmatprep.subr.mxu0 0.0
    %3337 = vmatpush1.msra.mxu0 0.0
    %3338 = vmatprep.subr.mxu0 0.0
    %3339 = vmatpush1.msra.mxu0 0.0
    %3340 = vmatprep.subr.mxu0 0.0
    %3341 = vmatpush1.msra.mxu0 0.0
    %3342 = vmatprep.subr.mxu0 0.0
    %3343 = vmatpush1.msra.mxu0 0.0
    %3344 = vmatprep.subr.mxu0 0.0
    %3345 = vmatpush1.msra.mxu0 0.0
    %3346 = vmatprep.subr.mxu0 0.0
    %3347 = vmatpush1.msra.mxu0 0.0
    %3348 = vmatprep.subr.mxu0 0.0
    %3349 = vmatpush1.msra.mxu0 0.0
    %3350 = vmatprep.subr.mxu0 0.0
    %3351 = vmatpush1.msra.mxu0 0.0
    %3352 = vmatprep.subr.mxu0 0.0
    %3353 = vmatpush1.msra.mxu0 0.0
    %3354 = vmatprep.subr.mxu0 0.0
    %3355 = vmatpush1.msra.mxu0 0.0
    %3356 = vmatprep.subr.mxu0 0.0
    %3357 = vmatpush1.msra.mxu0 0.0
    %3358 = vmatprep.subr.mxu0 0.0
    %3359 = vmatpush1.msra.mxu0 0.0
    %3360 = vmatprep.mubr.f32.mxu0 0.0
    %3361 = vmatmul.mubr.f32.gmra.mrb[0].mxu0 %v3223
    %v3362 = vpop.f32.mrb[0].mxu0
    %v3363 = vadd.f32 %v2213, %v3362
    %v3364 = vpop.f32.mrb[0].mxu0
    %3365 = vdwg.mxu0
    %v3366 = vadd.f32 %v3219, %v3292
    %v3367 = vxor.u32 %v3366, 2147483648
    %v3368 = vmul.f32 %v3367, 1.442695
    %v3369 = vpow.pop %v3368
    %v3370 = vadd.f32 %v3369, 1.0
    %v3371 = vrcp.pop %v3370
    %v3372 = vmul.f32 1.0, %v3371
    %v3373 = vadd.f32 %v3220, %v3294
    %v3374 = vxor.u32 %v3373, 2147483648
    %v3375 = vmul.f32 %v3374, 1.442695
    %v3376 = vpow.pop %v3375
    %v3377 = vadd.f32 %v3376, 1.0
    %v3378 = vrcp.pop %v3377
    %v3379 = vmul.f32 1.0, %v3378
    %v3380 = vmul.f32 %v3372, %v3363
    %v3381 = vadd.f32 %v3221, %v3380
    %v3382 = vtanh.pop %v3381
    %v3383 = vsub.f32 1.0, %v3379
    %v3384 = vmul.f32 %v3383, %v3382
    %v3385 = vmul.f32 %v3379, %v3218
    %v3386 = vadd.f32 %v3384, %v3385
    %v3387 = vld [vmem:[#allocation2] sm:$0xff]
    %v3388 = vld [vmem:[#allocation2 + $0x8] sm:$0xff]
    %v3389 = vld [vmem:[#allocation2 + $0x10] sm:$0xff]
    %v3391 = vsel %vm574, %v3386, 0
    %3393 = vmatprep.subr.mxu0 %v1918
    %3394 = vmatpush1.msra.mxu0 %v1917
    %3395 = vmatprep.subr.mxu0 %v1921
    %3396 = vmatpush1.msra.mxu0 %v1920
    %3397 = vmatprep.subr.mxu0 %v1924
    %3398 = vmatpush1.msra.mxu0 %v1923
    %3399 = vmatprep.subr.mxu0 %v1927
    %3400 = vmatpush1.msra.mxu0 %v1926
    %3401 = vmatprep.subr.mxu0 0.0
    %3402 = vmatpush1.msra.mxu0 0.0
    %3403 = vmatprep.subr.mxu0 0.0
    %3404 = vmatpush1.msra.mxu0 0.0
    %3405 = vmatprep.subr.mxu0 0.0
    %3406 = vmatpush1.msra.mxu0 0.0
    %3407 = vmatprep.subr.mxu0 0.0
    %3408 = vmatpush1.msra.mxu0 0.0
    %3409 = vmatprep.subr.mxu0 0.0
    %3410 = vmatpush1.msra.mxu0 0.0
    %3411 = vmatprep.subr.mxu0 0.0
    %3412 = vmatpush1.msra.mxu0 0.0
    %3413 = vmatprep.subr.mxu0 0.0
    %3414 = vmatpush1.msra.mxu0 0.0
    %3415 = vmatprep.subr.mxu0 0.0
    %3416 = vmatpush1.msra.mxu0 0.0
    %3417 = vmatprep.subr.mxu0 0.0
    %3418 = vmatpush1.msra.mxu0 0.0
    %3419 = vmatprep.subr.mxu0 0.0
    %3420 = vmatpush1.msra.mxu0 0.0
    %3421 = vmatprep.subr.mxu0 0.0
    %3422 = vmatpush1.msra.mxu0 0.0
    %3423 = vmatprep.subr.mxu0 0.0
    %3424 = vmatpush1.msra.mxu0 0.0
    %3425 = vmatprep.subr.mxu0 0.0
    %3426 = vmatpush1.msra.mxu0 0.0
    %3427 = vmatprep.subr.mxu0 0.0
    %3428 = vmatpush1.msra.mxu0 0.0
    %3429 = vmatprep.subr.mxu0 0.0
    %3430 = vmatpush1.msra.mxu0 0.0
    %3431 = vmatprep.subr.mxu0 0.0
    %3432 = vmatpush1.msra.mxu0 0.0
    %3433 = vmatprep.subr.mxu0 0.0
    %3434 = vmatpush1.msra.mxu0 0.0
    %3435 = vmatprep.subr.mxu0 0.0
    %3436 = vmatpush1.msra.mxu0 0.0
    %3437 = vmatprep.subr.mxu0 0.0
    %3438 = vmatpush1.msra.mxu0 0.0
    %3439 = vmatprep.subr.mxu0 0.0
    %3440 = vmatpush1.msra.mxu0 0.0
    %3441 = vmatprep.subr.mxu0 0.0
    %3442 = vmatpush1.msra.mxu0 0.0
    %3443 = vmatprep.subr.mxu0 0.0
    %3444 = vmatpush1.msra.mxu0 0.0
    %3445 = vmatprep.subr.mxu0 0.0
    %3446 = vmatpush1.msra.mxu0 0.0
    %3447 = vmatprep.subr.mxu0 0.0
    %3448 = vmatpush1.msra.mxu0 0.0
    %3449 = vmatprep.subr.mxu0 0.0
    %3450 = vmatpush1.msra.mxu0 0.0
    %3451 = vmatprep.subr.mxu0 0.0
    %3452 = vmatpush1.msra.mxu0 0.0
    %3453 = vmatprep.subr.mxu0 0.0
    %3454 = vmatpush1.msra.mxu0 0.0
    %3455 = vmatprep.subr.mxu0 0.0
    %3456 = vmatpush1.msra.mxu0 0.0
    %3457 = vmatprep.mubr.f32.mxu0 0.0
    %3458 = vmatmul.mubr.f32.gmra.mrb[0].mxu0 %v3391
    %v3459 = vpop.f32.mrb[0].mxu0
    %v3460 = vadd.f32 %v2205, %v3459
    %v3461 = vpop.f32.mrb[0].mxu0
    %v3462 = vadd.f32 %v2209, %v3461
    %3463 = vdwg.mxu0
    %3464 = vmatprep.subr.mxu0 0.0
    %3465 = vmatpush1.msra.mxu0 %v1919
    %3466 = vmatprep.subr.mxu0 0.0
    %3467 = vmatpush1.msra.mxu0 %v1922
    %3468 = vmatprep.subr.mxu0 0.0
    %3469 = vmatpush1.msra.mxu0 %v1925
    %3470 = vmatprep.subr.mxu0 0.0
    %3471 = vmatpush1.msra.mxu0 %v1928
    %3472 = vmatprep.subr.mxu0 0.0
    %3473 = vmatpush1.msra.mxu0 0.0
    %3474 = vmatprep.subr.mxu0 0.0
    %3475 = vmatpush1.msra.mxu0 0.0
    %3476 = vmatprep.subr.mxu0 0.0
    %3477 = vmatpush1.msra.mxu0 0.0
    %3478 = vmatprep.subr.mxu0 0.0
    %3479 = vmatpush1.msra.mxu0 0.0
    %3480 = vmatprep.subr.mxu0 0.0
    %3481 = vmatpush1.msra.mxu0 0.0
    %3482 = vmatprep.subr.mxu0 0.0
    %3483 = vmatpush1.msra.mxu0 0.0
    %3484 = vmatprep.subr.mxu0 0.0
    %3485 = vmatpush1.msra.mxu0 0.0
    %3486 = vmatprep.subr.mxu0 0.0
    %3487 = vmatpush1.msra.mxu0 0.0
    %3488 = vmatprep.subr.mxu0 0.0
    %3489 = vmatpush1.msra.mxu0 0.0
    %3490 = vmatprep.subr.mxu0 0.0
    %3491 = vmatpush1.msra.mxu0 0.0
    %3492 = vmatprep.subr.mxu0 0.0
    %3493 = vmatpush1.msra.mxu0 0.0
    %3494 = vmatprep.subr.mxu0 0.0
    %3495 = vmatpush1.msra.mxu0 0.0
    %3496 = vmatprep.subr.mxu0 0.0
    %3497 = vmatpush1.msra.mxu0 0.0
    %3498 = vmatprep.subr.mxu0 0.0
    %3499 = vmatpush1.msra.mxu0 0.0
    %3500 = vmatprep.subr.mxu0 0.0
    %3501 = vmatpush1.msra.mxu0 0.0
    %3502 = vmatprep.subr.mxu0 0.0
    %3503 = vmatpush1.msra.mxu0 0.0
    %3504 = vmatprep.subr.mxu0 0.0
    %3505 = vmatpush1.msra.mxu0 0.0
    %3506 = vmatprep.subr.mxu0 0.0
    %3507 = vmatpush1.msra.mxu0 0.0
    %3508 = vmatprep.subr.mxu0 0.0
    %3509 = vmatpush1.msra.mxu0 0.0
    %3510 = vmatprep.subr.mxu0 0.0
    %3511 = vmatpush1.msra.mxu0 0.0
    %3512 = vmatprep.subr.mxu0 0.0
    %3513 = vmatpush1.msra.mxu0 0.0
    %3514 = vmatprep.subr.mxu0 0.0
    %3515 = vmatpush1.msra.mxu0 0.0
    %3516 = vmatprep.subr.mxu0 0.0
    %3517 = vmatpush1.msra.mxu0 0.0
    %3518 = vmatprep.subr.mxu0 0.0
    %3519 = vmatpush1.msra.mxu0 0.0
    %3520 = vmatprep.subr.mxu0 0.0
    %3521 = vmatpush1.msra.mxu0 0.0
    %3522 = vmatprep.subr.mxu0 0.0
    %3523 = vmatpush1.msra.mxu0 0.0
    %3524 = vmatprep.subr.mxu0 0.0
    %3525 = vmatpush1.msra.mxu0 0.0
    %3526 = vmatprep.subr.mxu0 0.0
    %3527 = vmatpush1.msra.mxu0 0.0
    %3528 = vmatprep.mubr.f32.mxu0 0.0
    %3529 = vmatmul.mubr.f32.gmra.mrb[0].mxu0 %v3391
    %v3530 = vpop.f32.mrb[0].mxu0
    %v3531 = vadd.f32 %v2213, %v3530
    %v3532 = vpop.f32.mrb[0].mxu0
    %3533 = vdwg.mxu0
    %v3534 = vadd.f32 %v3387, %v3460
    %v3535 = vxor.u32 %v3534, 2147483648
    %v3536 = vmul.f32 %v3535, 1.442695
    %v3537 = vpow.pop %v3536
    %v3538 = vadd.f32 %v3537, 1.0
    %v3539 = vrcp.pop %v3538
    %v3540 = vmul.f32 1.0, %v3539
    %v3541 = vadd.f32 %v3388, %v3462
    %v3542 = vxor.u32 %v3541, 2147483648
    %v3543 = vmul.f32 %v3542, 1.442695
    %v3544 = vpow.pop %v3543
    %v3545 = vadd.f32 %v3544, 1.0
    %v3546 = vrcp.pop %v3545
    %v3547 = vmul.f32 1.0, %v3546
    %v3548 = vmul.f32 %v3540, %v3531
    %v3549 = vadd.f32 %v3389, %v3548
    %v3550 = vtanh.pop %v3549
    %v3551 = vsub.f32 1.0, %v3547
    %v3552 = vmul.f32 %v3551, %v3550
    %v3553 = vmul.f32 %v3547, %v3386
    %v3554 = vadd.f32 %v3552, %v3553
    %s3555 = scalar_lea.vmem [#allocation6], 192
    %v3556 = vld [vmem:[%s3555] sm:$0xff]
    %v3557 = vld [vmem:[%s3555 + $0x8] sm:$0xff]
    %v3558 = vld [vmem:[%s3555 + $0x10] sm:$0xff]
    %v3559 = vld [vmem:[%s3555 + $0x18] sm:$0xff]
    %v3560 = vld [vmem:[%s3555 + $0x20] sm:$0xff]
    %v3561 = vld [vmem:[%s3555 + $0x28] sm:$0xff]
    %v3562 = vld [vmem:[%s3555 + $0x30] sm:$0xff]
    %v3563 = vld [vmem:[%s3555 + $0x38] sm:$0xff]
    %v3564 = vld [vmem:[%s3555 + $0x40] sm:$0xff]
    %v3565 = vld [vmem:[%s3555 + $0x48] sm:$0xff]
    %v3566 = vld [vmem:[%s3555 + $0x50] sm:$0xff]
    %v3567 = vld [vmem:[%s3555 + $0x58] sm:$0xff]
    %s3568 = scalar_lea.vmem %s5, 6
    %v3569 = vld [vmem:[%s3568] sm:$0x7]
    %s3570 = scalar_lea.vmem %s6, 6
    %v3571 = vld [vmem:[%s3570] sm:$0x7]
    %v3572 = vld [vmem:[#allocation3] sm:$0xff]
    %v3573 = vld [vmem:[#allocation3 + $0x8] sm:$0xff]
    %v3574 = vld [vmem:[#allocation3 + $0x10] sm:$0xff]
    %v3575 = vld [vmem:[#allocation3 + $0x18] sm:$0xff]
    %v3576 = vld [vmem:[#allocation3 + $0x20] sm:$0xff]
    %v3577 = vld [vmem:[#allocation3 + $0x28] sm:$0xff]
    %v3578 = vld [vmem:[#allocation3 + $0x30] sm:$0xff]
    %v3579 = vld [vmem:[#allocation3 + $0x38] sm:$0xff]
    %v3580 = vld [vmem:[#allocation3 + $0x40] sm:$0xff]
    %v3581 = vld [vmem:[#allocation3 + $0x48] sm:$0xff]
    %v3582 = vld [vmem:[#allocation3 + $0x50] sm:$0xff]
    %v3583 = vld [vmem:[#allocation3 + $0x58] sm:$0xff]
    %s3584 = scalar_lea.vmem [#allocation3], 96
    %v3585 = vld [vmem:[%s3584] sm:$0xff]
    %v3586 = vld [vmem:[%s3584 + $0x8] sm:$0xff]
    %v3587 = vld [vmem:[%s3584 + $0x10] sm:$0xff]
    %v3588 = vld [vmem:[%s3584 + $0x18] sm:$0xff]
    %v3589 = vld [vmem:[%s3584 + $0x20] sm:$0xff]
    %v3590 = vld [vmem:[%s3584 + $0x28] sm:$0xff]
    %v3591 = vld [vmem:[%s3584 + $0x30] sm:$0xff]
    %v3592 = vld [vmem:[%s3584 + $0x38] sm:$0xff]
    %v3593 = vld [vmem:[%s3584 + $0x40] sm:$0xff]
    %v3594 = vld [vmem:[%s3584 + $0x48] sm:$0xff]
    %v3595 = vld [vmem:[%s3584 + $0x50] sm:$0xff]
    %v3596 = vld [vmem:[%s3584 + $0x58] sm:$0xff]
    %v3598 = vsel %vm574, %v3554, 0
    %3600 = vmatprep.subr.mxu0 %v3586
    %3601 = vmatpush1.msra.mxu0 %v3585
    %3602 = vmatprep.subr.mxu0 %v3589
    %3603 = vmatpush1.msra.mxu0 %v3588
    %3604 = vmatprep.subr.mxu0 %v3592
    %3605 = vmatpush1.msra.mxu0 %v3591
    %3606 = vmatprep.subr.mxu0 %v3595
    %3607 = vmatpush1.msra.mxu0 %v3594
    %3608 = vmatprep.subr.mxu0 0.0
    %3609 = vmatpush1.msra.mxu0 0.0
    %3610 = vmatprep.subr.mxu0 0.0
    %3611 = vmatpush1.msra.mxu0 0.0
    %3612 = vmatprep.subr.mxu0 0.0
    %3613 = vmatpush1.msra.mxu0 0.0
    %3614 = vmatprep.subr.mxu0 0.0
    %3615 = vmatpush1.msra.mxu0 0.0
    %3616 = vmatprep.subr.mxu0 0.0
    %3617 = vmatpush1.msra.mxu0 0.0
    %3618 = vmatprep.subr.mxu0 0.0
    %3619 = vmatpush1.msra.mxu0 0.0
    %3620 = vmatprep.subr.mxu0 0.0
    %3621 = vmatpush1.msra.mxu0 0.0
    %3622 = vmatprep.subr.mxu0 0.0
    %3623 = vmatpush1.msra.mxu0 0.0
    %3624 = vmatprep.subr.mxu0 0.0
    %3625 = vmatpush1.msra.mxu0 0.0
    %3626 = vmatprep.subr.mxu0 0.0
    %3627 = vmatpush1.msra.mxu0 0.0
    %3628 = vmatprep.subr.mxu0 0.0
    %3629 = vmatpush1.msra.mxu0 0.0
    %3630 = vmatprep.subr.mxu0 0.0
    %3631 = vmatpush1.msra.mxu0 0.0
    %3632 = vmatprep.subr.mxu0 0.0
    %3633 = vmatpush1.msra.mxu0 0.0
    %3634 = vmatprep.subr.mxu0 0.0
    %3635 = vmatpush1.msra.mxu0 0.0
    %3636 = vmatprep.subr.mxu0 0.0
    %3637 = vmatpush1.msra.mxu0 0.0
    %3638 = vmatprep.subr.mxu0 0.0
    %3639 = vmatpush1.msra.mxu0 0.0
    %3640 = vmatprep.subr.mxu0 0.0
    %3641 = vmatpush1.msra.mxu0 0.0
    %3642 = vmatprep.subr.mxu0 0.0
    %3643 = vmatpush1.msra.mxu0 0.0
    %3644 = vmatprep.subr.mxu0 0.0
    %3645 = vmatpush1.msra.mxu0 0.0
    %3646 = vmatprep.subr.mxu0 0.0
    %3647 = vmatpush1.msra.mxu0 0.0
    %3648 = vmatprep.subr.mxu0 0.0
    %3649 = vmatpush1.msra.mxu0 0.0
    %3650 = vmatprep.subr.mxu0 0.0
    %3651 = vmatpush1.msra.mxu0 0.0
    %3652 = vmatprep.subr.mxu0 0.0
    %3653 = vmatpush1.msra.mxu0 0.0
    %3654 = vmatprep.subr.mxu0 0.0
    %3655 = vmatpush1.msra.mxu0 0.0
    %3656 = vmatprep.subr.mxu0 0.0
    %3657 = vmatpush1.msra.mxu0 0.0
    %3658 = vmatprep.subr.mxu0 0.0
    %3659 = vmatpush1.msra.mxu0 0.0
    %3660 = vmatprep.subr.mxu0 0.0
    %3661 = vmatpush1.msra.mxu0 0.0
    %3662 = vmatprep.subr.mxu0 0.0
    %3663 = vmatpush1.msra.mxu0 0.0
    %3664 = vmatprep.mubr.f32.mxu0 0.0
    %3665 = vmatmul.mubr.f32.gmra.mrb[0].mxu0 %v3598
    %v3666 = vpop.f32.mrb[0].mxu0
    %v3667 = vadd.f32 0.0, %v3666
    %v3668 = vpop.f32.mrb[0].mxu0
    %v3669 = vadd.f32 0.0, %v3668
    %3670 = vmatprep.mubr.f32.mxu0 0.0
    %3671 = vmatmul.mubr.f32.gmra.mrb[0].mxu0 %v3391
    %v3672 = vpop.f32.mrb[0].mxu0
    %v3673 = vadd.f32 0.0, %v3672
    %v3674 = vpop.f32.mrb[0].mxu0
    %v3675 = vadd.f32 0.0, %v3674
    %3676 = vmatprep.mubr.f32.mxu0 0.0
    %3677 = vmatmul.mubr.f32.gmra.mrb[0].mxu0 %v3223
    %v3678 = vpop.f32.mrb[0].mxu0
    %v3679 = vadd.f32 0.0, %v3678
    %v3680 = vpop.f32.mrb[0].mxu0
    %v3681 = vadd.f32 0.0, %v3680
    %3682 = vmatprep.mubr.f32.mxu0 0.0
    %3683 = vmatmul.mubr.f32.gmra.mrb[0].mxu0 %v3055
    %v3684 = vpop.f32.mrb[0].mxu0
    %v3685 = vadd.f32 0.0, %v3684
    %v3686 = vpop.f32.mrb[0].mxu0
    %v3687 = vadd.f32 0.0, %v3686
    %3688 = vmatprep.mubr.f32.mxu0 0.0
    %3689 = vmatmul.mubr.f32.gmra.mrb[0].mxu0 %v2887
    %v3690 = vpop.f32.mrb[0].mxu0
    %v3691 = vadd.f32 0.0, %v3690
    %v3692 = vpop.f32.mrb[0].mxu0
    %v3693 = vadd.f32 0.0, %v3692
    %3694 = vmatprep.mubr.f32.mxu0 0.0
    %3695 = vmatmul.mubr.f32.gmra.mrb[0].mxu0 %v2719
    %v3696 = vpop.f32.mrb[0].mxu0
    %v3697 = vadd.f32 0.0, %v3696
    %v3698 = vpop.f32.mrb[0].mxu0
    %v3699 = vadd.f32 0.0, %v3698
    %3700 = vmatprep.mubr.f32.mxu0 0.0
    %3701 = vmatmul.mubr.f32.gmra.mrb[0].mxu0 %v2551
    %v3702 = vpop.f32.mrb[0].mxu0
    %v3703 = vadd.f32 0.0, %v3702
    %v3704 = vpop.f32.mrb[0].mxu0
    %v3705 = vadd.f32 0.0, %v3704
    %3706 = vmatprep.mubr.f32.mxu0 0.0
    %3707 = vmatmul.mubr.f32.gmra.mrb[0].mxu0 %v2383
    %v3708 = vpop.f32.mrb[0].mxu0
    %v3709 = vadd.f32 0.0, %v3708
    %v3710 = vpop.f32.mrb[0].mxu0
    %v3711 = vadd.f32 0.0, %v3710
    %3712 = vdwg.mxu0
    %3713 = vmatprep.subr.mxu0 0.0
    %3714 = vmatpush1.msra.mxu0 %v3587
    %3715 = vmatprep.subr.mxu0 0.0
    %3716 = vmatpush1.msra.mxu0 %v3590
    %3717 = vmatprep.subr.mxu0 0.0
    %3718 = vmatpush1.msra.mxu0 %v3593
    %3719 = vmatprep.subr.mxu0 0.0
    %3720 = vmatpush1.msra.mxu0 %v3596
    %3721 = vmatprep.subr.mxu0 0.0
    %3722 = vmatpush1.msra.mxu0 0.0
    %3723 = vmatprep.subr.mxu0 0.0
    %3724 = vmatpush1.msra.mxu0 0.0
    %3725 = vmatprep.subr.mxu0 0.0
    %3726 = vmatpush1.msra.mxu0 0.0
    %3727 = vmatprep.subr.mxu0 0.0
    %3728 = vmatpush1.msra.mxu0 0.0
    %3729 = vmatprep.subr.mxu0 0.0
    %3730 = vmatpush1.msra.mxu0 0.0
    %3731 = vmatprep.subr.mxu0 0.0
    %3732 = vmatpush1.msra.mxu0 0.0
    %3733 = vmatprep.subr.mxu0 0.0
    %3734 = vmatpush1.msra.mxu0 0.0
    %3735 = vmatprep.subr.mxu0 0.0
    %3736 = vmatpush1.msra.mxu0 0.0
    %3737 = vmatprep.subr.mxu0 0.0
    %3738 = vmatpush1.msra.mxu0 0.0
    %3739 = vmatprep.subr.mxu0 0.0
    %3740 = vmatpush1.msra.mxu0 0.0
    %3741 = vmatprep.subr.mxu0 0.0
    %3742 = vmatpush1.msra.mxu0 0.0
    %3743 = vmatprep.subr.mxu0 0.0
    %3744 = vmatpush1.msra.mxu0 0.0
    %3745 = vmatprep.subr.mxu0 0.0
    %3746 = vmatpush1.msra.mxu0 0.0
    %3747 = vmatprep.subr.mxu0 0.0
    %3748 = vmatpush1.msra.mxu0 0.0
    %3749 = vmatprep.subr.mxu0 0.0
    %3750 = vmatpush1.msra.mxu0 0.0
    %3751 = vmatprep.subr.mxu0 0.0
    %3752 = vmatpush1.msra.mxu0 0.0
    %3753 = vmatprep.subr.mxu0 0.0
    %3754 = vmatpush1.msra.mxu0 0.0
    %3755 = vmatprep.subr.mxu0 0.0
    %3756 = vmatpush1.msra.mxu0 0.0
    %3757 = vmatprep.subr.mxu0 0.0
    %3758 = vmatpush1.msra.mxu0 0.0
    %3759 = vmatprep.subr.mxu0 0.0
    %3760 = vmatpush1.msra.mxu0 0.0
    %3761 = vmatprep.subr.mxu0 0.0
    %3762 = vmatpush1.msra.mxu0 0.0
    %3763 = vmatprep.subr.mxu0 0.0
    %3764 = vmatpush1.msra.mxu0 0.0
    %3765 = vmatprep.subr.mxu0 0.0
    %3766 = vmatpush1.msra.mxu0 0.0
    %3767 = vmatprep.subr.mxu0 0.0
    %3768 = vmatpush1.msra.mxu0 0.0
    %3769 = vmatprep.subr.mxu0 0.0
    %3770 = vmatpush1.msra.mxu0 0.0
    %3771 = vmatprep.subr.mxu0 0.0
    %3772 = vmatpush1.msra.mxu0 0.0
    %3773 = vmatprep.subr.mxu0 0.0
    %3774 = vmatpush1.msra.mxu0 0.0
    %3775 = vmatprep.subr.mxu0 0.0
    %3776 = vmatpush1.msra.mxu0 0.0
    %3777 = vmatprep.mubr.f32.mxu0 0.0
    %3778 = vmatmul.mubr.f32.gmra.mrb[0].mxu0 %v3598
    %v3779 = vpop.f32.mrb[0].mxu0
    %v3780 = vadd.f32 0.0, %v3779
    %v3781 = vpop.f32.mrb[0].mxu0
    %3782 = vmatprep.mubr.f32.mxu0 0.0
    %3783 = vmatmul.mubr.f32.gmra.mrb[0].mxu0 %v3391
    %v3784 = vpop.f32.mrb[0].mxu0
    %v3785 = vadd.f32 0.0, %v3784
    %v3786 = vpop.f32.mrb[0].mxu0
    %3787 = vmatprep.mubr.f32.mxu0 0.0
    %3788 = vmatmul.mubr.f32.gmra.mrb[0].mxu0 %v3223
    %v3789 = vpop.f32.mrb[0].mxu0
    %v3790 = vadd.f32 0.0, %v3789
    %v3791 = vpop.f32.mrb[0].mxu0
    %3792 = vmatprep.mubr.f32.mxu0 0.0
    %3793 = vmatmul.mubr.f32.gmra.mrb[0].mxu0 %v3055
    %v3794 = vpop.f32.mrb[0].mxu0
    %v3795 = vadd.f32 0.0, %v3794
    %v3796 = vpop.f32.mrb[0].mxu0
    %3797 = vmatprep.mubr.f32.mxu0 0.0
    %3798 = vmatmul.mubr.f32.gmra.mrb[0].mxu0 %v2887
    %v3799 = vpop.f32.mrb[0].mxu0
    %v3800 = vadd.f32 0.0, %v3799
    %v3801 = vpop.f32.mrb[0].mxu0
    %3802 = vmatprep.mubr.f32.mxu0 0.0
    %3803 = vmatmul.mubr.f32.gmra.mrb[0].mxu0 %v2719
    %v3804 = vpop.f32.mrb[0].mxu0
    %v3805 = vadd.f32 0.0, %v3804
    %v3806 = vpop.f32.mrb[0].mxu0
    %3807 = vmatprep.mubr.f32.mxu0 0.0
    %3808 = vmatmul.mubr.f32.gmra.mrb[0].mxu0 %v2551
    %v3809 = vpop.f32.mrb[0].mxu0
    %v3810 = vadd.f32 0.0, %v3809
    %v3811 = vpop.f32.mrb[0].mxu0
    %3812 = vmatprep.mubr.f32.mxu0 0.0
    %3813 = vmatmul.mubr.f32.gmra.mrb[0].mxu0 %v2383
    %v3814 = vpop.f32.mrb[0].mxu0
    %v3815 = vadd.f32 0.0, %v3814
    %v3816 = vpop.f32.mrb[0].mxu0
    %3817 = vdwg.mxu0
    %v3819 = vsel %vm574, %v1915, 0
    %3821 = vmatprep.subr.mxu0 %v3573
    %3822 = vmatpush1.msra.mxu0 %v3572
    %3823 = vmatprep.subr.mxu0 %v3576
    %3824 = vmatpush1.msra.mxu0 %v3575
    %3825 = vmatprep.subr.mxu0 %v3579
    %3826 = vmatpush1.msra.mxu0 %v3578
    %3827 = vmatprep.subr.mxu0 %v3582
    %3828 = vmatpush1.msra.mxu0 %v3581
    %3829 = vmatprep.subr.mxu0 0.0
    %3830 = vmatpush1.msra.mxu0 0.0
    %3831 = vmatprep.subr.mxu0 0.0
    %3832 = vmatpush1.msra.mxu0 0.0
    %3833 = vmatprep.subr.mxu0 0.0
    %3834 = vmatpush1.msra.mxu0 0.0
    %3835 = vmatprep.subr.mxu0 0.0
    %3836 = vmatpush1.msra.mxu0 0.0
    %3837 = vmatprep.subr.mxu0 0.0
    %3838 = vmatpush1.msra.mxu0 0.0
    %3839 = vmatprep.subr.mxu0 0.0
    %3840 = vmatpush1.msra.mxu0 0.0
    %3841 = vmatprep.subr.mxu0 0.0
    %3842 = vmatpush1.msra.mxu0 0.0
    %3843 = vmatprep.subr.mxu0 0.0
    %3844 = vmatpush1.msra.mxu0 0.0
    %3845 = vmatprep.subr.mxu0 0.0
    %3846 = vmatpush1.msra.mxu0 0.0
    %3847 = vmatprep.subr.mxu0 0.0
    %3848 = vmatpush1.msra.mxu0 0.0
    %3849 = vmatprep.subr.mxu0 0.0
    %3850 = vmatpush1.msra.mxu0 0.0
    %3851 = vmatprep.subr.mxu0 0.0
    %3852 = vmatpush1.msra.mxu0 0.0
    %3853 = vmatprep.subr.mxu0 0.0
    %3854 = vmatpush1.msra.mxu0 0.0
    %3855 = vmatprep.subr.mxu0 0.0
    %3856 = vmatpush1.msra.mxu0 0.0
    %3857 = vmatprep.subr.mxu0 0.0
    %3858 = vmatpush1.msra.mxu0 0.0
    %3859 = vmatprep.subr.mxu0 0.0
    %3860 = vmatpush1.msra.mxu0 0.0
    %3861 = vmatprep.subr.mxu0 0.0
    %3862 = vmatpush1.msra.mxu0 0.0
    %3863 = vmatprep.subr.mxu0 0.0
    %3864 = vmatpush1.msra.mxu0 0.0
    %3865 = vmatprep.subr.mxu0 0.0
    %3866 = vmatpush1.msra.mxu0 0.0
    %3867 = vmatprep.subr.mxu0 0.0
    %3868 = vmatpush1.msra.mxu0 0.0
    %3869 = vmatprep.subr.mxu0 0.0
    %3870 = vmatpush1.msra.mxu0 0.0
    %3871 = vmatprep.subr.mxu0 0.0
    %3872 = vmatpush1.msra.mxu0 0.0
    %3873 = vmatprep.subr.mxu0 0.0
    %3874 = vmatpush1.msra.mxu0 0.0
    %3875 = vmatprep.subr.mxu0 0.0
    %3876 = vmatpush1.msra.mxu0 0.0
    %3877 = vmatprep.subr.mxu0 0.0
    %3878 = vmatpush1.msra.mxu0 0.0
    %3879 = vmatprep.subr.mxu0 0.0
    %3880 = vmatpush1.msra.mxu0 0.0
    %3881 = vmatprep.subr.mxu0 0.0
    %3882 = vmatpush1.msra.mxu0 0.0
    %3883 = vmatprep.subr.mxu0 0.0
    %3884 = vmatpush1.msra.mxu0 0.0
    %3885 = vmatprep.mubr.f32.mxu0 0.0
    %3886 = vmatmul.mubr.f32.gmra.mrb[0].mxu0 %v744
    %v3887 = vpop.f32.mrb[0].mxu0
    %v3888 = vadd.f32 %v3667, %v3887
    %v3889 = vpop.f32.mrb[0].mxu0
    %v3890 = vadd.f32 %v3669, %v3889
    %3891 = vmatprep.mubr.f32.mxu0 0.0
    %3892 = vmatmul.mubr.f32.gmra.mrb[0].mxu0 %v912
    %v3893 = vpop.f32.mrb[0].mxu0
    %v3894 = vadd.f32 %v3673, %v3893
    %v3895 = vpop.f32.mrb[0].mxu0
    %v3896 = vadd.f32 %v3675, %v3895
    %3897 = vmatprep.mubr.f32.mxu0 0.0
    %3898 = vmatmul.mubr.f32.gmra.mrb[0].mxu0 %v1080
    %v3899 = vpop.f32.mrb[0].mxu0
    %v3900 = vadd.f32 %v3679, %v3899
    %v3901 = vpop.f32.mrb[0].mxu0
    %v3902 = vadd.f32 %v3681, %v3901
    %3903 = vmatprep.mubr.f32.mxu0 0.0
    %3904 = vmatmul.mubr.f32.gmra.mrb[0].mxu0 %v1248
    %v3905 = vpop.f32.mrb[0].mxu0
    %v3906 = vadd.f32 %v3685, %v3905
    %v3907 = vpop.f32.mrb[0].mxu0
    %v3908 = vadd.f32 %v3687, %v3907
    %3909 = vmatprep.mubr.f32.mxu0 0.0
    %3910 = vmatmul.mubr.f32.gmra.mrb[0].mxu0 %v1416
    %v3911 = vpop.f32.mrb[0].mxu0
    %v3912 = vadd.f32 %v3691, %v3911
    %v3913 = vpop.f32.mrb[0].mxu0
    %v3914 = vadd.f32 %v3693, %v3913
    %3915 = vmatprep.mubr.f32.mxu0 0.0
    %3916 = vmatmul.mubr.f32.gmra.mrb[0].mxu0 %v1584
    %v3917 = vpop.f32.mrb[0].mxu0
    %v3918 = vadd.f32 %v3697, %v3917
    %v3919 = vpop.f32.mrb[0].mxu0
    %v3920 = vadd.f32 %v3699, %v3919
    %3921 = vmatprep.mubr.f32.mxu0 0.0
    %3922 = vmatmul.mubr.f32.gmra.mrb[0].mxu0 %v1752
    %v3923 = vpop.f32.mrb[0].mxu0
    %v3924 = vadd.f32 %v3703, %v3923
    %v3925 = vpop.f32.mrb[0].mxu0
    %v3926 = vadd.f32 %v3705, %v3925
    %3927 = vmatprep.mubr.f32.mxu0 0.0
    %3928 = vmatmul.mubr.f32.gmra.mrb[0].mxu0 %v3819
    %v3929 = vpop.f32.mrb[0].mxu0
    %v3930 = vadd.f32 %v3709, %v3929
    %v3931 = vpop.f32.mrb[0].mxu0
    %v3932 = vadd.f32 %v3711, %v3931
    %3933 = vdwg.mxu0
    %3934 = vmatprep.subr.mxu0 0.0
    %3935 = vmatpush1.msra.mxu0 %v3574
    %3936 = vmatprep.subr.mxu0 0.0
    %3937 = vmatpush1.msra.mxu0 %v3577
    %3938 = vmatprep.subr.mxu0 0.0
    %3939 = vmatpush1.msra.mxu0 %v3580
    %3940 = vmatprep.subr.mxu0 0.0
    %3941 = vmatpush1.msra.mxu0 %v3583
    %3942 = vmatprep.subr.mxu0 0.0
    %3943 = vmatpush1.msra.mxu0 0.0
    %3944 = vmatprep.subr.mxu0 0.0
    %3945 = vmatpush1.msra.mxu0 0.0
    %3946 = vmatprep.subr.mxu0 0.0
    %3947 = vmatpush1.msra.mxu0 0.0
    %3948 = vmatprep.subr.mxu0 0.0
    %3949 = vmatpush1.msra.mxu0 0.0
    %3950 = vmatprep.subr.mxu0 0.0
    %3951 = vmatpush1.msra.mxu0 0.0
    %3952 = vmatprep.subr.mxu0 0.0
    %3953 = vmatpush1.msra.mxu0 0.0
    %3954 = vmatprep.subr.mxu0 0.0
    %3955 = vmatpush1.msra.mxu0 0.0
    %3956 = vmatprep.subr.mxu0 0.0
    %3957 = vmatpush1.msra.mxu0 0.0
    %3958 = vmatprep.subr.mxu0 0.0
    %3959 = vmatpush1.msra.mxu0 0.0
    %3960 = vmatprep.subr.mxu0 0.0
    %3961 = vmatpush1.msra.mxu0 0.0
    %3962 = vmatprep.subr.mxu0 0.0
    %3963 = vmatpush1.msra.mxu0 0.0
    %3964 = vmatprep.subr.mxu0 0.0
    %3965 = vmatpush1.msra.mxu0 0.0
    %3966 = vmatprep.subr.mxu0 0.0
    %3967 = vmatpush1.msra.mxu0 0.0
    %3968 = vmatprep.subr.mxu0 0.0
    %3969 = vmatpush1.msra.mxu0 0.0
    %3970 = vmatprep.subr.mxu0 0.0
    %3971 = vmatpush1.msra.mxu0 0.0
    %3972 = vmatprep.subr.mxu0 0.0
    %3973 = vmatpush1.msra.mxu0 0.0
    %3974 = vmatprep.subr.mxu0 0.0
    %3975 = vmatpush1.msra.mxu0 0.0
    %3976 = vmatprep.subr.mxu0 0.0
    %3977 = vmatpush1.msra.mxu0 0.0
    %3978 = vmatprep.subr.mxu0 0.0
    %3979 = vmatpush1.msra.mxu0 0.0
    %3980 = vmatprep.subr.mxu0 0.0
    %3981 = vmatpush1.msra.mxu0 0.0
    %3982 = vmatprep.subr.mxu0 0.0
    %3983 = vmatpush1.msra.mxu0 0.0
    %3984 = vmatprep.subr.mxu0 0.0
    %3985 = vmatpush1.msra.mxu0 0.0
    %3986 = vmatprep.subr.mxu0 0.0
    %3987 = vmatpush1.msra.mxu0 0.0
    %3988 = vmatprep.subr.mxu0 0.0
    %3989 = vmatpush1.msra.mxu0 0.0
    %3990 = vmatprep.subr.mxu0 0.0
    %3991 = vmatpush1.msra.mxu0 0.0
    %3992 = vmatprep.subr.mxu0 0.0
    %3993 = vmatpush1.msra.mxu0 0.0
    %3994 = vmatprep.subr.mxu0 0.0
    %3995 = vmatpush1.msra.mxu0 0.0
    %3996 = vmatprep.subr.mxu0 0.0
    %3997 = vmatpush1.msra.mxu0 0.0
    %3998 = vmatprep.mubr.f32.mxu0 0.0
    %3999 = vmatmul.mubr.f32.gmra.mrb[0].mxu0 %v744
    %v4000 = vpop.f32.mrb[0].mxu0
    %v4001 = vadd.f32 %v3780, %v4000
    %v4002 = vpop.f32.mrb[0].mxu0
    %4003 = vmatprep.mubr.f32.mxu0 0.0
    %4004 = vmatmul.mubr.f32.gmra.mrb[0].mxu0 %v912
    %v4005 = vpop.f32.mrb[0].mxu0
    %v4006 = vadd.f32 %v3785, %v4005
    %v4007 = vpop.f32.mrb[0].mxu0
    %4008 = vmatprep.mubr.f32.mxu0 0.0
    %4009 = vmatmul.mubr.f32.gmra.mrb[0].mxu0 %v1080
    %v4010 = vpop.f32.mrb[0].mxu0
    %v4011 = vadd.f32 %v3790, %v4010
    %v4012 = vpop.f32.mrb[0].mxu0
    %4013 = vmatprep.mubr.f32.mxu0 0.0
    %4014 = vmatmul.mubr.f32.gmra.mrb[0].mxu0 %v1248
    %v4015 = vpop.f32.mrb[0].mxu0
    %v4016 = vadd.f32 %v3795, %v4015
    %v4017 = vpop.f32.mrb[0].mxu0
    %4018 = vmatprep.mubr.f32.mxu0 0.0
    %4019 = vmatmul.mubr.f32.gmra.mrb[0].mxu0 %v1416
    %v4020 = vpop.f32.mrb[0].mxu0
    %v4021 = vadd.f32 %v3800, %v4020
    %v4022 = vpop.f32.mrb[0].mxu0
    %4023 = vmatprep.mubr.f32.mxu0 0.0
    %4024 = vmatmul.mubr.f32.gmra.mrb[0].mxu0 %v1584
    %v4025 = vpop.f32.mrb[0].mxu0
    %v4026 = vadd.f32 %v3805, %v4025
    %v4027 = vpop.f32.mrb[0].mxu0
    %4028 = vmatprep.mubr.f32.mxu0 0.0
    %4029 = vmatmul.mubr.f32.gmra.mrb[0].mxu0 %v1752
    %v4030 = vpop.f32.mrb[0].mxu0
    %v4031 = vadd.f32 %v3810, %v4030
    %v4032 = vpop.f32.mrb[0].mxu0
    %4033 = vmatprep.mubr.f32.mxu0 0.0
    %4034 = vmatmul.mubr.f32.gmra.mrb[0].mxu0 %v3819
    %v4035 = vpop.f32.mrb[0].mxu0
    %v4036 = vadd.f32 %v3815, %v4035
    %v4037 = vpop.f32.mrb[0].mxu0
    %4038 = vdwg.mxu0
    %v4040 = vlaneseq
    %v4041 = vshrl.u32 %v4040, 7
    %v4042 = vsub.s32 0, %v4041
    %v4043 = vrot.slane %v3569, %v4042
    %v4044 = vlaneseq
    %v4045 = vshrl.u32 %v4044, 7
    %v4046 = vsub.s32 1, %v4045
    %v4047 = vrot.slane %v3569, %v4046
    %v4048 = vlaneseq
    %v4049 = vshrl.u32 %v4048, 7
    %v4050 = vsub.s32 2, %v4049
    %v4051 = vrot.slane %v3569, %v4050
    %v4055 = vadd.f32 %v3888, %v4043
    %v4056 = vadd.f32 %v3890, %v4047
    %v4057 = vadd.f32 %v4001, %v4051
    %v4058 = vadd.f32 %v3894, %v4043
    %v4059 = vadd.f32 %v3896, %v4047
    %v4060 = vadd.f32 %v4006, %v4051
    %v4061 = vadd.f32 %v3900, %v4043
    %v4062 = vadd.f32 %v3902, %v4047
    %v4063 = vadd.f32 %v4011, %v4051
    %v4064 = vadd.f32 %v3906, %v4043
    %v4065 = vadd.f32 %v3908, %v4047
    %v4066 = vadd.f32 %v4016, %v4051
    %v4067 = vadd.f32 %v3912, %v4043
    %v4068 = vadd.f32 %v3914, %v4047
    %v4069 = vadd.f32 %v4021, %v4051
    %v4070 = vadd.f32 %v3918, %v4043
    %v4071 = vadd.f32 %v3920, %v4047
    %v4072 = vadd.f32 %v4026, %v4051
    %v4073 = vadd.f32 %v3924, %v4043
    %v4074 = vadd.f32 %v3926, %v4047
    %v4075 = vadd.f32 %v4031, %v4051
    %v4076 = vadd.f32 %v3930, %v4043
    %v4077 = vadd.f32 %v3932, %v4047
    %v4078 = vadd.f32 %v4036, %v4051
    %4079 = vst [vmem:[#allocation2] sm:$0xff] %v4055
    %4080 = vst [vmem:[#allocation2 + $0x8] sm:$0xff] %v4056
    %4081 = vst [vmem:[#allocation2 + $0x10] sm:$0xff] %v4057
    %4082 = vst [vmem:[#allocation2 + $0x18] sm:$0xff] %v4058
    %4083 = vst [vmem:[#allocation2 + $0x20] sm:$0xff] %v4059
    %4084 = vst [vmem:[#allocation2 + $0x28] sm:$0xff] %v4060
    %4085 = vst [vmem:[#allocation2 + $0x30] sm:$0xff] %v4061
    %4086 = vst [vmem:[#allocation2 + $0x38] sm:$0xff] %v4062
    %4087 = vst [vmem:[#allocation2 + $0x40] sm:$0xff] %v4063
    %4088 = vst [vmem:[#allocation2 + $0x48] sm:$0xff] %v4064
    %4089 = vst [vmem:[#allocation2 + $0x50] sm:$0xff] %v4065
    %4090 = vst [vmem:[#allocation2 + $0x58] sm:$0xff] %v4066
    %4091 = vst [vmem:[#allocation2 + $0x60] sm:$0xff] %v4067
    %4092 = vst [vmem:[#allocation2 + $0x68] sm:$0xff] %v4068
    %4093 = vst [vmem:[#allocation2 + $0x70] sm:$0xff] %v4069
    %4094 = vst [vmem:[#allocation2 + $0x78] sm:$0xff] %v4070
    %4095 = vst [vmem:[#allocation2 + $0x80] sm:$0xff] %v4071
    %4096 = vst [vmem:[#allocation2 + $0x88] sm:$0xff] %v4072
    %4097 = vst [vmem:[#allocation2 + $0x90] sm:$0xff] %v4073
    %4098 = vst [vmem:[#allocation2 + $0x98] sm:$0xff] %v4074
    %4099 = vst [vmem:[#allocation2 + $0xa0] sm:$0xff] %v4075
    %4100 = vst [vmem:[#allocation2 + $0xa8] sm:$0xff] %v4076
    %4101 = vst [vmem:[#allocation2 + $0xb0] sm:$0xff] %v4077
    %4102 = vst [vmem:[#allocation2 + $0xb8] sm:$0xff] %v4078
    %v4103 = vld [vmem:[#allocation2] sm:$0xff]
    %v4104 = vld [vmem:[#allocation2 + $0x8] sm:$0xff]
    %v4105 = vld [vmem:[#allocation2 + $0x10] sm:$0xff]
    %v4107 = vlaneseq
    %v4108 = vshrl.u32 %v4107, 7
    %v4109 = vsub.s32 0, %v4108
    %v4110 = vrot.slane %v3571, %v4109
    %v4111 = vlaneseq
    %v4112 = vshrl.u32 %v4111, 7
    %v4113 = vsub.s32 1, %v4112
    %v4114 = vrot.slane %v3571, %v4113
    %v4115 = vlaneseq
    %v4116 = vshrl.u32 %v4115, 7
    %v4117 = vsub.s32 2, %v4116
    %v4118 = vrot.slane %v3571, %v4117
    %4122 = vmatprep.subr.mxu0 %v3557
    %4123 = vmatpush1.msra.mxu0 %v3556
    %4124 = vmatprep.subr.mxu0 %v3560
    %4125 = vmatpush1.msra.mxu0 %v3559
    %4126 = vmatprep.subr.mxu0 %v3563
    %4127 = vmatpush1.msra.mxu0 %v3562
    %4128 = vmatprep.subr.mxu0 %v3566
    %4129 = vmatpush1.msra.mxu0 %v3565
    %4130 = vmatprep.subr.mxu0 0.0
    %4131 = vmatpush1.msra.mxu0 0.0
    %4132 = vmatprep.subr.mxu0 0.0
    %4133 = vmatpush1.msra.mxu0 0.0
    %4134 = vmatprep.subr.mxu0 0.0
    %4135 = vmatpush1.msra.mxu0 0.0
    %4136 = vmatprep.subr.mxu0 0.0
    %4137 = vmatpush1.msra.mxu0 0.0
    %4138 = vmatprep.subr.mxu0 0.0
    %4139 = vmatpush1.msra.mxu0 0.0
    %4140 = vmatprep.subr.mxu0 0.0
    %4141 = vmatpush1.msra.mxu0 0.0
    %4142 = vmatprep.subr.mxu0 0.0
    %4143 = vmatpush1.msra.mxu0 0.0
    %4144 = vmatprep.subr.mxu0 0.0
    %4145 = vmatpush1.msra.mxu0 0.0
    %4146 = vmatprep.subr.mxu0 0.0
    %4147 = vmatpush1.msra.mxu0 0.0
    %4148 = vmatprep.subr.mxu0 0.0
    %4149 = vmatpush1.msra.mxu0 0.0
    %4150 = vmatprep.subr.mxu0 0.0
    %4151 = vmatpush1.msra.mxu0 0.0
    %4152 = vmatprep.subr.mxu0 0.0
    %4153 = vmatpush1.msra.mxu0 0.0
    %4154 = vmatprep.subr.mxu0 0.0
    %4155 = vmatpush1.msra.mxu0 0.0
    %4156 = vmatprep.subr.mxu0 0.0
    %4157 = vmatpush1.msra.mxu0 0.0
    %4158 = vmatprep.subr.mxu0 0.0
    %4159 = vmatpush1.msra.mxu0 0.0
    %4160 = vmatprep.subr.mxu0 0.0
    %4161 = vmatpush1.msra.mxu0 0.0
    %4162 = vmatprep.subr.mxu0 0.0
    %4163 = vmatpush1.msra.mxu0 0.0
    %4164 = vmatprep.subr.mxu0 0.0
    %4165 = vmatpush1.msra.mxu0 0.0
    %4166 = vmatprep.subr.mxu0 0.0
    %4167 = vmatpush1.msra.mxu0 0.0
    %4168 = vmatprep.subr.mxu0 0.0
    %4169 = vmatpush1.msra.mxu0 0.0
    %4170 = vmatprep.subr.mxu0 0.0
    %4171 = vmatpush1.msra.mxu0 0.0
    %4172 = vmatprep.subr.mxu0 0.0
    %4173 = vmatpush1.msra.mxu0 0.0
    %4174 = vmatprep.subr.mxu0 0.0
    %4175 = vmatpush1.msra.mxu0 0.0
    %4176 = vmatprep.subr.mxu0 0.0
    %4177 = vmatpush1.msra.mxu0 0.0
    %4178 = vmatprep.subr.mxu0 0.0
    %4179 = vmatpush1.msra.mxu0 0.0
    %4180 = vmatprep.subr.mxu0 0.0
    %4181 = vmatpush1.msra.mxu0 0.0
    %4182 = vmatprep.subr.mxu0 0.0
    %4183 = vmatpush1.msra.mxu0 0.0
    %4184 = vmatprep.subr.mxu0 0.0
    %4185 = vmatpush1.msra.mxu0 0.0
    %4186 = vmatprep.mubr.f32.mxu0 0.0
    %4187 = vmatmul.mubr.f32.gmra.mrb[0].mxu0 %v576
    %v4188 = vpop.f32.mrb[0].mxu0
    %v4189 = vadd.f32 %v4110, %v4188
    %v4190 = vpop.f32.mrb[0].mxu0
    %v4191 = vadd.f32 %v4114, %v4190
    %4192 = vdwg.mxu0
    %4193 = vmatprep.subr.mxu0 0.0
    %4194 = vmatpush1.msra.mxu0 %v3558
    %4195 = vmatprep.subr.mxu0 0.0
    %4196 = vmatpush1.msra.mxu0 %v3561
    %4197 = vmatprep.subr.mxu0 0.0
    %4198 = vmatpush1.msra.mxu0 %v3564
    %4199 = vmatprep.subr.mxu0 0.0
    %4200 = vmatpush1.msra.mxu0 %v3567
    %4201 = vmatprep.subr.mxu0 0.0
    %4202 = vmatpush1.msra.mxu0 0.0
    %4203 = vmatprep.subr.mxu0 0.0
    %4204 = vmatpush1.msra.mxu0 0.0
    %4205 = vmatprep.subr.mxu0 0.0
    %4206 = vmatpush1.msra.mxu0 0.0
    %4207 = vmatprep.subr.mxu0 0.0
    %4208 = vmatpush1.msra.mxu0 0.0
    %4209 = vmatprep.subr.mxu0 0.0
    %4210 = vmatpush1.msra.mxu0 0.0
    %4211 = vmatprep.subr.mxu0 0.0
    %4212 = vmatpush1.msra.mxu0 0.0
    %4213 = vmatprep.subr.mxu0 0.0
    %4214 = vmatpush1.msra.mxu0 0.0
    %4215 = vmatprep.subr.mxu0 0.0
    %4216 = vmatpush1.msra.mxu0 0.0
    %4217 = vmatprep.subr.mxu0 0.0
    %4218 = vmatpush1.msra.mxu0 0.0
    %4219 = vmatprep.subr.mxu0 0.0
    %4220 = vmatpush1.msra.mxu0 0.0
    %4221 = vmatprep.subr.mxu0 0.0
    %4222 = vmatpush1.msra.mxu0 0.0
    %4223 = vmatprep.subr.mxu0 0.0
    %4224 = vmatpush1.msra.mxu0 0.0
    %4225 = vmatprep.subr.mxu0 0.0
    %4226 = vmatpush1.msra.mxu0 0.0
    %4227 = vmatprep.subr.mxu0 0.0
    %4228 = vmatpush1.msra.mxu0 0.0
    %4229 = vmatprep.subr.mxu0 0.0
    %4230 = vmatpush1.msra.mxu0 0.0
    %4231 = vmatprep.subr.mxu0 0.0
    %4232 = vmatpush1.msra.mxu0 0.0
    %4233 = vmatprep.subr.mxu0 0.0
    %4234 = vmatpush1.msra.mxu0 0.0
    %4235 = vmatprep.subr.mxu0 0.0
    %4236 = vmatpush1.msra.mxu0 0.0
    %4237 = vmatprep.subr.mxu0 0.0
    %4238 = vmatpush1.msra.mxu0 0.0
    %4239 = vmatprep.subr.mxu0 0.0
    %4240 = vmatpush1.msra.mxu0 0.0
    %4241 = vmatprep.subr.mxu0 0.0
    %4242 = vmatpush1.msra.mxu0 0.0
    %4243 = vmatprep.subr.mxu0 0.0
    %4244 = vmatpush1.msra.mxu0 0.0
    %4245 = vmatprep.subr.mxu0 0.0
    %4246 = vmatpush1.msra.mxu0 0.0
    %4247 = vmatprep.subr.mxu0 0.0
    %4248 = vmatpush1.msra.mxu0 0.0
    %4249 = vmatprep.subr.mxu0 0.0
    %4250 = vmatpush1.msra.mxu0 0.0
    %4251 = vmatprep.subr.mxu0 0.0
    %4252 = vmatpush1.msra.mxu0 0.0
    %4253 = vmatprep.subr.mxu0 0.0
    %4254 = vmatpush1.msra.mxu0 0.0
    %4255 = vmatprep.subr.mxu0 0.0
    %4256 = vmatpush1.msra.mxu0 0.0
    %4257 = vmatprep.mubr.f32.mxu0 0.0
    %4258 = vmatmul.mubr.f32.gmra.mrb[0].mxu0 %v576
    %v4259 = vpop.f32.mrb[0].mxu0
    %v4260 = vadd.f32 %v4118, %v4259
    %v4261 = vpop.f32.mrb[0].mxu0
    %4262 = vdwg.mxu0
    %v4263 = vadd.f32 %v4103, %v4189
    %v4264 = vxor.u32 %v4263, 2147483648
    %v4265 = vmul.f32 %v4264, 1.442695
    %v4266 = vpow.pop %v4265
    %v4267 = vadd.f32 %v4266, 1.0
    %v4268 = vrcp.pop %v4267
    %v4269 = vmul.f32 1.0, %v4268
    %v4270 = vadd.f32 %v4104, %v4191
    %v4271 = vxor.u32 %v4270, 2147483648
    %v4272 = vmul.f32 %v4271, 1.442695
    %v4273 = vpow.pop %v4272
    %v4274 = vadd.f32 %v4273, 1.0
    %v4275 = vrcp.pop %v4274
    %v4276 = vmul.f32 1.0, %v4275
    %v4277 = vmul.f32 %v4269, %v4260
    %v4278 = vadd.f32 %v4105, %v4277
    %v4279 = vtanh.pop %v4278
    %v4280 = vsub.f32 1.0, %v4276
    %v4281 = vmul.f32 %v4280, %v4279
    %v4282 = vmul.f32 %v4276, 0.0
    %v4283 = vadd.f32 %v4281, %v4282
    %v4284 = vld [vmem:[#allocation2 + $0x18] sm:$0xff]
    %v4285 = vld [vmem:[#allocation2 + $0x20] sm:$0xff]
    %v4286 = vld [vmem:[#allocation2 + $0x28] sm:$0xff]
    %v4288 = vsel %vm574, %v4283, 0
    %4290 = vmatprep.subr.mxu0 %v3557
    %4291 = vmatpush1.msra.mxu0 %v3556
    %4292 = vmatprep.subr.mxu0 %v3560
    %4293 = vmatpush1.msra.mxu0 %v3559
    %4294 = vmatprep.subr.mxu0 %v3563
    %4295 = vmatpush1.msra.mxu0 %v3562
    %4296 = vmatprep.subr.mxu0 %v3566
    %4297 = vmatpush1.msra.mxu0 %v3565
    %4298 = vmatprep.subr.mxu0 0.0
    %4299 = vmatpush1.msra.mxu0 0.0
    %4300 = vmatprep.subr.mxu0 0.0
    %4301 = vmatpush1.msra.mxu0 0.0
    %4302 = vmatprep.subr.mxu0 0.0
    %4303 = vmatpush1.msra.mxu0 0.0
    %4304 = vmatprep.subr.mxu0 0.0
    %4305 = vmatpush1.msra.mxu0 0.0
    %4306 = vmatprep.subr.mxu0 0.0
    %4307 = vmatpush1.msra.mxu0 0.0
    %4308 = vmatprep.subr.mxu0 0.0
    %4309 = vmatpush1.msra.mxu0 0.0
    %4310 = vmatprep.subr.mxu0 0.0
    %4311 = vmatpush1.msra.mxu0 0.0
    %4312 = vmatprep.subr.mxu0 0.0
    %4313 = vmatpush1.msra.mxu0 0.0
    %4314 = vmatprep.subr.mxu0 0.0
    %4315 = vmatpush1.msra.mxu0 0.0
    %4316 = vmatprep.subr.mxu0 0.0
    %4317 = vmatpush1.msra.mxu0 0.0
    %4318 = vmatprep.subr.mxu0 0.0
    %4319 = vmatpush1.msra.mxu0 0.0
    %4320 = vmatprep.subr.mxu0 0.0
    %4321 = vmatpush1.msra.mxu0 0.0
    %4322 = vmatprep.subr.mxu0 0.0
    %4323 = vmatpush1.msra.mxu0 0.0
    %4324 = vmatprep.subr.mxu0 0.0
    %4325 = vmatpush1.msra.mxu0 0.0
    %4326 = vmatprep.subr.mxu0 0.0
    %4327 = vmatpush1.msra.mxu0 0.0
    %4328 = vmatprep.subr.mxu0 0.0
    %4329 = vmatpush1.msra.mxu0 0.0
    %4330 = vmatprep.subr.mxu0 0.0
    %4331 = vmatpush1.msra.mxu0 0.0
    %4332 = vmatprep.subr.mxu0 0.0
    %4333 = vmatpush1.msra.mxu0 0.0
    %4334 = vmatprep.subr.mxu0 0.0
    %4335 = vmatpush1.msra.mxu0 0.0
    %4336 = vmatprep.subr.mxu0 0.0
    %4337 = vmatpush1.msra.mxu0 0.0
    %4338 = vmatprep.subr.mxu0 0.0
    %4339 = vmatpush1.msra.mxu0 0.0
    %4340 = vmatprep.subr.mxu0 0.0
    %4341 = vmatpush1.msra.mxu0 0.0
    %4342 = vmatprep.subr.mxu0 0.0
    %4343 = vmatpush1.msra.mxu0 0.0
    %4344 = vmatprep.subr.mxu0 0.0
    %4345 = vmatpush1.msra.mxu0 0.0
    %4346 = vmatprep.subr.mxu0 0.0
    %4347 = vmatpush1.msra.mxu0 0.0
    %4348 = vmatprep.subr.mxu0 0.0
    %4349 = vmatpush1.msra.mxu0 0.0
    %4350 = vmatprep.subr.mxu0 0.0
    %4351 = vmatpush1.msra.mxu0 0.0
    %4352 = vmatprep.subr.mxu0 0.0
    %4353 = vmatpush1.msra.mxu0 0.0
    %4354 = vmatprep.mubr.f32.mxu0 0.0
    %4355 = vmatmul.mubr.f32.gmra.mrb[0].mxu0 %v4288
    %v4356 = vpop.f32.mrb[0].mxu0
    %v4357 = vadd.f32 %v4110, %v4356
    %v4358 = vpop.f32.mrb[0].mxu0
    %v4359 = vadd.f32 %v4114, %v4358
    %4360 = vdwg.mxu0
    %4361 = vmatprep.subr.mxu0 0.0
    %4362 = vmatpush1.msra.mxu0 %v3558
    %4363 = vmatprep.subr.mxu0 0.0
    %4364 = vmatpush1.msra.mxu0 %v3561
    %4365 = vmatprep.subr.mxu0 0.0
    %4366 = vmatpush1.msra.mxu0 %v3564
    %4367 = vmatprep.subr.mxu0 0.0
    %4368 = vmatpush1.msra.mxu0 %v3567
    %4369 = vmatprep.subr.mxu0 0.0
    %4370 = vmatpush1.msra.mxu0 0.0
    %4371 = vmatprep.subr.mxu0 0.0
    %4372 = vmatpush1.msra.mxu0 0.0
    %4373 = vmatprep.subr.mxu0 0.0
    %4374 = vmatpush1.msra.mxu0 0.0
    %4375 = vmatprep.subr.mxu0 0.0
    %4376 = vmatpush1.msra.mxu0 0.0
    %4377 = vmatprep.subr.mxu0 0.0
    %4378 = vmatpush1.msra.mxu0 0.0
    %4379 = vmatprep.subr.mxu0 0.0
    %4380 = vmatpush1.msra.mxu0 0.0
    %4381 = vmatprep.subr.mxu0 0.0
    %4382 = vmatpush1.msra.mxu0 0.0
    %4383 = vmatprep.subr.mxu0 0.0
    %4384 = vmatpush1.msra.mxu0 0.0
    %4385 = vmatprep.subr.mxu0 0.0
    %4386 = vmatpush1.msra.mxu0 0.0
    %4387 = vmatprep.subr.mxu0 0.0
    %4388 = vmatpush1.msra.mxu0 0.0
    %4389 = vmatprep.subr.mxu0 0.0
    %4390 = vmatpush1.msra.mxu0 0.0
    %4391 = vmatprep.subr.mxu0 0.0
    %4392 = vmatpush1.msra.mxu0 0.0
    %4393 = vmatprep.subr.mxu0 0.0
    %4394 = vmatpush1.msra.mxu0 0.0
    %4395 = vmatprep.subr.mxu0 0.0
    %4396 = vmatpush1.msra.mxu0 0.0
    %4397 = vmatprep.subr.mxu0 0.0
    %4398 = vmatpush1.msra.mxu0 0.0
    %4399 = vmatprep.subr.mxu0 0.0
    %4400 = vmatpush1.msra.mxu0 0.0
    %4401 = vmatprep.subr.mxu0 0.0
    %4402 = vmatpush1.msra.mxu0 0.0
    %4403 = vmatprep.subr.mxu0 0.0
    %4404 = vmatpush1.msra.mxu0 0.0
    %4405 = vmatprep.subr.mxu0 0.0
    %4406 = vmatpush1.msra.mxu0 0.0
    %4407 = vmatprep.subr.mxu0 0.0
    %4408 = vmatpush1.msra.mxu0 0.0
    %4409 = vmatprep.subr.mxu0 0.0
    %4410 = vmatpush1.msra.mxu0 0.0
    %4411 = vmatprep.subr.mxu0 0.0
    %4412 = vmatpush1.msra.mxu0 0.0
    %4413 = vmatprep.subr.mxu0 0.0
    %4414 = vmatpush1.msra.mxu0 0.0
    %4415 = vmatprep.subr.mxu0 0.0
    %4416 = vmatpush1.msra.mxu0 0.0
    %4417 = vmatprep.subr.mxu0 0.0
    %4418 = vmatpush1.msra.mxu0 0.0
    %4419 = vmatprep.subr.mxu0 0.0
    %4420 = vmatpush1.msra.mxu0 0.0
    %4421 = vmatprep.subr.mxu0 0.0
    %4422 = vmatpush1.msra.mxu0 0.0
    %4423 = vmatprep.subr.mxu0 0.0
    %4424 = vmatpush1.msra.mxu0 0.0
    %4425 = vmatprep.mubr.f32.mxu0 0.0
    %4426 = vmatmul.mubr.f32.gmra.mrb[0].mxu0 %v4288
    %v4427 = vpop.f32.mrb[0].mxu0
    %v4428 = vadd.f32 %v4118, %v4427
    %v4429 = vpop.f32.mrb[0].mxu0
    %4430 = vdwg.mxu0
    %v4431 = vadd.f32 %v4284, %v4357
    %v4432 = vxor.u32 %v4431, 2147483648
    %v4433 = vmul.f32 %v4432, 1.442695
    %v4434 = vpow.pop %v4433
    %v4435 = vadd.f32 %v4434, 1.0
    %v4436 = vrcp.pop %v4435
    %v4437 = vmul.f32 1.0, %v4436
    %v4438 = vadd.f32 %v4285, %v4359
    %v4439 = vxor.u32 %v4438, 2147483648
    %v4440 = vmul.f32 %v4439, 1.442695
    %v4441 = vpow.pop %v4440
    %v4442 = vadd.f32 %v4441, 1.0
    %v4443 = vrcp.pop %v4442
    %v4444 = vmul.f32 1.0, %v4443
    %v4445 = vmul.f32 %v4437, %v4428
    %v4446 = vadd.f32 %v4286, %v4445
    %v4447 = vtanh.pop %v4446
    %v4448 = vsub.f32 1.0, %v4444
    %v4449 = vmul.f32 %v4448, %v4447
    %v4450 = vmul.f32 %v4444, %v4283
    %v4451 = vadd.f32 %v4449, %v4450
    %v4452 = vld [vmem:[#allocation2 + $0x30] sm:$0xff]
    %v4453 = vld [vmem:[#allocation2 + $0x38] sm:$0xff]
    %v4454 = vld [vmem:[#allocation2 + $0x40] sm:$0xff]
    %v4456 = vsel %vm574, %v4451, 0
    %4458 = vmatprep.subr.mxu0 %v3557
    %4459 = vmatpush1.msra.mxu0 %v3556
    %4460 = vmatprep.subr.mxu0 %v3560
    %4461 = vmatpush1.msra.mxu0 %v3559
    %4462 = vmatprep.subr.mxu0 %v3563
    %4463 = vmatpush1.msra.mxu0 %v3562
    %4464 = vmatprep.subr.mxu0 %v3566
    %4465 = vmatpush1.msra.mxu0 %v3565
    %4466 = vmatprep.subr.mxu0 0.0
    %4467 = vmatpush1.msra.mxu0 0.0
    %4468 = vmatprep.subr.mxu0 0.0
    %4469 = vmatpush1.msra.mxu0 0.0
    %4470 = vmatprep.subr.mxu0 0.0
    %4471 = vmatpush1.msra.mxu0 0.0
    %4472 = vmatprep.subr.mxu0 0.0
    %4473 = vmatpush1.msra.mxu0 0.0
    %4474 = vmatprep.subr.mxu0 0.0
    %4475 = vmatpush1.msra.mxu0 0.0
    %4476 = vmatprep.subr.mxu0 0.0
    %4477 = vmatpush1.msra.mxu0 0.0
    %4478 = vmatprep.subr.mxu0 0.0
    %4479 = vmatpush1.msra.mxu0 0.0
    %4480 = vmatprep.subr.mxu0 0.0
    %4481 = vmatpush1.msra.mxu0 0.0
    %4482 = vmatprep.subr.mxu0 0.0
    %4483 = vmatpush1.msra.mxu0 0.0
    %4484 = vmatprep.subr.mxu0 0.0
    %4485 = vmatpush1.msra.mxu0 0.0
    %4486 = vmatprep.subr.mxu0 0.0
    %4487 = vmatpush1.msra.mxu0 0.0
    %4488 = vmatprep.subr.mxu0 0.0
    %4489 = vmatpush1.msra.mxu0 0.0
    %4490 = vmatprep.subr.mxu0 0.0
    %4491 = vmatpush1.msra.mxu0 0.0
    %4492 = vmatprep.subr.mxu0 0.0
    %4493 = vmatpush1.msra.mxu0 0.0
    %4494 = vmatprep.subr.mxu0 0.0
    %4495 = vmatpush1.msra.mxu0 0.0
    %4496 = vmatprep.subr.mxu0 0.0
    %4497 = vmatpush1.msra.mxu0 0.0
    %4498 = vmatprep.subr.mxu0 0.0
    %4499 = vmatpush1.msra.mxu0 0.0
    %4500 = vmatprep.subr.mxu0 0.0
    %4501 = vmatpush1.msra.mxu0 0.0
    %4502 = vmatprep.subr.mxu0 0.0
    %4503 = vmatpush1.msra.mxu0 0.0
    %4504 = vmatprep.subr.mxu0 0.0
    %4505 = vmatpush1.msra.mxu0 0.0
    %4506 = vmatprep.subr.mxu0 0.0
    %4507 = vmatpush1.msra.mxu0 0.0
    %4508 = vmatprep.subr.mxu0 0.0
    %4509 = vmatpush1.msra.mxu0 0.0
    %4510 = vmatprep.subr.mxu0 0.0
    %4511 = vmatpush1.msra.mxu0 0.0
    %4512 = vmatprep.subr.mxu0 0.0
    %4513 = vmatpush1.msra.mxu0 0.0
    %4514 = vmatprep.subr.mxu0 0.0
    %4515 = vmatpush1.msra.mxu0 0.0
    %4516 = vmatprep.subr.mxu0 0.0
    %4517 = vmatpush1.msra.mxu0 0.0
    %4518 = vmatprep.subr.mxu0 0.0
    %4519 = vmatpush1.msra.mxu0 0.0
    %4520 = vmatprep.subr.mxu0 0.0
    %4521 = vmatpush1.msra.mxu0 0.0
    %4522 = vmatprep.mubr.f32.mxu0 0.0
    %4523 = vmatmul.mubr.f32.gmra.mrb[0].mxu0 %v4456
    %v4524 = vpop.f32.mrb[0].mxu0
    %v4525 = vadd.f32 %v4110, %v4524
    %v4526 = vpop.f32.mrb[0].mxu0
    %v4527 = vadd.f32 %v4114, %v4526
    %4528 = vdwg.mxu0
    %4529 = vmatprep.subr.mxu0 0.0
    %4530 = vmatpush1.msra.mxu0 %v3558
    %4531 = vmatprep.subr.mxu0 0.0
    %4532 = vmatpush1.msra.mxu0 %v3561
    %4533 = vmatprep.subr.mxu0 0.0
    %4534 = vmatpush1.msra.mxu0 %v3564
    %4535 = vmatprep.subr.mxu0 0.0
    %4536 = vmatpush1.msra.mxu0 %v3567
    %4537 = vmatprep.subr.mxu0 0.0
    %4538 = vmatpush1.msra.mxu0 0.0
    %4539 = vmatprep.subr.mxu0 0.0
    %4540 = vmatpush1.msra.mxu0 0.0
    %4541 = vmatprep.subr.mxu0 0.0
    %4542 = vmatpush1.msra.mxu0 0.0
    %4543 = vmatprep.subr.mxu0 0.0
    %4544 = vmatpush1.msra.mxu0 0.0
    %4545 = vmatprep.subr.mxu0 0.0
    %4546 = vmatpush1.msra.mxu0 0.0
    %4547 = vmatprep.subr.mxu0 0.0
    %4548 = vmatpush1.msra.mxu0 0.0
    %4549 = vmatprep.subr.mxu0 0.0
    %4550 = vmatpush1.msra.mxu0 0.0
    %4551 = vmatprep.subr.mxu0 0.0
    %4552 = vmatpush1.msra.mxu0 0.0
    %4553 = vmatprep.subr.mxu0 0.0
    %4554 = vmatpush1.msra.mxu0 0.0
    %4555 = vmatprep.subr.mxu0 0.0
    %4556 = vmatpush1.msra.mxu0 0.0
    %4557 = vmatprep.subr.mxu0 0.0
    %4558 = vmatpush1.msra.mxu0 0.0
    %4559 = vmatprep.subr.mxu0 0.0
    %4560 = vmatpush1.msra.mxu0 0.0
    %4561 = vmatprep.subr.mxu0 0.0
    %4562 = vmatpush1.msra.mxu0 0.0
    %4563 = vmatprep.subr.mxu0 0.0
    %4564 = vmatpush1.msra.mxu0 0.0
    %4565 = vmatprep.subr.mxu0 0.0
    %4566 = vmatpush1.msra.mxu0 0.0
    %4567 = vmatprep.subr.mxu0 0.0
    %4568 = vmatpush1.msra.mxu0 0.0
    %4569 = vmatprep.subr.mxu0 0.0
    %4570 = vmatpush1.msra.mxu0 0.0
    %4571 = vmatprep.subr.mxu0 0.0
    %4572 = vmatpush1.msra.mxu0 0.0
    %4573 = vmatprep.subr.mxu0 0.0
    %4574 = vmatpush1.msra.mxu0 0.0
    %4575 = vmatprep.subr.mxu0 0.0
    %4576 = vmatpush1.msra.mxu0 0.0
    %4577 = vmatprep.subr.mxu0 0.0
    %4578 = vmatpush1.msra.mxu0 0.0
    %4579 = vmatprep.subr.mxu0 0.0
    %4580 = vmatpush1.msra.mxu0 0.0
    %4581 = vmatprep.subr.mxu0 0.0
    %4582 = vmatpush1.msra.mxu0 0.0
    %4583 = vmatprep.subr.mxu0 0.0
    %4584 = vmatpush1.msra.mxu0 0.0
    %4585 = vmatprep.subr.mxu0 0.0
    %4586 = vmatpush1.msra.mxu0 0.0
    %4587 = vmatprep.subr.mxu0 0.0
    %4588 = vmatpush1.msra.mxu0 0.0
    %4589 = vmatprep.subr.mxu0 0.0
    %4590 = vmatpush1.msra.mxu0 0.0
    %4591 = vmatprep.subr.mxu0 0.0
    %4592 = vmatpush1.msra.mxu0 0.0
    %4593 = vmatprep.mubr.f32.mxu0 0.0
    %4594 = vmatmul.mubr.f32.gmra.mrb[0].mxu0 %v4456
    %v4595 = vpop.f32.mrb[0].mxu0
    %v4596 = vadd.f32 %v4118, %v4595
    %v4597 = vpop.f32.mrb[0].mxu0
    %4598 = vdwg.mxu0
    %v4599 = vadd.f32 %v4452, %v4525
    %v4600 = vxor.u32 %v4599, 2147483648
    %v4601 = vmul.f32 %v4600, 1.442695
    %v4602 = vpow.pop %v4601
    %v4603 = vadd.f32 %v4602, 1.0
    %v4604 = vrcp.pop %v4603
    %v4605 = vmul.f32 1.0, %v4604
    %v4606 = vadd.f32 %v4453, %v4527
    %v4607 = vxor.u32 %v4606, 2147483648
    %v4608 = vmul.f32 %v4607, 1.442695
    %v4609 = vpow.pop %v4608
    %v4610 = vadd.f32 %v4609, 1.0
    %v4611 = vrcp.pop %v4610
    %v4612 = vmul.f32 1.0, %v4611
    %v4613 = vmul.f32 %v4605, %v4596
    %v4614 = vadd.f32 %v4454, %v4613
    %v4615 = vtanh.pop %v4614
    %v4616 = vsub.f32 1.0, %v4612
    %v4617 = vmul.f32 %v4616, %v4615
    %v4618 = vmul.f32 %v4612, %v4451
    %v4619 = vadd.f32 %v4617, %v4618
    %v4620 = vld [vmem:[#allocation2 + $0x48] sm:$0xff]
    %v4621 = vld [vmem:[#allocation2 + $0x50] sm:$0xff]
    %v4622 = vld [vmem:[#allocation2 + $0x58] sm:$0xff]
    %v4624 = vsel %vm574, %v4619, 0
    %4626 = vmatprep.subr.mxu0 %v3557
    %4627 = vmatpush1.msra.mxu0 %v3556
    %4628 = vmatprep.subr.mxu0 %v3560
    %4629 = vmatpush1.msra.mxu0 %v3559
    %4630 = vmatprep.subr.mxu0 %v3563
    %4631 = vmatpush1.msra.mxu0 %v3562
    %4632 = vmatprep.subr.mxu0 %v3566
    %4633 = vmatpush1.msra.mxu0 %v3565
    %4634 = vmatprep.subr.mxu0 0.0
    %4635 = vmatpush1.msra.mxu0 0.0
    %4636 = vmatprep.subr.mxu0 0.0
    %4637 = vmatpush1.msra.mxu0 0.0
    %4638 = vmatprep.subr.mxu0 0.0
    %4639 = vmatpush1.msra.mxu0 0.0
    %4640 = vmatprep.subr.mxu0 0.0
    %4641 = vmatpush1.msra.mxu0 0.0
    %4642 = vmatprep.subr.mxu0 0.0
    %4643 = vmatpush1.msra.mxu0 0.0
    %4644 = vmatprep.subr.mxu0 0.0
    %4645 = vmatpush1.msra.mxu0 0.0
    %4646 = vmatprep.subr.mxu0 0.0
    %4647 = vmatpush1.msra.mxu0 0.0
    %4648 = vmatprep.subr.mxu0 0.0
    %4649 = vmatpush1.msra.mxu0 0.0
    %4650 = vmatprep.subr.mxu0 0.0
    %4651 = vmatpush1.msra.mxu0 0.0
    %4652 = vmatprep.subr.mxu0 0.0
    %4653 = vmatpush1.msra.mxu0 0.0
    %4654 = vmatprep.subr.mxu0 0.0
    %4655 = vmatpush1.msra.mxu0 0.0
    %4656 = vmatprep.subr.mxu0 0.0
    %4657 = vmatpush1.msra.mxu0 0.0
    %4658 = vmatprep.subr.mxu0 0.0
    %4659 = vmatpush1.msra.mxu0 0.0
    %4660 = vmatprep.subr.mxu0 0.0
    %4661 = vmatpush1.msra.mxu0 0.0
    %4662 = vmatprep.subr.mxu0 0.0
    %4663 = vmatpush1.msra.mxu0 0.0
    %4664 = vmatprep.subr.mxu0 0.0
    %4665 = vmatpush1.msra.mxu0 0.0
    %4666 = vmatprep.subr.mxu0 0.0
    %4667 = vmatpush1.msra.mxu0 0.0
    %4668 = vmatprep.subr.mxu0 0.0
    %4669 = vmatpush1.msra.mxu0 0.0
    %4670 = vmatprep.subr.mxu0 0.0
    %4671 = vmatpush1.msra.mxu0 0.0
    %4672 = vmatprep.subr.mxu0 0.0
    %4673 = vmatpush1.msra.mxu0 0.0
    %4674 = vmatprep.subr.mxu0 0.0
    %4675 = vmatpush1.msra.mxu0 0.0
    %4676 = vmatprep.subr.mxu0 0.0
    %4677 = vmatpush1.msra.mxu0 0.0
    %4678 = vmatprep.subr.mxu0 0.0
    %4679 = vmatpush1.msra.mxu0 0.0
    %4680 = vmatprep.subr.mxu0 0.0
    %4681 = vmatpush1.msra.mxu0 0.0
    %4682 = vmatprep.subr.mxu0 0.0
    %4683 = vmatpush1.msra.mxu0 0.0
    %4684 = vmatprep.subr.mxu0 0.0
    %4685 = vmatpush1.msra.mxu0 0.0
    %4686 = vmatprep.subr.mxu0 0.0
    %4687 = vmatpush1.msra.mxu0 0.0
    %4688 = vmatprep.subr.mxu0 0.0
    %4689 = vmatpush1.msra.mxu0 0.0
    %4690 = vmatprep.mubr.f32.mxu0 0.0
    %4691 = vmatmul.mubr.f32.gmra.mrb[0].mxu0 %v4624
    %v4692 = vpop.f32.mrb[0].mxu0
    %v4693 = vadd.f32 %v4110, %v4692
    %v4694 = vpop.f32.mrb[0].mxu0
    %v4695 = vadd.f32 %v4114, %v4694
    %4696 = vdwg.mxu0
    %4697 = vmatprep.subr.mxu0 0.0
    %4698 = vmatpush1.msra.mxu0 %v3558
    %4699 = vmatprep.subr.mxu0 0.0
    %4700 = vmatpush1.msra.mxu0 %v3561
    %4701 = vmatprep.subr.mxu0 0.0
    %4702 = vmatpush1.msra.mxu0 %v3564
    %4703 = vmatprep.subr.mxu0 0.0
    %4704 = vmatpush1.msra.mxu0 %v3567
    %4705 = vmatprep.subr.mxu0 0.0
    %4706 = vmatpush1.msra.mxu0 0.0
    %4707 = vmatprep.subr.mxu0 0.0
    %4708 = vmatpush1.msra.mxu0 0.0
    %4709 = vmatprep.subr.mxu0 0.0
    %4710 = vmatpush1.msra.mxu0 0.0
    %4711 = vmatprep.subr.mxu0 0.0
    %4712 = vmatpush1.msra.mxu0 0.0
    %4713 = vmatprep.subr.mxu0 0.0
    %4714 = vmatpush1.msra.mxu0 0.0
    %4715 = vmatprep.subr.mxu0 0.0
    %4716 = vmatpush1.msra.mxu0 0.0
    %4717 = vmatprep.subr.mxu0 0.0
    %4718 = vmatpush1.msra.mxu0 0.0
    %4719 = vmatprep.subr.mxu0 0.0
    %4720 = vmatpush1.msra.mxu0 0.0
    %4721 = vmatprep.subr.mxu0 0.0
    %4722 = vmatpush1.msra.mxu0 0.0
    %4723 = vmatprep.subr.mxu0 0.0
    %4724 = vmatpush1.msra.mxu0 0.0
    %4725 = vmatprep.subr.mxu0 0.0
    %4726 = vmatpush1.msra.mxu0 0.0
    %4727 = vmatprep.subr.mxu0 0.0
    %4728 = vmatpush1.msra.mxu0 0.0
    %4729 = vmatprep.subr.mxu0 0.0
    %4730 = vmatpush1.msra.mxu0 0.0
    %4731 = vmatprep.subr.mxu0 0.0
    %4732 = vmatpush1.msra.mxu0 0.0
    %4733 = vmatprep.subr.mxu0 0.0
    %4734 = vmatpush1.msra.mxu0 0.0
    %4735 = vmatprep.subr.mxu0 0.0
    %4736 = vmatpush1.msra.mxu0 0.0
    %4737 = vmatprep.subr.mxu0 0.0
    %4738 = vmatpush1.msra.mxu0 0.0
    %4739 = vmatprep.subr.mxu0 0.0
    %4740 = vmatpush1.msra.mxu0 0.0
    %4741 = vmatprep.subr.mxu0 0.0
    %4742 = vmatpush1.msra.mxu0 0.0
    %4743 = vmatprep.subr.mxu0 0.0
    %4744 = vmatpush1.msra.mxu0 0.0
    %4745 = vmatprep.subr.mxu0 0.0
    %4746 = vmatpush1.msra.mxu0 0.0
    %4747 = vmatprep.subr.mxu0 0.0
    %4748 = vmatpush1.msra.mxu0 0.0
    %4749 = vmatprep.subr.mxu0 0.0
    %4750 = vmatpush1.msra.mxu0 0.0
    %4751 = vmatprep.subr.mxu0 0.0
    %4752 = vmatpush1.msra.mxu0 0.0
    %4753 = vmatprep.subr.mxu0 0.0
    %4754 = vmatpush1.msra.mxu0 0.0
    %4755 = vmatprep.subr.mxu0 0.0
    %4756 = vmatpush1.msra.mxu0 0.0
    %4757 = vmatprep.subr.mxu0 0.0
    %4758 = vmatpush1.msra.mxu0 0.0
    %4759 = vmatprep.subr.mxu0 0.0
    %4760 = vmatpush1.msra.mxu0 0.0
    %4761 = vmatprep.mubr.f32.mxu0 0.0
    %4762 = vmatmul.mubr.f32.gmra.mrb[0].mxu0 %v4624
    %v4763 = vpop.f32.mrb[0].mxu0
    %v4764 = vadd.f32 %v4118, %v4763
    %v4765 = vpop.f32.mrb[0].mxu0
    %4766 = vdwg.mxu0
    %v4767 = vadd.f32 %v4620, %v4693
    %v4768 = vxor.u32 %v4767, 2147483648
    %v4769 = vmul.f32 %v4768, 1.442695
    %v4770 = vpow.pop %v4769
    %v4771 = vadd.f32 %v4770, 1.0
    %v4772 = vrcp.pop %v4771
    %v4773 = vmul.f32 1.0, %v4772
    %v4774 = vadd.f32 %v4621, %v4695
    %v4775 = vxor.u32 %v4774, 2147483648
    %v4776 = vmul.f32 %v4775, 1.442695
    %v4777 = vpow.pop %v4776
    %v4778 = vadd.f32 %v4777, 1.0
    %v4779 = vrcp.pop %v4778
    %v4780 = vmul.f32 1.0, %v4779
    %v4781 = vmul.f32 %v4773, %v4764
    %v4782 = vadd.f32 %v4622, %v4781
    %v4783 = vtanh.pop %v4782
    %v4784 = vsub.f32 1.0, %v4780
    %v4785 = vmul.f32 %v4784, %v4783
    %v4786 = vmul.f32 %v4780, %v4619
    %v4787 = vadd.f32 %v4785, %v4786
    %v4788 = vld [vmem:[#allocation2 + $0x60] sm:$0xff]
    %v4789 = vld [vmem:[#allocation2 + $0x68] sm:$0xff]
    %v4790 = vld [vmem:[#allocation2 + $0x70] sm:$0xff]
    %v4792 = vsel %vm574, %v4787, 0
    %4794 = vmatprep.subr.mxu0 %v3557
    %4795 = vmatpush1.msra.mxu0 %v3556
    %4796 = vmatprep.subr.mxu0 %v3560
    %4797 = vmatpush1.msra.mxu0 %v3559
    %4798 = vmatprep.subr.mxu0 %v3563
    %4799 = vmatpush1.msra.mxu0 %v3562
    %4800 = vmatprep.subr.mxu0 %v3566
    %4801 = vmatpush1.msra.mxu0 %v3565
    %4802 = vmatprep.subr.mxu0 0.0
    %4803 = vmatpush1.msra.mxu0 0.0
    %4804 = vmatprep.subr.mxu0 0.0
    %4805 = vmatpush1.msra.mxu0 0.0
    %4806 = vmatprep.subr.mxu0 0.0
    %4807 = vmatpush1.msra.mxu0 0.0
    %4808 = vmatprep.subr.mxu0 0.0
    %4809 = vmatpush1.msra.mxu0 0.0
    %4810 = vmatprep.subr.mxu0 0.0
    %4811 = vmatpush1.msra.mxu0 0.0
    %4812 = vmatprep.subr.mxu0 0.0
    %4813 = vmatpush1.msra.mxu0 0.0
    %4814 = vmatprep.subr.mxu0 0.0
    %4815 = vmatpush1.msra.mxu0 0.0
    %4816 = vmatprep.subr.mxu0 0.0
    %4817 = vmatpush1.msra.mxu0 0.0
    %4818 = vmatprep.subr.mxu0 0.0
    %4819 = vmatpush1.msra.mxu0 0.0
    %4820 = vmatprep.subr.mxu0 0.0
    %4821 = vmatpush1.msra.mxu0 0.0
    %4822 = vmatprep.subr.mxu0 0.0
    %4823 = vmatpush1.msra.mxu0 0.0
    %4824 = vmatprep.subr.mxu0 0.0
    %4825 = vmatpush1.msra.mxu0 0.0
    %4826 = vmatprep.subr.mxu0 0.0
    %4827 = vmatpush1.msra.mxu0 0.0
    %4828 = vmatprep.subr.mxu0 0.0
    %4829 = vmatpush1.msra.mxu0 0.0
    %4830 = vmatprep.subr.mxu0 0.0
    %4831 = vmatpush1.msra.mxu0 0.0
    %4832 = vmatprep.subr.mxu0 0.0
    %4833 = vmatpush1.msra.mxu0 0.0
    %4834 = vmatprep.subr.mxu0 0.0
    %4835 = vmatpush1.msra.mxu0 0.0
    %4836 = vmatprep.subr.mxu0 0.0
    %4837 = vmatpush1.msra.mxu0 0.0
    %4838 = vmatprep.subr.mxu0 0.0
    %4839 = vmatpush1.msra.mxu0 0.0
    %4840 = vmatprep.subr.mxu0 0.0
    %4841 = vmatpush1.msra.mxu0 0.0
    %4842 = vmatprep.subr.mxu0 0.0
    %4843 = vmatpush1.msra.mxu0 0.0
    %4844 = vmatprep.subr.mxu0 0.0
    %4845 = vmatpush1.msra.mxu0 0.0
    %4846 = vmatprep.subr.mxu0 0.0
    %4847 = vmatpush1.msra.mxu0 0.0
    %4848 = vmatprep.subr.mxu0 0.0
    %4849 = vmatpush1.msra.mxu0 0.0
    %4850 = vmatprep.subr.mxu0 0.0
    %4851 = vmatpush1.msra.mxu0 0.0
    %4852 = vmatprep.subr.mxu0 0.0
    %4853 = vmatpush1.msra.mxu0 0.0
    %4854 = vmatprep.subr.mxu0 0.0
    %4855 = vmatpush1.msra.mxu0 0.0
    %4856 = vmatprep.subr.mxu0 0.0
    %4857 = vmatpush1.msra.mxu0 0.0
    %4858 = vmatprep.mubr.f32.mxu0 0.0
    %4859 = vmatmul.mubr.f32.gmra.mrb[0].mxu0 %v4792
    %v4860 = vpop.f32.mrb[0].mxu0
    %v4861 = vadd.f32 %v4110, %v4860
    %v4862 = vpop.f32.mrb[0].mxu0
    %v4863 = vadd.f32 %v4114, %v4862
    %4864 = vdwg.mxu0
    %4865 = vmatprep.subr.mxu0 0.0
    %4866 = vmatpush1.msra.mxu0 %v3558
    %4867 = vmatprep.subr.mxu0 0.0
    %4868 = vmatpush1.msra.mxu0 %v3561
    %4869 = vmatprep.subr.mxu0 0.0
    %4870 = vmatpush1.msra.mxu0 %v3564
    %4871 = vmatprep.subr.mxu0 0.0
    %4872 = vmatpush1.msra.mxu0 %v3567
    %4873 = vmatprep.subr.mxu0 0.0
    %4874 = vmatpush1.msra.mxu0 0.0
    %4875 = vmatprep.subr.mxu0 0.0
    %4876 = vmatpush1.msra.mxu0 0.0
    %4877 = vmatprep.subr.mxu0 0.0
    %4878 = vmatpush1.msra.mxu0 0.0
    %4879 = vmatprep.subr.mxu0 0.0
    %4880 = vmatpush1.msra.mxu0 0.0
    %4881 = vmatprep.subr.mxu0 0.0
    %4882 = vmatpush1.msra.mxu0 0.0
    %4883 = vmatprep.subr.mxu0 0.0
    %4884 = vmatpush1.msra.mxu0 0.0
    %4885 = vmatprep.subr.mxu0 0.0
    %4886 = vmatpush1.msra.mxu0 0.0
    %4887 = vmatprep.subr.mxu0 0.0
    %4888 = vmatpush1.msra.mxu0 0.0
    %4889 = vmatprep.subr.mxu0 0.0
    %4890 = vmatpush1.msra.mxu0 0.0
    %4891 = vmatprep.subr.mxu0 0.0
    %4892 = vmatpush1.msra.mxu0 0.0
    %4893 = vmatprep.subr.mxu0 0.0
    %4894 = vmatpush1.msra.mxu0 0.0
    %4895 = vmatprep.subr.mxu0 0.0
    %4896 = vmatpush1.msra.mxu0 0.0
    %4897 = vmatprep.subr.mxu0 0.0
    %4898 = vmatpush1.msra.mxu0 0.0
    %4899 = vmatprep.subr.mxu0 0.0
    %4900 = vmatpush1.msra.mxu0 0.0
    %4901 = vmatprep.subr.mxu0 0.0
    %4902 = vmatpush1.msra.mxu0 0.0
    %4903 = vmatprep.subr.mxu0 0.0
    %4904 = vmatpush1.msra.mxu0 0.0
    %4905 = vmatprep.subr.mxu0 0.0
    %4906 = vmatpush1.msra.mxu0 0.0
    %4907 = vmatprep.subr.mxu0 0.0
    %4908 = vmatpush1.msra.mxu0 0.0
    %4909 = vmatprep.subr.mxu0 0.0
    %4910 = vmatpush1.msra.mxu0 0.0
    %4911 = vmatprep.subr.mxu0 0.0
    %4912 = vmatpush1.msra.mxu0 0.0
    %4913 = vmatprep.subr.mxu0 0.0
    %4914 = vmatpush1.msra.mxu0 0.0
    %4915 = vmatprep.subr.mxu0 0.0
    %4916 = vmatpush1.msra.mxu0 0.0
    %4917 = vmatprep.subr.mxu0 0.0
    %4918 = vmatpush1.msra.mxu0 0.0
    %4919 = vmatprep.subr.mxu0 0.0
    %4920 = vmatpush1.msra.mxu0 0.0
    %4921 = vmatprep.subr.mxu0 0.0
    %4922 = vmatpush1.msra.mxu0 0.0
    %4923 = vmatprep.subr.mxu0 0.0
    %4924 = vmatpush1.msra.mxu0 0.0
    %4925 = vmatprep.subr.mxu0 0.0
    %4926 = vmatpush1.msra.mxu0 0.0
    %4927 = vmatprep.subr.mxu0 0.0
    %4928 = vmatpush1.msra.mxu0 0.0
    %4929 = vmatprep.mubr.f32.mxu0 0.0
    %4930 = vmatmul.mubr.f32.gmra.mrb[0].mxu0 %v4792
    %v4931 = vpop.f32.mrb[0].mxu0
    %v4932 = vadd.f32 %v4118, %v4931
    %v4933 = vpop.f32.mrb[0].mxu0
    %4934 = vdwg.mxu0
    %v4935 = vadd.f32 %v4788, %v4861
    %v4936 = vxor.u32 %v4935, 2147483648
    %v4937 = vmul.f32 %v4936, 1.442695
    %v4938 = vpow.pop %v4937
    %v4939 = vadd.f32 %v4938, 1.0
    %v4940 = vrcp.pop %v4939
    %v4941 = vmul.f32 1.0, %v4940
    %v4942 = vadd.f32 %v4789, %v4863
    %v4943 = vxor.u32 %v4942, 2147483648
    %v4944 = vmul.f32 %v4943, 1.442695
    %v4945 = vpow.pop %v4944
    %v4946 = vadd.f32 %v4945, 1.0
    %v4947 = vrcp.pop %v4946
    %v4948 = vmul.f32 1.0, %v4947
    %v4949 = vmul.f32 %v4941, %v4932
    %v4950 = vadd.f32 %v4790, %v4949
    %v4951 = vtanh.pop %v4950
    %v4952 = vsub.f32 1.0, %v4948
    %v4953 = vmul.f32 %v4952, %v4951
    %v4954 = vmul.f32 %v4948, %v4787
    %v4955 = vadd.f32 %v4953, %v4954
    %v4956 = vld [vmem:[#allocation2 + $0x78] sm:$0xff]
    %v4957 = vld [vmem:[#allocation2 + $0x80] sm:$0xff]
    %v4958 = vld [vmem:[#allocation2 + $0x88] sm:$0xff]
    %v4960 = vsel %vm574, %v4955, 0
    %4962 = vmatprep.subr.mxu0 %v3557
    %4963 = vmatpush1.msra.mxu0 %v3556
    %4964 = vmatprep.subr.mxu0 %v3560
    %4965 = vmatpush1.msra.mxu0 %v3559
    %4966 = vmatprep.subr.mxu0 %v3563
    %4967 = vmatpush1.msra.mxu0 %v3562
    %4968 = vmatprep.subr.mxu0 %v3566
    %4969 = vmatpush1.msra.mxu0 %v3565
    %4970 = vmatprep.subr.mxu0 0.0
    %4971 = vmatpush1.msra.mxu0 0.0
    %4972 = vmatprep.subr.mxu0 0.0
    %4973 = vmatpush1.msra.mxu0 0.0
    %4974 = vmatprep.subr.mxu0 0.0
    %4975 = vmatpush1.msra.mxu0 0.0
    %4976 = vmatprep.subr.mxu0 0.0
    %4977 = vmatpush1.msra.mxu0 0.0
    %4978 = vmatprep.subr.mxu0 0.0
    %4979 = vmatpush1.msra.mxu0 0.0
    %4980 = vmatprep.subr.mxu0 0.0
    %4981 = vmatpush1.msra.mxu0 0.0
    %4982 = vmatprep.subr.mxu0 0.0
    %4983 = vmatpush1.msra.mxu0 0.0
    %4984 = vmatprep.subr.mxu0 0.0
    %4985 = vmatpush1.msra.mxu0 0.0
    %4986 = vmatprep.subr.mxu0 0.0
    %4987 = vmatpush1.msra.mxu0 0.0
    %4988 = vmatprep.subr.mxu0 0.0
    %4989 = vmatpush1.msra.mxu0 0.0
    %4990 = vmatprep.subr.mxu0 0.0
    %4991 = vmatpush1.msra.mxu0 0.0
    %4992 = vmatprep.subr.mxu0 0.0
    %4993 = vmatpush1.msra.mxu0 0.0
    %4994 = vmatprep.subr.mxu0 0.0
    %4995 = vmatpush1.msra.mxu0 0.0
    %4996 = vmatprep.subr.mxu0 0.0
    %4997 = vmatpush1.msra.mxu0 0.0
    %4998 = vmatprep.subr.mxu0 0.0
    %4999 = vmatpush1.msra.mxu0 0.0
    %5000 = vmatprep.subr.mxu0 0.0
    %5001 = vmatpush1.msra.mxu0 0.0
    %5002 = vmatprep.subr.mxu0 0.0
    %5003 = vmatpush1.msra.mxu0 0.0
    %5004 = vmatprep.subr.mxu0 0.0
    %5005 = vmatpush1.msra.mxu0 0.0
    %5006 = vmatprep.subr.mxu0 0.0
    %5007 = vmatpush1.msra.mxu0 0.0
    %5008 = vmatprep.subr.mxu0 0.0
    %5009 = vmatpush1.msra.mxu0 0.0
    %5010 = vmatprep.subr.mxu0 0.0
    %5011 = vmatpush1.msra.mxu0 0.0
    %5012 = vmatprep.subr.mxu0 0.0
    %5013 = vmatpush1.msra.mxu0 0.0
    %5014 = vmatprep.subr.mxu0 0.0
    %5015 = vmatpush1.msra.mxu0 0.0
    %5016 = vmatprep.subr.mxu0 0.0
    %5017 = vmatpush1.msra.mxu0 0.0
    %5018 = vmatprep.subr.mxu0 0.0
    %5019 = vmatpush1.msra.mxu0 0.0
    %5020 = vmatprep.subr.mxu0 0.0
    %5021 = vmatpush1.msra.mxu0 0.0
    %5022 = vmatprep.subr.mxu0 0.0
    %5023 = vmatpush1.msra.mxu0 0.0
    %5024 = vmatprep.subr.mxu0 0.0
    %5025 = vmatpush1.msra.mxu0 0.0
    %5026 = vmatprep.mubr.f32.mxu0 0.0
    %5027 = vmatmul.mubr.f32.gmra.mrb[0].mxu0 %v4960
    %v5028 = vpop.f32.mrb[0].mxu0
    %v5029 = vadd.f32 %v4110, %v5028
    %v5030 = vpop.f32.mrb[0].mxu0
    %v5031 = vadd.f32 %v4114, %v5030
    %5032 = vdwg.mxu0
    %5033 = vmatprep.subr.mxu0 0.0
    %5034 = vmatpush1.msra.mxu0 %v3558
    %5035 = vmatprep.subr.mxu0 0.0
    %5036 = vmatpush1.msra.mxu0 %v3561
    %5037 = vmatprep.subr.mxu0 0.0
    %5038 = vmatpush1.msra.mxu0 %v3564
    %5039 = vmatprep.subr.mxu0 0.0
    %5040 = vmatpush1.msra.mxu0 %v3567
    %5041 = vmatprep.subr.mxu0 0.0
    %5042 = vmatpush1.msra.mxu0 0.0
    %5043 = vmatprep.subr.mxu0 0.0
    %5044 = vmatpush1.msra.mxu0 0.0
    %5045 = vmatprep.subr.mxu0 0.0
    %5046 = vmatpush1.msra.mxu0 0.0
    %5047 = vmatprep.subr.mxu0 0.0
    %5048 = vmatpush1.msra.mxu0 0.0
    %5049 = vmatprep.subr.mxu0 0.0
    %5050 = vmatpush1.msra.mxu0 0.0
    %5051 = vmatprep.subr.mxu0 0.0
    %5052 = vmatpush1.msra.mxu0 0.0
    %5053 = vmatprep.subr.mxu0 0.0
    %5054 = vmatpush1.msra.mxu0 0.0
    %5055 = vmatprep.subr.mxu0 0.0
    %5056 = vmatpush1.msra.mxu0 0.0
    %5057 = vmatprep.subr.mxu0 0.0
    %5058 = vmatpush1.msra.mxu0 0.0
    %5059 = vmatprep.subr.mxu0 0.0
    %5060 = vmatpush1.msra.mxu0 0.0
    %5061 = vmatprep.subr.mxu0 0.0
    %5062 = vmatpush1.msra.mxu0 0.0
    %5063 = vmatprep.subr.mxu0 0.0
    %5064 = vmatpush1.msra.mxu0 0.0
    %5065 = vmatprep.subr.mxu0 0.0
    %5066 = vmatpush1.msra.mxu0 0.0
    %5067 = vmatprep.subr.mxu0 0.0
    %5068 = vmatpush1.msra.mxu0 0.0
    %5069 = vmatprep.subr.mxu0 0.0
    %5070 = vmatpush1.msra.mxu0 0.0
    %5071 = vmatprep.subr.mxu0 0.0
    %5072 = vmatpush1.msra.mxu0 0.0
    %5073 = vmatprep.subr.mxu0 0.0
    %5074 = vmatpush1.msra.mxu0 0.0
    %5075 = vmatprep.subr.mxu0 0.0
    %5076 = vmatpush1.msra.mxu0 0.0
    %5077 = vmatprep.subr.mxu0 0.0
    %5078 = vmatpush1.msra.mxu0 0.0
    %5079 = vmatprep.subr.mxu0 0.0
    %5080 = vmatpush1.msra.mxu0 0.0
    %5081 = vmatprep.subr.mxu0 0.0
    %5082 = vmatpush1.msra.mxu0 0.0
    %5083 = vmatprep.subr.mxu0 0.0
    %5084 = vmatpush1.msra.mxu0 0.0
    %5085 = vmatprep.subr.mxu0 0.0
    %5086 = vmatpush1.msra.mxu0 0.0
    %5087 = vmatprep.subr.mxu0 0.0
    %5088 = vmatpush1.msra.mxu0 0.0
    %5089 = vmatprep.subr.mxu0 0.0
    %5090 = vmatpush1.msra.mxu0 0.0
    %5091 = vmatprep.subr.mxu0 0.0
    %5092 = vmatpush1.msra.mxu0 0.0
    %5093 = vmatprep.subr.mxu0 0.0
    %5094 = vmatpush1.msra.mxu0 0.0
    %5095 = vmatprep.subr.mxu0 0.0
    %5096 = vmatpush1.msra.mxu0 0.0
    %5097 = vmatprep.mubr.f32.mxu0 0.0
    %5098 = vmatmul.mubr.f32.gmra.mrb[0].mxu0 %v4960
    %v5099 = vpop.f32.mrb[0].mxu0
    %v5100 = vadd.f32 %v4118, %v5099
    %v5101 = vpop.f32.mrb[0].mxu0
    %5102 = vdwg.mxu0
    %v5103 = vadd.f32 %v4956, %v5029
    %v5104 = vxor.u32 %v5103, 2147483648
    %v5105 = vmul.f32 %v5104, 1.442695
    %v5106 = vpow.pop %v5105
    %v5107 = vadd.f32 %v5106, 1.0
    %v5108 = vrcp.pop %v5107
    %v5109 = vmul.f32 1.0, %v5108
    %v5110 = vadd.f32 %v4957, %v5031
    %v5111 = vxor.u32 %v5110, 2147483648
    %v5112 = vmul.f32 %v5111, 1.442695
    %v5113 = vpow.pop %v5112
    %v5114 = vadd.f32 %v5113, 1.0
    %v5115 = vrcp.pop %v5114
    %v5116 = vmul.f32 1.0, %v5115
    %v5117 = vmul.f32 %v5109, %v5100
    %v5118 = vadd.f32 %v4958, %v5117
    %v5119 = vtanh.pop %v5118
    %v5120 = vsub.f32 1.0, %v5116
    %v5121 = vmul.f32 %v5120, %v5119
    %v5122 = vmul.f32 %v5116, %v4955
    %v5123 = vadd.f32 %v5121, %v5122
    %v5124 = vld [vmem:[#allocation2 + $0x90] sm:$0xff]
    %v5125 = vld [vmem:[#allocation2 + $0x98] sm:$0xff]
    %v5126 = vld [vmem:[#allocation2 + $0xa0] sm:$0xff]
    %v5128 = vsel %vm574, %v5123, 0
    %5130 = vmatprep.subr.mxu0 %v3557
    %5131 = vmatpush1.msra.mxu0 %v3556
    %5132 = vmatprep.subr.mxu0 %v3560
    %5133 = vmatpush1.msra.mxu0 %v3559
    %5134 = vmatprep.subr.mxu0 %v3563
    %5135 = vmatpush1.msra.mxu0 %v3562
    %5136 = vmatprep.subr.mxu0 %v3566
    %5137 = vmatpush1.msra.mxu0 %v3565
    %5138 = vmatprep.subr.mxu0 0.0
    %5139 = vmatpush1.msra.mxu0 0.0
    %5140 = vmatprep.subr.mxu0 0.0
    %5141 = vmatpush1.msra.mxu0 0.0
    %5142 = vmatprep.subr.mxu0 0.0
    %5143 = vmatpush1.msra.mxu0 0.0
    %5144 = vmatprep.subr.mxu0 0.0
    %5145 = vmatpush1.msra.mxu0 0.0
    %5146 = vmatprep.subr.mxu0 0.0
    %5147 = vmatpush1.msra.mxu0 0.0
    %5148 = vmatprep.subr.mxu0 0.0
    %5149 = vmatpush1.msra.mxu0 0.0
    %5150 = vmatprep.subr.mxu0 0.0
    %5151 = vmatpush1.msra.mxu0 0.0
    %5152 = vmatprep.subr.mxu0 0.0
    %5153 = vmatpush1.msra.mxu0 0.0
    %5154 = vmatprep.subr.mxu0 0.0
    %5155 = vmatpush1.msra.mxu0 0.0
    %5156 = vmatprep.subr.mxu0 0.0
    %5157 = vmatpush1.msra.mxu0 0.0
    %5158 = vmatprep.subr.mxu0 0.0
    %5159 = vmatpush1.msra.mxu0 0.0
    %5160 = vmatprep.subr.mxu0 0.0
    %5161 = vmatpush1.msra.mxu0 0.0
    %5162 = vmatprep.subr.mxu0 0.0
    %5163 = vmatpush1.msra.mxu0 0.0
    %5164 = vmatprep.subr.mxu0 0.0
    %5165 = vmatpush1.msra.mxu0 0.0
    %5166 = vmatprep.subr.mxu0 0.0
    %5167 = vmatpush1.msra.mxu0 0.0
    %5168 = vmatprep.subr.mxu0 0.0
    %5169 = vmatpush1.msra.mxu0 0.0
    %5170 = vmatprep.subr.mxu0 0.0
    %5171 = vmatpush1.msra.mxu0 0.0
    %5172 = vmatprep.subr.mxu0 0.0
    %5173 = vmatpush1.msra.mxu0 0.0
    %5174 = vmatprep.subr.mxu0 0.0
    %5175 = vmatpush1.msra.mxu0 0.0
    %5176 = vmatprep.subr.mxu0 0.0
    %5177 = vmatpush1.msra.mxu0 0.0
    %5178 = vmatprep.subr.mxu0 0.0
    %5179 = vmatpush1.msra.mxu0 0.0
    %5180 = vmatprep.subr.mxu0 0.0
    %5181 = vmatpush1.msra.mxu0 0.0
    %5182 = vmatprep.subr.mxu0 0.0
    %5183 = vmatpush1.msra.mxu0 0.0
    %5184 = vmatprep.subr.mxu0 0.0
    %5185 = vmatpush1.msra.mxu0 0.0
    %5186 = vmatprep.subr.mxu0 0.0
    %5187 = vmatpush1.msra.mxu0 0.0
    %5188 = vmatprep.subr.mxu0 0.0
    %5189 = vmatpush1.msra.mxu0 0.0
    %5190 = vmatprep.subr.mxu0 0.0
    %5191 = vmatpush1.msra.mxu0 0.0
    %5192 = vmatprep.subr.mxu0 0.0
    %5193 = vmatpush1.msra.mxu0 0.0
    %5194 = vmatprep.mubr.f32.mxu0 0.0
    %5195 = vmatmul.mubr.f32.gmra.mrb[0].mxu0 %v5128
    %v5196 = vpop.f32.mrb[0].mxu0
    %v5197 = vadd.f32 %v4110, %v5196
    %v5198 = vpop.f32.mrb[0].mxu0
    %v5199 = vadd.f32 %v4114, %v5198
    %5200 = vdwg.mxu0
    %5201 = vmatprep.subr.mxu0 0.0
    %5202 = vmatpush1.msra.mxu0 %v3558
    %5203 = vmatprep.subr.mxu0 0.0
    %5204 = vmatpush1.msra.mxu0 %v3561
    %5205 = vmatprep.subr.mxu0 0.0
    %5206 = vmatpush1.msra.mxu0 %v3564
    %5207 = vmatprep.subr.mxu0 0.0
    %5208 = vmatpush1.msra.mxu0 %v3567
    %5209 = vmatprep.subr.mxu0 0.0
    %5210 = vmatpush1.msra.mxu0 0.0
    %5211 = vmatprep.subr.mxu0 0.0
    %5212 = vmatpush1.msra.mxu0 0.0
    %5213 = vmatprep.subr.mxu0 0.0
    %5214 = vmatpush1.msra.mxu0 0.0
    %5215 = vmatprep.subr.mxu0 0.0
    %5216 = vmatpush1.msra.mxu0 0.0
    %5217 = vmatprep.subr.mxu0 0.0
    %5218 = vmatpush1.msra.mxu0 0.0
    %5219 = vmatprep.subr.mxu0 0.0
    %5220 = vmatpush1.msra.mxu0 0.0
    %5221 = vmatprep.subr.mxu0 0.0
    %5222 = vmatpush1.msra.mxu0 0.0
    %5223 = vmatprep.subr.mxu0 0.0
    %5224 = vmatpush1.msra.mxu0 0.0
    %5225 = vmatprep.subr.mxu0 0.0
    %5226 = vmatpush1.msra.mxu0 0.0
    %5227 = vmatprep.subr.mxu0 0.0
    %5228 = vmatpush1.msra.mxu0 0.0
    %5229 = vmatprep.subr.mxu0 0.0
    %5230 = vmatpush1.msra.mxu0 0.0
    %5231 = vmatprep.subr.mxu0 0.0
    %5232 = vmatpush1.msra.mxu0 0.0
    %5233 = vmatprep.subr.mxu0 0.0
    %5234 = vmatpush1.msra.mxu0 0.0
    %5235 = vmatprep.subr.mxu0 0.0
    %5236 = vmatpush1.msra.mxu0 0.0
    %5237 = vmatprep.subr.mxu0 0.0
    %5238 = vmatpush1.msra.mxu0 0.0
    %5239 = vmatprep.subr.mxu0 0.0
    %5240 = vmatpush1.msra.mxu0 0.0
    %5241 = vmatprep.subr.mxu0 0.0
    %5242 = vmatpush1.msra.mxu0 0.0
    %5243 = vmatprep.subr.mxu0 0.0
    %5244 = vmatpush1.msra.mxu0 0.0
    %5245 = vmatprep.subr.mxu0 0.0
    %5246 = vmatpush1.msra.mxu0 0.0
    %5247 = vmatprep.subr.mxu0 0.0
    %5248 = vmatpush1.msra.mxu0 0.0
    %5249 = vmatprep.subr.mxu0 0.0
    %5250 = vmatpush1.msra.mxu0 0.0
    %5251 = vmatprep.subr.mxu0 0.0
    %5252 = vmatpush1.msra.mxu0 0.0
    %5253 = vmatprep.subr.mxu0 0.0
    %5254 = vmatpush1.msra.mxu0 0.0
    %5255 = vmatprep.subr.mxu0 0.0
    %5256 = vmatpush1.msra.mxu0 0.0
    %5257 = vmatprep.subr.mxu0 0.0
    %5258 = vmatpush1.msra.mxu0 0.0
    %5259 = vmatprep.subr.mxu0 0.0
    %5260 = vmatpush1.msra.mxu0 0.0
    %5261 = vmatprep.subr.mxu0 0.0
    %5262 = vmatpush1.msra.mxu0 0.0
    %5263 = vmatprep.subr.mxu0 0.0
    %5264 = vmatpush1.msra.mxu0 0.0
    %5265 = vmatprep.mubr.f32.mxu0 0.0
    %5266 = vmatmul.mubr.f32.gmra.mrb[0].mxu0 %v5128
    %v5267 = vpop.f32.mrb[0].mxu0
    %v5268 = vadd.f32 %v4118, %v5267
    %v5269 = vpop.f32.mrb[0].mxu0
    %5270 = vdwg.mxu0
    %v5271 = vadd.f32 %v5124, %v5197
    %v5272 = vxor.u32 %v5271, 2147483648
    %v5273 = vmul.f32 %v5272, 1.442695
    %v5274 = vpow.pop %v5273
    %v5275 = vadd.f32 %v5274, 1.0
    %v5276 = vrcp.pop %v5275
    %v5277 = vmul.f32 1.0, %v5276
    %v5278 = vadd.f32 %v5125, %v5199
    %v5279 = vxor.u32 %v5278, 2147483648
    %v5280 = vmul.f32 %v5279, 1.442695
    %v5281 = vpow.pop %v5280
    %v5282 = vadd.f32 %v5281, 1.0
    %v5283 = vrcp.pop %v5282
    %v5284 = vmul.f32 1.0, %v5283
    %v5285 = vmul.f32 %v5277, %v5268
    %v5286 = vadd.f32 %v5126, %v5285
    %v5287 = vtanh.pop %v5286
    %v5288 = vsub.f32 1.0, %v5284
    %v5289 = vmul.f32 %v5288, %v5287
    %v5290 = vmul.f32 %v5284, %v5123
    %v5291 = vadd.f32 %v5289, %v5290
    %v5292 = vld [vmem:[#allocation2 + $0xa8] sm:$0xff]
    %v5293 = vld [vmem:[#allocation2 + $0xb0] sm:$0xff]
    %v5294 = vld [vmem:[#allocation2 + $0xb8] sm:$0xff]
    %v5296 = vsel %vm574, %v5291, 0
    %5298 = vmatprep.subr.mxu0 %v3557
    %5299 = vmatpush1.msra.mxu0 %v3556
    %5300 = vmatprep.subr.mxu0 %v3560
    %5301 = vmatpush1.msra.mxu0 %v3559
    %5302 = vmatprep.subr.mxu0 %v3563
    %5303 = vmatpush1.msra.mxu0 %v3562
    %5304 = vmatprep.subr.mxu0 %v3566
    %5305 = vmatpush1.msra.mxu0 %v3565
    %5306 = vmatprep.subr.mxu0 0.0
    %5307 = vmatpush1.msra.mxu0 0.0
    %5308 = vmatprep.subr.mxu0 0.0
    %5309 = vmatpush1.msra.mxu0 0.0
    %5310 = vmatprep.subr.mxu0 0.0
    %5311 = vmatpush1.msra.mxu0 0.0
    %5312 = vmatprep.subr.mxu0 0.0
    %5313 = vmatpush1.msra.mxu0 0.0
    %5314 = vmatprep.subr.mxu0 0.0
    %5315 = vmatpush1.msra.mxu0 0.0
    %5316 = vmatprep.subr.mxu0 0.0
    %5317 = vmatpush1.msra.mxu0 0.0
    %5318 = vmatprep.subr.mxu0 0.0
    %5319 = vmatpush1.msra.mxu0 0.0
    %5320 = vmatprep.subr.mxu0 0.0
    %5321 = vmatpush1.msra.mxu0 0.0
    %5322 = vmatprep.subr.mxu0 0.0
    %5323 = vmatpush1.msra.mxu0 0.0
    %5324 = vmatprep.subr.mxu0 0.0
    %5325 = vmatpush1.msra.mxu0 0.0
    %5326 = vmatprep.subr.mxu0 0.0
    %5327 = vmatpush1.msra.mxu0 0.0
    %5328 = vmatprep.subr.mxu0 0.0
    %5329 = vmatpush1.msra.mxu0 0.0
    %5330 = vmatprep.subr.mxu0 0.0
    %5331 = vmatpush1.msra.mxu0 0.0
    %5332 = vmatprep.subr.mxu0 0.0
    %5333 = vmatpush1.msra.mxu0 0.0
    %5334 = vmatprep.subr.mxu0 0.0
    %5335 = vmatpush1.msra.mxu0 0.0
    %5336 = vmatprep.subr.mxu0 0.0
    %5337 = vmatpush1.msra.mxu0 0.0
    %5338 = vmatprep.subr.mxu0 0.0
    %5339 = vmatpush1.msra.mxu0 0.0
    %5340 = vmatprep.subr.mxu0 0.0
    %5341 = vmatpush1.msra.mxu0 0.0
    %5342 = vmatprep.subr.mxu0 0.0
    %5343 = vmatpush1.msra.mxu0 0.0
    %5344 = vmatprep.subr.mxu0 0.0
    %5345 = vmatpush1.msra.mxu0 0.0
    %5346 = vmatprep.subr.mxu0 0.0
    %5347 = vmatpush1.msra.mxu0 0.0
    %5348 = vmatprep.subr.mxu0 0.0
    %5349 = vmatpush1.msra.mxu0 0.0
    %5350 = vmatprep.subr.mxu0 0.0
    %5351 = vmatpush1.msra.mxu0 0.0
    %5352 = vmatprep.subr.mxu0 0.0
    %5353 = vmatpush1.msra.mxu0 0.0
    %5354 = vmatprep.subr.mxu0 0.0
    %5355 = vmatpush1.msra.mxu0 0.0
    %5356 = vmatprep.subr.mxu0 0.0
    %5357 = vmatpush1.msra.mxu0 0.0
    %5358 = vmatprep.subr.mxu0 0.0
    %5359 = vmatpush1.msra.mxu0 0.0
    %5360 = vmatprep.subr.mxu0 0.0
    %5361 = vmatpush1.msra.mxu0 0.0
    %5362 = vmatprep.mubr.f32.mxu0 0.0
    %5363 = vmatmul.mubr.f32.gmra.mrb[0].mxu0 %v5296
    %v5364 = vpop.f32.mrb[0].mxu0
    %v5365 = vadd.f32 %v4110, %v5364
    %v5366 = vpop.f32.mrb[0].mxu0
    %v5367 = vadd.f32 %v4114, %v5366
    %5368 = vdwg.mxu0
    %5369 = vmatprep.subr.mxu0 0.0
    %5370 = vmatpush1.msra.mxu0 %v3558
    %5371 = vmatprep.subr.mxu0 0.0
    %5372 = vmatpush1.msra.mxu0 %v3561
    %5373 = vmatprep.subr.mxu0 0.0
    %5374 = vmatpush1.msra.mxu0 %v3564
    %5375 = vmatprep.subr.mxu0 0.0
    %5376 = vmatpush1.msra.mxu0 %v3567
    %5377 = vmatprep.subr.mxu0 0.0
    %5378 = vmatpush1.msra.mxu0 0.0
    %5379 = vmatprep.subr.mxu0 0.0
    %5380 = vmatpush1.msra.mxu0 0.0
    %5381 = vmatprep.subr.mxu0 0.0
    %5382 = vmatpush1.msra.mxu0 0.0
    %5383 = vmatprep.subr.mxu0 0.0
    %5384 = vmatpush1.msra.mxu0 0.0
    %5385 = vmatprep.subr.mxu0 0.0
    %5386 = vmatpush1.msra.mxu0 0.0
    %5387 = vmatprep.subr.mxu0 0.0
    %5388 = vmatpush1.msra.mxu0 0.0
    %5389 = vmatprep.subr.mxu0 0.0
    %5390 = vmatpush1.msra.mxu0 0.0
    %5391 = vmatprep.subr.mxu0 0.0
    %5392 = vmatpush1.msra.mxu0 0.0
    %5393 = vmatprep.subr.mxu0 0.0
    %5394 = vmatpush1.msra.mxu0 0.0
    %5395 = vmatprep.subr.mxu0 0.0
    %5396 = vmatpush1.msra.mxu0 0.0
    %5397 = vmatprep.subr.mxu0 0.0
    %5398 = vmatpush1.msra.mxu0 0.0
    %5399 = vmatprep.subr.mxu0 0.0
    %5400 = vmatpush1.msra.mxu0 0.0
    %5401 = vmatprep.subr.mxu0 0.0
    %5402 = vmatpush1.msra.mxu0 0.0
    %5403 = vmatprep.subr.mxu0 0.0
    %5404 = vmatpush1.msra.mxu0 0.0
    %5405 = vmatprep.subr.mxu0 0.0
    %5406 = vmatpush1.msra.mxu0 0.0
    %5407 = vmatprep.subr.mxu0 0.0
    %5408 = vmatpush1.msra.mxu0 0.0
    %5409 = vmatprep.subr.mxu0 0.0
    %5410 = vmatpush1.msra.mxu0 0.0
    %5411 = vmatprep.subr.mxu0 0.0
    %5412 = vmatpush1.msra.mxu0 0.0
    %5413 = vmatprep.subr.mxu0 0.0
    %5414 = vmatpush1.msra.mxu0 0.0
    %5415 = vmatprep.subr.mxu0 0.0
    %5416 = vmatpush1.msra.mxu0 0.0
    %5417 = vmatprep.subr.mxu0 0.0
    %5418 = vmatpush1.msra.mxu0 0.0
    %5419 = vmatprep.subr.mxu0 0.0
    %5420 = vmatpush1.msra.mxu0 0.0
    %5421 = vmatprep.subr.mxu0 0.0
    %5422 = vmatpush1.msra.mxu0 0.0
    %5423 = vmatprep.subr.mxu0 0.0
    %5424 = vmatpush1.msra.mxu0 0.0
    %5425 = vmatprep.subr.mxu0 0.0
    %5426 = vmatpush1.msra.mxu0 0.0
    %5427 = vmatprep.subr.mxu0 0.0
    %5428 = vmatpush1.msra.mxu0 0.0
    %5429 = vmatprep.subr.mxu0 0.0
    %5430 = vmatpush1.msra.mxu0 0.0
    %5431 = vmatprep.subr.mxu0 0.0
    %5432 = vmatpush1.msra.mxu0 0.0
    %5433 = vmatprep.mubr.f32.mxu0 0.0
    %5434 = vmatmul.mubr.f32.gmra.mrb[0].mxu0 %v5296
    %v5435 = vpop.f32.mrb[0].mxu0
    %v5436 = vadd.f32 %v4118, %v5435
    %v5437 = vpop.f32.mrb[0].mxu0
    %5438 = vdwg.mxu0
    %v5439 = vadd.f32 %v5292, %v5365
    %v5440 = vxor.u32 %v5439, 2147483648
    %v5441 = vmul.f32 %v5440, 1.442695
    %v5442 = vpow.pop %v5441
    %v5443 = vadd.f32 %v5442, 1.0
    %v5444 = vrcp.pop %v5443
    %v5445 = vmul.f32 1.0, %v5444
    %v5446 = vadd.f32 %v5293, %v5367
    %v5447 = vxor.u32 %v5446, 2147483648
    %v5448 = vmul.f32 %v5447, 1.442695
    %v5449 = vpow.pop %v5448
    %v5450 = vadd.f32 %v5449, 1.0
    %v5451 = vrcp.pop %v5450
    %v5452 = vmul.f32 1.0, %v5451
    %v5453 = vmul.f32 %v5445, %v5436
    %v5454 = vadd.f32 %v5294, %v5453
    %v5455 = vtanh.pop %v5454
    %v5456 = vsub.f32 1.0, %v5452
    %v5457 = vmul.f32 %v5456, %v5455
    %v5458 = vmul.f32 %v5452, %v5291
    %v5459 = vadd.f32 %v5457, %v5458
    %s5460 = scalar_lea.vmem [#allocation6], 288
    %v5461 = vld [vmem:[%s5460] sm:$0xff]
    %v5462 = vld [vmem:[%s5460 + $0x8] sm:$0xff]
    %v5463 = vld [vmem:[%s5460 + $0x10] sm:$0xff]
    %v5464 = vld [vmem:[%s5460 + $0x18] sm:$0xff]
    %v5465 = vld [vmem:[%s5460 + $0x20] sm:$0xff]
    %v5466 = vld [vmem:[%s5460 + $0x28] sm:$0xff]
    %v5467 = vld [vmem:[%s5460 + $0x30] sm:$0xff]
    %v5468 = vld [vmem:[%s5460 + $0x38] sm:$0xff]
    %v5469 = vld [vmem:[%s5460 + $0x40] sm:$0xff]
    %v5470 = vld [vmem:[%s5460 + $0x48] sm:$0xff]
    %v5471 = vld [vmem:[%s5460 + $0x50] sm:$0xff]
    %v5472 = vld [vmem:[%s5460 + $0x58] sm:$0xff]
    %s5473 = scalar_lea.vmem %s5, 9
    %v5474 = vld [vmem:[%s5473] sm:$0x7]
    %s5475 = scalar_lea.vmem %s6, 9
    %v5476 = vld [vmem:[%s5475] sm:$0x7]
    %s5477 = scalar_lea.vmem [#allocation3], 192
    %v5478 = vld [vmem:[%s5477] sm:$0xff]
    %v5479 = vld [vmem:[%s5477 + $0x8] sm:$0xff]
    %v5480 = vld [vmem:[%s5477 + $0x10] sm:$0xff]
    %v5481 = vld [vmem:[%s5477 + $0x18] sm:$0xff]
    %v5482 = vld [vmem:[%s5477 + $0x20] sm:$0xff]
    %v5483 = vld [vmem:[%s5477 + $0x28] sm:$0xff]
    %v5484 = vld [vmem:[%s5477 + $0x30] sm:$0xff]
    %v5485 = vld [vmem:[%s5477 + $0x38] sm:$0xff]
    %v5486 = vld [vmem:[%s5477 + $0x40] sm:$0xff]
    %v5487 = vld [vmem:[%s5477 + $0x48] sm:$0xff]
    %v5488 = vld [vmem:[%s5477 + $0x50] sm:$0xff]
    %v5489 = vld [vmem:[%s5477 + $0x58] sm:$0xff]
    %s5490 = scalar_lea.vmem [#allocation3], 288
    %v5491 = vld [vmem:[%s5490] sm:$0xff]
    %v5492 = vld [vmem:[%s5490 + $0x8] sm:$0xff]
    %v5493 = vld [vmem:[%s5490 + $0x10] sm:$0xff]
    %v5494 = vld [vmem:[%s5490 + $0x18] sm:$0xff]
    %v5495 = vld [vmem:[%s5490 + $0x20] sm:$0xff]
    %v5496 = vld [vmem:[%s5490 + $0x28] sm:$0xff]
    %v5497 = vld [vmem:[%s5490 + $0x30] sm:$0xff]
    %v5498 = vld [vmem:[%s5490 + $0x38] sm:$0xff]
    %v5499 = vld [vmem:[%s5490 + $0x40] sm:$0xff]
    %v5500 = vld [vmem:[%s5490 + $0x48] sm:$0xff]
    %v5501 = vld [vmem:[%s5490 + $0x50] sm:$0xff]
    %v5502 = vld [vmem:[%s5490 + $0x58] sm:$0xff]
    %5503 = vmatprep.subr.mxu0 %v5492
    %5504 = vmatpush1.msra.mxu0 %v5491
    %5505 = vmatprep.subr.mxu0 %v5495
    %5506 = vmatpush1.msra.mxu0 %v5494
    %5507 = vmatprep.subr.mxu0 %v5498
    %5508 = vmatpush1.msra.mxu0 %v5497
    %5509 = vmatprep.subr.mxu0 %v5501
    %5510 = vmatpush1.msra.mxu0 %v5500
    %5511 = vmatprep.subr.mxu0 0.0
    %5512 = vmatpush1.msra.mxu0 0.0
    %5513 = vmatprep.subr.mxu0 0.0
    %5514 = vmatpush1.msra.mxu0 0.0
    %5515 = vmatprep.subr.mxu0 0.0
    %5516 = vmatpush1.msra.mxu0 0.0
    %5517 = vmatprep.subr.mxu0 0.0
    %5518 = vmatpush1.msra.mxu0 0.0
    %5519 = vmatprep.subr.mxu0 0.0
    %5520 = vmatpush1.msra.mxu0 0.0
    %5521 = vmatprep.subr.mxu0 0.0
    %5522 = vmatpush1.msra.mxu0 0.0
    %5523 = vmatprep.subr.mxu0 0.0
    %5524 = vmatpush1.msra.mxu0 0.0
    %5525 = vmatprep.subr.mxu0 0.0
    %5526 = vmatpush1.msra.mxu0 0.0
    %5527 = vmatprep.subr.mxu0 0.0
    %5528 = vmatpush1.msra.mxu0 0.0
    %5529 = vmatprep.subr.mxu0 0.0
    %5530 = vmatpush1.msra.mxu0 0.0
    %5531 = vmatprep.subr.mxu0 0.0
    %5532 = vmatpush1.msra.mxu0 0.0
    %5533 = vmatprep.subr.mxu0 0.0
    %5534 = vmatpush1.msra.mxu0 0.0
    %5535 = vmatprep.subr.mxu0 0.0
    %5536 = vmatpush1.msra.mxu0 0.0
    %5537 = vmatprep.subr.mxu0 0.0
    %5538 = vmatpush1.msra.mxu0 0.0
    %5539 = vmatprep.subr.mxu0 0.0
    %5540 = vmatpush1.msra.mxu0 0.0
    %5541 = vmatprep.subr.mxu0 0.0
    %5542 = vmatpush1.msra.mxu0 0.0
    %5543 = vmatprep.subr.mxu0 0.0
    %5544 = vmatpush1.msra.mxu0 0.0
    %5545 = vmatprep.subr.mxu0 0.0
    %5546 = vmatpush1.msra.mxu0 0.0
    %5547 = vmatprep.subr.mxu0 0.0
    %5548 = vmatpush1.msra.mxu0 0.0
    %5549 = vmatprep.subr.mxu0 0.0
    %5550 = vmatpush1.msra.mxu0 0.0
    %5551 = vmatprep.subr.mxu0 0.0
    %5552 = vmatpush1.msra.mxu0 0.0
    %5553 = vmatprep.subr.mxu0 0.0
    %5554 = vmatpush1.msra.mxu0 0.0
    %5555 = vmatprep.subr.mxu0 0.0
    %5556 = vmatpush1.msra.mxu0 0.0
    %5557 = vmatprep.subr.mxu0 0.0
    %5558 = vmatpush1.msra.mxu0 0.0
    %5559 = vmatprep.subr.mxu0 0.0
    %5560 = vmatpush1.msra.mxu0 0.0
    %5561 = vmatprep.subr.mxu0 0.0
    %5562 = vmatpush1.msra.mxu0 0.0
    %5563 = vmatprep.subr.mxu0 0.0
    %5564 = vmatpush1.msra.mxu0 0.0
    %5565 = vmatprep.subr.mxu0 0.0
    %5566 = vmatpush1.msra.mxu0 0.0
    %5567 = vmatprep.mubr.f32.mxu0 0.0
    %5568 = vmatmul.mubr.f32.gmra.mrb[0].mxu0 %v3598
    %v5569 = vpop.f32.mrb[0].mxu0
    %v5570 = vadd.f32 0.0, %v5569
    %v5571 = vpop.f32.mrb[0].mxu0
    %v5572 = vadd.f32 0.0, %v5571
    %5573 = vmatprep.mubr.f32.mxu0 0.0
    %5574 = vmatmul.mubr.f32.gmra.mrb[0].mxu0 %v3391
    %v5575 = vpop.f32.mrb[0].mxu0
    %v5576 = vadd.f32 0.0, %v5575
    %v5577 = vpop.f32.mrb[0].mxu0
    %v5578 = vadd.f32 0.0, %v5577
    %5579 = vmatprep.mubr.f32.mxu0 0.0
    %5580 = vmatmul.mubr.f32.gmra.mrb[0].mxu0 %v3223
    %v5581 = vpop.f32.mrb[0].mxu0
    %v5582 = vadd.f32 0.0, %v5581
    %v5583 = vpop.f32.mrb[0].mxu0
    %v5584 = vadd.f32 0.0, %v5583
    %5585 = vmatprep.mubr.f32.mxu0 0.0
    %5586 = vmatmul.mubr.f32.gmra.mrb[0].mxu0 %v3055
    %v5587 = vpop.f32.mrb[0].mxu0
    %v5588 = vadd.f32 0.0, %v5587
    %v5589 = vpop.f32.mrb[0].mxu0
    %v5590 = vadd.f32 0.0, %v5589
    %5591 = vmatprep.mubr.f32.mxu0 0.0
    %5592 = vmatmul.mubr.f32.gmra.mrb[0].mxu0 %v2887
    %v5593 = vpop.f32.mrb[0].mxu0
    %v5594 = vadd.f32 0.0, %v5593
    %v5595 = vpop.f32.mrb[0].mxu0
    %v5596 = vadd.f32 0.0, %v5595
    %5597 = vmatprep.mubr.f32.mxu0 0.0
    %5598 = vmatmul.mubr.f32.gmra.mrb[0].mxu0 %v2719
    %v5599 = vpop.f32.mrb[0].mxu0
    %v5600 = vadd.f32 0.0, %v5599
    %v5601 = vpop.f32.mrb[0].mxu0
    %v5602 = vadd.f32 0.0, %v5601
    %5603 = vmatprep.mubr.f32.mxu0 0.0
    %5604 = vmatmul.mubr.f32.gmra.mrb[0].mxu0 %v2551
    %v5605 = vpop.f32.mrb[0].mxu0
    %v5606 = vadd.f32 0.0, %v5605
    %v5607 = vpop.f32.mrb[0].mxu0
    %v5608 = vadd.f32 0.0, %v5607
    %5609 = vmatprep.mubr.f32.mxu0 0.0
    %5610 = vmatmul.mubr.f32.gmra.mrb[0].mxu0 %v2383
    %v5611 = vpop.f32.mrb[0].mxu0
    %v5612 = vadd.f32 0.0, %v5611
    %v5613 = vpop.f32.mrb[0].mxu0
    %v5614 = vadd.f32 0.0, %v5613
    %5615 = vdwg.mxu0
    %5616 = vmatprep.subr.mxu0 0.0
    %5617 = vmatpush1.msra.mxu0 %v5493
    %5618 = vmatprep.subr.mxu0 0.0
    %5619 = vmatpush1.msra.mxu0 %v5496
    %5620 = vmatprep.subr.mxu0 0.0
    %5621 = vmatpush1.msra.mxu0 %v5499
    %5622 = vmatprep.subr.mxu0 0.0
    %5623 = vmatpush1.msra.mxu0 %v5502
    %5624 = vmatprep.subr.mxu0 0.0
    %5625 = vmatpush1.msra.mxu0 0.0
    %5626 = vmatprep.subr.mxu0 0.0
    %5627 = vmatpush1.msra.mxu0 0.0
    %5628 = vmatprep.subr.mxu0 0.0
    %5629 = vmatpush1.msra.mxu0 0.0
    %5630 = vmatprep.subr.mxu0 0.0
    %5631 = vmatpush1.msra.mxu0 0.0
    %5632 = vmatprep.subr.mxu0 0.0
    %5633 = vmatpush1.msra.mxu0 0.0
    %5634 = vmatprep.subr.mxu0 0.0
    %5635 = vmatpush1.msra.mxu0 0.0
    %5636 = vmatprep.subr.mxu0 0.0
    %5637 = vmatpush1.msra.mxu0 0.0
    %5638 = vmatprep.subr.mxu0 0.0
    %5639 = vmatpush1.msra.mxu0 0.0
    %5640 = vmatprep.subr.mxu0 0.0
    %5641 = vmatpush1.msra.mxu0 0.0
    %5642 = vmatprep.subr.mxu0 0.0
    %5643 = vmatpush1.msra.mxu0 0.0
    %5644 = vmatprep.subr.mxu0 0.0
    %5645 = vmatpush1.msra.mxu0 0.0
    %5646 = vmatprep.subr.mxu0 0.0
    %5647 = vmatpush1.msra.mxu0 0.0
    %5648 = vmatprep.subr.mxu0 0.0
    %5649 = vmatpush1.msra.mxu0 0.0
    %5650 = vmatprep.subr.mxu0 0.0
    %5651 = vmatpush1.msra.mxu0 0.0
    %5652 = vmatprep.subr.mxu0 0.0
    %5653 = vmatpush1.msra.mxu0 0.0
    %5654 = vmatprep.subr.mxu0 0.0
    %5655 = vmatpush1.msra.mxu0 0.0
    %5656 = vmatprep.subr.mxu0 0.0
    %5657 = vmatpush1.msra.mxu0 0.0
    %5658 = vmatprep.subr.mxu0 0.0
    %5659 = vmatpush1.msra.mxu0 0.0
    %5660 = vmatprep.subr.mxu0 0.0
    %5661 = vmatpush1.msra.mxu0 0.0
    %5662 = vmatprep.subr.mxu0 0.0
    %5663 = vmatpush1.msra.mxu0 0.0
    %5664 = vmatprep.subr.mxu0 0.0
    %5665 = vmatpush1.msra.mxu0 0.0
    %5666 = vmatprep.subr.mxu0 0.0
    %5667 = vmatpush1.msra.mxu0 0.0
    %5668 = vmatprep.subr.mxu0 0.0
    %5669 = vmatpush1.msra.mxu0 0.0
    %5670 = vmatprep.subr.mxu0 0.0
    %5671 = vmatpush1.msra.mxu0 0.0
    %5672 = vmatprep.subr.mxu0 0.0
    %5673 = vmatpush1.msra.mxu0 0.0
    %5674 = vmatprep.subr.mxu0 0.0
    %5675 = vmatpush1.msra.mxu0 0.0
    %5676 = vmatprep.subr.mxu0 0.0
    %5677 = vmatpush1.msra.mxu0 0.0
    %5678 = vmatprep.subr.mxu0 0.0
    %5679 = vmatpush1.msra.mxu0 0.0
    %5680 = vmatprep.mubr.f32.mxu0 0.0
    %5681 = vmatmul.mubr.f32.gmra.mrb[0].mxu0 %v3598
    %v5682 = vpop.f32.mrb[0].mxu0
    %v5683 = vadd.f32 0.0, %v5682
    %v5684 = vpop.f32.mrb[0].mxu0
    %5685 = vmatprep.mubr.f32.mxu0 0.0
    %5686 = vmatmul.mubr.f32.gmra.mrb[0].mxu0 %v3391
    %v5687 = vpop.f32.mrb[0].mxu0
    %v5688 = vadd.f32 0.0, %v5687
    %v5689 = vpop.f32.mrb[0].mxu0
    %5690 = vmatprep.mubr.f32.mxu0 0.0
    %5691 = vmatmul.mubr.f32.gmra.mrb[0].mxu0 %v3223
    %v5692 = vpop.f32.mrb[0].mxu0
    %v5693 = vadd.f32 0.0, %v5692
    %v5694 = vpop.f32.mrb[0].mxu0
    %5695 = vmatprep.mubr.f32.mxu0 0.0
    %5696 = vmatmul.mubr.f32.gmra.mrb[0].mxu0 %v3055
    %v5697 = vpop.f32.mrb[0].mxu0
    %v5698 = vadd.f32 0.0, %v5697
    %v5699 = vpop.f32.mrb[0].mxu0
    %5700 = vmatprep.mubr.f32.mxu0 0.0
    %5701 = vmatmul.mubr.f32.gmra.mrb[0].mxu0 %v2887
    %v5702 = vpop.f32.mrb[0].mxu0
    %v5703 = vadd.f32 0.0, %v5702
    %v5704 = vpop.f32.mrb[0].mxu0
    %5705 = vmatprep.mubr.f32.mxu0 0.0
    %5706 = vmatmul.mubr.f32.gmra.mrb[0].mxu0 %v2719
    %v5707 = vpop.f32.mrb[0].mxu0
    %v5708 = vadd.f32 0.0, %v5707
    %v5709 = vpop.f32.mrb[0].mxu0
    %5710 = vmatprep.mubr.f32.mxu0 0.0
    %5711 = vmatmul.mubr.f32.gmra.mrb[0].mxu0 %v2551
    %v5712 = vpop.f32.mrb[0].mxu0
    %v5713 = vadd.f32 0.0, %v5712
    %v5714 = vpop.f32.mrb[0].mxu0
    %5715 = vmatprep.mubr.f32.mxu0 0.0
    %5716 = vmatmul.mubr.f32.gmra.mrb[0].mxu0 %v2383
    %v5717 = vpop.f32.mrb[0].mxu0
    %v5718 = vadd.f32 0.0, %v5717
    %v5719 = vpop.f32.mrb[0].mxu0
    %5720 = vdwg.mxu0
    %5721 = vmatprep.subr.mxu0 %v5479
    %5722 = vmatpush1.msra.mxu0 %v5478
    %5723 = vmatprep.subr.mxu0 %v5482
    %5724 = vmatpush1.msra.mxu0 %v5481
    %5725 = vmatprep.subr.mxu0 %v5485
    %5726 = vmatpush1.msra.mxu0 %v5484
    %5727 = vmatprep.subr.mxu0 %v5488
    %5728 = vmatpush1.msra.mxu0 %v5487
    %5729 = vmatprep.subr.mxu0 0.0
    %5730 = vmatpush1.msra.mxu0 0.0
    %5731 = vmatprep.subr.mxu0 0.0
    %5732 = vmatpush1.msra.mxu0 0.0
    %5733 = vmatprep.subr.mxu0 0.0
    %5734 = vmatpush1.msra.mxu0 0.0
    %5735 = vmatprep.subr.mxu0 0.0
    %5736 = vmatpush1.msra.mxu0 0.0
    %5737 = vmatprep.subr.mxu0 0.0
    %5738 = vmatpush1.msra.mxu0 0.0
    %5739 = vmatprep.subr.mxu0 0.0
    %5740 = vmatpush1.msra.mxu0 0.0
    %5741 = vmatprep.subr.mxu0 0.0
    %5742 = vmatpush1.msra.mxu0 0.0
    %5743 = vmatprep.subr.mxu0 0.0
    %5744 = vmatpush1.msra.mxu0 0.0
    %5745 = vmatprep.subr.mxu0 0.0
    %5746 = vmatpush1.msra.mxu0 0.0
    %5747 = vmatprep.subr.mxu0 0.0
    %5748 = vmatpush1.msra.mxu0 0.0
    %5749 = vmatprep.subr.mxu0 0.0
    %5750 = vmatpush1.msra.mxu0 0.0
    %5751 = vmatprep.subr.mxu0 0.0
    %5752 = vmatpush1.msra.mxu0 0.0
    %5753 = vmatprep.subr.mxu0 0.0
    %5754 = vmatpush1.msra.mxu0 0.0
    %5755 = vmatprep.subr.mxu0 0.0
    %5756 = vmatpush1.msra.mxu0 0.0
    %5757 = vmatprep.subr.mxu0 0.0
    %5758 = vmatpush1.msra.mxu0 0.0
    %5759 = vmatprep.subr.mxu0 0.0
    %5760 = vmatpush1.msra.mxu0 0.0
    %5761 = vmatprep.subr.mxu0 0.0
    %5762 = vmatpush1.msra.mxu0 0.0
    %5763 = vmatprep.subr.mxu0 0.0
    %5764 = vmatpush1.msra.mxu0 0.0
    %5765 = vmatprep.subr.mxu0 0.0
    %5766 = vmatpush1.msra.mxu0 0.0
    %5767 = vmatprep.subr.mxu0 0.0
    %5768 = vmatpush1.msra.mxu0 0.0
    %5769 = vmatprep.subr.mxu0 0.0
    %5770 = vmatpush1.msra.mxu0 0.0
    %5771 = vmatprep.subr.mxu0 0.0
    %5772 = vmatpush1.msra.mxu0 0.0
    %5773 = vmatprep.subr.mxu0 0.0
    %5774 = vmatpush1.msra.mxu0 0.0
    %5775 = vmatprep.subr.mxu0 0.0
    %5776 = vmatpush1.msra.mxu0 0.0
    %5777 = vmatprep.subr.mxu0 0.0
    %5778 = vmatpush1.msra.mxu0 0.0
    %5779 = vmatprep.subr.mxu0 0.0
    %5780 = vmatpush1.msra.mxu0 0.0
    %5781 = vmatprep.subr.mxu0 0.0
    %5782 = vmatpush1.msra.mxu0 0.0
    %5783 = vmatprep.subr.mxu0 0.0
    %5784 = vmatpush1.msra.mxu0 0.0
    %5785 = vmatprep.mubr.f32.mxu0 0.0
    %5786 = vmatmul.mubr.f32.gmra.mrb[0].mxu0 %v744
    %v5787 = vpop.f32.mrb[0].mxu0
    %v5788 = vadd.f32 %v5570, %v5787
    %v5789 = vpop.f32.mrb[0].mxu0
    %v5790 = vadd.f32 %v5572, %v5789
    %5791 = vmatprep.mubr.f32.mxu0 0.0
    %5792 = vmatmul.mubr.f32.gmra.mrb[0].mxu0 %v912
    %v5793 = vpop.f32.mrb[0].mxu0
    %v5794 = vadd.f32 %v5576, %v5793
    %v5795 = vpop.f32.mrb[0].mxu0
    %v5796 = vadd.f32 %v5578, %v5795
    %5797 = vmatprep.mubr.f32.mxu0 0.0
    %5798 = vmatmul.mubr.f32.gmra.mrb[0].mxu0 %v1080
    %v5799 = vpop.f32.mrb[0].mxu0
    %v5800 = vadd.f32 %v5582, %v5799
    %v5801 = vpop.f32.mrb[0].mxu0
    %v5802 = vadd.f32 %v5584, %v5801
    %5803 = vmatprep.mubr.f32.mxu0 0.0
    %5804 = vmatmul.mubr.f32.gmra.mrb[0].mxu0 %v1248
    %v5805 = vpop.f32.mrb[0].mxu0
    %v5806 = vadd.f32 %v5588, %v5805
    %v5807 = vpop.f32.mrb[0].mxu0
    %v5808 = vadd.f32 %v5590, %v5807
    %5809 = vmatprep.mubr.f32.mxu0 0.0
    %5810 = vmatmul.mubr.f32.gmra.mrb[0].mxu0 %v1416
    %v5811 = vpop.f32.mrb[0].mxu0
    %v5812 = vadd.f32 %v5594, %v5811
    %v5813 = vpop.f32.mrb[0].mxu0
    %v5814 = vadd.f32 %v5596, %v5813
    %5815 = vmatprep.mubr.f32.mxu0 0.0
    %5816 = vmatmul.mubr.f32.gmra.mrb[0].mxu0 %v1584
    %v5817 = vpop.f32.mrb[0].mxu0
    %v5818 = vadd.f32 %v5600, %v5817
    %v5819 = vpop.f32.mrb[0].mxu0
    %v5820 = vadd.f32 %v5602, %v5819
    %5821 = vmatprep.mubr.f32.mxu0 0.0
    %5822 = vmatmul.mubr.f32.gmra.mrb[0].mxu0 %v1752
    %v5823 = vpop.f32.mrb[0].mxu0
    %v5824 = vadd.f32 %v5606, %v5823
    %v5825 = vpop.f32.mrb[0].mxu0
    %v5826 = vadd.f32 %v5608, %v5825
    %5827 = vmatprep.mubr.f32.mxu0 0.0
    %5828 = vmatmul.mubr.f32.gmra.mrb[0].mxu0 %v3819
    %v5829 = vpop.f32.mrb[0].mxu0
    %v5830 = vadd.f32 %v5612, %v5829
    %v5831 = vpop.f32.mrb[0].mxu0
    %v5832 = vadd.f32 %v5614, %v5831
    %5833 = vdwg.mxu0
    %5834 = vmatprep.subr.mxu0 0.0
    %5835 = vmatpush1.msra.mxu0 %v5480
    %5836 = vmatprep.subr.mxu0 0.0
    %5837 = vmatpush1.msra.mxu0 %v5483
    %5838 = vmatprep.subr.mxu0 0.0
    %5839 = vmatpush1.msra.mxu0 %v5486
    %5840 = vmatprep.subr.mxu0 0.0
    %5841 = vmatpush1.msra.mxu0 %v5489
    %5842 = vmatprep.subr.mxu0 0.0
    %5843 = vmatpush1.msra.mxu0 0.0
    %5844 = vmatprep.subr.mxu0 0.0
    %5845 = vmatpush1.msra.mxu0 0.0
    %5846 = vmatprep.subr.mxu0 0.0
    %5847 = vmatpush1.msra.mxu0 0.0
    %5848 = vmatprep.subr.mxu0 0.0
    %5849 = vmatpush1.msra.mxu0 0.0
    %5850 = vmatprep.subr.mxu0 0.0
    %5851 = vmatpush1.msra.mxu0 0.0
    %5852 = vmatprep.subr.mxu0 0.0
    %5853 = vmatpush1.msra.mxu0 0.0
    %5854 = vmatprep.subr.mxu0 0.0
    %5855 = vmatpush1.msra.mxu0 0.0
    %5856 = vmatprep.subr.mxu0 0.0
    %5857 = vmatpush1.msra.mxu0 0.0
    %5858 = vmatprep.subr.mxu0 0.0
    %5859 = vmatpush1.msra.mxu0 0.0
    %5860 = vmatprep.subr.mxu0 0.0
    %5861 = vmatpush1.msra.mxu0 0.0
    %5862 = vmatprep.subr.mxu0 0.0
    %5863 = vmatpush1.msra.mxu0 0.0
    %5864 = vmatprep.subr.mxu0 0.0
    %5865 = vmatpush1.msra.mxu0 0.0
    %5866 = vmatprep.subr.mxu0 0.0
    %5867 = vmatpush1.msra.mxu0 0.0
    %5868 = vmatprep.subr.mxu0 0.0
    %5869 = vmatpush1.msra.mxu0 0.0
    %5870 = vmatprep.subr.mxu0 0.0
    %5871 = vmatpush1.msra.mxu0 0.0
    %5872 = vmatprep.subr.mxu0 0.0
    %5873 = vmatpush1.msra.mxu0 0.0
    %5874 = vmatprep.subr.mxu0 0.0
    %5875 = vmatpush1.msra.mxu0 0.0
    %5876 = vmatprep.subr.mxu0 0.0
    %5877 = vmatpush1.msra.mxu0 0.0
    %5878 = vmatprep.subr.mxu0 0.0
    %5879 = vmatpush1.msra.mxu0 0.0
    %5880 = vmatprep.subr.mxu0 0.0
    %5881 = vmatpush1.msra.mxu0 0.0
    %5882 = vmatprep.subr.mxu0 0.0
    %5883 = vmatpush1.msra.mxu0 0.0
    %5884 = vmatprep.subr.mxu0 0.0
    %5885 = vmatpush1.msra.mxu0 0.0
    %5886 = vmatprep.subr.mxu0 0.0
    %5887 = vmatpush1.msra.mxu0 0.0
    %5888 = vmatprep.subr.mxu0 0.0
    %5889 = vmatpush1.msra.mxu0 0.0
    %5890 = vmatprep.subr.mxu0 0.0
    %5891 = vmatpush1.msra.mxu0 0.0
    %5892 = vmatprep.subr.mxu0 0.0
    %5893 = vmatpush1.msra.mxu0 0.0
    %5894 = vmatprep.subr.mxu0 0.0
    %5895 = vmatpush1.msra.mxu0 0.0
    %5896 = vmatprep.subr.mxu0 0.0
    %5897 = vmatpush1.msra.mxu0 0.0
    %5898 = vmatprep.mubr.f32.mxu0 0.0
    %5899 = vmatmul.mubr.f32.gmra.mrb[0].mxu0 %v744
    %v5900 = vpop.f32.mrb[0].mxu0
    %v5901 = vadd.f32 %v5683, %v5900
    %v5902 = vpop.f32.mrb[0].mxu0
    %5903 = vmatprep.mubr.f32.mxu0 0.0
    %5904 = vmatmul.mubr.f32.gmra.mrb[0].mxu0 %v912
    %v5905 = vpop.f32.mrb[0].mxu0
    %v5906 = vadd.f32 %v5688, %v5905
    %v5907 = vpop.f32.mrb[0].mxu0
    %5908 = vmatprep.mubr.f32.mxu0 0.0
    %5909 = vmatmul.mubr.f32.gmra.mrb[0].mxu0 %v1080
    %v5910 = vpop.f32.mrb[0].mxu0
    %v5911 = vadd.f32 %v5693, %v5910
    %v5912 = vpop.f32.mrb[0].mxu0
    %5913 = vmatprep.mubr.f32.mxu0 0.0
    %5914 = vmatmul.mubr.f32.gmra.mrb[0].mxu0 %v1248
    %v5915 = vpop.f32.mrb[0].mxu0
    %v5916 = vadd.f32 %v5698, %v5915
    %v5917 = vpop.f32.mrb[0].mxu0
    %5918 = vmatprep.mubr.f32.mxu0 0.0
    %5919 = vmatmul.mubr.f32.gmra.mrb[0].mxu0 %v1416
    %v5920 = vpop.f32.mrb[0].mxu0
    %v5921 = vadd.f32 %v5703, %v5920
    %v5922 = vpop.f32.mrb[0].mxu0
    %5923 = vmatprep.mubr.f32.mxu0 0.0
    %5924 = vmatmul.mubr.f32.gmra.mrb[0].mxu0 %v1584
    %v5925 = vpop.f32.mrb[0].mxu0
    %v5926 = vadd.f32 %v5708, %v5925
    %v5927 = vpop.f32.mrb[0].mxu0
    %5928 = vmatprep.mubr.f32.mxu0 0.0
    %5929 = vmatmul.mubr.f32.gmra.mrb[0].mxu0 %v1752
    %v5930 = vpop.f32.mrb[0].mxu0
    %v5931 = vadd.f32 %v5713, %v5930
    %v5932 = vpop.f32.mrb[0].mxu0
    %5933 = vmatprep.mubr.f32.mxu0 0.0
    %5934 = vmatmul.mubr.f32.gmra.mrb[0].mxu0 %v3819
    %v5935 = vpop.f32.mrb[0].mxu0
    %v5936 = vadd.f32 %v5718, %v5935
    %v5937 = vpop.f32.mrb[0].mxu0
    %5938 = vdwg.mxu0
    %v5940 = vlaneseq
    %v5941 = vshrl.u32 %v5940, 7
    %v5942 = vsub.s32 0, %v5941
    %v5943 = vrot.slane %v5474, %v5942
    %v5944 = vlaneseq
    %v5945 = vshrl.u32 %v5944, 7
    %v5946 = vsub.s32 1, %v5945
    %v5947 = vrot.slane %v5474, %v5946
    %v5948 = vlaneseq
    %v5949 = vshrl.u32 %v5948, 7
    %v5950 = vsub.s32 2, %v5949
    %v5951 = vrot.slane %v5474, %v5950
    %v5955 = vadd.f32 %v5788, %v5943
    %v5956 = vadd.f32 %v5790, %v5947
    %v5957 = vadd.f32 %v5901, %v5951
    %v5958 = vadd.f32 %v5794, %v5943
    %v5959 = vadd.f32 %v5796, %v5947
    %v5960 = vadd.f32 %v5906, %v5951
    %v5961 = vadd.f32 %v5800, %v5943
    %v5962 = vadd.f32 %v5802, %v5947
    %v5963 = vadd.f32 %v5911, %v5951
    %v5964 = vadd.f32 %v5806, %v5943
    %v5965 = vadd.f32 %v5808, %v5947
    %v5966 = vadd.f32 %v5916, %v5951
    %v5967 = vadd.f32 %v5812, %v5943
    %v5968 = vadd.f32 %v5814, %v5947
    %v5969 = vadd.f32 %v5921, %v5951
    %v5970 = vadd.f32 %v5818, %v5943
    %v5971 = vadd.f32 %v5820, %v5947
    %v5972 = vadd.f32 %v5926, %v5951
    %v5973 = vadd.f32 %v5824, %v5943
    %v5974 = vadd.f32 %v5826, %v5947
    %v5975 = vadd.f32 %v5931, %v5951
    %v5976 = vadd.f32 %v5830, %v5943
    %v5977 = vadd.f32 %v5832, %v5947
    %v5978 = vadd.f32 %v5936, %v5951
    %5979 = vst [vmem:[#allocation2] sm:$0xff] %v5955
    %5980 = vst [vmem:[#allocation2 + $0x8] sm:$0xff] %v5956
    %5981 = vst [vmem:[#allocation2 + $0x10] sm:$0xff] %v5957
    %5982 = vst [vmem:[#allocation2 + $0x18] sm:$0xff] %v5958
    %5983 = vst [vmem:[#allocation2 + $0x20] sm:$0xff] %v5959
    %5984 = vst [vmem:[#allocation2 + $0x28] sm:$0xff] %v5960
    %5985 = vst [vmem:[#allocation2 + $0x30] sm:$0xff] %v5961
    %5986 = vst [vmem:[#allocation2 + $0x38] sm:$0xff] %v5962
    %5987 = vst [vmem:[#allocation2 + $0x40] sm:$0xff] %v5963
    %5988 = vst [vmem:[#allocation2 + $0x48] sm:$0xff] %v5964
    %5989 = vst [vmem:[#allocation2 + $0x50] sm:$0xff] %v5965
    %5990 = vst [vmem:[#allocation2 + $0x58] sm:$0xff] %v5966
    %5991 = vst [vmem:[#allocation2 + $0x60] sm:$0xff] %v5967
    %5992 = vst [vmem:[#allocation2 + $0x68] sm:$0xff] %v5968
    %5993 = vst [vmem:[#allocation2 + $0x70] sm:$0xff] %v5969
    %5994 = vst [vmem:[#allocation2 + $0x78] sm:$0xff] %v5970
    %5995 = vst [vmem:[#allocation2 + $0x80] sm:$0xff] %v5971
    %5996 = vst [vmem:[#allocation2 + $0x88] sm:$0xff] %v5972
    %5997 = vst [vmem:[#allocation2 + $0x90] sm:$0xff] %v5973
    %5998 = vst [vmem:[#allocation2 + $0x98] sm:$0xff] %v5974
    %5999 = vst [vmem:[#allocation2 + $0xa0] sm:$0xff] %v5975
    %6000 = vst [vmem:[#allocation2 + $0xa8] sm:$0xff] %v5976
    %6001 = vst [vmem:[#allocation2 + $0xb0] sm:$0xff] %v5977
    %6002 = vst [vmem:[#allocation2 + $0xb8] sm:$0xff] %v5978
    %v6003 = vld [vmem:[#allocation2 + $0xa8] sm:$0xff]
    %v6004 = vld [vmem:[#allocation2 + $0xb0] sm:$0xff]
    %v6005 = vld [vmem:[#allocation2 + $0xb8] sm:$0xff]
    %v6007 = vlaneseq
    %v6008 = vshrl.u32 %v6007, 7
    %v6009 = vsub.s32 0, %v6008
    %v6010 = vrot.slane %v5476, %v6009
    %v6011 = vlaneseq
    %v6012 = vshrl.u32 %v6011, 7
    %v6013 = vsub.s32 1, %v6012
    %v6014 = vrot.slane %v5476, %v6013
    %v6015 = vlaneseq
    %v6016 = vshrl.u32 %v6015, 7
    %v6017 = vsub.s32 2, %v6016
    %v6018 = vrot.slane %v5476, %v6017
    %6022 = vmatprep.subr.mxu0 %v5462
    %6023 = vmatpush1.msra.mxu0 %v5461
    %6024 = vmatprep.subr.mxu0 %v5465
    %6025 = vmatpush1.msra.mxu0 %v5464
    %6026 = vmatprep.subr.mxu0 %v5468
    %6027 = vmatpush1.msra.mxu0 %v5467
    %6028 = vmatprep.subr.mxu0 %v5471
    %6029 = vmatpush1.msra.mxu0 %v5470
    %6030 = vmatprep.subr.mxu0 0.0
    %6031 = vmatpush1.msra.mxu0 0.0
    %6032 = vmatprep.subr.mxu0 0.0
    %6033 = vmatpush1.msra.mxu0 0.0
    %6034 = vmatprep.subr.mxu0 0.0
    %6035 = vmatpush1.msra.mxu0 0.0
    %6036 = vmatprep.subr.mxu0 0.0
    %6037 = vmatpush1.msra.mxu0 0.0
    %6038 = vmatprep.subr.mxu0 0.0
    %6039 = vmatpush1.msra.mxu0 0.0
    %6040 = vmatprep.subr.mxu0 0.0
    %6041 = vmatpush1.msra.mxu0 0.0
    %6042 = vmatprep.subr.mxu0 0.0
    %6043 = vmatpush1.msra.mxu0 0.0
    %6044 = vmatprep.subr.mxu0 0.0
    %6045 = vmatpush1.msra.mxu0 0.0
    %6046 = vmatprep.subr.mxu0 0.0
    %6047 = vmatpush1.msra.mxu0 0.0
    %6048 = vmatprep.subr.mxu0 0.0
    %6049 = vmatpush1.msra.mxu0 0.0
    %6050 = vmatprep.subr.mxu0 0.0
    %6051 = vmatpush1.msra.mxu0 0.0
    %6052 = vmatprep.subr.mxu0 0.0
    %6053 = vmatpush1.msra.mxu0 0.0
    %6054 = vmatprep.subr.mxu0 0.0
    %6055 = vmatpush1.msra.mxu0 0.0
    %6056 = vmatprep.subr.mxu0 0.0
    %6057 = vmatpush1.msra.mxu0 0.0
    %6058 = vmatprep.subr.mxu0 0.0
    %6059 = vmatpush1.msra.mxu0 0.0
    %6060 = vmatprep.subr.mxu0 0.0
    %6061 = vmatpush1.msra.mxu0 0.0
    %6062 = vmatprep.subr.mxu0 0.0
    %6063 = vmatpush1.msra.mxu0 0.0
    %6064 = vmatprep.subr.mxu0 0.0
    %6065 = vmatpush1.msra.mxu0 0.0
    %6066 = vmatprep.subr.mxu0 0.0
    %6067 = vmatpush1.msra.mxu0 0.0
    %6068 = vmatprep.subr.mxu0 0.0
    %6069 = vmatpush1.msra.mxu0 0.0
    %6070 = vmatprep.subr.mxu0 0.0
    %6071 = vmatpush1.msra.mxu0 0.0
    %6072 = vmatprep.subr.mxu0 0.0
    %6073 = vmatpush1.msra.mxu0 0.0
    %6074 = vmatprep.subr.mxu0 0.0
    %6075 = vmatpush1.msra.mxu0 0.0
    %6076 = vmatprep.subr.mxu0 0.0
    %6077 = vmatpush1.msra.mxu0 0.0
    %6078 = vmatprep.subr.mxu0 0.0
    %6079 = vmatpush1.msra.mxu0 0.0
    %6080 = vmatprep.subr.mxu0 0.0
    %6081 = vmatpush1.msra.mxu0 0.0
    %6082 = vmatprep.subr.mxu0 0.0
    %6083 = vmatpush1.msra.mxu0 0.0
    %6084 = vmatprep.subr.mxu0 0.0
    %6085 = vmatpush1.msra.mxu0 0.0
    %6086 = vmatprep.mubr.f32.mxu0 0.0
    %6087 = vmatmul.mubr.f32.gmra.mrb[0].mxu0 %v576
    %v6088 = vpop.f32.mrb[0].mxu0
    %v6089 = vadd.f32 %v6010, %v6088
    %v6090 = vpop.f32.mrb[0].mxu0
    %v6091 = vadd.f32 %v6014, %v6090
    %6092 = vdwg.mxu0
    %6093 = vmatprep.subr.mxu0 0.0
    %6094 = vmatpush1.msra.mxu0 %v5463
    %6095 = vmatprep.subr.mxu0 0.0
    %6096 = vmatpush1.msra.mxu0 %v5466
    %6097 = vmatprep.subr.mxu0 0.0
    %6098 = vmatpush1.msra.mxu0 %v5469
    %6099 = vmatprep.subr.mxu0 0.0
    %6100 = vmatpush1.msra.mxu0 %v5472
    %6101 = vmatprep.subr.mxu0 0.0
    %6102 = vmatpush1.msra.mxu0 0.0
    %6103 = vmatprep.subr.mxu0 0.0
    %6104 = vmatpush1.msra.mxu0 0.0
    %6105 = vmatprep.subr.mxu0 0.0
    %6106 = vmatpush1.msra.mxu0 0.0
    %6107 = vmatprep.subr.mxu0 0.0
    %6108 = vmatpush1.msra.mxu0 0.0
    %6109 = vmatprep.subr.mxu0 0.0
    %6110 = vmatpush1.msra.mxu0 0.0
    %6111 = vmatprep.subr.mxu0 0.0
    %6112 = vmatpush1.msra.mxu0 0.0
    %6113 = vmatprep.subr.mxu0 0.0
    %6114 = vmatpush1.msra.mxu0 0.0
    %6115 = vmatprep.subr.mxu0 0.0
    %6116 = vmatpush1.msra.mxu0 0.0
    %6117 = vmatprep.subr.mxu0 0.0
    %6118 = vmatpush1.msra.mxu0 0.0
    %6119 = vmatprep.subr.mxu0 0.0
    %6120 = vmatpush1.msra.mxu0 0.0
    %6121 = vmatprep.subr.mxu0 0.0
    %6122 = vmatpush1.msra.mxu0 0.0
    %6123 = vmatprep.subr.mxu0 0.0
    %6124 = vmatpush1.msra.mxu0 0.0
    %6125 = vmatprep.subr.mxu0 0.0
    %6126 = vmatpush1.msra.mxu0 0.0
    %6127 = vmatprep.subr.mxu0 0.0
    %6128 = vmatpush1.msra.mxu0 0.0
    %6129 = vmatprep.subr.mxu0 0.0
    %6130 = vmatpush1.msra.mxu0 0.0
    %6131 = vmatprep.subr.mxu0 0.0
    %6132 = vmatpush1.msra.mxu0 0.0
    %6133 = vmatprep.subr.mxu0 0.0
    %6134 = vmatpush1.msra.mxu0 0.0
    %6135 = vmatprep.subr.mxu0 0.0
    %6136 = vmatpush1.msra.mxu0 0.0
    %6137 = vmatprep.subr.mxu0 0.0
    %6138 = vmatpush1.msra.mxu0 0.0
    %6139 = vmatprep.subr.mxu0 0.0
    %6140 = vmatpush1.msra.mxu0 0.0
    %6141 = vmatprep.subr.mxu0 0.0
    %6142 = vmatpush1.msra.mxu0 0.0
    %6143 = vmatprep.subr.mxu0 0.0
    %6144 = vmatpush1.msra.mxu0 0.0
    %6145 = vmatprep.subr.mxu0 0.0
    %6146 = vmatpush1.msra.mxu0 0.0
    %6147 = vmatprep.subr.mxu0 0.0
    %6148 = vmatpush1.msra.mxu0 0.0
    %6149 = vmatprep.subr.mxu0 0.0
    %6150 = vmatpush1.msra.mxu0 0.0
    %6151 = vmatprep.subr.mxu0 0.0
    %6152 = vmatpush1.msra.mxu0 0.0
    %6153 = vmatprep.subr.mxu0 0.0
    %6154 = vmatpush1.msra.mxu0 0.0
    %6155 = vmatprep.subr.mxu0 0.0
    %6156 = vmatpush1.msra.mxu0 0.0
    %6157 = vmatprep.mubr.f32.mxu0 0.0
    %6158 = vmatmul.mubr.f32.gmra.mrb[0].mxu0 %v576
    %v6159 = vpop.f32.mrb[0].mxu0
    %v6160 = vadd.f32 %v6018, %v6159
    %v6161 = vpop.f32.mrb[0].mxu0
    %6162 = vdwg.mxu0
    %v6163 = vadd.f32 %v6003, %v6089
    %v6164 = vxor.u32 %v6163, 2147483648
    %v6165 = vmul.f32 %v6164, 1.442695
    %v6166 = vpow.pop %v6165
    %v6167 = vadd.f32 %v6166, 1.0
    %v6168 = vrcp.pop %v6167
    %v6169 = vmul.f32 1.0, %v6168
    %v6170 = vadd.f32 %v6004, %v6091
    %v6171 = vxor.u32 %v6170, 2147483648
    %v6172 = vmul.f32 %v6171, 1.442695
    %v6173 = vpow.pop %v6172
    %v6174 = vadd.f32 %v6173, 1.0
    %v6175 = vrcp.pop %v6174
    %v6176 = vmul.f32 1.0, %v6175
    %v6177 = vmul.f32 %v6169, %v6160
    %v6178 = vadd.f32 %v6005, %v6177
    %v6179 = vtanh.pop %v6178
    %v6180 = vsub.f32 1.0, %v6176
    %v6181 = vmul.f32 %v6180, %v6179
    %v6182 = vmul.f32 %v6176, 0.0
    %v6183 = vadd.f32 %v6181, %v6182
    %v6184 = vld [vmem:[#allocation2 + $0x90] sm:$0xff]
    %v6185 = vld [vmem:[#allocation2 + $0x98] sm:$0xff]
    %v6186 = vld [vmem:[#allocation2 + $0xa0] sm:$0xff]
    %v6188 = vsel %vm574, %v6183, 0
    %6190 = vmatprep.subr.mxu0 %v5462
    %6191 = vmatpush1.msra.mxu0 %v5461
    %6192 = vmatprep.subr.mxu0 %v5465
    %6193 = vmatpush1.msra.mxu0 %v5464
    %6194 = vmatprep.subr.mxu0 %v5468
    %6195 = vmatpush1.msra.mxu0 %v5467
    %6196 = vmatprep.subr.mxu0 %v5471
    %6197 = vmatpush1.msra.mxu0 %v5470
    %6198 = vmatprep.subr.mxu0 0.0
    %6199 = vmatpush1.msra.mxu0 0.0
    %6200 = vmatprep.subr.mxu0 0.0
    %6201 = vmatpush1.msra.mxu0 0.0
    %6202 = vmatprep.subr.mxu0 0.0
    %6203 = vmatpush1.msra.mxu0 0.0
    %6204 = vmatprep.subr.mxu0 0.0
    %6205 = vmatpush1.msra.mxu0 0.0
    %6206 = vmatprep.subr.mxu0 0.0
    %6207 = vmatpush1.msra.mxu0 0.0
    %6208 = vmatprep.subr.mxu0 0.0
    %6209 = vmatpush1.msra.mxu0 0.0
    %6210 = vmatprep.subr.mxu0 0.0
    %6211 = vmatpush1.msra.mxu0 0.0
    %6212 = vmatprep.subr.mxu0 0.0
    %6213 = vmatpush1.msra.mxu0 0.0
    %6214 = vmatprep.subr.mxu0 0.0
    %6215 = vmatpush1.msra.mxu0 0.0
    %6216 = vmatprep.subr.mxu0 0.0
    %6217 = vmatpush1.msra.mxu0 0.0
    %6218 = vmatprep.subr.mxu0 0.0
    %6219 = vmatpush1.msra.mxu0 0.0
    %6220 = vmatprep.subr.mxu0 0.0
    %6221 = vmatpush1.msra.mxu0 0.0
    %6222 = vmatprep.subr.mxu0 0.0
    %6223 = vmatpush1.msra.mxu0 0.0
    %6224 = vmatprep.subr.mxu0 0.0
    %6225 = vmatpush1.msra.mxu0 0.0
    %6226 = vmatprep.subr.mxu0 0.0
    %6227 = vmatpush1.msra.mxu0 0.0
    %6228 = vmatprep.subr.mxu0 0.0
    %6229 = vmatpush1.msra.mxu0 0.0
    %6230 = vmatprep.subr.mxu0 0.0
    %6231 = vmatpush1.msra.mxu0 0.0
    %6232 = vmatprep.subr.mxu0 0.0
    %6233 = vmatpush1.msra.mxu0 0.0
    %6234 = vmatprep.subr.mxu0 0.0
    %6235 = vmatpush1.msra.mxu0 0.0
    %6236 = vmatprep.subr.mxu0 0.0
    %6237 = vmatpush1.msra.mxu0 0.0
    %6238 = vmatprep.subr.mxu0 0.0
    %6239 = vmatpush1.msra.mxu0 0.0
    %6240 = vmatprep.subr.mxu0 0.0
    %6241 = vmatpush1.msra.mxu0 0.0
    %6242 = vmatprep.subr.mxu0 0.0
    %6243 = vmatpush1.msra.mxu0 0.0
    %6244 = vmatprep.subr.mxu0 0.0
    %6245 = vmatpush1.msra.mxu0 0.0
    %6246 = vmatprep.subr.mxu0 0.0
    %6247 = vmatpush1.msra.mxu0 0.0
    %6248 = vmatprep.subr.mxu0 0.0
    %6249 = vmatpush1.msra.mxu0 0.0
    %6250 = vmatprep.subr.mxu0 0.0
    %6251 = vmatpush1.msra.mxu0 0.0
    %6252 = vmatprep.subr.mxu0 0.0
    %6253 = vmatpush1.msra.mxu0 0.0
    %6254 = vmatprep.mubr.f32.mxu0 0.0
    %6255 = vmatmul.mubr.f32.gmra.mrb[0].mxu0 %v6188
    %v6256 = vpop.f32.mrb[0].mxu0
    %v6257 = vadd.f32 %v6010, %v6256
    %v6258 = vpop.f32.mrb[0].mxu0
    %v6259 = vadd.f32 %v6014, %v6258
    %6260 = vdwg.mxu0
    %6261 = vmatprep.subr.mxu0 0.0
    %6262 = vmatpush1.msra.mxu0 %v5463
    %6263 = vmatprep.subr.mxu0 0.0
    %6264 = vmatpush1.msra.mxu0 %v5466
    %6265 = vmatprep.subr.mxu0 0.0
    %6266 = vmatpush1.msra.mxu0 %v5469
    %6267 = vmatprep.subr.mxu0 0.0
    %6268 = vmatpush1.msra.mxu0 %v5472
    %6269 = vmatprep.subr.mxu0 0.0
    %6270 = vmatpush1.msra.mxu0 0.0
    %6271 = vmatprep.subr.mxu0 0.0
    %6272 = vmatpush1.msra.mxu0 0.0
    %6273 = vmatprep.subr.mxu0 0.0
    %6274 = vmatpush1.msra.mxu0 0.0
    %6275 = vmatprep.subr.mxu0 0.0
    %6276 = vmatpush1.msra.mxu0 0.0
    %6277 = vmatprep.subr.mxu0 0.0
    %6278 = vmatpush1.msra.mxu0 0.0
    %6279 = vmatprep.subr.mxu0 0.0
    %6280 = vmatpush1.msra.mxu0 0.0
    %6281 = vmatprep.subr.mxu0 0.0
    %6282 = vmatpush1.msra.mxu0 0.0
    %6283 = vmatprep.subr.mxu0 0.0
    %6284 = vmatpush1.msra.mxu0 0.0
    %6285 = vmatprep.subr.mxu0 0.0
    %6286 = vmatpush1.msra.mxu0 0.0
    %6287 = vmatprep.subr.mxu0 0.0
    %6288 = vmatpush1.msra.mxu0 0.0
    %6289 = vmatprep.subr.mxu0 0.0
    %6290 = vmatpush1.msra.mxu0 0.0
    %6291 = vmatprep.subr.mxu0 0.0
    %6292 = vmatpush1.msra.mxu0 0.0
    %6293 = vmatprep.subr.mxu0 0.0
    %6294 = vmatpush1.msra.mxu0 0.0
    %6295 = vmatprep.subr.mxu0 0.0
    %6296 = vmatpush1.msra.mxu0 0.0
    %6297 = vmatprep.subr.mxu0 0.0
    %6298 = vmatpush1.msra.mxu0 0.0
    %6299 = vmatprep.subr.mxu0 0.0
    %6300 = vmatpush1.msra.mxu0 0.0
    %6301 = vmatprep.subr.mxu0 0.0
    %6302 = vmatpush1.msra.mxu0 0.0
    %6303 = vmatprep.subr.mxu0 0.0
    %6304 = vmatpush1.msra.mxu0 0.0
    %6305 = vmatprep.subr.mxu0 0.0
    %6306 = vmatpush1.msra.mxu0 0.0
    %6307 = vmatprep.subr.mxu0 0.0
    %6308 = vmatpush1.msra.mxu0 0.0
    %6309 = vmatprep.subr.mxu0 0.0
    %6310 = vmatpush1.msra.mxu0 0.0
    %6311 = vmatprep.subr.mxu0 0.0
    %6312 = vmatpush1.msra.mxu0 0.0
    %6313 = vmatprep.subr.mxu0 0.0
    %6314 = vmatpush1.msra.mxu0 0.0
    %6315 = vmatprep.subr.mxu0 0.0
    %6316 = vmatpush1.msra.mxu0 0.0
    %6317 = vmatprep.subr.mxu0 0.0
    %6318 = vmatpush1.msra.mxu0 0.0
    %6319 = vmatprep.subr.mxu0 0.0
    %6320 = vmatpush1.msra.mxu0 0.0
    %6321 = vmatprep.subr.mxu0 0.0
    %6322 = vmatpush1.msra.mxu0 0.0
    %6323 = vmatprep.subr.mxu0 0.0
    %6324 = vmatpush1.msra.mxu0 0.0
    %6325 = vmatprep.mubr.f32.mxu0 0.0
    %6326 = vmatmul.mubr.f32.gmra.mrb[0].mxu0 %v6188
    %v6327 = vpop.f32.mrb[0].mxu0
    %v6328 = vadd.f32 %v6018, %v6327
    %v6329 = vpop.f32.mrb[0].mxu0
    %6330 = vdwg.mxu0
    %v6331 = vadd.f32 %v6184, %v6257
    %v6332 = vxor.u32 %v6331, 2147483648
    %v6333 = vmul.f32 %v6332, 1.442695
    %v6334 = vpow.pop %v6333
    %v6335 = vadd.f32 %v6334, 1.0
    %v6336 = vrcp.pop %v6335
    %v6337 = vmul.f32 1.0, %v6336
    %v6338 = vadd.f32 %v6185, %v6259
    %v6339 = vxor.u32 %v6338, 2147483648
    %v6340 = vmul.f32 %v6339, 1.442695
    %v6341 = vpow.pop %v6340
    %v6342 = vadd.f32 %v6341, 1.0
    %v6343 = vrcp.pop %v6342
    %v6344 = vmul.f32 1.0, %v6343
    %v6345 = vmul.f32 %v6337, %v6328
    %v6346 = vadd.f32 %v6186, %v6345
    %v6347 = vtanh.pop %v6346
    %v6348 = vsub.f32 1.0, %v6344
    %v6349 = vmul.f32 %v6348, %v6347
    %v6350 = vmul.f32 %v6344, %v6183
    %v6351 = vadd.f32 %v6349, %v6350
    %v6352 = vld [vmem:[#allocation2 + $0x78] sm:$0xff]
    %v6353 = vld [vmem:[#allocation2 + $0x80] sm:$0xff]
    %v6354 = vld [vmem:[#allocation2 + $0x88] sm:$0xff]
    %v6356 = vsel %vm574, %v6351, 0
    %6358 = vmatprep.subr.mxu0 %v5462
    %6359 = vmatpush1.msra.mxu0 %v5461
    %6360 = vmatprep.subr.mxu0 %v5465
    %6361 = vmatpush1.msra.mxu0 %v5464
    %6362 = vmatprep.subr.mxu0 %v5468
    %6363 = vmatpush1.msra.mxu0 %v5467
    %6364 = vmatprep.subr.mxu0 %v5471
    %6365 = vmatpush1.msra.mxu0 %v5470
    %6366 = vmatprep.subr.mxu0 0.0
    %6367 = vmatpush1.msra.mxu0 0.0
    %6368 = vmatprep.subr.mxu0 0.0
    %6369 = vmatpush1.msra.mxu0 0.0
    %6370 = vmatprep.subr.mxu0 0.0
    %6371 = vmatpush1.msra.mxu0 0.0
    %6372 = vmatprep.subr.mxu0 0.0
    %6373 = vmatpush1.msra.mxu0 0.0
    %6374 = vmatprep.subr.mxu0 0.0
    %6375 = vmatpush1.msra.mxu0 0.0
    %6376 = vmatprep.subr.mxu0 0.0
    %6377 = vmatpush1.msra.mxu0 0.0
    %6378 = vmatprep.subr.mxu0 0.0
    %6379 = vmatpush1.msra.mxu0 0.0
    %6380 = vmatprep.subr.mxu0 0.0
    %6381 = vmatpush1.msra.mxu0 0.0
    %6382 = vmatprep.subr.mxu0 0.0
    %6383 = vmatpush1.msra.mxu0 0.0
    %6384 = vmatprep.subr.mxu0 0.0
    %6385 = vmatpush1.msra.mxu0 0.0
    %6386 = vmatprep.subr.mxu0 0.0
    %6387 = vmatpush1.msra.mxu0 0.0
    %6388 = vmatprep.subr.mxu0 0.0
    %6389 = vmatpush1.msra.mxu0 0.0
    %6390 = vmatprep.subr.mxu0 0.0
    %6391 = vmatpush1.msra.mxu0 0.0
    %6392 = vmatprep.subr.mxu0 0.0
    %6393 = vmatpush1.msra.mxu0 0.0
    %6394 = vmatprep.subr.mxu0 0.0
    %6395 = vmatpush1.msra.mxu0 0.0
    %6396 = vmatprep.subr.mxu0 0.0
    %6397 = vmatpush1.msra.mxu0 0.0
    %6398 = vmatprep.subr.mxu0 0.0
    %6399 = vmatpush1.msra.mxu0 0.0
    %6400 = vmatprep.subr.mxu0 0.0
    %6401 = vmatpush1.msra.mxu0 0.0
    %6402 = vmatprep.subr.mxu0 0.0
    %6403 = vmatpush1.msra.mxu0 0.0
    %6404 = vmatprep.subr.mxu0 0.0
    %6405 = vmatpush1.msra.mxu0 0.0
    %6406 = vmatprep.subr.mxu0 0.0
    %6407 = vmatpush1.msra.mxu0 0.0
    %6408 = vmatprep.subr.mxu0 0.0
    %6409 = vmatpush1.msra.mxu0 0.0
    %6410 = vmatprep.subr.mxu0 0.0
    %6411 = vmatpush1.msra.mxu0 0.0
    %6412 = vmatprep.subr.mxu0 0.0
    %6413 = vmatpush1.msra.mxu0 0.0
    %6414 = vmatprep.subr.mxu0 0.0
    %6415 = vmatpush1.msra.mxu0 0.0
    %6416 = vmatprep.subr.mxu0 0.0
    %6417 = vmatpush1.msra.mxu0 0.0
    %6418 = vmatprep.subr.mxu0 0.0
    %6419 = vmatpush1.msra.mxu0 0.0
    %6420 = vmatprep.subr.mxu0 0.0
    %6421 = vmatpush1.msra.mxu0 0.0
    %6422 = vmatprep.mubr.f32.mxu0 0.0
    %6423 = vmatmul.mubr.f32.gmra.mrb[0].mxu0 %v6356
    %v6424 = vpop.f32.mrb[0].mxu0
    %v6425 = vadd.f32 %v6010, %v6424
    %v6426 = vpop.f32.mrb[0].mxu0
    %v6427 = vadd.f32 %v6014, %v6426
    %6428 = vdwg.mxu0
    %6429 = vmatprep.subr.mxu0 0.0
    %6430 = vmatpush1.msra.mxu0 %v5463
    %6431 = vmatprep.subr.mxu0 0.0
    %6432 = vmatpush1.msra.mxu0 %v5466
    %6433 = vmatprep.subr.mxu0 0.0
    %6434 = vmatpush1.msra.mxu0 %v5469
    %6435 = vmatprep.subr.mxu0 0.0
    %6436 = vmatpush1.msra.mxu0 %v5472
    %6437 = vmatprep.subr.mxu0 0.0
    %6438 = vmatpush1.msra.mxu0 0.0
    %6439 = vmatprep.subr.mxu0 0.0
    %6440 = vmatpush1.msra.mxu0 0.0
    %6441 = vmatprep.subr.mxu0 0.0
    %6442 = vmatpush1.msra.mxu0 0.0
    %6443 = vmatprep.subr.mxu0 0.0
    %6444 = vmatpush1.msra.mxu0 0.0
    %6445 = vmatprep.subr.mxu0 0.0
    %6446 = vmatpush1.msra.mxu0 0.0
    %6447 = vmatprep.subr.mxu0 0.0
    %6448 = vmatpush1.msra.mxu0 0.0
    %6449 = vmatprep.subr.mxu0 0.0
    %6450 = vmatpush1.msra.mxu0 0.0
    %6451 = vmatprep.subr.mxu0 0.0
    %6452 = vmatpush1.msra.mxu0 0.0
    %6453 = vmatprep.subr.mxu0 0.0
    %6454 = vmatpush1.msra.mxu0 0.0
    %6455 = vmatprep.subr.mxu0 0.0
    %6456 = vmatpush1.msra.mxu0 0.0
    %6457 = vmatprep.subr.mxu0 0.0
    %6458 = vmatpush1.msra.mxu0 0.0
    %6459 = vmatprep.subr.mxu0 0.0
    %6460 = vmatpush1.msra.mxu0 0.0
    %6461 = vmatprep.subr.mxu0 0.0
    %6462 = vmatpush1.msra.mxu0 0.0
    %6463 = vmatprep.subr.mxu0 0.0
    %6464 = vmatpush1.msra.mxu0 0.0
    %6465 = vmatprep.subr.mxu0 0.0
    %6466 = vmatpush1.msra.mxu0 0.0
    %6467 = vmatprep.subr.mxu0 0.0
    %6468 = vmatpush1.msra.mxu0 0.0
    %6469 = vmatprep.subr.mxu0 0.0
    %6470 = vmatpush1.msra.mxu0 0.0
    %6471 = vmatprep.subr.mxu0 0.0
    %6472 = vmatpush1.msra.mxu0 0.0
    %6473 = vmatprep.subr.mxu0 0.0
    %6474 = vmatpush1.msra.mxu0 0.0
    %6475 = vmatprep.subr.mxu0 0.0
    %6476 = vmatpush1.msra.mxu0 0.0
    %6477 = vmatprep.subr.mxu0 0.0
    %6478 = vmatpush1.msra.mxu0 0.0
    %6479 = vmatprep.subr.mxu0 0.0
    %6480 = vmatpush1.msra.mxu0 0.0
    %6481 = vmatprep.subr.mxu0 0.0
    %6482 = vmatpush1.msra.mxu0 0.0
    %6483 = vmatprep.subr.mxu0 0.0
    %6484 = vmatpush1.msra.mxu0 0.0
    %6485 = vmatprep.subr.mxu0 0.0
    %6486 = vmatpush1.msra.mxu0 0.0
    %6487 = vmatprep.subr.mxu0 0.0
    %6488 = vmatpush1.msra.mxu0 0.0
    %6489 = vmatprep.subr.mxu0 0.0
    %6490 = vmatpush1.msra.mxu0 0.0
    %6491 = vmatprep.subr.mxu0 0.0
    %6492 = vmatpush1.msra.mxu0 0.0
    %6493 = vmatprep.mubr.f32.mxu0 0.0
    %6494 = vmatmul.mubr.f32.gmra.mrb[0].mxu0 %v6356
    %v6495 = vpop.f32.mrb[0].mxu0
    %v6496 = vadd.f32 %v6018, %v6495
    %v6497 = vpop.f32.mrb[0].mxu0
    %6498 = vdwg.mxu0
    %v6499 = vadd.f32 %v6352, %v6425
    %v6500 = vxor.u32 %v6499, 2147483648
    %v6501 = vmul.f32 %v6500, 1.442695
    %v6502 = vpow.pop %v6501
    %v6503 = vadd.f32 %v6502, 1.0
    %v6504 = vrcp.pop %v6503
    %v6505 = vmul.f32 1.0, %v6504
    %v6506 = vadd.f32 %v6353, %v6427
    %v6507 = vxor.u32 %v6506, 2147483648
    %v6508 = vmul.f32 %v6507, 1.442695
    %v6509 = vpow.pop %v6508
    %v6510 = vadd.f32 %v6509, 1.0
    %v6511 = vrcp.pop %v6510
    %v6512 = vmul.f32 1.0, %v6511
    %v6513 = vmul.f32 %v6505, %v6496
    %v6514 = vadd.f32 %v6354, %v6513
    %v6515 = vtanh.pop %v6514
    %v6516 = vsub.f32 1.0, %v6512
    %v6517 = vmul.f32 %v6516, %v6515
    %v6518 = vmul.f32 %v6512, %v6351
    %v6519 = vadd.f32 %v6517, %v6518
    %v6520 = vld [vmem:[#allocation2 + $0x60] sm:$0xff]
    %v6521 = vld [vmem:[#allocation2 + $0x68] sm:$0xff]
    %v6522 = vld [vmem:[#allocation2 + $0x70] sm:$0xff]
    %v6524 = vsel %vm574, %v6519, 0
    %6526 = vmatprep.subr.mxu0 %v5462
    %6527 = vmatpush1.msra.mxu0 %v5461
    %6528 = vmatprep.subr.mxu0 %v5465
    %6529 = vmatpush1.msra.mxu0 %v5464
    %6530 = vmatprep.subr.mxu0 %v5468
    %6531 = vmatpush1.msra.mxu0 %v5467
    %6532 = vmatprep.subr.mxu0 %v5471
    %6533 = vmatpush1.msra.mxu0 %v5470
    %6534 = vmatprep.subr.mxu0 0.0
    %6535 = vmatpush1.msra.mxu0 0.0
    %6536 = vmatprep.subr.mxu0 0.0
    %6537 = vmatpush1.msra.mxu0 0.0
    %6538 = vmatprep.subr.mxu0 0.0
    %6539 = vmatpush1.msra.mxu0 0.0
    %6540 = vmatprep.subr.mxu0 0.0
    %6541 = vmatpush1.msra.mxu0 0.0
    %6542 = vmatprep.subr.mxu0 0.0
    %6543 = vmatpush1.msra.mxu0 0.0
    %6544 = vmatprep.subr.mxu0 0.0
    %6545 = vmatpush1.msra.mxu0 0.0
    %6546 = vmatprep.subr.mxu0 0.0
    %6547 = vmatpush1.msra.mxu0 0.0
    %6548 = vmatprep.subr.mxu0 0.0
    %6549 = vmatpush1.msra.mxu0 0.0
    %6550 = vmatprep.subr.mxu0 0.0
    %6551 = vmatpush1.msra.mxu0 0.0
    %6552 = vmatprep.subr.mxu0 0.0
    %6553 = vmatpush1.msra.mxu0 0.0
    %6554 = vmatprep.subr.mxu0 0.0
    %6555 = vmatpush1.msra.mxu0 0.0
    %6556 = vmatprep.subr.mxu0 0.0
    %6557 = vmatpush1.msra.mxu0 0.0
    %6558 = vmatprep.subr.mxu0 0.0
    %6559 = vmatpush1.msra.mxu0 0.0
    %6560 = vmatprep.subr.mxu0 0.0
    %6561 = vmatpush1.msra.mxu0 0.0
    %6562 = vmatprep.subr.mxu0 0.0
    %6563 = vmatpush1.msra.mxu0 0.0
    %6564 = vmatprep.subr.mxu0 0.0
    %6565 = vmatpush1.msra.mxu0 0.0
    %6566 = vmatprep.subr.mxu0 0.0
    %6567 = vmatpush1.msra.mxu0 0.0
    %6568 = vmatprep.subr.mxu0 0.0
    %6569 = vmatpush1.msra.mxu0 0.0
    %6570 = vmatprep.subr.mxu0 0.0
    %6571 = vmatpush1.msra.mxu0 0.0
    %6572 = vmatprep.subr.mxu0 0.0
    %6573 = vmatpush1.msra.mxu0 0.0
    %6574 = vmatprep.subr.mxu0 0.0
    %6575 = vmatpush1.msra.mxu0 0.0
    %6576 = vmatprep.subr.mxu0 0.0
    %6577 = vmatpush1.msra.mxu0 0.0
    %6578 = vmatprep.subr.mxu0 0.0
    %6579 = vmatpush1.msra.mxu0 0.0
    %6580 = vmatprep.subr.mxu0 0.0
    %6581 = vmatpush1.msra.mxu0 0.0
    %6582 = vmatprep.subr.mxu0 0.0
    %6583 = vmatpush1.msra.mxu0 0.0
    %6584 = vmatprep.subr.mxu0 0.0
    %6585 = vmatpush1.msra.mxu0 0.0
    %6586 = vmatprep.subr.mxu0 0.0
    %6587 = vmatpush1.msra.mxu0 0.0
    %6588 = vmatprep.subr.mxu0 0.0
    %6589 = vmatpush1.msra.mxu0 0.0
    %6590 = vmatprep.mubr.f32.mxu0 0.0
    %6591 = vmatmul.mubr.f32.gmra.mrb[0].mxu0 %v6524
    %v6592 = vpop.f32.mrb[0].mxu0
    %v6593 = vadd.f32 %v6010, %v6592
    %v6594 = vpop.f32.mrb[0].mxu0
    %v6595 = vadd.f32 %v6014, %v6594
    %6596 = vdwg.mxu0
    %6597 = vmatprep.subr.mxu0 0.0
    %6598 = vmatpush1.msra.mxu0 %v5463
    %6599 = vmatprep.subr.mxu0 0.0
    %6600 = vmatpush1.msra.mxu0 %v5466
    %6601 = vmatprep.subr.mxu0 0.0
    %6602 = vmatpush1.msra.mxu0 %v5469
    %6603 = vmatprep.subr.mxu0 0.0
    %6604 = vmatpush1.msra.mxu0 %v5472
    %6605 = vmatprep.subr.mxu0 0.0
    %6606 = vmatpush1.msra.mxu0 0.0
    %6607 = vmatprep.subr.mxu0 0.0
    %6608 = vmatpush1.msra.mxu0 0.0
    %6609 = vmatprep.subr.mxu0 0.0
    %6610 = vmatpush1.msra.mxu0 0.0
    %6611 = vmatprep.subr.mxu0 0.0
    %6612 = vmatpush1.msra.mxu0 0.0
    %6613 = vmatprep.subr.mxu0 0.0
    %6614 = vmatpush1.msra.mxu0 0.0
    %6615 = vmatprep.subr.mxu0 0.0
    %6616 = vmatpush1.msra.mxu0 0.0
    %6617 = vmatprep.subr.mxu0 0.0
    %6618 = vmatpush1.msra.mxu0 0.0
    %6619 = vmatprep.subr.mxu0 0.0
    %6620 = vmatpush1.msra.mxu0 0.0
    %6621 = vmatprep.subr.mxu0 0.0
    %6622 = vmatpush1.msra.mxu0 0.0
    %6623 = vmatprep.subr.mxu0 0.0
    %6624 = vmatpush1.msra.mxu0 0.0
    %6625 = vmatprep.subr.mxu0 0.0
    %6626 = vmatpush1.msra.mxu0 0.0
    %6627 = vmatprep.subr.mxu0 0.0
    %6628 = vmatpush1.msra.mxu0 0.0
    %6629 = vmatprep.subr.mxu0 0.0
    %6630 = vmatpush1.msra.mxu0 0.0
    %6631 = vmatprep.subr.mxu0 0.0
    %6632 = vmatpush1.msra.mxu0 0.0
    %6633 = vmatprep.subr.mxu0 0.0
    %6634 = vmatpush1.msra.mxu0 0.0
    %6635 = vmatprep.subr.mxu0 0.0
    %6636 = vmatpush1.msra.mxu0 0.0
    %6637 = vmatprep.subr.mxu0 0.0
    %6638 = vmatpush1.msra.mxu0 0.0
    %6639 = vmatprep.subr.mxu0 0.0
    %6640 = vmatpush1.msra.mxu0 0.0
    %6641 = vmatprep.subr.mxu0 0.0
    %6642 = vmatpush1.msra.mxu0 0.0
    %6643 = vmatprep.subr.mxu0 0.0
    %6644 = vmatpush1.msra.mxu0 0.0
    %6645 = vmatprep.subr.mxu0 0.0
    %6646 = vmatpush1.msra.mxu0 0.0
    %6647 = vmatprep.subr.mxu0 0.0
    %6648 = vmatpush1.msra.mxu0 0.0
    %6649 = vmatprep.subr.mxu0 0.0
    %6650 = vmatpush1.msra.mxu0 0.0
    %6651 = vmatprep.subr.mxu0 0.0
    %6652 = vmatpush1.msra.mxu0 0.0
    %6653 = vmatprep.subr.mxu0 0.0
    %6654 = vmatpush1.msra.mxu0 0.0
    %6655 = vmatprep.subr.mxu0 0.0
    %6656 = vmatpush1.msra.mxu0 0.0
    %6657 = vmatprep.subr.mxu0 0.0
    %6658 = vmatpush1.msra.mxu0 0.0
    %6659 = vmatprep.subr.mxu0 0.0
    %6660 = vmatpush1.msra.mxu0 0.0
    %6661 = vmatprep.mubr.f32.mxu0 0.0
    %6662 = vmatmul.mubr.f32.gmra.mrb[0].mxu0 %v6524
    %v6663 = vpop.f32.mrb[0].mxu0
    %v6664 = vadd.f32 %v6018, %v6663
    %v6665 = vpop.f32.mrb[0].mxu0
    %6666 = vdwg.mxu0
    %v6667 = vadd.f32 %v6520, %v6593
    %v6668 = vxor.u32 %v6667, 2147483648
    %v6669 = vmul.f32 %v6668, 1.442695
    %v6670 = vpow.pop %v6669
    %v6671 = vadd.f32 %v6670, 1.0
    %v6672 = vrcp.pop %v6671
    %v6673 = vmul.f32 1.0, %v6672
    %v6674 = vadd.f32 %v6521, %v6595
    %v6675 = vxor.u32 %v6674, 2147483648
    %v6676 = vmul.f32 %v6675, 1.442695
    %v6677 = vpow.pop %v6676
    %v6678 = vadd.f32 %v6677, 1.0
    %v6679 = vrcp.pop %v6678
    %v6680 = vmul.f32 1.0, %v6679
    %v6681 = vmul.f32 %v6673, %v6664
    %v6682 = vadd.f32 %v6522, %v6681
    %v6683 = vtanh.pop %v6682
    %v6684 = vsub.f32 1.0, %v6680
    %v6685 = vmul.f32 %v6684, %v6683
    %v6686 = vmul.f32 %v6680, %v6519
    %v6687 = vadd.f32 %v6685, %v6686
    %v6688 = vld [vmem:[#allocation2 + $0x48] sm:$0xff]
    %v6689 = vld [vmem:[#allocation2 + $0x50] sm:$0xff]
    %v6690 = vld [vmem:[#allocation2 + $0x58] sm:$0xff]
    %v6692 = vsel %vm574, %v6687, 0
    %6694 = vmatprep.subr.mxu0 %v5462
    %6695 = vmatpush1.msra.mxu0 %v5461
    %6696 = vmatprep.subr.mxu0 %v5465
    %6697 = vmatpush1.msra.mxu0 %v5464
    %6698 = vmatprep.subr.mxu0 %v5468
    %6699 = vmatpush1.msra.mxu0 %v5467
    %6700 = vmatprep.subr.mxu0 %v5471
    %6701 = vmatpush1.msra.mxu0 %v5470
    %6702 = vmatprep.subr.mxu0 0.0
    %6703 = vmatpush1.msra.mxu0 0.0
    %6704 = vmatprep.subr.mxu0 0.0
    %6705 = vmatpush1.msra.mxu0 0.0
    %6706 = vmatprep.subr.mxu0 0.0
    %6707 = vmatpush1.msra.mxu0 0.0
    %6708 = vmatprep.subr.mxu0 0.0
    %6709 = vmatpush1.msra.mxu0 0.0
    %6710 = vmatprep.subr.mxu0 0.0
    %6711 = vmatpush1.msra.mxu0 0.0
    %6712 = vmatprep.subr.mxu0 0.0
    %6713 = vmatpush1.msra.mxu0 0.0
    %6714 = vmatprep.subr.mxu0 0.0
    %6715 = vmatpush1.msra.mxu0 0.0
    %6716 = vmatprep.subr.mxu0 0.0
    %6717 = vmatpush1.msra.mxu0 0.0
    %6718 = vmatprep.subr.mxu0 0.0
    %6719 = vmatpush1.msra.mxu0 0.0
    %6720 = vmatprep.subr.mxu0 0.0
    %6721 = vmatpush1.msra.mxu0 0.0
    %6722 = vmatprep.subr.mxu0 0.0
    %6723 = vmatpush1.msra.mxu0 0.0
    %6724 = vmatprep.subr.mxu0 0.0
    %6725 = vmatpush1.msra.mxu0 0.0
    %6726 = vmatprep.subr.mxu0 0.0
    %6727 = vmatpush1.msra.mxu0 0.0
    %6728 = vmatprep.subr.mxu0 0.0
    %6729 = vmatpush1.msra.mxu0 0.0
    %6730 = vmatprep.subr.mxu0 0.0
    %6731 = vmatpush1.msra.mxu0 0.0
    %6732 = vmatprep.subr.mxu0 0.0
    %6733 = vmatpush1.msra.mxu0 0.0
    %6734 = vmatprep.subr.mxu0 0.0
    %6735 = vmatpush1.msra.mxu0 0.0
    %6736 = vmatprep.subr.mxu0 0.0
    %6737 = vmatpush1.msra.mxu0 0.0
    %6738 = vmatprep.subr.mxu0 0.0
    %6739 = vmatpush1.msra.mxu0 0.0
    %6740 = vmatprep.subr.mxu0 0.0
    %6741 = vmatpush1.msra.mxu0 0.0
    %6742 = vmatprep.subr.mxu0 0.0
    %6743 = vmatpush1.msra.mxu0 0.0
    %6744 = vmatprep.subr.mxu0 0.0
    %6745 = vmatpush1.msra.mxu0 0.0
    %6746 = vmatprep.subr.mxu0 0.0
    %6747 = vmatpush1.msra.mxu0 0.0
    %6748 = vmatprep.subr.mxu0 0.0
    %6749 = vmatpush1.msra.mxu0 0.0
    %6750 = vmatprep.subr.mxu0 0.0
    %6751 = vmatpush1.msra.mxu0 0.0
    %6752 = vmatprep.subr.mxu0 0.0
    %6753 = vmatpush1.msra.mxu0 0.0
    %6754 = vmatprep.subr.mxu0 0.0
    %6755 = vmatpush1.msra.mxu0 0.0
    %6756 = vmatprep.subr.mxu0 0.0
    %6757 = vmatpush1.msra.mxu0 0.0
    %6758 = vmatprep.mubr.f32.mxu0 0.0
    %6759 = vmatmul.mubr.f32.gmra.mrb[0].mxu0 %v6692
    %v6760 = vpop.f32.mrb[0].mxu0
    %v6761 = vadd.f32 %v6010, %v6760
    %v6762 = vpop.f32.mrb[0].mxu0
    %v6763 = vadd.f32 %v6014, %v6762
    %6764 = vdwg.mxu0
    %6765 = vmatprep.subr.mxu0 0.0
    %6766 = vmatpush1.msra.mxu0 %v5463
    %6767 = vmatprep.subr.mxu0 0.0
    %6768 = vmatpush1.msra.mxu0 %v5466
    %6769 = vmatprep.subr.mxu0 0.0
    %6770 = vmatpush1.msra.mxu0 %v5469
    %6771 = vmatprep.subr.mxu0 0.0
    %6772 = vmatpush1.msra.mxu0 %v5472
    %6773 = vmatprep.subr.mxu0 0.0
    %6774 = vmatpush1.msra.mxu0 0.0
    %6775 = vmatprep.subr.mxu0 0.0
    %6776 = vmatpush1.msra.mxu0 0.0
    %6777 = vmatprep.subr.mxu0 0.0
    %6778 = vmatpush1.msra.mxu0 0.0
    %6779 = vmatprep.subr.mxu0 0.0
    %6780 = vmatpush1.msra.mxu0 0.0
    %6781 = vmatprep.subr.mxu0 0.0
    %6782 = vmatpush1.msra.mxu0 0.0
    %6783 = vmatprep.subr.mxu0 0.0
    %6784 = vmatpush1.msra.mxu0 0.0
    %6785 = vmatprep.subr.mxu0 0.0
    %6786 = vmatpush1.msra.mxu0 0.0
    %6787 = vmatprep.subr.mxu0 0.0
    %6788 = vmatpush1.msra.mxu0 0.0
    %6789 = vmatprep.subr.mxu0 0.0
    %6790 = vmatpush1.msra.mxu0 0.0
    %6791 = vmatprep.subr.mxu0 0.0
    %6792 = vmatpush1.msra.mxu0 0.0
    %6793 = vmatprep.subr.mxu0 0.0
    %6794 = vmatpush1.msra.mxu0 0.0
    %6795 = vmatprep.subr.mxu0 0.0
    %6796 = vmatpush1.msra.mxu0 0.0
    %6797 = vmatprep.subr.mxu0 0.0
    %6798 = vmatpush1.msra.mxu0 0.0
    %6799 = vmatprep.subr.mxu0 0.0
    %6800 = vmatpush1.msra.mxu0 0.0
    %6801 = vmatprep.subr.mxu0 0.0
    %6802 = vmatpush1.msra.mxu0 0.0
    %6803 = vmatprep.subr.mxu0 0.0
    %6804 = vmatpush1.msra.mxu0 0.0
    %6805 = vmatprep.subr.mxu0 0.0
    %6806 = vmatpush1.msra.mxu0 0.0
    %6807 = vmatprep.subr.mxu0 0.0
    %6808 = vmatpush1.msra.mxu0 0.0
    %6809 = vmatprep.subr.mxu0 0.0
    %6810 = vmatpush1.msra.mxu0 0.0
    %6811 = vmatprep.subr.mxu0 0.0
    %6812 = vmatpush1.msra.mxu0 0.0
    %6813 = vmatprep.subr.mxu0 0.0
    %6814 = vmatpush1.msra.mxu0 0.0
    %6815 = vmatprep.subr.mxu0 0.0
    %6816 = vmatpush1.msra.mxu0 0.0
    %6817 = vmatprep.subr.mxu0 0.0
    %6818 = vmatpush1.msra.mxu0 0.0
    %6819 = vmatprep.subr.mxu0 0.0
    %6820 = vmatpush1.msra.mxu0 0.0
    %6821 = vmatprep.subr.mxu0 0.0
    %6822 = vmatpush1.msra.mxu0 0.0
    %6823 = vmatprep.subr.mxu0 0.0
    %6824 = vmatpush1.msra.mxu0 0.0
    %6825 = vmatprep.subr.mxu0 0.0
    %6826 = vmatpush1.msra.mxu0 0.0
    %6827 = vmatprep.subr.mxu0 0.0
    %6828 = vmatpush1.msra.mxu0 0.0
    %6829 = vmatprep.mubr.f32.mxu0 0.0
    %6830 = vmatmul.mubr.f32.gmra.mrb[0].mxu0 %v6692
    %v6831 = vpop.f32.mrb[0].mxu0
    %v6832 = vadd.f32 %v6018, %v6831
    %v6833 = vpop.f32.mrb[0].mxu0
    %6834 = vdwg.mxu0
    %v6835 = vadd.f32 %v6688, %v6761
    %v6836 = vxor.u32 %v6835, 2147483648
    %v6837 = vmul.f32 %v6836, 1.442695
    %v6838 = vpow.pop %v6837
    %v6839 = vadd.f32 %v6838, 1.0
    %v6840 = vrcp.pop %v6839
    %v6841 = vmul.f32 1.0, %v6840
    %v6842 = vadd.f32 %v6689, %v6763
    %v6843 = vxor.u32 %v6842, 2147483648
    %v6844 = vmul.f32 %v6843, 1.442695
    %v6845 = vpow.pop %v6844
    %v6846 = vadd.f32 %v6845, 1.0
    %v6847 = vrcp.pop %v6846
    %v6848 = vmul.f32 1.0, %v6847
    %v6849 = vmul.f32 %v6841, %v6832
    %v6850 = vadd.f32 %v6690, %v6849
    %v6851 = vtanh.pop %v6850
    %v6852 = vsub.f32 1.0, %v6848
    %v6853 = vmul.f32 %v6852, %v6851
    %v6854 = vmul.f32 %v6848, %v6687
    %v6855 = vadd.f32 %v6853, %v6854
    %v6856 = vld [vmem:[#allocation2 + $0x30] sm:$0xff]
    %v6857 = vld [vmem:[#allocation2 + $0x38] sm:$0xff]
    %v6858 = vld [vmem:[#allocation2 + $0x40] sm:$0xff]
    %v6860 = vsel %vm574, %v6855, 0
    %6862 = vmatprep.subr.mxu0 %v5462
    %6863 = vmatpush1.msra.mxu0 %v5461
    %6864 = vmatprep.subr.mxu0 %v5465
    %6865 = vmatpush1.msra.mxu0 %v5464
    %6866 = vmatprep.subr.mxu0 %v5468
    %6867 = vmatpush1.msra.mxu0 %v5467
    %6868 = vmatprep.subr.mxu0 %v5471
    %6869 = vmatpush1.msra.mxu0 %v5470
    %6870 = vmatprep.subr.mxu0 0.0
    %6871 = vmatpush1.msra.mxu0 0.0
    %6872 = vmatprep.subr.mxu0 0.0
    %6873 = vmatpush1.msra.mxu0 0.0
    %6874 = vmatprep.subr.mxu0 0.0
    %6875 = vmatpush1.msra.mxu0 0.0
    %6876 = vmatprep.subr.mxu0 0.0
    %6877 = vmatpush1.msra.mxu0 0.0
    %6878 = vmatprep.subr.mxu0 0.0
    %6879 = vmatpush1.msra.mxu0 0.0
    %6880 = vmatprep.subr.mxu0 0.0
    %6881 = vmatpush1.msra.mxu0 0.0
    %6882 = vmatprep.subr.mxu0 0.0
    %6883 = vmatpush1.msra.mxu0 0.0
    %6884 = vmatprep.subr.mxu0 0.0
    %6885 = vmatpush1.msra.mxu0 0.0
    %6886 = vmatprep.subr.mxu0 0.0
    %6887 = vmatpush1.msra.mxu0 0.0
    %6888 = vmatprep.subr.mxu0 0.0
    %6889 = vmatpush1.msra.mxu0 0.0
    %6890 = vmatprep.subr.mxu0 0.0
    %6891 = vmatpush1.msra.mxu0 0.0
    %6892 = vmatprep.subr.mxu0 0.0
    %6893 = vmatpush1.msra.mxu0 0.0
    %6894 = vmatprep.subr.mxu0 0.0
    %6895 = vmatpush1.msra.mxu0 0.0
    %6896 = vmatprep.subr.mxu0 0.0
    %6897 = vmatpush1.msra.mxu0 0.0
    %6898 = vmatprep.subr.mxu0 0.0
    %6899 = vmatpush1.msra.mxu0 0.0
    %6900 = vmatprep.subr.mxu0 0.0
    %6901 = vmatpush1.msra.mxu0 0.0
    %6902 = vmatprep.subr.mxu0 0.0
    %6903 = vmatpush1.msra.mxu0 0.0
    %6904 = vmatprep.subr.mxu0 0.0
    %6905 = vmatpush1.msra.mxu0 0.0
    %6906 = vmatprep.subr.mxu0 0.0
    %6907 = vmatpush1.msra.mxu0 0.0
    %6908 = vmatprep.subr.mxu0 0.0
    %6909 = vmatpush1.msra.mxu0 0.0
    %6910 = vmatprep.subr.mxu0 0.0
    %6911 = vmatpush1.msra.mxu0 0.0
    %6912 = vmatprep.subr.mxu0 0.0
    %6913 = vmatpush1.msra.mxu0 0.0
    %6914 = vmatprep.subr.mxu0 0.0
    %6915 = vmatpush1.msra.mxu0 0.0
    %6916 = vmatprep.subr.mxu0 0.0
    %6917 = vmatpush1.msra.mxu0 0.0
    %6918 = vmatprep.subr.mxu0 0.0
    %6919 = vmatpush1.msra.mxu0 0.0
    %6920 = vmatprep.subr.mxu0 0.0
    %6921 = vmatpush1.msra.mxu0 0.0
    %6922 = vmatprep.subr.mxu0 0.0
    %6923 = vmatpush1.msra.mxu0 0.0
    %6924 = vmatprep.subr.mxu0 0.0
    %6925 = vmatpush1.msra.mxu0 0.0
    %6926 = vmatprep.mubr.f32.mxu0 0.0
    %6927 = vmatmul.mubr.f32.gmra.mrb[0].mxu0 %v6860
    %v6928 = vpop.f32.mrb[0].mxu0
    %v6929 = vadd.f32 %v6010, %v6928
    %v6930 = vpop.f32.mrb[0].mxu0
    %v6931 = vadd.f32 %v6014, %v6930
    %6932 = vdwg.mxu0
    %6933 = vmatprep.subr.mxu0 0.0
    %6934 = vmatpush1.msra.mxu0 %v5463
    %6935 = vmatprep.subr.mxu0 0.0
    %6936 = vmatpush1.msra.mxu0 %v5466
    %6937 = vmatprep.subr.mxu0 0.0
    %6938 = vmatpush1.msra.mxu0 %v5469
    %6939 = vmatprep.subr.mxu0 0.0
    %6940 = vmatpush1.msra.mxu0 %v5472
    %6941 = vmatprep.subr.mxu0 0.0
    %6942 = vmatpush1.msra.mxu0 0.0
    %6943 = vmatprep.subr.mxu0 0.0
    %6944 = vmatpush1.msra.mxu0 0.0
    %6945 = vmatprep.subr.mxu0 0.0
    %6946 = vmatpush1.msra.mxu0 0.0
    %6947 = vmatprep.subr.mxu0 0.0
    %6948 = vmatpush1.msra.mxu0 0.0
    %6949 = vmatprep.subr.mxu0 0.0
    %6950 = vmatpush1.msra.mxu0 0.0
    %6951 = vmatprep.subr.mxu0 0.0
    %6952 = vmatpush1.msra.mxu0 0.0
    %6953 = vmatprep.subr.mxu0 0.0
    %6954 = vmatpush1.msra.mxu0 0.0
    %6955 = vmatprep.subr.mxu0 0.0
    %6956 = vmatpush1.msra.mxu0 0.0
    %6957 = vmatprep.subr.mxu0 0.0
    %6958 = vmatpush1.msra.mxu0 0.0
    %6959 = vmatprep.subr.mxu0 0.0
    %6960 = vmatpush1.msra.mxu0 0.0
    %6961 = vmatprep.subr.mxu0 0.0
    %6962 = vmatpush1.msra.mxu0 0.0
    %6963 = vmatprep.subr.mxu0 0.0
    %6964 = vmatpush1.msra.mxu0 0.0
    %6965 = vmatprep.subr.mxu0 0.0
    %6966 = vmatpush1.msra.mxu0 0.0
    %6967 = vmatprep.subr.mxu0 0.0
    %6968 = vmatpush1.msra.mxu0 0.0
    %6969 = vmatprep.subr.mxu0 0.0
    %6970 = vmatpush1.msra.mxu0 0.0
    %6971 = vmatprep.subr.mxu0 0.0
    %6972 = vmatpush1.msra.mxu0 0.0
    %6973 = vmatprep.subr.mxu0 0.0
    %6974 = vmatpush1.msra.mxu0 0.0
    %6975 = vmatprep.subr.mxu0 0.0
    %6976 = vmatpush1.msra.mxu0 0.0
    %6977 = vmatprep.subr.mxu0 0.0
    %6978 = vmatpush1.msra.mxu0 0.0
    %6979 = vmatprep.subr.mxu0 0.0
    %6980 = vmatpush1.msra.mxu0 0.0
    %6981 = vmatprep.subr.mxu0 0.0
    %6982 = vmatpush1.msra.mxu0 0.0
    %6983 = vmatprep.subr.mxu0 0.0
    %6984 = vmatpush1.msra.mxu0 0.0
    %6985 = vmatprep.subr.mxu0 0.0
    %6986 = vmatpush1.msra.mxu0 0.0
    %6987 = vmatprep.subr.mxu0 0.0
    %6988 = vmatpush1.msra.mxu0 0.0
    %6989 = vmatprep.subr.mxu0 0.0
    %6990 = vmatpush1.msra.mxu0 0.0
    %6991 = vmatprep.subr.mxu0 0.0
    %6992 = vmatpush1.msra.mxu0 0.0
    %6993 = vmatprep.subr.mxu0 0.0
    %6994 = vmatpush1.msra.mxu0 0.0
    %6995 = vmatprep.subr.mxu0 0.0
    %6996 = vmatpush1.msra.mxu0 0.0
    %6997 = vmatprep.mubr.f32.mxu0 0.0
    %6998 = vmatmul.mubr.f32.gmra.mrb[0].mxu0 %v6860
    %v6999 = vpop.f32.mrb[0].mxu0
    %v7000 = vadd.f32 %v6018, %v6999
    %v7001 = vpop.f32.mrb[0].mxu0
    %7002 = vdwg.mxu0
    %v7003 = vadd.f32 %v6856, %v6929
    %v7004 = vxor.u32 %v7003, 2147483648
    %v7005 = vmul.f32 %v7004, 1.442695
    %v7006 = vpow.pop %v7005
    %v7007 = vadd.f32 %v7006, 1.0
    %v7008 = vrcp.pop %v7007
    %v7009 = vmul.f32 1.0, %v7008
    %v7010 = vadd.f32 %v6857, %v6931
    %v7011 = vxor.u32 %v7010, 2147483648
    %v7012 = vmul.f32 %v7011, 1.442695
    %v7013 = vpow.pop %v7012
    %v7014 = vadd.f32 %v7013, 1.0
    %v7015 = vrcp.pop %v7014
    %v7016 = vmul.f32 1.0, %v7015
    %v7017 = vmul.f32 %v7009, %v7000
    %v7018 = vadd.f32 %v6858, %v7017
    %v7019 = vtanh.pop %v7018
    %v7020 = vsub.f32 1.0, %v7016
    %v7021 = vmul.f32 %v7020, %v7019
    %v7022 = vmul.f32 %v7016, %v6855
    %v7023 = vadd.f32 %v7021, %v7022
    %v7024 = vld [vmem:[#allocation2 + $0x18] sm:$0xff]
    %v7025 = vld [vmem:[#allocation2 + $0x20] sm:$0xff]
    %v7026 = vld [vmem:[#allocation2 + $0x28] sm:$0xff]
    %v7028 = vsel %vm574, %v7023, 0
    %7030 = vmatprep.subr.mxu0 %v5462
    %7031 = vmatpush1.msra.mxu0 %v5461
    %7032 = vmatprep.subr.mxu0 %v5465
    %7033 = vmatpush1.msra.mxu0 %v5464
    %7034 = vmatprep.subr.mxu0 %v5468
    %7035 = vmatpush1.msra.mxu0 %v5467
    %7036 = vmatprep.subr.mxu0 %v5471
    %7037 = vmatpush1.msra.mxu0 %v5470
    %7038 = vmatprep.subr.mxu0 0.0
    %7039 = vmatpush1.msra.mxu0 0.0
    %7040 = vmatprep.subr.mxu0 0.0
    %7041 = vmatpush1.msra.mxu0 0.0
    %7042 = vmatprep.subr.mxu0 0.0
    %7043 = vmatpush1.msra.mxu0 0.0
    %7044 = vmatprep.subr.mxu0 0.0
    %7045 = vmatpush1.msra.mxu0 0.0
    %7046 = vmatprep.subr.mxu0 0.0
    %7047 = vmatpush1.msra.mxu0 0.0
    %7048 = vmatprep.subr.mxu0 0.0
    %7049 = vmatpush1.msra.mxu0 0.0
    %7050 = vmatprep.subr.mxu0 0.0
    %7051 = vmatpush1.msra.mxu0 0.0
    %7052 = vmatprep.subr.mxu0 0.0
    %7053 = vmatpush1.msra.mxu0 0.0
    %7054 = vmatprep.subr.mxu0 0.0
    %7055 = vmatpush1.msra.mxu0 0.0
    %7056 = vmatprep.subr.mxu0 0.0
    %7057 = vmatpush1.msra.mxu0 0.0
    %7058 = vmatprep.subr.mxu0 0.0
    %7059 = vmatpush1.msra.mxu0 0.0
    %7060 = vmatprep.subr.mxu0 0.0
    %7061 = vmatpush1.msra.mxu0 0.0
    %7062 = vmatprep.subr.mxu0 0.0
    %7063 = vmatpush1.msra.mxu0 0.0
    %7064 = vmatprep.subr.mxu0 0.0
    %7065 = vmatpush1.msra.mxu0 0.0
    %7066 = vmatprep.subr.mxu0 0.0
    %7067 = vmatpush1.msra.mxu0 0.0
    %7068 = vmatprep.subr.mxu0 0.0
    %7069 = vmatpush1.msra.mxu0 0.0
    %7070 = vmatprep.subr.mxu0 0.0
    %7071 = vmatpush1.msra.mxu0 0.0
    %7072 = vmatprep.subr.mxu0 0.0
    %7073 = vmatpush1.msra.mxu0 0.0
    %7074 = vmatprep.subr.mxu0 0.0
    %7075 = vmatpush1.msra.mxu0 0.0
    %7076 = vmatprep.subr.mxu0 0.0
    %7077 = vmatpush1.msra.mxu0 0.0
    %7078 = vmatprep.subr.mxu0 0.0
    %7079 = vmatpush1.msra.mxu0 0.0
    %7080 = vmatprep.subr.mxu0 0.0
    %7081 = vmatpush1.msra.mxu0 0.0
    %7082 = vmatprep.subr.mxu0 0.0
    %7083 = vmatpush1.msra.mxu0 0.0
    %7084 = vmatprep.subr.mxu0 0.0
    %7085 = vmatpush1.msra.mxu0 0.0
    %7086 = vmatprep.subr.mxu0 0.0
    %7087 = vmatpush1.msra.mxu0 0.0
    %7088 = vmatprep.subr.mxu0 0.0
    %7089 = vmatpush1.msra.mxu0 0.0
    %7090 = vmatprep.subr.mxu0 0.0
    %7091 = vmatpush1.msra.mxu0 0.0
    %7092 = vmatprep.subr.mxu0 0.0
    %7093 = vmatpush1.msra.mxu0 0.0
    %7094 = vmatprep.mubr.f32.mxu0 0.0
    %7095 = vmatmul.mubr.f32.gmra.mrb[0].mxu0 %v7028
    %v7096 = vpop.f32.mrb[0].mxu0
    %v7097 = vadd.f32 %v6010, %v7096
    %v7098 = vpop.f32.mrb[0].mxu0
    %v7099 = vadd.f32 %v6014, %v7098
    %7100 = vdwg.mxu0
    %7101 = vmatprep.subr.mxu0 0.0
    %7102 = vmatpush1.msra.mxu0 %v5463
    %7103 = vmatprep.subr.mxu0 0.0
    %7104 = vmatpush1.msra.mxu0 %v5466
    %7105 = vmatprep.subr.mxu0 0.0
    %7106 = vmatpush1.msra.mxu0 %v5469
    %7107 = vmatprep.subr.mxu0 0.0
    %7108 = vmatpush1.msra.mxu0 %v5472
    %7109 = vmatprep.subr.mxu0 0.0
    %7110 = vmatpush1.msra.mxu0 0.0
    %7111 = vmatprep.subr.mxu0 0.0
    %7112 = vmatpush1.msra.mxu0 0.0
    %7113 = vmatprep.subr.mxu0 0.0
    %7114 = vmatpush1.msra.mxu0 0.0
    %7115 = vmatprep.subr.mxu0 0.0
    %7116 = vmatpush1.msra.mxu0 0.0
    %7117 = vmatprep.subr.mxu0 0.0
    %7118 = vmatpush1.msra.mxu0 0.0
    %7119 = vmatprep.subr.mxu0 0.0
    %7120 = vmatpush1.msra.mxu0 0.0
    %7121 = vmatprep.subr.mxu0 0.0
    %7122 = vmatpush1.msra.mxu0 0.0
    %7123 = vmatprep.subr.mxu0 0.0
    %7124 = vmatpush1.msra.mxu0 0.0
    %7125 = vmatprep.subr.mxu0 0.0
    %7126 = vmatpush1.msra.mxu0 0.0
    %7127 = vmatprep.subr.mxu0 0.0
    %7128 = vmatpush1.msra.mxu0 0.0
    %7129 = vmatprep.subr.mxu0 0.0
    %7130 = vmatpush1.msra.mxu0 0.0
    %7131 = vmatprep.subr.mxu0 0.0
    %7132 = vmatpush1.msra.mxu0 0.0
    %7133 = vmatprep.subr.mxu0 0.0
    %7134 = vmatpush1.msra.mxu0 0.0
    %7135 = vmatprep.subr.mxu0 0.0
    %7136 = vmatpush1.msra.mxu0 0.0
    %7137 = vmatprep.subr.mxu0 0.0
    %7138 = vmatpush1.msra.mxu0 0.0
    %7139 = vmatprep.subr.mxu0 0.0
    %7140 = vmatpush1.msra.mxu0 0.0
    %7141 = vmatprep.subr.mxu0 0.0
    %7142 = vmatpush1.msra.mxu0 0.0
    %7143 = vmatprep.subr.mxu0 0.0
    %7144 = vmatpush1.msra.mxu0 0.0
    %7145 = vmatprep.subr.mxu0 0.0
    %7146 = vmatpush1.msra.mxu0 0.0
    %7147 = vmatprep.subr.mxu0 0.0
    %7148 = vmatpush1.msra.mxu0 0.0
    %7149 = vmatprep.subr.mxu0 0.0
    %7150 = vmatpush1.msra.mxu0 0.0
    %7151 = vmatprep.subr.mxu0 0.0
    %7152 = vmatpush1.msra.mxu0 0.0
    %7153 = vmatprep.subr.mxu0 0.0
    %7154 = vmatpush1.msra.mxu0 0.0
    %7155 = vmatprep.subr.mxu0 0.0
    %7156 = vmatpush1.msra.mxu0 0.0
    %7157 = vmatprep.subr.mxu0 0.0
    %7158 = vmatpush1.msra.mxu0 0.0
    %7159 = vmatprep.subr.mxu0 0.0
    %7160 = vmatpush1.msra.mxu0 0.0
    %7161 = vmatprep.subr.mxu0 0.0
    %7162 = vmatpush1.msra.mxu0 0.0
    %7163 = vmatprep.subr.mxu0 0.0
    %7164 = vmatpush1.msra.mxu0 0.0
    %7165 = vmatprep.mubr.f32.mxu0 0.0
    %7166 = vmatmul.mubr.f32.gmra.mrb[0].mxu0 %v7028
    %v7167 = vpop.f32.mrb[0].mxu0
    %v7168 = vadd.f32 %v6018, %v7167
    %v7169 = vpop.f32.mrb[0].mxu0
    %7170 = vdwg.mxu0
    %v7171 = vadd.f32 %v7024, %v7097
    %v7172 = vxor.u32 %v7171, 2147483648
    %v7173 = vmul.f32 %v7172, 1.442695
    %v7174 = vpow.pop %v7173
    %v7175 = vadd.f32 %v7174, 1.0
    %v7176 = vrcp.pop %v7175
    %v7177 = vmul.f32 1.0, %v7176
    %v7178 = vadd.f32 %v7025, %v7099
    %v7179 = vxor.u32 %v7178, 2147483648
    %v7180 = vmul.f32 %v7179, 1.442695
    %v7181 = vpow.pop %v7180
    %v7182 = vadd.f32 %v7181, 1.0
    %v7183 = vrcp.pop %v7182
    %v7184 = vmul.f32 1.0, %v7183
    %v7185 = vmul.f32 %v7177, %v7168
    %v7186 = vadd.f32 %v7026, %v7185
    %v7187 = vtanh.pop %v7186
    %v7188 = vsub.f32 1.0, %v7184
    %v7189 = vmul.f32 %v7188, %v7187
    %v7190 = vmul.f32 %v7184, %v7023
    %v7191 = vadd.f32 %v7189, %v7190
    %v7192 = vld [vmem:[#allocation2] sm:$0xff]
    %v7193 = vld [vmem:[#allocation2 + $0x8] sm:$0xff]
    %v7194 = vld [vmem:[#allocation2 + $0x10] sm:$0xff]
    %v7196 = vsel %vm574, %v7191, 0
    %7198 = vmatprep.subr.mxu0 %v5462
    %7199 = vmatpush1.msra.mxu0 %v5461
    %7200 = vmatprep.subr.mxu0 %v5465
    %7201 = vmatpush1.msra.mxu0 %v5464
    %7202 = vmatprep.subr.mxu0 %v5468
    %7203 = vmatpush1.msra.mxu0 %v5467
    %7204 = vmatprep.subr.mxu0 %v5471
    %7205 = vmatpush1.msra.mxu0 %v5470
    %7206 = vmatprep.subr.mxu0 0.0
    %7207 = vmatpush1.msra.mxu0 0.0
    %7208 = vmatprep.subr.mxu0 0.0
    %7209 = vmatpush1.msra.mxu0 0.0
    %7210 = vmatprep.subr.mxu0 0.0
    %7211 = vmatpush1.msra.mxu0 0.0
    %7212 = vmatprep.subr.mxu0 0.0
    %7213 = vmatpush1.msra.mxu0 0.0
    %7214 = vmatprep.subr.mxu0 0.0
    %7215 = vmatpush1.msra.mxu0 0.0
    %7216 = vmatprep.subr.mxu0 0.0
    %7217 = vmatpush1.msra.mxu0 0.0
    %7218 = vmatprep.subr.mxu0 0.0
    %7219 = vmatpush1.msra.mxu0 0.0
    %7220 = vmatprep.subr.mxu0 0.0
    %7221 = vmatpush1.msra.mxu0 0.0
    %7222 = vmatprep.subr.mxu0 0.0
    %7223 = vmatpush1.msra.mxu0 0.0
    %7224 = vmatprep.subr.mxu0 0.0
    %7225 = vmatpush1.msra.mxu0 0.0
    %7226 = vmatprep.subr.mxu0 0.0
    %7227 = vmatpush1.msra.mxu0 0.0
    %7228 = vmatprep.subr.mxu0 0.0
    %7229 = vmatpush1.msra.mxu0 0.0
    %7230 = vmatprep.subr.mxu0 0.0
    %7231 = vmatpush1.msra.mxu0 0.0
    %7232 = vmatprep.subr.mxu0 0.0
    %7233 = vmatpush1.msra.mxu0 0.0
    %7234 = vmatprep.subr.mxu0 0.0
    %7235 = vmatpush1.msra.mxu0 0.0
    %7236 = vmatprep.subr.mxu0 0.0
    %7237 = vmatpush1.msra.mxu0 0.0
    %7238 = vmatprep.subr.mxu0 0.0
    %7239 = vmatpush1.msra.mxu0 0.0
    %7240 = vmatprep.subr.mxu0 0.0
    %7241 = vmatpush1.msra.mxu0 0.0
    %7242 = vmatprep.subr.mxu0 0.0
    %7243 = vmatpush1.msra.mxu0 0.0
    %7244 = vmatprep.subr.mxu0 0.0
    %7245 = vmatpush1.msra.mxu0 0.0
    %7246 = vmatprep.subr.mxu0 0.0
    %7247 = vmatpush1.msra.mxu0 0.0
    %7248 = vmatprep.subr.mxu0 0.0
    %7249 = vmatpush1.msra.mxu0 0.0
    %7250 = vmatprep.subr.mxu0 0.0
    %7251 = vmatpush1.msra.mxu0 0.0
    %7252 = vmatprep.subr.mxu0 0.0
    %7253 = vmatpush1.msra.mxu0 0.0
    %7254 = vmatprep.subr.mxu0 0.0
    %7255 = vmatpush1.msra.mxu0 0.0
    %7256 = vmatprep.subr.mxu0 0.0
    %7257 = vmatpush1.msra.mxu0 0.0
    %7258 = vmatprep.subr.mxu0 0.0
    %7259 = vmatpush1.msra.mxu0 0.0
    %7260 = vmatprep.subr.mxu0 0.0
    %7261 = vmatpush1.msra.mxu0 0.0
    %7262 = vmatprep.mubr.f32.mxu0 0.0
    %7263 = vmatmul.mubr.f32.gmra.mrb[0].mxu0 %v7196
    %v7264 = vpop.f32.mrb[0].mxu0
    %v7265 = vadd.f32 %v6010, %v7264
    %v7266 = vpop.f32.mrb[0].mxu0
    %v7267 = vadd.f32 %v6014, %v7266
    %7268 = vdwg.mxu0
    %7269 = vmatprep.subr.mxu0 0.0
    %7270 = vmatpush1.msra.mxu0 %v5463
    %7271 = vmatprep.subr.mxu0 0.0
    %7272 = vmatpush1.msra.mxu0 %v5466
    %7273 = vmatprep.subr.mxu0 0.0
    %7274 = vmatpush1.msra.mxu0 %v5469
    %7275 = vmatprep.subr.mxu0 0.0
    %7276 = vmatpush1.msra.mxu0 %v5472
    %7277 = vmatprep.subr.mxu0 0.0
    %7278 = vmatpush1.msra.mxu0 0.0
    %7279 = vmatprep.subr.mxu0 0.0
    %7280 = vmatpush1.msra.mxu0 0.0
    %7281 = vmatprep.subr.mxu0 0.0
    %7282 = vmatpush1.msra.mxu0 0.0
    %7283 = vmatprep.subr.mxu0 0.0
    %7284 = vmatpush1.msra.mxu0 0.0
    %7285 = vmatprep.subr.mxu0 0.0
    %7286 = vmatpush1.msra.mxu0 0.0
    %7287 = vmatprep.subr.mxu0 0.0
    %7288 = vmatpush1.msra.mxu0 0.0
    %7289 = vmatprep.subr.mxu0 0.0
    %7290 = vmatpush1.msra.mxu0 0.0
    %7291 = vmatprep.subr.mxu0 0.0
    %7292 = vmatpush1.msra.mxu0 0.0
    %7293 = vmatprep.subr.mxu0 0.0
    %7294 = vmatpush1.msra.mxu0 0.0
    %7295 = vmatprep.subr.mxu0 0.0
    %7296 = vmatpush1.msra.mxu0 0.0
    %7297 = vmatprep.subr.mxu0 0.0
    %7298 = vmatpush1.msra.mxu0 0.0
    %7299 = vmatprep.subr.mxu0 0.0
    %7300 = vmatpush1.msra.mxu0 0.0
    %7301 = vmatprep.subr.mxu0 0.0
    %7302 = vmatpush1.msra.mxu0 0.0
    %7303 = vmatprep.subr.mxu0 0.0
    %7304 = vmatpush1.msra.mxu0 0.0
    %7305 = vmatprep.subr.mxu0 0.0
    %7306 = vmatpush1.msra.mxu0 0.0
    %7307 = vmatprep.subr.mxu0 0.0
    %7308 = vmatpush1.msra.mxu0 0.0
    %7309 = vmatprep.subr.mxu0 0.0
    %7310 = vmatpush1.msra.mxu0 0.0
    %7311 = vmatprep.subr.mxu0 0.0
    %7312 = vmatpush1.msra.mxu0 0.0
    %7313 = vmatprep.subr.mxu0 0.0
    %7314 = vmatpush1.msra.mxu0 0.0
    %7315 = vmatprep.subr.mxu0 0.0
    %7316 = vmatpush1.msra.mxu0 0.0
    %7317 = vmatprep.subr.mxu0 0.0
    %7318 = vmatpush1.msra.mxu0 0.0
    %7319 = vmatprep.subr.mxu0 0.0
    %7320 = vmatpush1.msra.mxu0 0.0
    %7321 = vmatprep.subr.mxu0 0.0
    %7322 = vmatpush1.msra.mxu0 0.0
    %7323 = vmatprep.subr.mxu0 0.0
    %7324 = vmatpush1.msra.mxu0 0.0
    %7325 = vmatprep.subr.mxu0 0.0
    %7326 = vmatpush1.msra.mxu0 0.0
    %7327 = vmatprep.subr.mxu0 0.0
    %7328 = vmatpush1.msra.mxu0 0.0
    %7329 = vmatprep.subr.mxu0 0.0
    %7330 = vmatpush1.msra.mxu0 0.0
    %7331 = vmatprep.subr.mxu0 0.0
    %7332 = vmatpush1.msra.mxu0 0.0
    %7333 = vmatprep.mubr.f32.mxu0 0.0
    %7334 = vmatmul.mubr.f32.gmra.mrb[0].mxu0 %v7196
    %v7335 = vpop.f32.mrb[0].mxu0
    %v7336 = vadd.f32 %v6018, %v7335
    %v7337 = vpop.f32.mrb[0].mxu0
    %7338 = vdwg.mxu0
    %v7339 = vadd.f32 %v7192, %v7265
    %v7340 = vxor.u32 %v7339, 2147483648
    %v7341 = vmul.f32 %v7340, 1.442695
    %v7342 = vpow.pop %v7341
    %v7343 = vadd.f32 %v7342, 1.0
    %v7344 = vrcp.pop %v7343
    %v7345 = vmul.f32 1.0, %v7344
    %v7346 = vadd.f32 %v7193, %v7267
    %v7347 = vxor.u32 %v7346, 2147483648
    %v7348 = vmul.f32 %v7347, 1.442695
    %v7349 = vpow.pop %v7348
    %v7350 = vadd.f32 %v7349, 1.0
    %v7351 = vrcp.pop %v7350
    %v7352 = vmul.f32 1.0, %v7351
    %v7353 = vmul.f32 %v7345, %v7336
    %v7354 = vadd.f32 %v7194, %v7353
    %v7355 = vtanh.pop %v7354
    %v7356 = vsub.f32 1.0, %v7352
    %v7357 = vmul.f32 %v7356, %v7355
    %v7358 = vmul.f32 %v7352, %v7191
    %v7359 = vadd.f32 %v7357, %v7358
    %v7360 = vld [vmem:[%s7] sm:$0xff]
    %v7361 = vld [vmem:[%s7 + $0x8] sm:$0xff]
    %v7362 = vld [vmem:[%s7 + $0x10] sm:$0xff]
    %v7363 = vld [vmem:[%s7 + $0x18] sm:$0xff]
    %s7364 = scalar_lea.vmem %s7, 32
    %v7365 = vld [vmem:[%s7364] sm:$0xff]
    %v7366 = vld [vmem:[%s7364 + $0x8] sm:$0xff]
    %v7367 = vld [vmem:[%s7364 + $0x10] sm:$0xff]
    %v7368 = vld [vmem:[%s7364 + $0x18] sm:$0xff]
    %v7370 = vsel %vm574, %v7359, 0
    %7372 = vmatprep.subr.mxu0 0.0
    %7373 = vmatpush1.msra.mxu0 %v7365
    %7374 = vmatprep.subr.mxu0 0.0
    %7375 = vmatpush1.msra.mxu0 %v7366
    %7376 = vmatprep.subr.mxu0 0.0
    %7377 = vmatpush1.msra.mxu0 %v7367
    %7378 = vmatprep.subr.mxu0 0.0
    %7379 = vmatpush1.msra.mxu0 %v7368
    %7380 = vmatprep.subr.mxu0 0.0
    %7381 = vmatpush1.msra.mxu0 0.0
    %7382 = vmatprep.subr.mxu0 0.0
    %7383 = vmatpush1.msra.mxu0 0.0
    %7384 = vmatprep.subr.mxu0 0.0
    %7385 = vmatpush1.msra.mxu0 0.0
    %7386 = vmatprep.subr.mxu0 0.0
    %7387 = vmatpush1.msra.mxu0 0.0
    %7388 = vmatprep.subr.mxu0 0.0
    %7389 = vmatpush1.msra.mxu0 0.0
    %7390 = vmatprep.subr.mxu0 0.0
    %7391 = vmatpush1.msra.mxu0 0.0
    %7392 = vmatprep.subr.mxu0 0.0
    %7393 = vmatpush1.msra.mxu0 0.0
    %7394 = vmatprep.subr.mxu0 0.0
    %7395 = vmatpush1.msra.mxu0 0.0
    %7396 = vmatprep.subr.mxu0 0.0
    %7397 = vmatpush1.msra.mxu0 0.0
    %7398 = vmatprep.subr.mxu0 0.0
    %7399 = vmatpush1.msra.mxu0 0.0
    %7400 = vmatprep.subr.mxu0 0.0
    %7401 = vmatpush1.msra.mxu0 0.0
    %7402 = vmatprep.subr.mxu0 0.0
    %7403 = vmatpush1.msra.mxu0 0.0
    %7404 = vmatprep.subr.mxu0 0.0
    %7405 = vmatpush1.msra.mxu0 0.0
    %7406 = vmatprep.subr.mxu0 0.0
    %7407 = vmatpush1.msra.mxu0 0.0
    %7408 = vmatprep.subr.mxu0 0.0
    %7409 = vmatpush1.msra.mxu0 0.0
    %7410 = vmatprep.subr.mxu0 0.0
    %7411 = vmatpush1.msra.mxu0 0.0
    %7412 = vmatprep.subr.mxu0 0.0
    %7413 = vmatpush1.msra.mxu0 0.0
    %7414 = vmatprep.subr.mxu0 0.0
    %7415 = vmatpush1.msra.mxu0 0.0
    %7416 = vmatprep.subr.mxu0 0.0
    %7417 = vmatpush1.msra.mxu0 0.0
    %7418 = vmatprep.subr.mxu0 0.0
    %7419 = vmatpush1.msra.mxu0 0.0
    %7420 = vmatprep.subr.mxu0 0.0
    %7421 = vmatpush1.msra.mxu0 0.0
    %7422 = vmatprep.subr.mxu0 0.0
    %7423 = vmatpush1.msra.mxu0 0.0
    %7424 = vmatprep.subr.mxu0 0.0
    %7425 = vmatpush1.msra.mxu0 0.0
    %7426 = vmatprep.subr.mxu0 0.0
    %7427 = vmatpush1.msra.mxu0 0.0
    %7428 = vmatprep.subr.mxu0 0.0
    %7429 = vmatpush1.msra.mxu0 0.0
    %7430 = vmatprep.subr.mxu0 0.0
    %7431 = vmatpush1.msra.mxu0 0.0
    %7432 = vmatprep.subr.mxu0 0.0
    %7433 = vmatpush1.msra.mxu0 0.0
    %7434 = vmatprep.subr.mxu0 0.0
    %7435 = vmatpush1.msra.mxu0 0.0
    %7436 = vmatprep.mubr.f32.mxu0 0.0
    %7437 = vmatmul.mubr.f32.gmra.mrb[0].mxu0 %v7370
    %v7438 = vpop.f32.mrb[0].mxu0
    %v7439 = vadd.f32 0.0, %v7438
    %v7440 = vpop.f32.mrb[0].mxu0
    %7441 = vdwg.mxu0
    %v7443 = vsel %vm574, %v5459, 0
    %7445 = vmatprep.subr.mxu0 0.0
    %7446 = vmatpush1.msra.mxu0 %v7360
    %7447 = vmatprep.subr.mxu0 0.0
    %7448 = vmatpush1.msra.mxu0 %v7361
    %7449 = vmatprep.subr.mxu0 0.0
    %7450 = vmatpush1.msra.mxu0 %v7362
    %7451 = vmatprep.subr.mxu0 0.0
    %7452 = vmatpush1.msra.mxu0 %v7363
    %7453 = vmatprep.subr.mxu0 0.0
    %7454 = vmatpush1.msra.mxu0 0.0
    %7455 = vmatprep.subr.mxu0 0.0
    %7456 = vmatpush1.msra.mxu0 0.0
    %7457 = vmatprep.subr.mxu0 0.0
    %7458 = vmatpush1.msra.mxu0 0.0
    %7459 = vmatprep.subr.mxu0 0.0
    %7460 = vmatpush1.msra.mxu0 0.0
    %7461 = vmatprep.subr.mxu0 0.0
    %7462 = vmatpush1.msra.mxu0 0.0
    %7463 = vmatprep.subr.mxu0 0.0
    %7464 = vmatpush1.msra.mxu0 0.0
    %7465 = vmatprep.subr.mxu0 0.0
    %7466 = vmatpush1.msra.mxu0 0.0
    %7467 = vmatprep.subr.mxu0 0.0
    %7468 = vmatpush1.msra.mxu0 0.0
    %7469 = vmatprep.subr.mxu0 0.0
    %7470 = vmatpush1.msra.mxu0 0.0
    %7471 = vmatprep.subr.mxu0 0.0
    %7472 = vmatpush1.msra.mxu0 0.0
    %7473 = vmatprep.subr.mxu0 0.0
    %7474 = vmatpush1.msra.mxu0 0.0
    %7475 = vmatprep.subr.mxu0 0.0
    %7476 = vmatpush1.msra.mxu0 0.0
    %7477 = vmatprep.subr.mxu0 0.0
    %7478 = vmatpush1.msra.mxu0 0.0
    %7479 = vmatprep.subr.mxu0 0.0
    %7480 = vmatpush1.msra.mxu0 0.0
    %7481 = vmatprep.subr.mxu0 0.0
    %7482 = vmatpush1.msra.mxu0 0.0
    %7483 = vmatprep.subr.mxu0 0.0
    %7484 = vmatpush1.msra.mxu0 0.0
    %7485 = vmatprep.subr.mxu0 0.0
    %7486 = vmatpush1.msra.mxu0 0.0
    %7487 = vmatprep.subr.mxu0 0.0
    %7488 = vmatpush1.msra.mxu0 0.0
    %7489 = vmatprep.subr.mxu0 0.0
    %7490 = vmatpush1.msra.mxu0 0.0
    %7491 = vmatprep.subr.mxu0 0.0
    %7492 = vmatpush1.msra.mxu0 0.0
    %7493 = vmatprep.subr.mxu0 0.0
    %7494 = vmatpush1.msra.mxu0 0.0
    %7495 = vmatprep.subr.mxu0 0.0
    %7496 = vmatpush1.msra.mxu0 0.0
    %7497 = vmatprep.subr.mxu0 0.0
    %7498 = vmatpush1.msra.mxu0 0.0
    %7499 = vmatprep.subr.mxu0 0.0
    %7500 = vmatpush1.msra.mxu0 0.0
    %7501 = vmatprep.subr.mxu0 0.0
    %7502 = vmatpush1.msra.mxu0 0.0
    %7503 = vmatprep.subr.mxu0 0.0
    %7504 = vmatpush1.msra.mxu0 0.0
    %7505 = vmatprep.subr.mxu0 0.0
    %7506 = vmatpush1.msra.mxu0 0.0
    %7507 = vmatprep.subr.mxu0 0.0
    %7508 = vmatpush1.msra.mxu0 0.0
    %7509 = vmatprep.mubr.f32.mxu0 0.0
    %7510 = vmatmul.mubr.f32.gmra.mrb[0].mxu0 %v7443
    %v7511 = vpop.f32.mrb[0].mxu0
    %v7512 = vadd.f32 %v7439, %v7511
    %v7513 = vpop.f32.mrb[0].mxu0
    %7514 = vdwg.mxu0
    %v7515 = vld [vmem:[%s8] sm:$0x1]
    %v7517 = vlaneseq
    %v7518 = vshrl.u32 %v7517, 7
    %v7519 = vsub.s32 0, %v7518
    %v7520 = vrot.slane %v7515, %v7519
    %v7522 = vadd.f32 %v7512, %v7520
    %vm7523 = vcmask 31744
    %v7524 = vsel %vm7523, %v7522, -inf
    %7525 = vmax.xlane.f32.xlu0 %v7524
    %v7526 = vpop.xlane.xlu0 %7525
    %v7527 = vsub.f32 %v7522, %v7526
    %v7528 = vmul.f32 %v7527, 1.442695
    %v7529 = vpow.pop %v7528
    %v7530 = vsel %vm7523, %v7529, 0.0
    %7531 = vadd.xlane.f32.xlu0 %v7530
    %v7532 = vpop.xlane.xlu0 %7531
    %v7533 = vlog2.pop %v7532
    %v7534 = vmul.f32 %v7533, 0.6931472
    %v7535 = vsub.f32 %v7527, %v7534
    %vm7536 = vcmask 25600
    %7537 = vst.msk [vmem:[#allocation8] sm:$0x3] %vm7536, %v7535
    // Predicated region
    $region46: #{rnn_forward.1} parent=1 // pred_check
      _
    $region47: #{rnn_forward.1} parent=1 // pred_check_branch
      %7539 = sbr.rel (0) target = $region49
    $region48: #{rnn_forward.1} parent=1 // pred_region
      %s7541 = ssub.s32 32, 32
      %7542 = vsyncadd [#allocation5], %s7541
      %s7544 = sshll.u32 [#allocation8], 4
      %s7545 = int_to_ptr.vmem [resolvable:$true] %s7544
      %7547 = dma.vmem_to_hbm [thread:$0]  %s7545, 32, %s9, [#allocation5]
    $region49: #{rnn_forward.1} parent=1 // pred_fallthru
      _
    // Predicated region
    $region50: #{rnn_forward.1} parent=1 // pred_check
      _
    $region51: #{rnn_forward.1} parent=1 // pred_check_branch
      %7549 = sbr.rel (0) target = $region53
    $region52: #{rnn_forward.1} parent=1 // pred_region
      %7550 = dma.done [#allocation5], 32
    $region53: #{rnn_forward.1} parent=1 // pred_fallthru
      _
    %7551 = vsyncpa [#allocation4], 1
    %7552 = vsyncpa [#allocation7], 1
    %7553 = vsyncpa [#allocation5], 1

</llo_original>
